<compile_context>
chip_gen: v5e
topology: v5e:2x2
jax: 0.10.0
libtpu: 0.0.40
codegen_flags: <defaults>
</compile_context>

<pallas_src>
import functools

import jax
import jax.numpy as jnp
from jax.experimental import pallas as pl
from jax.experimental.pallas import tpu as pltpu


def _attention_kernel(x_ref, wqkv_ref, wproj_ref, bproj_ref, o_ref,
                      qkv_ref, ctx_ref,
                      *, num_heads, head_dim, seq_len, approx_recip):
    """One grid step = one batch element; fully fused in VMEM."""
    n_pad = x_ref.shape[1]
    dim = x_ref.shape[2]
    d = head_dim

    # Heads per lane-dense store group: the largest divisor of num_heads with
    # group*d <= 128 (8 heads at d=16, 2 heads at d=64, 1 head at d>=128).
    group = max(1, min(num_heads, 128 // d) if d <= 128 else 1)
    while num_heads % group:
        group -= 1
    gw = group * d
    num_groups = num_heads // group

    x = x_ref[0]                                                   # (n_pad, dim) bf16

    # QKV projection: one wide bf16 MXU matmul, f32 accumulation.  The softmax
    # scale is already folded into the q columns of wqkv_ref.  The result is
    # cast once to bf16 into a VMEM scratch (single lane-dense store); the big
    # f32 intermediate dies immediately.
    qkv = jnp.dot(x, wqkv_ref[...], preferred_element_type=jnp.float32)
    qkv_ref[...] = qkv.astype(jnp.bfloat16)                        # (n_pad, 3*dim)

    # Key-padding bias (only materialized when the sequence was padded).
    # Padded x rows are zero => their scores are exactly 0, so they must be
    # pushed to -inf before the softmax.  exp(-1e30 - m) underflows to 0.
    if seq_len < n_pad:
        key_ids = jax.lax.broadcasted_iota(jnp.int32, (1, n_pad), 1)
        key_bias = jnp.where(key_ids < seq_len,
                             jnp.float32(0.0), jnp.float32(-1e30))
    else:
        key_bias = None

    def process_group(goff):
        # Lane-dense (n_pad, gw) bf16 loads from the staged qkv scratch.
        q_grp = qkv_ref[:, pl.ds(0 * dim + goff, gw)]
        k_grp = qkv_ref[:, pl.ds(1 * dim + goff, gw)]
        v_grp = qkv_ref[:, pl.ds(2 * dim + goff, gw)]
        parts = []
        for j in range(group):
            q = q_grp[:, j * d:(j + 1) * d]                        # (n_pad, d) bf16
            k = k_grp[:, j * d:(j + 1) * d]
            v = v_grp[:, j * d:(j + 1) * d]

            # scores = q @ k^T (bf16 operands, f32 accumulation on the MXU).
            s = jax.lax.dot_general(
                q, k, dimension_numbers=(((1,), (1,)), ((), ())),
                preferred_element_type=jnp.float32)                # (n_pad, n_pad)
            if key_bias is not None:
                s = s + key_bias

            # Numerically-stable softmax in f32; normalization deferred past PV.
            m = jnp.max(s, axis=-1, keepdims=True)
            e = jnp.exp(s - m)
            denom = jnp.sum(e, axis=-1, keepdims=True)             # (n_pad, 1)

            o_h = jnp.dot(e.astype(jnp.bfloat16), v,
                          preferred_element_type=jnp.float32)      # (n_pad, d)
            if approx_recip:
                o_h = o_h * pl.reciprocal(denom, approx=True)      # EUP, ~free
            else:
                o_h = o_h / denom
            parts.append(o_h)

        # One lane-dense (n_pad, gw) bf16 store per head group.
        blk = parts[0] if group == 1 else jnp.concatenate(parts, axis=-1)
        ctx_ref[:, pl.ds(goff, gw)] = blk.astype(jnp.bfloat16)

    if num_groups > 1 and gw % 128 == 0:
        # fori_loop bounds the live range of the (n_pad, n_pad) f32 score/exp
        # blocks (one group at a time) while staying visible to the scheduler.
        def body(g, carry):
            process_group(pl.multiple_of(g * gw, 128))
            return carry
        jax.lax.fori_loop(0, num_groups, body, 0, unroll=True)
    else:
        for g in range(num_groups):
            process_group(g * gw)

    # Output projection (single full-depth bf16 matmul) + bias; lane-dense
    # f32 store of the whole (n_pad, dim) tile.
    out = jnp.dot(ctx_ref[...], wproj_ref[...],
                  preferred_element_type=jnp.float32) + bproj_ref[...]
    o_ref[0] = out.astype(o_ref.dtype)


def _prepare_operands(x, w_qkv, w_proj, b_proj, *, num_heads):
    """Glue: transpose weights to (in, out), fold the softmax scale into the q
    columns (exact for power-of-two head dims, negligible rounding otherwise),
    cast matmul operands to bf16, keep the bias in f32."""
    _, _, dim = x.shape
    head_dim = dim // num_heads
    scale = head_dim ** (-0.5)

    wqkv_t = jnp.asarray(w_qkv, jnp.float32).T                     # (dim, 3*dim)
    wqkv_t = wqkv_t.at[:, :dim].multiply(scale)                    # fold scale into q
    wqkv_t = wqkv_t.astype(jnp.bfloat16)
    wproj_t = jnp.asarray(w_proj, jnp.float32).T.astype(jnp.bfloat16)  # (dim, dim)
    bproj2d = jnp.asarray(b_proj, jnp.float32).reshape(1, dim)
    x_bf16 = jnp.asarray(x, jnp.float32).astype(jnp.bfloat16)
    return x_bf16, wqkv_t, wproj_t, bproj2d


def _const_spec(block_shape, index_map, single_buffer):
    """BlockSpec for a grid-constant operand; single-buffered when supported."""
    if single_buffer:
        try:
            return pl.BlockSpec(block_shape, index_map,
                                pipeline_mode=pl.Buffered(1))
        except Exception:  # older JAX without pipeline_mode / Buffered
            pass
    return pl.BlockSpec(block_shape, index_map)


def _cost_estimate(batch, n_pad, dim, num_heads, head_dim):
    flops = batch * (2 * n_pad * dim * (3 * dim)          # QKV projection
                     + num_heads * 2 * (2 * n_pad * n_pad * head_dim)  # QK^T + PV
                     + 2 * n_pad * dim * dim)             # output projection
    transcendentals = batch * num_heads * n_pad * n_pad   # exp
    bytes_accessed = (batch * n_pad * dim * 2             # x (bf16)
                      + dim * 3 * dim * 2 + dim * dim * 2 + dim * 4  # weights
                      + batch * n_pad * dim * 4)          # out (f32)
    return pl.CostEstimate(flops=flops, transcendentals=transcendentals,
                           bytes_accessed=bytes_accessed)


def attention_forward(x, w_qkv, w_proj, b_proj, *, num_heads, approx_recip=True):
    """x: (B, N, D) f32. w_qkv: (3D, D), w_proj: (D, D) in PyTorch (out, in)
    layout, b_proj: (D,).  Returns (B, N, D) f32."""
    B, N, D = x.shape
    assert D % num_heads == 0, "dim must be divisible by num_heads"
    head_dim = D // num_heads

    # Pad the sequence length to a multiple of 128 (e.g. 197 -> 256 for ViT)
    # so the (N, N) score block and all reductions are lane-aligned.
    n_pad = ((N + 127) // 128) * 128

    x_bf16, wqkv_t, wproj_t, bproj2d = _prepare_operands(
        x, w_qkv, w_proj, b_proj, num_heads=num_heads)
    if n_pad != N:
        x_bf16 = jnp.pad(x_bf16, ((0, 0), (0, n_pad - N), (0, 0)))

    kernel = functools.partial(
        _attention_kernel, num_heads=num_heads, head_dim=head_dim,
        seq_len=N, approx_recip=approx_recip)

    def build(single_buffer_weights):
        return pl.pallas_call(
            kernel,
            out_shape=jax.ShapeDtypeStruct((B, n_pad, D), jnp.float32),
            grid_spec=pltpu.PrefetchScalarGridSpec(
                num_scalar_prefetch=0,
                grid=(B,),
                in_specs=[
                    pl.BlockSpec((1, n_pad, D), lambda b: (b, 0, 0)),   # x
                    _const_spec((D, 3 * D), lambda b: (0, 0),
                                single_buffer_weights),                 # W_qkv^T
                    _const_spec((D, D), lambda b: (0, 0),
                                single_buffer_weights),                 # W_proj^T
                    _const_spec((1, D), lambda b: (0, 0),
                                single_buffer_weights),                 # b_proj
                ],
                out_specs=pl.BlockSpec((1, n_pad, D), lambda b: (b, 0, 0)),
                scratch_shapes=[
                    pltpu.VMEM((n_pad, 3 * D), jnp.bfloat16),  # staged qkv
                    pltpu.VMEM((n_pad, D), jnp.bfloat16),      # per-head ctx
                ]),
            compiler_params=pltpu.CompilerParams(
                dimension_semantics=("parallel",),
                vmem_limit_bytes=32 * 1024 * 1024),
            cost_estimate=_cost_estimate(B, n_pad, D, num_heads, head_dim),
        )

    try:
        out_padded = build(True)(x_bf16, wqkv_t, wproj_t, bproj2d)
    except Exception:
        # Fallback if single-buffered weight specs are rejected by this JAX.
        out_padded = build(False)(x_bf16, wqkv_t, wproj_t, bproj2d)

    return out_padded[:, :N, :] if n_pad != N else out_padded


def attention_reference_bf16(x, w_qkv, w_proj, b_proj, *, num_heads):
    """Pure-JAX reference using the same bf16-operand / f32-accumulation recipe
    as the kernel (tight-tolerance structural check)."""
    B, N, D = x.shape
    h, d = num_heads, D // num_heads
    xb, wqkv_t, wproj_t, b2 = _prepare_operands(
        x, w_qkv, w_proj, b_proj, num_heads=num_heads)
    qkv = jnp.einsum('bnd,do->bno', xb, wqkv_t,
                     preferred_element_type=jnp.float32)            # (B, N, 3D) f32
    q = qkv[..., 0 * D:1 * D].reshape(B, N, h, d).transpose(0, 2, 1, 3)
    k = qkv[..., 1 * D:2 * D].reshape(B, N, h, d).transpose(0, 2, 1, 3)
    v = qkv[..., 2 * D:3 * D].reshape(B, N, h, d).transpose(0, 2, 1, 3)
    s = jnp.einsum('bhid,bhjd->bhij',
                   q.astype(jnp.bfloat16), k.astype(jnp.bfloat16),
                   preferred_element_type=jnp.float32)
    m = jnp.max(s, axis=-1, keepdims=True)
    e = jnp.exp(s - m)
    denom = jnp.sum(e, axis=-1, keepdims=True)
    o = jnp.einsum('bhij,bhjd->bhid',
                   e.astype(jnp.bfloat16), v.astype(jnp.bfloat16),
                   preferred_element_type=jnp.float32) / denom
    o = o.transpose(0, 2, 1, 3).reshape(B, N, D)
    return jnp.einsum('bnd,do->bno', o.astype(jnp.bfloat16), wproj_t,
                      preferred_element_type=jnp.float32) + b2


def attention_reference_f32(x, w_qkv, w_proj, b_proj, *, num_heads):
    """Pure-f32 reference mirroring the PyTorch forward exactly."""
    B, N, D = x.shape
    h, d = num_heads, D // num_heads
    scale = d ** (-0.5)
    qkv = jnp.einsum('bnd,od->bno', x, w_qkv)                       # no bias
    qkv = qkv.reshape(B, N, 3, h, d).transpose(2, 0, 3, 1, 4)       # (3, B, h, N, d)
    q, k, v = qkv[0], qkv[1], qkv[2]
    dots = jnp.einsum('bhid,bhjd->bhij', q, k) * scale
    attn = jax.nn.softmax(dots, axis=-1)
    out = jnp.einsum('bhij,bhjd->bhid', attn, v)
    out = out.transpose(0, 2, 1, 3).reshape(B, N, D)
    return jnp.einsum('bnd,od->bno', out, w_proj) + b_proj


if __name__ == "__main__":
    # Small shapes consistent with the module: dim divisible by num_heads.
    # N=64 deliberately exercises the pad-to-128 + key-mask path.
    B, N, D, H = 2, 64, 128, 8          # head_dim = 16

    key = jax.random.PRNGKey(0)
    k_x, k_wqkv, k_wproj, k_bproj = jax.random.split(key, 4)

    x = jax.random.normal(k_x, (B, N, D), dtype=jnp.float32)
    # Deterministic synthetic parameters (no checkpoint load).
    w_qkv = 0.05 * jax.random.normal(k_wqkv, (3 * D, D), dtype=jnp.float32)
    w_proj = 0.05 * jax.random.normal(k_wproj, (D, D), dtype=jnp.float32)
    b_proj = 0.01 * jax.random.normal(k_bproj, (D,), dtype=jnp.float32)

    out = attention_forward(x, w_qkv, w_proj, b_proj, num_heads=H)
    out = jax.block_until_ready(out)
    assert out.shape == (B, N, D)

    ref_m = attention_reference_bf16(x, w_qkv, w_proj, b_proj, num_heads=H)
    ref_f = attention_reference_f32(x, w_qkv, w_proj, b_proj, num_heads=H)
    err_m = float(jnp.max(jnp.abs(out - ref_m)))
    err_f = float(jnp.max(jnp.abs(out - ref_f)))

    # Tight check vs a reference that uses the same bf16-matmul recipe.
    assert jnp.allclose(out, ref_m, atol=5e-3, rtol=5e-3), (
        f"mismatch vs bf16-matched reference: max abs err = {err_m}")
    # Looser check vs the pure-f32 PyTorch-semantics reference (bf16 operands
    # bound the achievable accuracy here).
    assert jnp.allclose(out, ref_f, atol=2e-2, rtol=2e-2), (
        f"mismatch vs f32 reference: max abs err = {err_f}")

    print("KERNEL_OK")
</pallas_src>

<mosaic_0001>
module attributes {stable_mosaic.version = 11 : i64} {
  func.func @_attention_kernel(%arg0: i32, %arg1: memref<1x128x128xbf16, #tpu.memory_space<vmem>>, %arg2: memref<128x384xbf16, #tpu.memory_space<vmem>>, %arg3: memref<128x128xbf16, #tpu.memory_space<vmem>>, %arg4: memref<1x128xf32, #tpu.memory_space<vmem>>, %arg5: memref<1x128x128xf32, #tpu.memory_space<vmem>>, %arg6: memref<128x384xbf16, #tpu.memory_space<vmem>>, %arg7: memref<128x128xbf16, #tpu.memory_space<vmem>>) attributes {dimension_semantics = [#tpu.dimension_semantics<parallel>], iteration_bounds = array<i64: 2>, scalar_prefetch = 0 : i64, scratch_operands = 2 : i64, tpu.core_type = #tpu.core_type<tc>, window_params = [{transform_indices = @transform_0, window_bounds = array<i64: 1, 128, 128>}, {pipeline_mode = #tpu.pipeline_mode<synchronous>, transform_indices = @transform_1, window_bounds = array<i64: 128, 384>}, {pipeline_mode = #tpu.pipeline_mode<synchronous>, transform_indices = @transform_2, window_bounds = array<i64: 128, 128>}, {pipeline_mode = #tpu.pipeline_mode<synchronous>, transform_indices = @transform_3, window_bounds = array<i64: 1, 128>}, {transform_indices = @transform_4, window_bounds = array<i64: 1, 128, 128>}]} {
    %c0 = arith.constant 0 : index
    %c0_0 = arith.constant 0 : index
    %c0_1 = arith.constant 0 : index
    %0 = vector.load %arg1[%c0, %c0_0, %c0_1] : memref<1x128x128xbf16, #tpu.memory_space<vmem>>, vector<1x128x128xbf16>
    %1 = vector.shape_cast %0 : vector<1x128x128xbf16> to vector<128x128xbf16>
    %c0_2 = arith.constant 0 : index
    %c0_3 = arith.constant 0 : index
    %2 = vector.load %arg2[%c0_2, %c0_3] : memref<128x384xbf16, #tpu.memory_space<vmem>>, vector<128x384xbf16>
    %cst = arith.constant dense<0.000000e+00> : vector<128x384xf32>
    %3 = tpu.matmul %1, %2, %cst {dimension_numbers = #tpu.dot_dimension_numbers<[1], [0], [0], [1], [0, 0, 1, 1], [], []>} : vector<128x128xbf16>, vector<128x384xbf16>, vector<128x384xf32> -> vector<128x384xf32>
    %4 = arith.truncf %3 : vector<128x384xf32> to vector<128x384xbf16>
    %c0_4 = arith.constant 0 : index
    %c0_5 = arith.constant 0 : index
    %5 = vector.load %arg6[%c0_4, %c0_5] : memref<128x384xbf16, #tpu.memory_space<vmem>>, vector<128x384xbf16>
    tpu.vector_store %arg6[%c0_4, %c0_5], %4 {strides = array<i32>} : memref<128x384xbf16, #tpu.memory_space<vmem>>, vector<128x384xbf16>,
    %6 = tpu.iota {dimensions = array<i32: 1>} : vector<1x128xi32>
    %c64_i32 = arith.constant 64 : i32
    %7 = vector.broadcast %c64_i32 : i32 to vector<1x128xi32>
    %8 = arith.cmpi slt, %6, %7 : vector<1x128xi32>
    %cst_6 = arith.constant 0.000000e+00 : f32
    %cst_7 = arith.constant -1.000000e+30 : f32
    %9 = vector.broadcast %cst_6 : f32 to vector<1x128xf32>
    %10 = vector.broadcast %cst_7 : f32 to vector<1x128xf32>
    %11 = arith.select %8, %9, %10 : vector<1x128xi1>, vector<1x128xf32>
    %c0_8 = arith.constant 0 : index
    %c0_9 = arith.constant 0 : index
    %12 = vector.load %arg6[%c0_8, %c0_9] : memref<128x384xbf16, #tpu.memory_space<vmem>>, vector<128x128xbf16>
    %c0_10 = arith.constant 0 : index
    %c128 = arith.constant 128 : index
    %13 = vector.load %arg6[%c0_10, %c128] : memref<128x384xbf16, #tpu.memory_space<vmem>>, vector<128x128xbf16>
    %c0_11 = arith.constant 0 : index
    %c256 = arith.constant 256 : index
    %14 = vector.load %arg6[%c0_11, %c256] : memref<128x384xbf16, #tpu.memory_space<vmem>>, vector<128x128xbf16>
    %15 = vector.extract_strided_slice %12 {offsets = [0, 0], sizes = [128, 16], strides = [1, 1]} : vector<128x128xbf16> to vector<128x16xbf16>
    %16 = vector.extract_strided_slice %13 {offsets = [0, 0], sizes = [128, 16], strides = [1, 1]} : vector<128x128xbf16> to vector<128x16xbf16>
    %17 = vector.extract_strided_slice %14 {offsets = [0, 0], sizes = [128, 16], strides = [1, 1]} : vector<128x128xbf16> to vector<128x16xbf16>
    %cst_12 = arith.constant dense<0.000000e+00> : vector<128x128xf32>
    %18 = tpu.matmul %15, %16, %cst_12 {dimension_numbers = #tpu.dot_dimension_numbers<[1], [1], [0], [0], [0, 0, 1, 0], [], []>} : vector<128x16xbf16>, vector<128x16xbf16>, vector<128x128xf32> -> vector<128x128xf32>
    %19 = vector.broadcast %11 : vector<1x128xf32> to vector<128x128xf32>
    %20 = arith.addf %18, %19 : vector<128x128xf32>
    %cst_13 = arith.constant dense<0xFF800000> : vector<128xf32>
    %21 = vector.multi_reduction <maximumf>, %20, %cst_13 [1] : vector<128x128xf32> to vector<128xf32>
    %22 = vector.shape_cast %21 : vector<128xf32> to vector<128x1xf32>
    %23 = vector.broadcast %22 : vector<128x1xf32> to vector<128x128xf32>
    %24 = arith.subf %20, %23 : vector<128x128xf32>
    %25 = math.exp %24 : vector<128x128xf32>
    %cst_14 = arith.constant dense<0.000000e+00> : vector<128xf32>
    %26 = vector.multi_reduction <add>, %25, %cst_14 [1] : vector<128x128xf32> to vector<128xf32>
    %27 = vector.shape_cast %26 : vector<128xf32> to vector<128x1xf32>
    %28 = arith.truncf %25 : vector<128x128xf32> to vector<128x128xbf16>
    %cst_15 = arith.constant dense<0.000000e+00> : vector<128x16xf32>
    %29 = tpu.matmul %28, %17, %cst_15 {dimension_numbers = #tpu.dot_dimension_numbers<[1], [0], [0], [1], [0, 0, 1, 1], [], []>} : vector<128x128xbf16>, vector<128x16xbf16>, vector<128x16xf32> -> vector<128x16xf32>
    %30 = tpu.reciprocal %27 {approx = true} : vector<128x1xf32> -> vector<128x1xf32>
    %31 = vector.broadcast %30 : vector<128x1xf32> to vector<128x16xf32>
    %32 = arith.mulf %29, %31 : vector<128x16xf32>
    %33 = vector.extract_strided_slice %12 {offsets = [0, 16], sizes = [128, 16], strides = [1, 1]} : vector<128x128xbf16> to vector<128x16xbf16>
    %34 = vector.extract_strided_slice %13 {offsets = [0, 16], sizes = [128, 16], strides = [1, 1]} : vector<128x128xbf16> to vector<128x16xbf16>
    %35 = vector.extract_strided_slice %14 {offsets = [0, 16], sizes = [128, 16], strides = [1, 1]} : vector<128x128xbf16> to vector<128x16xbf16>
    %cst_16 = arith.constant dense<0.000000e+00> : vector<128x128xf32>
    %36 = tpu.matmul %33, %34, %cst_16 {dimension_numbers = #tpu.dot_dimension_numbers<[1], [1], [0], [0], [0, 0, 1, 0], [], []>} : vector<128x16xbf16>, vector<128x16xbf16>, vector<128x128xf32> -> vector<128x128xf32>
    %37 = vector.broadcast %11 : vector<1x128xf32> to vector<128x128xf32>
    %38 = arith.addf %36, %37 : vector<128x128xf32>
    %cst_17 = arith.constant dense<0xFF800000> : vector<128xf32>
    %39 = vector.multi_reduction <maximumf>, %38, %cst_17 [1] : vector<128x128xf32> to vector<128xf32>
    %40 = vector.shape_cast %39 : vector<128xf32> to vector<128x1xf32>
    %41 = vector.broadcast %40 : vector<128x1xf32> to vector<128x128xf32>
    %42 = arith.subf %38, %41 : vector<128x128xf32>
    %43 = math.exp %42 : vector<128x128xf32>
    %cst_18 = arith.constant dense<0.000000e+00> : vector<128xf32>
    %44 = vector.multi_reduction <add>, %43, %cst_18 [1] : vector<128x128xf32> to vector<128xf32>
    %45 = vector.shape_cast %44 : vector<128xf32> to vector<128x1xf32>
    %46 = arith.truncf %43 : vector<128x128xf32> to vector<128x128xbf16>
    %cst_19 = arith.constant dense<0.000000e+00> : vector<128x16xf32>
    %47 = tpu.matmul %46, %35, %cst_19 {dimension_numbers = #tpu.dot_dimension_numbers<[1], [0], [0], [1], [0, 0, 1, 1], [], []>} : vector<128x128xbf16>, vector<128x16xbf16>, vector<128x16xf32> -> vector<128x16xf32>
    %48 = tpu.reciprocal %45 {approx = true} : vector<128x1xf32> -> vector<128x1xf32>
    %49 = vector.broadcast %48 : vector<128x1xf32> to vector<128x16xf32>
    %50 = arith.mulf %47, %49 : vector<128x16xf32>
    %51 = vector.extract_strided_slice %12 {offsets = [0, 32], sizes = [128, 16], strides = [1, 1]} : vector<128x128xbf16> to vector<128x16xbf16>
    %52 = vector.extract_strided_slice %13 {offsets = [0, 32], sizes = [128, 16], strides = [1, 1]} : vector<128x128xbf16> to vector<128x16xbf16>
    %53 = vector.extract_strided_slice %14 {offsets = [0, 32], sizes = [128, 16], strides = [1, 1]} : vector<128x128xbf16> to vector<128x16xbf16>
    %cst_20 = arith.constant dense<0.000000e+00> : vector<128x128xf32>
    %54 = tpu.matmul %51, %52, %cst_20 {dimension_numbers = #tpu.dot_dimension_numbers<[1], [1], [0], [0], [0, 0, 1, 0], [], []>} : vector<128x16xbf16>, vector<128x16xbf16>, vector<128x128xf32> -> vector<128x128xf32>
    %55 = vector.broadcast %11 : vector<1x128xf32> to vector<128x128xf32>
    %56 = arith.addf %54, %55 : vector<128x128xf32>
    %cst_21 = arith.constant dense<0xFF800000> : vector<128xf32>
    %57 = vector.multi_reduction <maximumf>, %56, %cst_21 [1] : vector<128x128xf32> to vector<128xf32>
    %58 = vector.shape_cast %57 : vector<128xf32> to vector<128x1xf32>
    %59 = vector.broadcast %58 : vector<128x1xf32> to vector<128x128xf32>
    %60 = arith.subf %56, %59 : vector<128x128xf32>
    %61 = math.exp %60 : vector<128x128xf32>
    %cst_22 = arith.constant dense<0.000000e+00> : vector<128xf32>
    %62 = vector.multi_reduction <add>, %61, %cst_22 [1] : vector<128x128xf32> to vector<128xf32>
    %63 = vector.shape_cast %62 : vector<128xf32> to vector<128x1xf32>
    %64 = arith.truncf %61 : vector<128x128xf32> to vector<128x128xbf16>
    %cst_23 = arith.constant dense<0.000000e+00> : vector<128x16xf32>
    %65 = tpu.matmul %64, %53, %cst_23 {dimension_numbers = #tpu.dot_dimension_numbers<[1], [0], [0], [1], [0, 0, 1, 1], [], []>} : vector<128x128xbf16>, vector<128x16xbf16>, vector<128x16xf32> -> vector<128x16xf32>
    %66 = tpu.reciprocal %63 {approx = true} : vector<128x1xf32> -> vector<128x1xf32>
    %67 = vector.broadcast %66 : vector<128x1xf32> to vector<128x16xf32>
    %68 = arith.mulf %65, %67 : vector<128x16xf32>
    %69 = vector.extract_strided_slice %12 {offsets = [0, 48], sizes = [128, 16], strides = [1, 1]} : vector<128x128xbf16> to vector<128x16xbf16>
    %70 = vector.extract_strided_slice %13 {offsets = [0, 48], sizes = [128, 16], strides = [1, 1]} : vector<128x128xbf16> to vector<128x16xbf16>
    %71 = vector.extract_strided_slice %14 {offsets = [0, 48], sizes = [128, 16], strides = [1, 1]} : vector<128x128xbf16> to vector<128x16xbf16>
    %cst_24 = arith.constant dense<0.000000e+00> : vector<128x128xf32>
    %72 = tpu.matmul %69, %70, %cst_24 {dimension_numbers = #tpu.dot_dimension_numbers<[1], [1], [0], [0], [0, 0, 1, 0], [], []>} : vector<128x16xbf16>, vector<128x16xbf16>, vector<128x128xf32> -> vector<128x128xf32>
    %73 = vector.broadcast %11 : vector<1x128xf32> to vector<128x128xf32>
    %74 = arith.addf %72, %73 : vector<128x128xf32>
    %cst_25 = arith.constant dense<0xFF800000> : vector<128xf32>
    %75 = vector.multi_reduction <maximumf>, %74, %cst_25 [1] : vector<128x128xf32> to vector<128xf32>
    %76 = vector.shape_cast %75 : vector<128xf32> to vector<128x1xf32>
    %77 = vector.broadcast %76 : vector<128x1xf32> to vector<128x128xf32>
    %78 = arith.subf %74, %77 : vector<128x128xf32>
    %79 = math.exp %78 : vector<128x128xf32>
    %cst_26 = arith.constant dense<0.000000e+00> : vector<128xf32>
    %80 = vector.multi_reduction <add>, %79, %cst_26 [1] : vector<128x128xf32> to vector<128xf32>
    %81 = vector.shape_cast %80 : vector<128xf32> to vector<128x1xf32>
    %82 = arith.truncf %79 : vector<128x128xf32> to vector<128x128xbf16>
    %cst_27 = arith.constant dense<0.000000e+00> : vector<128x16xf32>
    %83 = tpu.matmul %82, %71, %cst_27 {dimension_numbers = #tpu.dot_dimension_numbers<[1], [0], [0], [1], [0, 0, 1, 1], [], []>} : vector<128x128xbf16>, vector<128x16xbf16>, vector<128x16xf32> -> vector<128x16xf32>
    %84 = tpu.reciprocal %81 {approx = true} : vector<128x1xf32> -> vector<128x1xf32>
    %85 = vector.broadcast %84 : vector<128x1xf32> to vector<128x16xf32>
    %86 = arith.mulf %83, %85 : vector<128x16xf32>
    %87 = vector.extract_strided_slice %12 {offsets = [0, 64], sizes = [128, 16], strides = [1, 1]} : vector<128x128xbf16> to vector<128x16xbf16>
    %88 = vector.extract_strided_slice %13 {offsets = [0, 64], sizes = [128, 16], strides = [1, 1]} : vector<128x128xbf16> to vector<128x16xbf16>
    %89 = vector.extract_strided_slice %14 {offsets = [0, 64], sizes = [128, 16], strides = [1, 1]} : vector<128x128xbf16> to vector<128x16xbf16>
    %cst_28 = arith.constant dense<0.000000e+00> : vector<128x128xf32>
    %90 = tpu.matmul %87, %88, %cst_28 {dimension_numbers = #tpu.dot_dimension_numbers<[1], [1], [0], [0], [0, 0, 1, 0], [], []>} : vector<128x16xbf16>, vector<128x16xbf16>, vector<128x128xf32> -> vector<128x128xf32>
    %91 = vector.broadcast %11 : vector<1x128xf32> to vector<128x128xf32>
    %92 = arith.addf %90, %91 : vector<128x128xf32>
    %cst_29 = arith.constant dense<0xFF800000> : vector<128xf32>
    %93 = vector.multi_reduction <maximumf>, %92, %cst_29 [1] : vector<128x128xf32> to vector<128xf32>
    %94 = vector.shape_cast %93 : vector<128xf32> to vector<128x1xf32>
    %95 = vector.broadcast %94 : vector<128x1xf32> to vector<128x128xf32>
    %96 = arith.subf %92, %95 : vector<128x128xf32>
    %97 = math.exp %96 : vector<128x128xf32>
    %cst_30 = arith.constant dense<0.000000e+00> : vector<128xf32>
    %98 = vector.multi_reduction <add>, %97, %cst_30 [1] : vector<128x128xf32> to vector<128xf32>
    %99 = vector.shape_cast %98 : vector<128xf32> to vector<128x1xf32>
    %100 = arith.truncf %97 : vector<128x128xf32> to vector<128x128xbf16>
    %cst_31 = arith.constant dense<0.000000e+00> : vector<128x16xf32>
    %101 = tpu.matmul %100, %89, %cst_31 {dimension_numbers = #tpu.dot_dimension_numbers<[1], [0], [0], [1], [0, 0, 1, 1], [], []>} : vector<128x128xbf16>, vector<128x16xbf16>, vector<128x16xf32> -> vector<128x16xf32>
    %102 = tpu.reciprocal %99 {approx = true} : vector<128x1xf32> -> vector<128x1xf32>
    %103 = vector.broadcast %102 : vector<128x1xf32> to vector<128x16xf32>
    %104 = arith.mulf %101, %103 : vector<128x16xf32>
    %105 = vector.extract_strided_slice %12 {offsets = [0, 80], sizes = [128, 16], strides = [1, 1]} : vector<128x128xbf16> to vector<128x16xbf16>
    %106 = vector.extract_strided_slice %13 {offsets = [0, 80], sizes = [128, 16], strides = [1, 1]} : vector<128x128xbf16> to vector<128x16xbf16>
    %107 = vector.extract_strided_slice %14 {offsets = [0, 80], sizes = [128, 16], strides = [1, 1]} : vector<128x128xbf16> to vector<128x16xbf16>
    %cst_32 = arith.constant dense<0.000000e+00> : vector<128x128xf32>
    %108 = tpu.matmul %105, %106, %cst_32 {dimension_numbers = #tpu.dot_dimension_numbers<[1], [1], [0], [0], [0, 0, 1, 0], [], []>} : vector<128x16xbf16>, vector<128x16xbf16>, vector<128x128xf32> -> vector<128x128xf32>
    %109 = vector.broadcast %11 : vector<1x128xf32> to vector<128x128xf32>
    %110 = arith.addf %108, %109 : vector<128x128xf32>
    %cst_33 = arith.constant dense<0xFF800000> : vector<128xf32>
    %111 = vector.multi_reduction <maximumf>, %110, %cst_33 [1] : vector<128x128xf32> to vector<128xf32>
    %112 = vector.shape_cast %111 : vector<128xf32> to vector<128x1xf32>
    %113 = vector.broadcast %112 : vector<128x1xf32> to vector<128x128xf32>
    %114 = arith.subf %110, %113 : vector<128x128xf32>
    %115 = math.exp %114 : vector<128x128xf32>
    %cst_34 = arith.constant dense<0.000000e+00> : vector<128xf32>
    %116 = vector.multi_reduction <add>, %115, %cst_34 [1] : vector<128x128xf32> to vector<128xf32>
    %117 = vector.shape_cast %116 : vector<128xf32> to vector<128x1xf32>
    %118 = arith.truncf %115 : vector<128x128xf32> to vector<128x128xbf16>
    %cst_35 = arith.constant dense<0.000000e+00> : vector<128x16xf32>
    %119 = tpu.matmul %118, %107, %cst_35 {dimension_numbers = #tpu.dot_dimension_numbers<[1], [0], [0], [1], [0, 0, 1, 1], [], []>} : vector<128x128xbf16>, vector<128x16xbf16>, vector<128x16xf32> -> vector<128x16xf32>
    %120 = tpu.reciprocal %117 {approx = true} : vector<128x1xf32> -> vector<128x1xf32>
    %121 = vector.broadcast %120 : vector<128x1xf32> to vector<128x16xf32>
    %122 = arith.mulf %119, %121 : vector<128x16xf32>
    %123 = vector.extract_strided_slice %12 {offsets = [0, 96], sizes = [128, 16], strides = [1, 1]} : vector<128x128xbf16> to vector<128x16xbf16>
    %124 = vector.extract_strided_slice %13 {offsets = [0, 96], sizes = [128, 16], strides = [1, 1]} : vector<128x128xbf16> to vector<128x16xbf16>
    %125 = vector.extract_strided_slice %14 {offsets = [0, 96], sizes = [128, 16], strides = [1, 1]} : vector<128x128xbf16> to vector<128x16xbf16>
    %cst_36 = arith.constant dense<0.000000e+00> : vector<128x128xf32>
    %126 = tpu.matmul %123, %124, %cst_36 {dimension_numbers = #tpu.dot_dimension_numbers<[1], [1], [0], [0], [0, 0, 1, 0], [], []>} : vector<128x16xbf16>, vector<128x16xbf16>, vector<128x128xf32> -> vector<128x128xf32>
    %127 = vector.broadcast %11 : vector<1x128xf32> to vector<128x128xf32>
    %128 = arith.addf %126, %127 : vector<128x128xf32>
    %cst_37 = arith.constant dense<0xFF800000> : vector<128xf32>
    %129 = vector.multi_reduction <maximumf>, %128, %cst_37 [1] : vector<128x128xf32> to vector<128xf32>
    %130 = vector.shape_cast %129 : vector<128xf32> to vector<128x1xf32>
    %131 = vector.broadcast %130 : vector<128x1xf32> to vector<128x128xf32>
    %132 = arith.subf %128, %131 : vector<128x128xf32>
    %133 = math.exp %132 : vector<128x128xf32>
    %cst_38 = arith.constant dense<0.000000e+00> : vector<128xf32>
    %134 = vector.multi_reduction <add>, %133, %cst_38 [1] : vector<128x128xf32> to vector<128xf32>
    %135 = vector.shape_cast %134 : vector<128xf32> to vector<128x1xf32>
    %136 = arith.truncf %133 : vector<128x128xf32> to vector<128x128xbf16>
    %cst_39 = arith.constant dense<0.000000e+00> : vector<128x16xf32>
    %137 = tpu.matmul %136, %125, %cst_39 {dimension_numbers = #tpu.dot_dimension_numbers<[1], [0], [0], [1], [0, 0, 1, 1], [], []>} : vector<128x128xbf16>, vector<128x16xbf16>, vector<128x16xf32> -> vector<128x16xf32>
    %138 = tpu.reciprocal %135 {approx = true} : vector<128x1xf32> -> vector<128x1xf32>
    %139 = vector.broadcast %138 : vector<128x1xf32> to vector<128x16xf32>
    %140 = arith.mulf %137, %139 : vector<128x16xf32>
    %141 = vector.extract_strided_slice %12 {offsets = [0, 112], sizes = [128, 16], strides = [1, 1]} : vector<128x128xbf16> to vector<128x16xbf16>
    %142 = vector.extract_strided_slice %13 {offsets = [0, 112], sizes = [128, 16], strides = [1, 1]} : vector<128x128xbf16> to vector<128x16xbf16>
    %143 = vector.extract_strided_slice %14 {offsets = [0, 112], sizes = [128, 16], strides = [1, 1]} : vector<128x128xbf16> to vector<128x16xbf16>
    %cst_40 = arith.constant dense<0.000000e+00> : vector<128x128xf32>
    %144 = tpu.matmul %141, %142, %cst_40 {dimension_numbers = #tpu.dot_dimension_numbers<[1], [1], [0], [0], [0, 0, 1, 0], [], []>} : vector<128x16xbf16>, vector<128x16xbf16>, vector<128x128xf32> -> vector<128x128xf32>
    %145 = vector.broadcast %11 : vector<1x128xf32> to vector<128x128xf32>
    %146 = arith.addf %144, %145 : vector<128x128xf32>
    %cst_41 = arith.constant dense<0xFF800000> : vector<128xf32>
    %147 = vector.multi_reduction <maximumf>, %146, %cst_41 [1] : vector<128x128xf32> to vector<128xf32>
    %148 = vector.shape_cast %147 : vector<128xf32> to vector<128x1xf32>
    %149 = vector.broadcast %148 : vector<128x1xf32> to vector<128x128xf32>
    %150 = arith.subf %146, %149 : vector<128x128xf32>
    %151 = math.exp %150 : vector<128x128xf32>
    %cst_42 = arith.constant dense<0.000000e+00> : vector<128xf32>
    %152 = vector.multi_reduction <add>, %151, %cst_42 [1] : vector<128x128xf32> to vector<128xf32>
    %153 = vector.shape_cast %152 : vector<128xf32> to vector<128x1xf32>
    %154 = arith.truncf %151 : vector<128x128xf32> to vector<128x128xbf16>
    %cst_43 = arith.constant dense<0.000000e+00> : vector<128x16xf32>
    %155 = tpu.matmul %154, %143, %cst_43 {dimension_numbers = #tpu.dot_dimension_numbers<[1], [0], [0], [1], [0, 0, 1, 1], [], []>} : vector<128x128xbf16>, vector<128x16xbf16>, vector<128x16xf32> -> vector<128x16xf32>
    %156 = tpu.reciprocal %153 {approx = true} : vector<128x1xf32> -> vector<128x1xf32>
    %157 = vector.broadcast %156 : vector<128x1xf32> to vector<128x16xf32>
    %158 = arith.mulf %155, %157 : vector<128x16xf32>
    %159 = tpu.concatenate %32, %50, %68, %86, %104, %122, %140, %158 in 1 : vector<128x16xf32>, vector<128x16xf32>, vector<128x16xf32>, vector<128x16xf32>, vector<128x16xf32>, vector<128x16xf32>, vector<128x16xf32>, vector<128x16xf32> -> vector<128x128xf32>
    %160 = arith.truncf %159 : vector<128x128xf32> to vector<128x128xbf16>
    %c0_44 = arith.constant 0 : index
    %c0_45 = arith.constant 0 : index
    %161 = vector.load %arg7[%c0_44, %c0_45] : memref<128x128xbf16, #tpu.memory_space<vmem>>, vector<128x128xbf16>
    tpu.vector_store %arg7[%c0_44, %c0_45], %160 {strides = array<i32>} : memref<128x128xbf16, #tpu.memory_space<vmem>>, vector<128x128xbf16>,
    %c0_46 = arith.constant 0 : index
    %c0_47 = arith.constant 0 : index
    %162 = vector.load %arg7[%c0_46, %c0_47] : memref<128x128xbf16, #tpu.memory_space<vmem>>, vector<128x128xbf16>
    %c0_48 = arith.constant 0 : index
    %c0_49 = arith.constant 0 : index
    %163 = vector.load %arg3[%c0_48, %c0_49] : memref<128x128xbf16, #tpu.memory_space<vmem>>, vector<128x128xbf16>
    %cst_50 = arith.constant dense<0.000000e+00> : vector<128x128xf32>
    %164 = tpu.matmul %162, %163, %cst_50 {dimension_numbers = #tpu.dot_dimension_numbers<[1], [0], [0], [1], [0, 0, 1, 1], [], []>} : vector<128x128xbf16>, vector<128x128xbf16>, vector<128x128xf32> -> vector<128x128xf32>
    %c0_51 = arith.constant 0 : index
    %c0_52 = arith.constant 0 : index
    %165 = vector.load %arg4[%c0_51, %c0_52] : memref<1x128xf32, #tpu.memory_space<vmem>>, vector<1x128xf32>
    %166 = vector.broadcast %165 : vector<1x128xf32> to vector<128x128xf32>
    %167 = arith.addf %164, %166 : vector<128x128xf32>
    %c0_53 = arith.constant 0 : index
    %c0_54 = arith.constant 0 : index
    %c0_55 = arith.constant 0 : index
    %168 = vector.load %arg5[%c0_53, %c0_54, %c0_55] : memref<1x128x128xf32, #tpu.memory_space<vmem>>, vector<1x128x128xf32>
    %169 = vector.shape_cast %168 : vector<1x128x128xf32> to vector<128x128xf32>
    %170 = vector.shape_cast %167 : vector<128x128xf32> to vector<1x128x128xf32>
    tpu.vector_store %arg5[%c0_53, %c0_54, %c0_55], %170 {strides = array<i32>} : memref<1x128x128xf32, #tpu.memory_space<vmem>>, vector<1x128x128xf32>,
    return
  }
  func.func @transform_0(%arg0: i32) -> (i32, i32, i32) {
    %c0_i32 = arith.constant 0 : i32
    %c0_i32_0 = arith.constant 0 : i32
    %c0_i32_1 = arith.constant 0 : i32
    return %arg0, %c0_i32, %c0_i32_0 : i32, i32, i32
  }
  func.func @transform_1(%arg0: i32) -> (i32, i32) {
    %c0_i32 = arith.constant 0 : i32
    %c0_i32_0 = arith.constant 0 : i32
    %c0_i32_1 = arith.constant 0 : i32
    return %c0_i32, %c0_i32_0 : i32, i32
  }
  func.func @transform_2(%arg0: i32) -> (i32, i32) {
    %c0_i32 = arith.constant 0 : i32
    %c0_i32_0 = arith.constant 0 : i32
    %c0_i32_1 = arith.constant 0 : i32
    return %c0_i32, %c0_i32_0 : i32, i32
  }
  func.func @transform_3(%arg0: i32) -> (i32, i32) {
    %c0_i32 = arith.constant 0 : i32
    %c0_i32_0 = arith.constant 0 : i32
    %c0_i32_1 = arith.constant 0 : i32
    return %c0_i32, %c0_i32_0 : i32, i32
  }
  func.func @transform_4(%arg0: i32) -> (i32, i32, i32) {
    %c0_i32 = arith.constant 0 : i32
    %c0_i32_0 = arith.constant 0 : i32
    %c0_i32_1 = arith.constant 0 : i32
    return %arg0, %c0_i32, %c0_i32_0 : i32, i32, i32
  }
}

module attributes {stable_mosaic.version = 11 : i64} {
  func.func @_attention_kernel(%arg0: i32, %arg1: memref<1x128x128xbf16, #tpu.memory_space<vmem>>, %arg2: memref<128x384xbf16, #tpu.memory_space<vmem>>, %arg3: memref<128x128xbf16, #tpu.memory_space<vmem>>, %arg4: memref<1x128xf32, #tpu.memory_space<vmem>>, %arg5: memref<1x128x128xf32, #tpu.memory_space<vmem>>, %arg6: memref<128x384xbf16, #tpu.memory_space<vmem>>, %arg7: memref<128x128xbf16, #tpu.memory_space<vmem>>) attributes {dimension_semantics = [#tpu.dimension_semantics<parallel>], iteration_bounds = array<i64: 2>, scalar_prefetch = 0 : i64, scratch_operands = 2 : i64, tpu.core_type = #tpu.core_type<tc>, window_params = [{transform_indices = @transform_0, window_bounds = array<i64: 1, 128, 128>}, {pipeline_mode = #tpu.pipeline_mode<synchronous>, transform_indices = @transform_1, window_bounds = array<i64: 128, 384>}, {pipeline_mode = #tpu.pipeline_mode<synchronous>, transform_indices = @transform_2, window_bounds = array<i64: 128, 128>}, {pipeline_mode = #tpu.pipeline_mode<synchronous>, transform_indices = @transform_3, window_bounds = array<i64: 1, 128>}, {transform_indices = @transform_4, window_bounds = array<i64: 1, 128, 128>}]} {
    %c0 = arith.constant 0 : index
    %c0_0 = arith.constant 0 : index
    %c0_1 = arith.constant 0 : index
    %0 = vector.load %arg1[%c0, %c0_0, %c0_1] : memref<1x128x128xbf16, #tpu.memory_space<vmem>>, vector<1x128x128xbf16>
    %1 = vector.shape_cast %0 : vector<1x128x128xbf16> to vector<128x128xbf16>
    %c0_2 = arith.constant 0 : index
    %c0_3 = arith.constant 0 : index
    %2 = vector.load %arg2[%c0_2, %c0_3] : memref<128x384xbf16, #tpu.memory_space<vmem>>, vector<128x384xbf16>
    %cst = arith.constant dense<0.000000e+00> : vector<128x384xf32>
    %3 = tpu.matmul %1, %2, %cst {dimension_numbers = #tpu.dot_dimension_numbers<[1], [0], [0], [1], [0, 0, 1, 1], [], []>} : vector<128x128xbf16>, vector<128x384xbf16>, vector<128x384xf32> -> vector<128x384xf32>
    %4 = arith.truncf %3 : vector<128x384xf32> to vector<128x384xbf16>
    %c0_4 = arith.constant 0 : index
    %c0_5 = arith.constant 0 : index
    %5 = vector.load %arg6[%c0_4, %c0_5] : memref<128x384xbf16, #tpu.memory_space<vmem>>, vector<128x384xbf16>
    tpu.vector_store %arg6[%c0_4, %c0_5], %4 {strides = array<i32>} : memref<128x384xbf16, #tpu.memory_space<vmem>>, vector<128x384xbf16>,
    %6 = tpu.iota {dimensions = array<i32: 1>} : vector<1x128xi32>
    %c64_i32 = arith.constant 64 : i32
    %7 = vector.broadcast %c64_i32 : i32 to vector<1x128xi32>
    %8 = arith.cmpi slt, %6, %7 : vector<1x128xi32>
    %cst_6 = arith.constant 0.000000e+00 : f32
    %cst_7 = arith.constant -1.000000e+30 : f32
    %9 = vector.broadcast %cst_6 : f32 to vector<1x128xf32>
    %10 = vector.broadcast %cst_7 : f32 to vector<1x128xf32>
    %11 = arith.select %8, %9, %10 : vector<1x128xi1>, vector<1x128xf32>
    %c0_8 = arith.constant 0 : index
    %c0_9 = arith.constant 0 : index
    %12 = vector.load %arg6[%c0_8, %c0_9] : memref<128x384xbf16, #tpu.memory_space<vmem>>, vector<128x128xbf16>
    %c0_10 = arith.constant 0 : index
    %c128 = arith.constant 128 : index
    %13 = vector.load %arg6[%c0_10, %c128] : memref<128x384xbf16, #tpu.memory_space<vmem>>, vector<128x128xbf16>
    %c0_11 = arith.constant 0 : index
    %c256 = arith.constant 256 : index
    %14 = vector.load %arg6[%c0_11, %c256] : memref<128x384xbf16, #tpu.memory_space<vmem>>, vector<128x128xbf16>
    %15 = vector.extract_strided_slice %12 {offsets = [0, 0], sizes = [128, 16], strides = [1, 1]} : vector<128x128xbf16> to vector<128x16xbf16>
    %16 = vector.extract_strided_slice %13 {offsets = [0, 0], sizes = [128, 16], strides = [1, 1]} : vector<128x128xbf16> to vector<128x16xbf16>
    %17 = vector.extract_strided_slice %14 {offsets = [0, 0], sizes = [128, 16], strides = [1, 1]} : vector<128x128xbf16> to vector<128x16xbf16>
    %cst_12 = arith.constant dense<0.000000e+00> : vector<128x128xf32>
    %18 = tpu.matmul %15, %16, %cst_12 {dimension_numbers = #tpu.dot_dimension_numbers<[1], [1], [0], [0], [0, 0, 1, 0], [], []>} : vector<128x16xbf16>, vector<128x16xbf16>, vector<128x128xf32> -> vector<128x128xf32>
    %19 = vector.broadcast %11 : vector<1x128xf32> to vector<128x128xf32>
    %20 = arith.addf %18, %19 : vector<128x128xf32>
    %cst_13 = arith.constant dense<0xFF800000> : vector<128xf32>
    %21 = vector.multi_reduction <maximumf>, %20, %cst_13 [1] : vector<128x128xf32> to vector<128xf32>
    %22 = vector.shape_cast %21 : vector<128xf32> to vector<128x1xf32>
    %23 = vector.broadcast %22 : vector<128x1xf32> to vector<128x128xf32>
    %24 = arith.subf %20, %23 : vector<128x128xf32>
    %25 = math.exp %24 : vector<128x128xf32>
    %cst_14 = arith.constant dense<0.000000e+00> : vector<128xf32>
    %26 = vector.multi_reduction <add>, %25, %cst_14 [1] : vector<128x128xf32> to vector<128xf32>
    %27 = vector.shape_cast %26 : vector<128xf32> to vector<128x1xf32>
    %28 = arith.truncf %25 : vector<128x128xf32> to vector<128x128xbf16>
    %cst_15 = arith.constant dense<0.000000e+00> : vector<128x16xf32>
    %29 = tpu.matmul %28, %17, %cst_15 {dimension_numbers = #tpu.dot_dimension_numbers<[1], [0], [0], [1], [0, 0, 1, 1], [], []>} : vector<128x128xbf16>, vector<128x16xbf16>, vector<128x16xf32> -> vector<128x16xf32>
    %30 = tpu.reciprocal %27 {approx = true} : vector<128x1xf32> -> vector<128x1xf32>
    %31 = vector.broadcast %30 : vector<128x1xf32> to vector<128x16xf32>
    %32 = arith.mulf %29, %31 : vector<128x16xf32>
    %33 = vector.extract_strided_slice %12 {offsets = [0, 16], sizes = [128, 16], strides = [1, 1]} : vector<128x128xbf16> to vector<128x16xbf16>
    %34 = vector.extract_strided_slice %13 {offsets = [0, 16], sizes = [128, 16], strides = [1, 1]} : vector<128x128xbf16> to vector<128x16xbf16>
    %35 = vector.extract_strided_slice %14 {offsets = [0, 16], sizes = [128, 16], strides = [1, 1]} : vector<128x128xbf16> to vector<128x16xbf16>
    %cst_16 = arith.constant dense<0.000000e+00> : vector<128x128xf32>
    %36 = tpu.matmul %33, %34, %cst_16 {dimension_numbers = #tpu.dot_dimension_numbers<[1], [1], [0], [0], [0, 0, 1, 0], [], []>} : vector<128x16xbf16>, vector<128x16xbf16>, vector<128x128xf32> -> vector<128x128xf32>
    %37 = vector.broadcast %11 : vector<1x128xf32> to vector<128x128xf32>
    %38 = arith.addf %36, %37 : vector<128x128xf32>
    %cst_17 = arith.constant dense<0xFF800000> : vector<128xf32>
    %39 = vector.multi_reduction <maximumf>, %38, %cst_17 [1] : vector<128x128xf32> to vector<128xf32>
    %40 = vector.shape_cast %39 : vector<128xf32> to vector<128x1xf32>
    %41 = vector.broadcast %40 : vector<128x1xf32> to vector<128x128xf32>
    %42 = arith.subf %38, %41 : vector<128x128xf32>
    %43 = math.exp %42 : vector<128x128xf32>
    %cst_18 = arith.constant dense<0.000000e+00> : vector<128xf32>
    %44 = vector.multi_reduction <add>, %43, %cst_18 [1] : vector<128x128xf32> to vector<128xf32>
    %45 = vector.shape_cast %44 : vector<128xf32> to vector<128x1xf32>
    %46 = arith.truncf %43 : vector<128x128xf32> to vector<128x128xbf16>
    %cst_19 = arith.constant dense<0.000000e+00> : vector<128x16xf32>
    %47 = tpu.matmul %46, %35, %cst_19 {dimension_numbers = #tpu.dot_dimension_numbers<[1], [0], [0], [1], [0, 0, 1, 1], [], []>} : vector<128x128xbf16>, vector<128x16xbf16>, vector<128x16xf32> -> vector<128x16xf32>
    %48 = tpu.reciprocal %45 {approx = true} : vector<128x1xf32> -> vector<128x1xf32>
    %49 = vector.broadcast %48 : vector<128x1xf32> to vector<128x16xf32>
    %50 = arith.mulf %47, %49 : vector<128x16xf32>
    %51 = vector.extract_strided_slice %12 {offsets = [0, 32], sizes = [128, 16], strides = [1, 1]} : vector<128x128xbf16> to vector<128x16xbf16>
    %52 = vector.extract_strided_slice %13 {offsets = [0, 32], sizes = [128, 16], strides = [1, 1]} : vector<128x128xbf16> to vector<128x16xbf16>
    %53 = vector.extract_strided_slice %14 {offsets = [0, 32], sizes = [128, 16], strides = [1, 1]} : vector<128x128xbf16> to vector<128x16xbf16>
    %cst_20 = arith.constant dense<0.000000e+00> : vector<128x128xf32>
    %54 = tpu.matmul %51, %52, %cst_20 {dimension_numbers = #tpu.dot_dimension_numbers<[1], [1], [0], [0], [0, 0, 1, 0], [], []>} : vector<128x16xbf16>, vector<128x16xbf16>, vector<128x128xf32> -> vector<128x128xf32>
    %55 = vector.broadcast %11 : vector<1x128xf32> to vector<128x128xf32>
    %56 = arith.addf %54, %55 : vector<128x128xf32>
    %cst_21 = arith.constant dense<0xFF800000> : vector<128xf32>
    %57 = vector.multi_reduction <maximumf>, %56, %cst_21 [1] : vector<128x128xf32> to vector<128xf32>
    %58 = vector.shape_cast %57 : vector<128xf32> to vector<128x1xf32>
    %59 = vector.broadcast %58 : vector<128x1xf32> to vector<128x128xf32>
    %60 = arith.subf %56, %59 : vector<128x128xf32>
    %61 = math.exp %60 : vector<128x128xf32>
    %cst_22 = arith.constant dense<0.000000e+00> : vector<128xf32>
    %62 = vector.multi_reduction <add>, %61, %cst_22 [1] : vector<128x128xf32> to vector<128xf32>
    %63 = vector.shape_cast %62 : vector<128xf32> to vector<128x1xf32>
    %64 = arith.truncf %61 : vector<128x128xf32> to vector<128x128xbf16>
    %cst_23 = arith.constant dense<0.000000e+00> : vector<128x16xf32>
    %65 = tpu.matmul %64, %53, %cst_23 {dimension_numbers = #tpu.dot_dimension_numbers<[1], [0], [0], [1], [0, 0, 1, 1], [], []>} : vector<128x128xbf16>, vector<128x16xbf16>, vector<128x16xf32> -> vector<128x16xf32>
    %66 = tpu.reciprocal %63 {approx = true} : vector<128x1xf32> -> vector<128x1xf32>
    %67 = vector.broadcast %66 : vector<128x1xf32> to vector<128x16xf32>
    %68 = arith.mulf %65, %67 : vector<128x16xf32>
    %69 = vector.extract_strided_slice %12 {offsets = [0, 48], sizes = [128, 16], strides = [1, 1]} : vector<128x128xbf16> to vector<128x16xbf16>
    %70 = vector.extract_strided_slice %13 {offsets = [0, 48], sizes = [128, 16], strides = [1, 1]} : vector<128x128xbf16> to vector<128x16xbf16>
    %71 = vector.extract_strided_slice %14 {offsets = [0, 48], sizes = [128, 16], strides = [1, 1]} : vector<128x128xbf16> to vector<128x16xbf16>
    %cst_24 = arith.constant dense<0.000000e+00> : vector<128x128xf32>
    %72 = tpu.matmul %69, %70, %cst_24 {dimension_numbers = #tpu.dot_dimension_numbers<[1], [1], [0], [0], [0, 0, 1, 0], [], []>} : vector<128x16xbf16>, vector<128x16xbf16>, vector<128x128xf32> -> vector<128x128xf32>
    %73 = vector.broadcast %11 : vector<1x128xf32> to vector<128x128xf32>
    %74 = arith.addf %72, %73 : vector<128x128xf32>
    %cst_25 = arith.constant dense<0xFF800000> : vector<128xf32>
    %75 = vector.multi_reduction <maximumf>, %74, %cst_25 [1] : vector<128x128xf32> to vector<128xf32>
    %76 = vector.shape_cast %75 : vector<128xf32> to vector<128x1xf32>
    %77 = vector.broadcast %76 : vector<128x1xf32> to vector<128x128xf32>
    %78 = arith.subf %74, %77 : vector<128x128xf32>
    %79 = math.exp %78 : vector<128x128xf32>
    %cst_26 = arith.constant dense<0.000000e+00> : vector<128xf32>
    %80 = vector.multi_reduction <add>, %79, %cst_26 [1] : vector<128x128xf32> to vector<128xf32>
    %81 = vector.shape_cast %80 : vector<128xf32> to vector<128x1xf32>
    %82 = arith.truncf %79 : vector<128x128xf32> to vector<128x128xbf16>
    %cst_27 = arith.constant dense<0.000000e+00> : vector<128x16xf32>
    %83 = tpu.matmul %82, %71, %cst_27 {dimension_numbers = #tpu.dot_dimension_numbers<[1], [0], [0], [1], [0, 0, 1, 1], [], []>} : vector<128x128xbf16>, vector<128x16xbf16>, vector<128x16xf32> -> vector<128x16xf32>
    %84 = tpu.reciprocal %81 {approx = true} : vector<128x1xf32> -> vector<128x1xf32>
    %85 = vector.broadcast %84 : vector<128x1xf32> to vector<128x16xf32>
    %86 = arith.mulf %83, %85 : vector<128x16xf32>
    %87 = vector.extract_strided_slice %12 {offsets = [0, 64], sizes = [128, 16], strides = [1, 1]} : vector<128x128xbf16> to vector<128x16xbf16>
    %88 = vector.extract_strided_slice %13 {offsets = [0, 64], sizes = [128, 16], strides = [1, 1]} : vector<128x128xbf16> to vector<128x16xbf16>
    %89 = vector.extract_strided_slice %14 {offsets = [0, 64], sizes = [128, 16], strides = [1, 1]} : vector<128x128xbf16> to vector<128x16xbf16>
    %cst_28 = arith.constant dense<0.000000e+00> : vector<128x128xf32>
    %90 = tpu.matmul %87, %88, %cst_28 {dimension_numbers = #tpu.dot_dimension_numbers<[1], [1], [0], [0], [0, 0, 1, 0], [], []>} : vector<128x16xbf16>, vector<128x16xbf16>, vector<128x128xf32> -> vector<128x128xf32>
    %91 = vector.broadcast %11 : vector<1x128xf32> to vector<128x128xf32>
    %92 = arith.addf %90, %91 : vector<128x128xf32>
    %cst_29 = arith.constant dense<0xFF800000> : vector<128xf32>
    %93 = vector.multi_reduction <maximumf>, %92, %cst_29 [1] : vector<128x128xf32> to vector<128xf32>
    %94 = vector.shape_cast %93 : vector<128xf32> to vector<128x1xf32>
    %95 = vector.broadcast %94 : vector<128x1xf32> to vector<128x128xf32>
    %96 = arith.subf %92, %95 : vector<128x128xf32>
    %97 = math.exp %96 : vector<128x128xf32>
    %cst_30 = arith.constant dense<0.000000e+00> : vector<128xf32>
    %98 = vector.multi_reduction <add>, %97, %cst_30 [1] : vector<128x128xf32> to vector<128xf32>
    %99 = vector.shape_cast %98 : vector<128xf32> to vector<128x1xf32>
    %100 = arith.truncf %97 : vector<128x128xf32> to vector<128x128xbf16>
    %cst_31 = arith.constant dense<0.000000e+00> : vector<128x16xf32>
    %101 = tpu.matmul %100, %89, %cst_31 {dimension_numbers = #tpu.dot_dimension_numbers<[1], [0], [0], [1], [0, 0, 1, 1], [], []>} : vector<128x128xbf16>, vector<128x16xbf16>, vector<128x16xf32> -> vector<128x16xf32>
    %102 = tpu.reciprocal %99 {approx = true} : vector<128x1xf32> -> vector<128x1xf32>
    %103 = vector.broadcast %102 : vector<128x1xf32> to vector<128x16xf32>
    %104 = arith.mulf %101, %103 : vector<128x16xf32>
    %105 = vector.extract_strided_slice %12 {offsets = [0, 80], sizes = [128, 16], strides = [1, 1]} : vector<128x128xbf16> to vector<128x16xbf16>
    %106 = vector.extract_strided_slice %13 {offsets = [0, 80], sizes = [128, 16], strides = [1, 1]} : vector<128x128xbf16> to vector<128x16xbf16>
    %107 = vector.extract_strided_slice %14 {offsets = [0, 80], sizes = [128, 16], strides = [1, 1]} : vector<128x128xbf16> to vector<128x16xbf16>
    %cst_32 = arith.constant dense<0.000000e+00> : vector<128x128xf32>
    %108 = tpu.matmul %105, %106, %cst_32 {dimension_numbers = #tpu.dot_dimension_numbers<[1], [1], [0], [0], [0, 0, 1, 0], [], []>} : vector<128x16xbf16>, vector<128x16xbf16>, vector<128x128xf32> -> vector<128x128xf32>
    %109 = vector.broadcast %11 : vector<1x128xf32> to vector<128x128xf32>
    %110 = arith.addf %108, %109 : vector<128x128xf32>
    %cst_33 = arith.constant dense<0xFF800000> : vector<128xf32>
    %111 = vector.multi_reduction <maximumf>, %110, %cst_33 [1] : vector<128x128xf32> to vector<128xf32>
    %112 = vector.shape_cast %111 : vector<128xf32> to vector<128x1xf32>
    %113 = vector.broadcast %112 : vector<128x1xf32> to vector<128x128xf32>
    %114 = arith.subf %110, %113 : vector<128x128xf32>
    %115 = math.exp %114 : vector<128x128xf32>
    %cst_34 = arith.constant dense<0.000000e+00> : vector<128xf32>
    %116 = vector.multi_reduction <add>, %115, %cst_34 [1] : vector<128x128xf32> to vector<128xf32>
    %117 = vector.shape_cast %116 : vector<128xf32> to vector<128x1xf32>
    %118 = arith.truncf %115 : vector<128x128xf32> to vector<128x128xbf16>
    %cst_35 = arith.constant dense<0.000000e+00> : vector<128x16xf32>
    %119 = tpu.matmul %118, %107, %cst_35 {dimension_numbers = #tpu.dot_dimension_numbers<[1], [0], [0], [1], [0, 0, 1, 1], [], []>} : vector<128x128xbf16>, vector<128x16xbf16>, vector<128x16xf32> -> vector<128x16xf32>
    %120 = tpu.reciprocal %117 {approx = true} : vector<128x1xf32> -> vector<128x1xf32>
    %121 = vector.broadcast %120 : vector<128x1xf32> to vector<128x16xf32>
    %122 = arith.mulf %119, %121 : vector<128x16xf32>
    %123 = vector.extract_strided_slice %12 {offsets = [0, 96], sizes = [128, 16], strides = [1, 1]} : vector<128x128xbf16> to vector<128x16xbf16>
    %124 = vector.extract_strided_slice %13 {offsets = [0, 96], sizes = [128, 16], strides = [1, 1]} : vector<128x128xbf16> to vector<128x16xbf16>
    %125 = vector.extract_strided_slice %14 {offsets = [0, 96], sizes = [128, 16], strides = [1, 1]} : vector<128x128xbf16> to vector<128x16xbf16>
    %cst_36 = arith.constant dense<0.000000e+00> : vector<128x128xf32>
    %126 = tpu.matmul %123, %124, %cst_36 {dimension_numbers = #tpu.dot_dimension_numbers<[1], [1], [0], [0], [0, 0, 1, 0], [], []>} : vector<128x16xbf16>, vector<128x16xbf16>, vector<128x128xf32> -> vector<128x128xf32>
    %127 = vector.broadcast %11 : vector<1x128xf32> to vector<128x128xf32>
    %128 = arith.addf %126, %127 : vector<128x128xf32>
    %cst_37 = arith.constant dense<0xFF800000> : vector<128xf32>
    %129 = vector.multi_reduction <maximumf>, %128, %cst_37 [1] : vector<128x128xf32> to vector<128xf32>
    %130 = vector.shape_cast %129 : vector<128xf32> to vector<128x1xf32>
    %131 = vector.broadcast %130 : vector<128x1xf32> to vector<128x128xf32>
    %132 = arith.subf %128, %131 : vector<128x128xf32>
    %133 = math.exp %132 : vector<128x128xf32>
    %cst_38 = arith.constant dense<0.000000e+00> : vector<128xf32>
    %134 = vector.multi_reduction <add>, %133, %cst_38 [1] : vector<128x128xf32> to vector<128xf32>
    %135 = vector.shape_cast %134 : vector<128xf32> to vector<128x1xf32>
    %136 = arith.truncf %133 : vector<128x128xf32> to vector<128x128xbf16>
    %cst_39 = arith.constant dense<0.000000e+00> : vector<128x16xf32>
    %137 = tpu.matmul %136, %125, %cst_39 {dimension_numbers = #tpu.dot_dimension_numbers<[1], [0], [0], [1], [0, 0, 1, 1], [], []>} : vector<128x128xbf16>, vector<128x16xbf16>, vector<128x16xf32> -> vector<128x16xf32>
    %138 = tpu.reciprocal %135 {approx = true} : vector<128x1xf32> -> vector<128x1xf32>
    %139 = vector.broadcast %138 : vector<128x1xf32> to vector<128x16xf32>
    %140 = arith.mulf %137, %139 : vector<128x16xf32>
    %141 = vector.extract_strided_slice %12 {offsets = [0, 112], sizes = [128, 16], strides = [1, 1]} : vector<128x128xbf16> to vector<128x16xbf16>
    %142 = vector.extract_strided_slice %13 {offsets = [0, 112], sizes = [128, 16], strides = [1, 1]} : vector<128x128xbf16> to vector<128x16xbf16>
    %143 = vector.extract_strided_slice %14 {offsets = [0, 112], sizes = [128, 16], strides = [1, 1]} : vector<128x128xbf16> to vector<128x16xbf16>
    %cst_40 = arith.constant dense<0.000000e+00> : vector<128x128xf32>
    %144 = tpu.matmul %141, %142, %cst_40 {dimension_numbers = #tpu.dot_dimension_numbers<[1], [1], [0], [0], [0, 0, 1, 0], [], []>} : vector<128x16xbf16>, vector<128x16xbf16>, vector<128x128xf32> -> vector<128x128xf32>
    %145 = vector.broadcast %11 : vector<1x128xf32> to vector<128x128xf32>
    %146 = arith.addf %144, %145 : vector<128x128xf32>
    %cst_41 = arith.constant dense<0xFF800000> : vector<128xf32>
    %147 = vector.multi_reduction <maximumf>, %146, %cst_41 [1] : vector<128x128xf32> to vector<128xf32>
    %148 = vector.shape_cast %147 : vector<128xf32> to vector<128x1xf32>
    %149 = vector.broadcast %148 : vector<128x1xf32> to vector<128x128xf32>
    %150 = arith.subf %146, %149 : vector<128x128xf32>
    %151 = math.exp %150 : vector<128x128xf32>
    %cst_42 = arith.constant dense<0.000000e+00> : vector<128xf32>
    %152 = vector.multi_reduction <add>, %151, %cst_42 [1] : vector<128x128xf32> to vector<128xf32>
    %153 = vector.shape_cast %152 : vector<128xf32> to vector<128x1xf32>
    %154 = arith.truncf %151 : vector<128x128xf32> to vector<128x128xbf16>
    %cst_43 = arith.constant dense<0.000000e+00> : vector<128x16xf32>
    %155 = tpu.matmul %154, %143, %cst_43 {dimension_numbers = #tpu.dot_dimension_numbers<[1], [0], [0], [1], [0, 0, 1, 1], [], []>} : vector<128x128xbf16>, vector<128x16xbf16>, vector<128x16xf32> -> vector<128x16xf32>
    %156 = tpu.reciprocal %153 {approx = true} : vector<128x1xf32> -> vector<128x1xf32>
    %157 = vector.broadcast %156 : vector<128x1xf32> to vector<128x16xf32>
    %158 = arith.mulf %155, %157 : vector<128x16xf32>
    %159 = tpu.concatenate %32, %50, %68, %86, %104, %122, %140, %158 in 1 : vector<128x16xf32>, vector<128x16xf32>, vector<128x16xf32>, vector<128x16xf32>, vector<128x16xf32>, vector<128x16xf32>, vector<128x16xf32>, vector<128x16xf32> -> vector<128x128xf32>
    %160 = arith.truncf %159 : vector<128x128xf32> to vector<128x128xbf16>
    %c0_44 = arith.constant 0 : index
    %c0_45 = arith.constant 0 : index
    %161 = vector.load %arg7[%c0_44, %c0_45] : memref<128x128xbf16, #tpu.memory_space<vmem>>, vector<128x128xbf16>
    tpu.vector_store %arg7[%c0_44, %c0_45], %160 {strides = array<i32>} : memref<128x128xbf16, #tpu.memory_space<vmem>>, vector<128x128xbf16>,
    %c0_46 = arith.constant 0 : index
    %c0_47 = arith.constant 0 : index
    %162 = vector.load %arg7[%c0_46, %c0_47] : memref<128x128xbf16, #tpu.memory_space<vmem>>, vector<128x128xbf16>
    %c0_48 = arith.constant 0 : index
    %c0_49 = arith.constant 0 : index
    %163 = vector.load %arg3[%c0_48, %c0_49] : memref<128x128xbf16, #tpu.memory_space<vmem>>, vector<128x128xbf16>
    %cst_50 = arith.constant dense<0.000000e+00> : vector<128x128xf32>
    %164 = tpu.matmul %162, %163, %cst_50 {dimension_numbers = #tpu.dot_dimension_numbers<[1], [0], [0], [1], [0, 0, 1, 1], [], []>} : vector<128x128xbf16>, vector<128x128xbf16>, vector<128x128xf32> -> vector<128x128xf32>
    %c0_51 = arith.constant 0 : index
    %c0_52 = arith.constant 0 : index
    %165 = vector.load %arg4[%c0_51, %c0_52] : memref<1x128xf32, #tpu.memory_space<vmem>>, vector<1x128xf32>
    %166 = vector.broadcast %165 : vector<1x128xf32> to vector<128x128xf32>
    %167 = arith.addf %164, %166 : vector<128x128xf32>
    %c0_53 = arith.constant 0 : index
    %c0_54 = arith.constant 0 : index
    %c0_55 = arith.constant 0 : index
    %168 = vector.load %arg5[%c0_53, %c0_54, %c0_55] : memref<1x128x128xf32, #tpu.memory_space<vmem>>, vector<1x128x128xf32>
    %169 = vector.shape_cast %168 : vector<1x128x128xf32> to vector<128x128xf32>
    %170 = vector.shape_cast %167 : vector<128x128xf32> to vector<1x128x128xf32>
    tpu.vector_store %arg5[%c0_53, %c0_54, %c0_55], %170 {strides = array<i32>} : memref<1x128x128xf32, #tpu.memory_space<vmem>>, vector<1x128x128xf32>,
    return
  }
  func.func @transform_0(%arg0: i32) -> (i32, i32, i32) {
    %c0_i32 = arith.constant 0 : i32
    %c0_i32_0 = arith.constant 0 : i32
    %c0_i32_1 = arith.constant 0 : i32
    return %arg0, %c0_i32, %c0_i32_0 : i32, i32, i32
  }
  func.func @transform_1(%arg0: i32) -> (i32, i32) {
    %c0_i32 = arith.constant 0 : i32
    %c0_i32_0 = arith.constant 0 : i32
    %c0_i32_1 = arith.constant 0 : i32
    return %c0_i32, %c0_i32_0 : i32, i32
  }
  func.func @transform_2(%arg0: i32) -> (i32, i32) {
    %c0_i32 = arith.constant 0 : i32
    %c0_i32_0 = arith.constant 0 : i32
    %c0_i32_1 = arith.constant 0 : i32
    return %c0_i32, %c0_i32_0 : i32, i32
  }
  func.func @transform_3(%arg0: i32) -> (i32, i32) {
    %c0_i32 = arith.constant 0 : i32
    %c0_i32_0 = arith.constant 0 : i32
    %c0_i32_1 = arith.constant 0 : i32
    return %c0_i32, %c0_i32_0 : i32, i32
  }
  func.func @transform_4(%arg0: i32) -> (i32, i32, i32) {
    %c0_i32 = arith.constant 0 : i32
    %c0_i32_0 = arith.constant 0 : i32
    %c0_i32_1 = arith.constant 0 : i32
    return %arg0, %c0_i32, %c0_i32_0 : i32, i32, i32
  }
}

</mosaic_0001>

<llo_original>
// kernel: tpu_custom_call.1
$region0: #{tpu_custom_call.1}
  #allocation0 [shape = 'u32[]', space=smem, size = 0x4, offset = 0x4, fixed_abs, tag = 'smem constant byte address 0x4 - core index']
  #allocation1 [shape = 'u32[72,128]{1,0:T(1,128)}', space=vmem, size = 0x9000, scoped, tag = 'internal scratch']
  #allocation2 [shape = 'bf16[128,384]{1,0:T(8,128)(2,1)}', space=vmem, size = 0x18000, scoped, tag = 'scratch operand']
  #allocation3 [shape = 'bf16[128,128]{1,0:T(8,128)(2,1)}', space=vmem, size = 0x8000, scoped, tag = 'scratch operand']
  %s0 = inlined_call_operand.hbm [shape: bf16[2,128,128], index: 0, kind: input, shape index: {}]
  %s1 = inlined_call_operand.hbm [shape: bf16[128,384], index: 1, kind: input, shape index: {}]
  %s2 = inlined_call_operand.hbm [shape: bf16[128,128], index: 2, kind: input, shape index: {}]
  %s3 = inlined_call_operand.vmem [shape: f32[1,128], index: 3, kind: input, shape index: {}]
  %s4 = inlined_call_operand.hbm [shape: f32[2,128,128], index: 4, kind: output, shape index: {}]
  %s5 = sld [smem:[#allocation0]]
  $region61: #{tpu_custom_call.1} parent=0
    _
  %s7 = ssub.s32 1, %s5
  %s8 = scalar_select 0, %s7, %s5
  $region1: #{tpu_custom_call.1} parent=0
    #allocation4 [shape = 'u8[65536]{0}', space=vmem, size = 0x10000, scoped, tag = 'input window, operand 0']
    #allocation5 [shape = 's32[2]{0}', space=sflag, size = 0x8, scoped, tag = 'scoped memory for tpu_custom_call.1']
    #allocation6 [shape = 's32[2]{0}', space=sflag, size = 0x8, scoped, tag = 'scoped memory for tpu_custom_call.1']
    #allocation7 [shape = 'u8[98304]{0}', space=vmem, size = 0x18000, scoped, tag = 'input window, operand 1, single buffered']
    #allocation8 [shape = 's32[1]{0}', space=sflag, size = 0x4, scoped, tag = 'scoped memory for tpu_custom_call.1']
    #allocation9 [shape = 'u8[32768]{0}', space=vmem, size = 0x8000, scoped, tag = 'input window, operand 2, single buffered']
    #allocation10 [shape = 'u8[131072]{0}', space=vmem, size = 0x20000, scoped, tag = 'output window, operand 0']
    %9 = vsyncpa [#allocation5], 0
    %s10 = scalar_lea.sflag [#allocation5], 1
    %11 = vsyncpa %s10, 0
    %12 = vsyncpa [#allocation8], 0
    %13 = vsyncpa [#allocation6], 0
    %s14 = scalar_lea.sflag [#allocation6], 1
    %15 = vsyncpa %s14, 0
    loop: start=0, step=1, limit=4
    $region2: #{tpu_custom_call.1} parent=1 // loop_pre_header
      _
    $region3: #{tpu_custom_call.1} parent=1 // loop_header
      %s17 = sphi 0, %s21
      %p18 = scmp.ge.s32.totalorder %s17, 4
      %s27 = sphi 0, %s29
      %s30 = sphi 0, %s27
      %s31 = sphi 0, %s30
      %s47 = sphi 0, %s31
      %s51 = sphi 0, %s51
      %s53 = sphi 0, %s51
      %s54 = sphi 0, %s53
      %s68 = sphi 0, %s54
      %s72 = sphi 0, %s72
      %s74 = sphi 0, %s72
      %s75 = sphi 0, %s74
      %s89 = sphi 0, %s75
      %s93 = sphi 0, %s93
      %s95 = sphi 0, %s93
      %s96 = sphi 0, %s95
      %s110 = sphi 0, %s96
      %s116 = sphi 0, %s118
      %s119 = sphi 0, %s116
      %s120 = sphi 0, %s119
      %s136 = sphi 0, %s120
    $region4: #{tpu_custom_call.1} parent=1 // loop_header_branch
      %20 = sbr.rel (%p18) target = $region8
    $region5: #{tpu_custom_call.1} parent=1 // loop_body
      %s22 = ssub.s32 %s17, 1
      %s23 = ssub.s32 %s17, 2
      %s24 = sadd.s32 %s17, 1
      %s25 = ssub.s32 %s17, %s24
      %p26 = scmp.eq.s32.totalorder %s25, 0
      %s28 = sadd.s32 %s27, 1
      %s29 = scalar_select %p26, %s27, %s28
      %p32 = pneg %p26
      %p33 = scmp.eq.s32.totalorder %s17, 1
      %p34 = por %p32, %p33
      %p35 = scmp.ne.s32.totalorder %s27, %s30
      %p36 = scmp.eq.s32.totalorder %s17, 0
      %p37 = por %p35, %p36
      %p38 = scmp.ne.s32.totalorder %s27, %s30
      %p39 = scmp.eq.s32.totalorder %s22, 1
      %p40 = por %p38, %p39
      %p41 = scmp.ne.s32.totalorder %s30, %s31
      %p42 = scmp.eq.s32.totalorder %s22, 0
      %p43 = por %p41, %p42
      %p44 = scmp.ne.s32.totalorder %s30, %s31
      %p45 = scmp.eq.s32.totalorder %s23, 1
      %p46 = por %p44, %p45
      %p48 = scmp.ne.s32.totalorder %s31, %s47
      %p49 = scmp.eq.s32.totalorder %s23, 0
      %p50 = por %p48, %p49
      %s52 = sadd.s32 %s51, 1
      %p55 = scmp.eq.s32.totalorder %s17, 1
      %p56 = scmp.ne.s32.totalorder %s51, %s53
      %p57 = scmp.eq.s32.totalorder %s17, 0
      %p58 = por %p56, %p57
      %p59 = scmp.ne.s32.totalorder %s51, %s53
      %p60 = scmp.eq.s32.totalorder %s22, 1
      %p61 = por %p59, %p60
      %p62 = scmp.ne.s32.totalorder %s53, %s54
      %p63 = scmp.eq.s32.totalorder %s22, 0
      %p64 = por %p62, %p63
      %p65 = scmp.ne.s32.totalorder %s53, %s54
      %p66 = scmp.eq.s32.totalorder %s23, 1
      %p67 = por %p65, %p66
      %p69 = scmp.ne.s32.totalorder %s54, %s68
      %p70 = scmp.eq.s32.totalorder %s23, 0
      %p71 = por %p69, %p70
      %s73 = sadd.s32 %s72, 1
      %p76 = scmp.eq.s32.totalorder %s17, 1
      %p77 = scmp.ne.s32.totalorder %s72, %s74
      %p78 = scmp.eq.s32.totalorder %s17, 0
      %p79 = por %p77, %p78
      %p80 = scmp.ne.s32.totalorder %s72, %s74
      %p81 = scmp.eq.s32.totalorder %s22, 1
      %p82 = por %p80, %p81
      %p83 = scmp.ne.s32.totalorder %s74, %s75
      %p84 = scmp.eq.s32.totalorder %s22, 0
      %p85 = por %p83, %p84
      %p86 = scmp.ne.s32.totalorder %s74, %s75
      %p87 = scmp.eq.s32.totalorder %s23, 1
      %p88 = por %p86, %p87
      %p90 = scmp.ne.s32.totalorder %s75, %s89
      %p91 = scmp.eq.s32.totalorder %s23, 0
      %p92 = por %p90, %p91
      %s94 = sadd.s32 %s93, 1
      %p97 = scmp.eq.s32.totalorder %s17, 1
      %p98 = scmp.ne.s32.totalorder %s93, %s95
      %p99 = scmp.eq.s32.totalorder %s17, 0
      %p100 = por %p98, %p99
      %p101 = scmp.ne.s32.totalorder %s93, %s95
      %p102 = scmp.eq.s32.totalorder %s22, 1
      %p103 = por %p101, %p102
      %p104 = scmp.ne.s32.totalorder %s95, %s96
      %p105 = scmp.eq.s32.totalorder %s22, 0
      %p106 = por %p104, %p105
      %p107 = scmp.ne.s32.totalorder %s95, %s96
      %p108 = scmp.eq.s32.totalorder %s23, 1
      %p109 = por %p107, %p108
      %p111 = scmp.ne.s32.totalorder %s96, %s110
      %p112 = scmp.eq.s32.totalorder %s23, 0
      %p113 = por %p111, %p112
      %s114 = ssub.s32 %s17, %s24
      %p115 = scmp.eq.s32.totalorder %s114, 0
      %s117 = sadd.s32 %s116, 1
      %s118 = scalar_select %p115, %s116, %s117
      %p121 = pneg %p115
      %p122 = scmp.eq.s32.totalorder %s17, 1
      %p123 = por %p121, %p122
      %p124 = scmp.ne.s32.totalorder %s116, %s119
      %p125 = scmp.eq.s32.totalorder %s17, 0
      %p126 = por %p124, %p125
      %p127 = scmp.ne.s32.totalorder %s116, %s119
      %p128 = scmp.eq.s32.totalorder %s22, 1
      %p129 = por %p127, %p128
      %p130 = scmp.ne.s32.totalorder %s119, %s120
      %p131 = scmp.eq.s32.totalorder %s22, 0
      %p132 = por %p130, %p131
      %p133 = scmp.ne.s32.totalorder %s119, %s120
      %p134 = scmp.eq.s32.totalorder %s23, 1
      %p135 = por %p133, %p134
      %p137 = scmp.ne.s32.totalorder %s120, %s136
      %p138 = scmp.eq.s32.totalorder %s23, 0
      %p139 = por %p137, %p138
      %p140 = scmp.le.s32.totalorder 1, %s17
      %p141 = scmp.lt.s32.totalorder %s17, 3
      %p142 = pnand %p140, %p141
      %p143 = pneg %p142
      // Predicated region
      $region9: #{tpu_custom_call.1} parent=5 // pred_check
        _
      $region10: #{tpu_custom_call.1} parent=5 // pred_check_branch
        %145 = sbr.rel (%p142) target = $region12
      $region11: #{tpu_custom_call.1} parent=5 // pred_region
        %s146 = ssub.s32 %s17, 1
        // Predicated region
        $region13: #{tpu_custom_call.1} parent=11 // pred_check
          %p147 = pneg %p64
        $region14: #{tpu_custom_call.1} parent=11 // pred_check_branch
          %149 = sbr.rel (%p147) target = $region16
        $region15: #{tpu_custom_call.1} parent=11 // pred_region
          %151 = vsyncadd [#allocation8], 0
          %s152 = sshll.u32 %s1, 4
          %s153 = int_to_ptr.hbm [resolvable:$true] %s152
          %s154 = sshll.u32 [#allocation7], 4
          %s155 = int_to_ptr.vmem [resolvable:$true] %s154
          %160 = dma.hbm_to_vmem [thread:$0]  %s153, 3072, %s155, [#allocation8], 192, 192, 12
        $region16: #{tpu_custom_call.1} parent=11 // pred_fallthru
          _
        // Predicated region
        $region17: #{tpu_custom_call.1} parent=11 // pred_check
          %p161 = pneg %p85
        $region18: #{tpu_custom_call.1} parent=11 // pred_check_branch
          %163 = sbr.rel (%p161) target = $region20
        $region19: #{tpu_custom_call.1} parent=11 // pred_region
          %165 = vsyncadd [#allocation8], 0
          %s166 = sshll.u32 %s2, 4
          %s167 = int_to_ptr.hbm [resolvable:$true] %s166
          %s168 = sshll.u32 [#allocation9], 4
          %s169 = int_to_ptr.vmem [resolvable:$true] %s168
          %174 = dma.hbm_to_vmem [thread:$0]  %s167, 1024, %s169, [#allocation8], 64, 64, 4
        $region20: #{tpu_custom_call.1} parent=11 // pred_fallthru
          _
        // Predicated region
        $region21: #{tpu_custom_call.1} parent=11 // pred_check
          %p175 = pneg %p106
        $region22: #{tpu_custom_call.1} parent=11 // pred_check_branch
          %177 = sbr.rel (%p175) target = $region24
        $region23: #{tpu_custom_call.1} parent=11 // pred_region
          _
        $region24: #{tpu_custom_call.1} parent=11 // pred_fallthru
          _
      $region12: #{tpu_custom_call.1} parent=5 // pred_fallthru
        _
      %p178 = scmp.lt.s32.totalorder %s17, 2
      // Predicated region
      $region25: #{tpu_custom_call.1} parent=5 // pred_check
        %p179 = pneg %p178
      $region26: #{tpu_custom_call.1} parent=5 // pred_check_branch
        %181 = sbr.rel (%p179) target = $region28
      $region27: #{tpu_custom_call.1} parent=5 // pred_region
        // Predicated region
        $region29: #{tpu_custom_call.1} parent=27 // pred_check
          %p182 = pneg %p37
        $region30: #{tpu_custom_call.1} parent=27 // pred_check_branch
          %184 = sbr.rel (%p182) target = $region32
        $region31: #{tpu_custom_call.1} parent=27 // pred_region
          %s185 = sand.u32 %s27, 1
          %s186 = scalar_lea.sflag [#allocation5], %s185
          %s187 = sand.u32 %s27, 1
          %s188 = smul.addr %s187, 64
          %s189 = scalar_lea.vmem [#allocation4], %s188
          %191 = vsyncadd %s186, 0
          %s192 = smul.addr %s17, 16
          %s193 = smul.addr %s192, 4
          %s194 = scalar_lea.hbm %s0, %s193
          %s195 = sshll.u32 %s194, 4
          %s196 = int_to_ptr.hbm [resolvable:$true] %s195
          %s197 = sshll.u32 %s189, 4
          %s198 = int_to_ptr.vmem [resolvable:$true] %s197
          %203 = dma.hbm_to_vmem [thread:$0]  %s196, 1024, %s198, %s186, 64, 64, 4
        $region32: #{tpu_custom_call.1} parent=27 // pred_fallthru
          _
      $region28: #{tpu_custom_call.1} parent=5 // pred_fallthru
        _
      %p204 = scmp.le.s32.totalorder 1, %s17
      %p205 = scmp.lt.s32.totalorder %s17, 3
      %p206 = pnand %p204, %p205
      %p207 = pneg %p206
      // Predicated region
      $region33: #{tpu_custom_call.1} parent=5 // pred_check
        _
      $region34: #{tpu_custom_call.1} parent=5 // pred_check_branch
        %209 = sbr.rel (%p206) target = $region36
      $region35: #{tpu_custom_call.1} parent=5 // pred_region
        %s210 = ssub.s32 %s17, 1
        %s211 = sand.u32 %s30, 1
        %s212 = scalar_lea.sflag [#allocation5], %s211
        %s213 = sand.u32 %s30, 1
        %s214 = smul.addr %s213, 64
        %s215 = scalar_lea.vmem [#allocation4], %s214
        // Predicated region
        $region37: #{tpu_custom_call.1} parent=35 // pred_check
          %p216 = pneg %p43
        $region38: #{tpu_custom_call.1} parent=35 // pred_check_branch
          %218 = sbr.rel (%p216) target = $region40
        $region39: #{tpu_custom_call.1} parent=35 // pred_region
          %220 = dma.done %s212, 1024
        $region40: #{tpu_custom_call.1} parent=35 // pred_fallthru
          _
        // Predicated region
        $region41: #{tpu_custom_call.1} parent=35 // pred_check
          %p221 = pneg %p64
        $region42: #{tpu_custom_call.1} parent=35 // pred_check_branch
          %223 = sbr.rel (%p221) target = $region44
        $region43: #{tpu_custom_call.1} parent=35 // pred_region
          %225 = dma.done [#allocation8], 3072
        $region44: #{tpu_custom_call.1} parent=35 // pred_fallthru
          _
        // Predicated region
        $region45: #{tpu_custom_call.1} parent=35 // pred_check
          %p226 = pneg %p85
        $region46: #{tpu_custom_call.1} parent=35 // pred_check_branch
          %228 = sbr.rel (%p226) target = $region48
        $region47: #{tpu_custom_call.1} parent=35 // pred_region
          %230 = dma.done [#allocation8], 1024
        $region48: #{tpu_custom_call.1} parent=35 // pred_fallthru
          _
        %s231 = sand.u32 %s30, 1
        %s232 = scalar_lea.sflag [#allocation5], %s231
        %s233 = sand.u32 %s30, 1
        %s234 = smul.addr %s233, 64
        %s235 = scalar_lea.vmem [#allocation4], %s234
        %p236 = pneg %p43
        %p237 = pneg %p40
        %p238 = pneg %p64
        %p239 = pneg %p61
        %p240 = pneg %p85
        %p241 = pneg %p82
        %p242 = pneg %p106
        %p243 = pneg %p103
        %p244 = pneg %p132
        %p245 = pneg %p129
        %s246 = sand.u32 %s119, 1
        %s247 = scalar_lea.sflag [#allocation6], %s246
        %s248 = sand.u32 %s119, 1
        %s249 = smul.addr %s248, 128
        %s250 = scalar_lea.vmem [#allocation10], %s249
        %v251 = vld [vmem:[%s215] sm:$0xf]
        %v252 = vld [vmem:[%s215 + $0x4] sm:$0xf]
        %v253 = vld [vmem:[%s215 + $0x8] sm:$0xf]
        %v254 = vld [vmem:[%s215 + $0xc] sm:$0xf]
        %v255 = vld [vmem:[%s215 + $0x10] sm:$0xf]
        %v256 = vld [vmem:[%s215 + $0x14] sm:$0xf]
        %v257 = vld [vmem:[%s215 + $0x18] sm:$0xf]
        %v258 = vld [vmem:[%s215 + $0x1c] sm:$0xf]
        %v259 = vld [vmem:[%s215 + $0x20] sm:$0xf]
        %v260 = vld [vmem:[%s215 + $0x24] sm:$0xf]
        %v261 = vld [vmem:[%s215 + $0x28] sm:$0xf]
        %v262 = vld [vmem:[%s215 + $0x2c] sm:$0xf]
        %v263 = vld [vmem:[%s215 + $0x30] sm:$0xf]
        %v264 = vld [vmem:[%s215 + $0x34] sm:$0xf]
        %v265 = vld [vmem:[%s215 + $0x38] sm:$0xf]
        %v266 = vld [vmem:[%s215 + $0x3c] sm:$0xf]
        %v267 = vld [vmem:[#allocation7] sm:$0xff]
        %v268 = vld [vmem:[#allocation7 + $0x8] sm:$0xf]
        %v269 = vld [vmem:[#allocation7 + $0xc] sm:$0xff]
        %v270 = vld [vmem:[#allocation7 + $0x14] sm:$0xf]
        %v271 = vld [vmem:[#allocation7 + $0x18] sm:$0xff]
        %v272 = vld [vmem:[#allocation7 + $0x20] sm:$0xf]
        %v273 = vld [vmem:[#allocation7 + $0x24] sm:$0xff]
        %v274 = vld [vmem:[#allocation7 + $0x2c] sm:$0xf]
        %v275 = vld [vmem:[#allocation7 + $0x30] sm:$0xff]
        %v276 = vld [vmem:[#allocation7 + $0x38] sm:$0xf]
        %v277 = vld [vmem:[#allocation7 + $0x3c] sm:$0xff]
        %v278 = vld [vmem:[#allocation7 + $0x44] sm:$0xf]
        %v279 = vld [vmem:[#allocation7 + $0x48] sm:$0xff]
        %v280 = vld [vmem:[#allocation7 + $0x50] sm:$0xf]
        %v281 = vld [vmem:[#allocation7 + $0x54] sm:$0xff]
        %v282 = vld [vmem:[#allocation7 + $0x5c] sm:$0xf]
        %v283 = vld [vmem:[#allocation7 + $0x60] sm:$0xff]
        %v284 = vld [vmem:[#allocation7 + $0x68] sm:$0xf]
        %v285 = vld [vmem:[#allocation7 + $0x6c] sm:$0xff]
        %v286 = vld [vmem:[#allocation7 + $0x74] sm:$0xf]
        %v287 = vld [vmem:[#allocation7 + $0x78] sm:$0xff]
        %v288 = vld [vmem:[#allocation7 + $0x80] sm:$0xf]
        %v289 = vld [vmem:[#allocation7 + $0x84] sm:$0xff]
        %v290 = vld [vmem:[#allocation7 + $0x8c] sm:$0xf]
        %v291 = vld [vmem:[#allocation7 + $0x90] sm:$0xff]
        %v292 = vld [vmem:[#allocation7 + $0x98] sm:$0xf]
        %v293 = vld [vmem:[#allocation7 + $0x9c] sm:$0xff]
        %v294 = vld [vmem:[#allocation7 + $0xa4] sm:$0xf]
        %v295 = vld [vmem:[#allocation7 + $0xa8] sm:$0xff]
        %v296 = vld [vmem:[#allocation7 + $0xb0] sm:$0xf]
        %v297 = vld [vmem:[#allocation7 + $0xb4] sm:$0xff]
        %v298 = vld [vmem:[#allocation7 + $0xbc] sm:$0xf]
        %v315 = vunpack.c.l.b16 %v251
        %v316 = vunpack.c.l.b16 %v252
        %v317 = vunpack.c.l.b16 %v253
        %v318 = vunpack.c.l.b16 %v254
        %v319 = vunpack.c.l.b16 %v255
        %v320 = vunpack.c.l.b16 %v256
        %v321 = vunpack.c.l.b16 %v257
        %v322 = vunpack.c.l.b16 %v258
        %v323 = vunpack.c.l.b16 %v259
        %v324 = vunpack.c.l.b16 %v260
        %v325 = vunpack.c.l.b16 %v261
        %v326 = vunpack.c.l.b16 %v262
        %v327 = vunpack.c.l.b16 %v263
        %v328 = vunpack.c.l.b16 %v264
        %v329 = vunpack.c.l.b16 %v265
        %v330 = vunpack.c.l.b16 %v266
        %v331 = vpack.c.b16 %v316, %v315
        %v332 = vpack.c.b16 %v318, %v317
        %v333 = vpack.c.b16 %v320, %v319
        %v334 = vpack.c.b16 %v322, %v321
        %v335 = vpack.c.b16 %v324, %v323
        %v336 = vpack.c.b16 %v326, %v325
        %v337 = vpack.c.b16 %v328, %v327
        %v338 = vpack.c.b16 %v330, %v329
        %v379 = vunpack.c.l.b16 %v267
        %v380 = vunpack.c.h.b16 %v267
        %v381 = vunpack.c.l.b16 %v268
        %v382 = vunpack.c.l.b16 %v269
        %v383 = vunpack.c.h.b16 %v269
        %v384 = vunpack.c.l.b16 %v270
        %v385 = vunpack.c.l.b16 %v271
        %v386 = vunpack.c.h.b16 %v271
        %v387 = vunpack.c.l.b16 %v272
        %v388 = vunpack.c.l.b16 %v273
        %v389 = vunpack.c.h.b16 %v273
        %v390 = vunpack.c.l.b16 %v274
        %v391 = vunpack.c.l.b16 %v275
        %v392 = vunpack.c.h.b16 %v275
        %v393 = vunpack.c.l.b16 %v276
        %v394 = vunpack.c.l.b16 %v277
        %v395 = vunpack.c.h.b16 %v277
        %v396 = vunpack.c.l.b16 %v278
        %v397 = vunpack.c.l.b16 %v279
        %v398 = vunpack.c.h.b16 %v279
        %v399 = vunpack.c.l.b16 %v280
        %v400 = vunpack.c.l.b16 %v281
        %v401 = vunpack.c.h.b16 %v281
        %v402 = vunpack.c.l.b16 %v282
        %v403 = vunpack.c.l.b16 %v283
        %v404 = vunpack.c.h.b16 %v283
        %v405 = vunpack.c.l.b16 %v284
        %v406 = vunpack.c.l.b16 %v285
        %v407 = vunpack.c.h.b16 %v285
        %v408 = vunpack.c.l.b16 %v286
        %v409 = vunpack.c.l.b16 %v287
        %v410 = vunpack.c.h.b16 %v287
        %v411 = vunpack.c.l.b16 %v288
        %v412 = vunpack.c.l.b16 %v289
        %v413 = vunpack.c.h.b16 %v289
        %v414 = vunpack.c.l.b16 %v290
        %v415 = vunpack.c.l.b16 %v291
        %v416 = vunpack.c.h.b16 %v291
        %v417 = vunpack.c.l.b16 %v292
        %v418 = vunpack.c.l.b16 %v293
        %v419 = vunpack.c.h.b16 %v293
        %v420 = vunpack.c.l.b16 %v294
        %v421 = vunpack.c.l.b16 %v295
        %v422 = vunpack.c.h.b16 %v295
        %v423 = vunpack.c.l.b16 %v296
        %v424 = vunpack.c.l.b16 %v297
        %v425 = vunpack.c.h.b16 %v297
        %v426 = vunpack.c.l.b16 %v298
        %v427 = vpack.c.b16 %v382, %v379
        %v428 = vpack.c.b16 %v383, %v380
        %v429 = vpack.c.b16 %v384, %v381
        %v430 = vpack.c.b16 %v388, %v385
        %v431 = vpack.c.b16 %v389, %v386
        %v432 = vpack.c.b16 %v390, %v387
        %v433 = vpack.c.b16 %v394, %v391
        %v434 = vpack.c.b16 %v395, %v392
        %v435 = vpack.c.b16 %v396, %v393
        %v436 = vpack.c.b16 %v400, %v397
        %v437 = vpack.c.b16 %v401, %v398
        %v438 = vpack.c.b16 %v402, %v399
        %v439 = vpack.c.b16 %v406, %v403
        %v440 = vpack.c.b16 %v407, %v404
        %v441 = vpack.c.b16 %v408, %v405
        %v442 = vpack.c.b16 %v412, %v409
        %v443 = vpack.c.b16 %v413, %v410
        %v444 = vpack.c.b16 %v414, %v411
        %v445 = vpack.c.b16 %v418, %v415
        %v446 = vpack.c.b16 %v419, %v416
        %v447 = vpack.c.b16 %v420, %v417
        %v448 = vpack.c.b16 %v424, %v421
        %v449 = vpack.c.b16 %v425, %v422
        %v450 = vpack.c.b16 %v426, %v423
        %475 = vmatpush.bf16.msra.mxu0 %v448
        %476 = vmatpush.bf16.msra.mxu0 %v445
        %477 = vmatpush.bf16.msra.mxu0 %v442
        %478 = vmatpush.bf16.msra.mxu0 %v439
        %479 = vmatpush.bf16.msra.mxu0 %v436
        %480 = vmatpush.bf16.msra.mxu0 %v433
        %481 = vmatpush.bf16.msra.mxu0 %v430
        %482 = vmatpush.bf16.msra.mxu0 %v427
        %483 = vmatmul.bf16.gmra.mxu0 %v331
        %v484 = vpop.f32.mrf.mxu0
        %v485 = vadd.f32 0.0, %v484
        %v486 = vpop.f32.mrf.mxu0
        %v487 = vadd.f32 0.0, %v486
        %488 = vmatmul.bf16.gmra.mxu0 %v332
        %v489 = vpop.f32.mrf.mxu0
        %v490 = vadd.f32 0.0, %v489
        %v491 = vpop.f32.mrf.mxu0
        %v492 = vadd.f32 0.0, %v491
        %493 = vmatmul.bf16.gmra.mxu0 %v333
        %v494 = vpop.f32.mrf.mxu0
        %v495 = vadd.f32 0.0, %v494
        %v496 = vpop.f32.mrf.mxu0
        %v497 = vadd.f32 0.0, %v496
        %498 = vmatmul.bf16.gmra.mxu0 %v334
        %v499 = vpop.f32.mrf.mxu0
        %v500 = vadd.f32 0.0, %v499
        %v501 = vpop.f32.mrf.mxu0
        %v502 = vadd.f32 0.0, %v501
        %503 = vmatmul.bf16.gmra.mxu0 %v335
        %v504 = vpop.f32.mrf.mxu0
        %v505 = vadd.f32 0.0, %v504
        %v506 = vpop.f32.mrf.mxu0
        %v507 = vadd.f32 0.0, %v506
        %508 = vmatmul.bf16.gmra.mxu0 %v336
        %v509 = vpop.f32.mrf.mxu0
        %v510 = vadd.f32 0.0, %v509
        %v511 = vpop.f32.mrf.mxu0
        %v512 = vadd.f32 0.0, %v511
        %513 = vmatmul.bf16.gmra.mxu0 %v337
        %v514 = vpop.f32.mrf.mxu0
        %v515 = vadd.f32 0.0, %v514
        %v516 = vpop.f32.mrf.mxu0
        %v517 = vadd.f32 0.0, %v516
        %518 = vmatmul.bf16.gmra.mxu0 %v338
        %v519 = vpop.f32.mrf.mxu0
        %v520 = vadd.f32 0.0, %v519
        %v521 = vpop.f32.mrf.mxu0
        %v522 = vadd.f32 0.0, %v521
        %523 = vdwg.mxu0
        %524 = vmatpush.bf16.msra.mxu0 %v449
        %525 = vmatpush.bf16.msra.mxu0 %v446
        %526 = vmatpush.bf16.msra.mxu0 %v443
        %527 = vmatpush.bf16.msra.mxu0 %v440
        %528 = vmatpush.bf16.msra.mxu0 %v437
        %529 = vmatpush.bf16.msra.mxu0 %v434
        %530 = vmatpush.bf16.msra.mxu0 %v431
        %531 = vmatpush.bf16.msra.mxu0 %v428
        %532 = vmatmul.bf16.gmra.mxu0 %v331
        %v533 = vpop.f32.mrf.mxu0
        %v534 = vadd.f32 0.0, %v533
        %v535 = vpop.f32.mrf.mxu0
        %v536 = vadd.f32 0.0, %v535
        %537 = vmatmul.bf16.gmra.mxu0 %v332
        %v538 = vpop.f32.mrf.mxu0
        %v539 = vadd.f32 0.0, %v538
        %v540 = vpop.f32.mrf.mxu0
        %v541 = vadd.f32 0.0, %v540
        %542 = vmatmul.bf16.gmra.mxu0 %v333
        %v543 = vpop.f32.mrf.mxu0
        %v544 = vadd.f32 0.0, %v543
        %v545 = vpop.f32.mrf.mxu0
        %v546 = vadd.f32 0.0, %v545
        %547 = vmatmul.bf16.gmra.mxu0 %v334
        %v548 = vpop.f32.mrf.mxu0
        %v549 = vadd.f32 0.0, %v548
        %v550 = vpop.f32.mrf.mxu0
        %v551 = vadd.f32 0.0, %v550
        %552 = vmatmul.bf16.gmra.mxu0 %v335
        %v553 = vpop.f32.mrf.mxu0
        %v554 = vadd.f32 0.0, %v553
        %v555 = vpop.f32.mrf.mxu0
        %v556 = vadd.f32 0.0, %v555
        %557 = vmatmul.bf16.gmra.mxu0 %v336
        %v558 = vpop.f32.mrf.mxu0
        %v559 = vadd.f32 0.0, %v558
        %v560 = vpop.f32.mrf.mxu0
        %v561 = vadd.f32 0.0, %v560
        %562 = vmatmul.bf16.gmra.mxu0 %v337
        %v563 = vpop.f32.mrf.mxu0
        %v564 = vadd.f32 0.0, %v563
        %v565 = vpop.f32.mrf.mxu0
        %v566 = vadd.f32 0.0, %v565
        %567 = vmatmul.bf16.gmra.mxu0 %v338
        %v568 = vpop.f32.mrf.mxu0
        %v569 = vadd.f32 0.0, %v568
        %v570 = vpop.f32.mrf.mxu0
        %v571 = vadd.f32 0.0, %v570
        %572 = vdwg.mxu0
        %573 = vmatpush.bf16.msra.mxu0 %v450
        %574 = vmatpush.bf16.msra.mxu0 %v447
        %575 = vmatpush.bf16.msra.mxu0 %v444
        %576 = vmatpush.bf16.msra.mxu0 %v441
        %577 = vmatpush.bf16.msra.mxu0 %v438
        %578 = vmatpush.bf16.msra.mxu0 %v435
        %579 = vmatpush.bf16.msra.mxu0 %v432
        %580 = vmatpush.bf16.msra.mxu0 %v429
        %581 = vmatmul.bf16.gmra.mxu0 %v331
        %v582 = vpop.f32.mrf.mxu0
        %v583 = vadd.f32 0.0, %v582
        %v584 = vpop.f32.mrf.mxu0
        %v585 = vadd.f32 0.0, %v584
        %586 = vmatmul.bf16.gmra.mxu0 %v332
        %v587 = vpop.f32.mrf.mxu0
        %v588 = vadd.f32 0.0, %v587
        %v589 = vpop.f32.mrf.mxu0
        %v590 = vadd.f32 0.0, %v589
        %591 = vmatmul.bf16.gmra.mxu0 %v333
        %v592 = vpop.f32.mrf.mxu0
        %v593 = vadd.f32 0.0, %v592
        %v594 = vpop.f32.mrf.mxu0
        %v595 = vadd.f32 0.0, %v594
        %596 = vmatmul.bf16.gmra.mxu0 %v334
        %v597 = vpop.f32.mrf.mxu0
        %v598 = vadd.f32 0.0, %v597
        %v599 = vpop.f32.mrf.mxu0
        %v600 = vadd.f32 0.0, %v599
        %601 = vmatmul.bf16.gmra.mxu0 %v335
        %v602 = vpop.f32.mrf.mxu0
        %v603 = vadd.f32 0.0, %v602
        %v604 = vpop.f32.mrf.mxu0
        %v605 = vadd.f32 0.0, %v604
        %606 = vmatmul.bf16.gmra.mxu0 %v336
        %v607 = vpop.f32.mrf.mxu0
        %v608 = vadd.f32 0.0, %v607
        %v609 = vpop.f32.mrf.mxu0
        %v610 = vadd.f32 0.0, %v609
        %611 = vmatmul.bf16.gmra.mxu0 %v337
        %v612 = vpop.f32.mrf.mxu0
        %v613 = vadd.f32 0.0, %v612
        %v614 = vpop.f32.mrf.mxu0
        %v615 = vadd.f32 0.0, %v614
        %616 = vmatmul.bf16.gmra.mxu0 %v338
        %v617 = vpop.f32.mrf.mxu0
        %v618 = vadd.f32 0.0, %v617
        %v619 = vpop.f32.mrf.mxu0
        %v620 = vadd.f32 0.0, %v619
        %621 = vdwg.mxu0
        %v622 = vpack.c.bf16 %v534, %v485
        %v623 = vpack.c.bf16 %v583, %v583
        %v624 = vpack.c.bf16 %v536, %v487
        %v625 = vpack.c.bf16 %v585, %v585
        %v626 = vpack.c.bf16 %v539, %v490
        %v627 = vpack.c.bf16 %v588, %v588
        %v628 = vpack.c.bf16 %v541, %v492
        %v629 = vpack.c.bf16 %v590, %v590
        %v630 = vpack.c.bf16 %v544, %v495
        %v631 = vpack.c.bf16 %v593, %v593
        %v632 = vpack.c.bf16 %v546, %v497
        %v633 = vpack.c.bf16 %v595, %v595
        %v634 = vpack.c.bf16 %v549, %v500
        %v635 = vpack.c.bf16 %v598, %v598
        %v636 = vpack.c.bf16 %v551, %v502
        %v637 = vpack.c.bf16 %v600, %v600
        %v638 = vpack.c.bf16 %v554, %v505
        %v639 = vpack.c.bf16 %v603, %v603
        %v640 = vpack.c.bf16 %v556, %v507
        %v641 = vpack.c.bf16 %v605, %v605
        %v642 = vpack.c.bf16 %v559, %v510
        %v643 = vpack.c.bf16 %v608, %v608
        %v644 = vpack.c.bf16 %v561, %v512
        %v645 = vpack.c.bf16 %v610, %v610
        %v646 = vpack.c.bf16 %v564, %v515
        %v647 = vpack.c.bf16 %v613, %v613
        %v648 = vpack.c.bf16 %v566, %v517
        %v649 = vpack.c.bf16 %v615, %v615
        %v650 = vpack.c.bf16 %v569, %v520
        %v651 = vpack.c.bf16 %v618, %v618
        %v652 = vpack.c.bf16 %v571, %v522
        %v653 = vpack.c.bf16 %v620, %v620
        %654 = vst [vmem:[#allocation2] sm:$0xff] %v622
        %655 = vst [vmem:[#allocation2 + $0x8] sm:$0xf] %v623
        %656 = vst [vmem:[#allocation2 + $0xc] sm:$0xff] %v624
        %657 = vst [vmem:[#allocation2 + $0x14] sm:$0xf] %v625
        %658 = vst [vmem:[#allocation2 + $0x18] sm:$0xff] %v626
        %659 = vst [vmem:[#allocation2 + $0x20] sm:$0xf] %v627
        %660 = vst [vmem:[#allocation2 + $0x24] sm:$0xff] %v628
        %661 = vst [vmem:[#allocation2 + $0x2c] sm:$0xf] %v629
        %662 = vst [vmem:[#allocation2 + $0x30] sm:$0xff] %v630
        %663 = vst [vmem:[#allocation2 + $0x38] sm:$0xf] %v631
        %664 = vst [vmem:[#allocation2 + $0x3c] sm:$0xff] %v632
        %665 = vst [vmem:[#allocation2 + $0x44] sm:$0xf] %v633
        %666 = vst [vmem:[#allocation2 + $0x48] sm:$0xff] %v634
        %667 = vst [vmem:[#allocation2 + $0x50] sm:$0xf] %v635
        %668 = vst [vmem:[#allocation2 + $0x54] sm:$0xff] %v636
        %669 = vst [vmem:[#allocation2 + $0x5c] sm:$0xf] %v637
        %670 = vst [vmem:[#allocation2 + $0x60] sm:$0xff] %v638
        %671 = vst [vmem:[#allocation2 + $0x68] sm:$0xf] %v639
        %672 = vst [vmem:[#allocation2 + $0x6c] sm:$0xff] %v640
        %673 = vst [vmem:[#allocation2 + $0x74] sm:$0xf] %v641
        %674 = vst [vmem:[#allocation2 + $0x78] sm:$0xff] %v642
        %675 = vst [vmem:[#allocation2 + $0x80] sm:$0xf] %v643
        %676 = vst [vmem:[#allocation2 + $0x84] sm:$0xff] %v644
        %677 = vst [vmem:[#allocation2 + $0x8c] sm:$0xf] %v645
        %678 = vst [vmem:[#allocation2 + $0x90] sm:$0xff] %v646
        %679 = vst [vmem:[#allocation2 + $0x98] sm:$0xf] %v647
        %680 = vst [vmem:[#allocation2 + $0x9c] sm:$0xff] %v648
        %681 = vst [vmem:[#allocation2 + $0xa4] sm:$0xf] %v649
        %682 = vst [vmem:[#allocation2 + $0xa8] sm:$0xff] %v650
        %683 = vst [vmem:[#allocation2 + $0xb0] sm:$0xf] %v651
        %684 = vst [vmem:[#allocation2 + $0xb4] sm:$0xff] %v652
        %685 = vst [vmem:[#allocation2 + $0xbc] sm:$0xf] %v653
        %v686 = vlaneseq
        %v687 = vand.u32 %v686, 127
        %vm688 = vcmp.lt.s32.totalorder %v687, 64
        %v689 = vsel %vm688, 0.0, -1e+30
        %v690 = vld [vmem:[#allocation2] sm:$0xf]
        %v691 = vld [vmem:[#allocation2 + $0xc] sm:$0xf]
        %v692 = vld [vmem:[#allocation2 + $0x18] sm:$0xf]
        %v693 = vld [vmem:[#allocation2 + $0x24] sm:$0xf]
        %v694 = vld [vmem:[#allocation2 + $0x30] sm:$0xf]
        %v695 = vld [vmem:[#allocation2 + $0x3c] sm:$0xf]
        %v696 = vld [vmem:[#allocation2 + $0x48] sm:$0xf]
        %v697 = vld [vmem:[#allocation2 + $0x54] sm:$0xf]
        %v698 = vld [vmem:[#allocation2 + $0x60] sm:$0xf]
        %v699 = vld [vmem:[#allocation2 + $0x6c] sm:$0xf]
        %v700 = vld [vmem:[#allocation2 + $0x78] sm:$0xf]
        %v701 = vld [vmem:[#allocation2 + $0x84] sm:$0xf]
        %v702 = vld [vmem:[#allocation2 + $0x90] sm:$0xf]
        %v703 = vld [vmem:[#allocation2 + $0x9c] sm:$0xf]
        %v704 = vld [vmem:[#allocation2 + $0xa8] sm:$0xf]
        %v705 = vld [vmem:[#allocation2 + $0xb4] sm:$0xf]
        %v706 = vld [vmem:[#allocation2 + $0x4] sm:$0xf]
        %v707 = vld [vmem:[#allocation2 + $0x10] sm:$0xf]
        %v708 = vld [vmem:[#allocation2 + $0x1c] sm:$0xf]
        %v709 = vld [vmem:[#allocation2 + $0x28] sm:$0xf]
        %v710 = vld [vmem:[#allocation2 + $0x34] sm:$0xf]
        %v711 = vld [vmem:[#allocation2 + $0x40] sm:$0xf]
        %v712 = vld [vmem:[#allocation2 + $0x4c] sm:$0xf]
        %v713 = vld [vmem:[#allocation2 + $0x58] sm:$0xf]
        %v714 = vld [vmem:[#allocation2 + $0x64] sm:$0xf]
        %v715 = vld [vmem:[#allocation2 + $0x70] sm:$0xf]
        %v716 = vld [vmem:[#allocation2 + $0x7c] sm:$0xf]
        %v717 = vld [vmem:[#allocation2 + $0x88] sm:$0xf]
        %v718 = vld [vmem:[#allocation2 + $0x94] sm:$0xf]
        %v719 = vld [vmem:[#allocation2 + $0xa0] sm:$0xf]
        %v720 = vld [vmem:[#allocation2 + $0xac] sm:$0xf]
        %v721 = vld [vmem:[#allocation2 + $0xb8] sm:$0xf]
        %v722 = vld [vmem:[#allocation2 + $0x8] sm:$0xf]
        %v723 = vld [vmem:[#allocation2 + $0x14] sm:$0xf]
        %v724 = vld [vmem:[#allocation2 + $0x20] sm:$0xf]
        %v725 = vld [vmem:[#allocation2 + $0x2c] sm:$0xf]
        %v726 = vld [vmem:[#allocation2 + $0x38] sm:$0xf]
        %v727 = vld [vmem:[#allocation2 + $0x44] sm:$0xf]
        %v728 = vld [vmem:[#allocation2 + $0x50] sm:$0xf]
        %v729 = vld [vmem:[#allocation2 + $0x5c] sm:$0xf]
        %v730 = vld [vmem:[#allocation2 + $0x68] sm:$0xf]
        %v731 = vld [vmem:[#allocation2 + $0x74] sm:$0xf]
        %v732 = vld [vmem:[#allocation2 + $0x80] sm:$0xf]
        %v733 = vld [vmem:[#allocation2 + $0x8c] sm:$0xf]
        %v734 = vld [vmem:[#allocation2 + $0x98] sm:$0xf]
        %v735 = vld [vmem:[#allocation2 + $0xa4] sm:$0xf]
        %v736 = vld [vmem:[#allocation2 + $0xb0] sm:$0xf]
        %v737 = vld [vmem:[#allocation2 + $0xbc] sm:$0xf]
        %v754 = vunpack.c.l.b16 %v690
        %v755 = vunpack.c.l.b16 %v691
        %v756 = vunpack.c.l.b16 %v692
        %v757 = vunpack.c.l.b16 %v693
        %v758 = vunpack.c.l.b16 %v694
        %v759 = vunpack.c.l.b16 %v695
        %v760 = vunpack.c.l.b16 %v696
        %v761 = vunpack.c.l.b16 %v697
        %v762 = vunpack.c.l.b16 %v698
        %v763 = vunpack.c.l.b16 %v699
        %v764 = vunpack.c.l.b16 %v700
        %v765 = vunpack.c.l.b16 %v701
        %v766 = vunpack.c.l.b16 %v702
        %v767 = vunpack.c.l.b16 %v703
        %v768 = vunpack.c.l.b16 %v704
        %v769 = vunpack.c.l.b16 %v705
        %v770 = vpack.c.b16 %v755, %v754
        %v771 = vpack.c.b16 %v757, %v756
        %v772 = vpack.c.b16 %v759, %v758
        %v773 = vpack.c.b16 %v761, %v760
        %v774 = vpack.c.b16 %v763, %v762
        %v775 = vpack.c.b16 %v765, %v764
        %v776 = vpack.c.b16 %v767, %v766
        %v777 = vpack.c.b16 %v769, %v768
        %v794 = vunpack.c.l.b16 %v706
        %v795 = vunpack.c.l.b16 %v707
        %v796 = vunpack.c.l.b16 %v708
        %v797 = vunpack.c.l.b16 %v709
        %v798 = vunpack.c.l.b16 %v710
        %v799 = vunpack.c.l.b16 %v711
        %v800 = vunpack.c.l.b16 %v712
        %v801 = vunpack.c.l.b16 %v713
        %v802 = vunpack.c.l.b16 %v714
        %v803 = vunpack.c.l.b16 %v715
        %v804 = vunpack.c.l.b16 %v716
        %v805 = vunpack.c.l.b16 %v717
        %v806 = vunpack.c.l.b16 %v718
        %v807 = vunpack.c.l.b16 %v719
        %v808 = vunpack.c.l.b16 %v720
        %v809 = vunpack.c.l.b16 %v721
        %v810 = vpack.c.b16 %v795, %v794
        %v811 = vpack.c.b16 %v797, %v796
        %v812 = vpack.c.b16 %v799, %v798
        %v813 = vpack.c.b16 %v801, %v800
        %v814 = vpack.c.b16 %v803, %v802
        %v815 = vpack.c.b16 %v805, %v804
        %v816 = vpack.c.b16 %v807, %v806
        %v817 = vpack.c.b16 %v809, %v808
        %vm818 = vcmask 130048
        %v820 = vsel %vm818, %v770, 0
        %v823 = vsel %vm818, %v771, 0
        %v826 = vsel %vm818, %v772, 0
        %v829 = vsel %vm818, %v773, 0
        %v832 = vsel %vm818, %v774, 0
        %v835 = vsel %vm818, %v775, 0
        %v838 = vsel %vm818, %v776, 0
        %v841 = vsel %vm818, %v777, 0
        %v844 = vsel %vm818, %v810, 0
        %v847 = vsel %vm818, %v811, 0
        %v850 = vsel %vm818, %v812, 0
        %v853 = vsel %vm818, %v813, 0
        %v856 = vsel %vm818, %v814, 0
        %v859 = vsel %vm818, %v815, 0
        %v862 = vsel %vm818, %v816, 0
        %v865 = vsel %vm818, %v817, 0
        %867 = vmatpush.bf16.xpose.msra.mxu0 %v865
        %868 = vmatpush.bf16.xpose.msra.mxu0 %v862
        %869 = vmatpush.bf16.xpose.msra.mxu0 %v859
        %870 = vmatpush.bf16.xpose.msra.mxu0 %v856
        %871 = vmatpush.bf16.xpose.msra.mxu0 %v853
        %872 = vmatpush.bf16.xpose.msra.mxu0 %v850
        %873 = vmatpush.bf16.xpose.msra.mxu0 %v847
        %874 = vmatpush.bf16.xpose.msra.mxu0 %v844
        %875 = vmatmul.bf16.gmra.mxu0 %v820
        %v876 = vpop.f32.mrf.mxu0
        %v877 = vadd.f32 %v689, %v876
        %v878 = vpop.f32.mrf.mxu0
        %v879 = vadd.f32 %v689, %v878
        %880 = vmatmul.bf16.gmra.mxu0 %v823
        %v881 = vpop.f32.mrf.mxu0
        %v882 = vadd.f32 %v689, %v881
        %v883 = vpop.f32.mrf.mxu0
        %v884 = vadd.f32 %v689, %v883
        %885 = vmatmul.bf16.gmra.mxu0 %v826
        %v886 = vpop.f32.mrf.mxu0
        %v887 = vadd.f32 %v689, %v886
        %v888 = vpop.f32.mrf.mxu0
        %v889 = vadd.f32 %v689, %v888
        %890 = vmatmul.bf16.gmra.mxu0 %v829
        %v891 = vpop.f32.mrf.mxu0
        %v892 = vadd.f32 %v689, %v891
        %v893 = vpop.f32.mrf.mxu0
        %v894 = vadd.f32 %v689, %v893
        %895 = vmatmul.bf16.gmra.mxu0 %v832
        %v896 = vpop.f32.mrf.mxu0
        %v897 = vadd.f32 %v689, %v896
        %v898 = vpop.f32.mrf.mxu0
        %v899 = vadd.f32 %v689, %v898
        %900 = vmatmul.bf16.gmra.mxu0 %v835
        %v901 = vpop.f32.mrf.mxu0
        %v902 = vadd.f32 %v689, %v901
        %v903 = vpop.f32.mrf.mxu0
        %v904 = vadd.f32 %v689, %v903
        %905 = vmatmul.bf16.gmra.mxu0 %v838
        %v906 = vpop.f32.mrf.mxu0
        %v907 = vadd.f32 %v689, %v906
        %v908 = vpop.f32.mrf.mxu0
        %v909 = vadd.f32 %v689, %v908
        %910 = vmatmul.bf16.gmra.mxu0 %v841
        %v911 = vpop.f32.mrf.mxu0
        %v912 = vadd.f32 %v689, %v911
        %v913 = vpop.f32.mrf.mxu0
        %v914 = vadd.f32 %v689, %v913
        %915 = vdwg.mxu0
        %916 = vmax.xlane.f32.xlu0 %v877
        %v917 = vpop.xlane.xlu0 %916
        %918 = vmax.xlane.f32.xlu0 %v879
        %v919 = vpop.xlane.xlu0 %918
        %920 = vmax.xlane.f32.xlu0 %v882
        %v921 = vpop.xlane.xlu0 %920
        %922 = vmax.xlane.f32.xlu0 %v884
        %v923 = vpop.xlane.xlu0 %922
        %924 = vmax.xlane.f32.xlu0 %v887
        %v925 = vpop.xlane.xlu0 %924
        %926 = vmax.xlane.f32.xlu0 %v889
        %v927 = vpop.xlane.xlu0 %926
        %928 = vmax.xlane.f32.xlu0 %v892
        %v929 = vpop.xlane.xlu0 %928
        %930 = vmax.xlane.f32.xlu0 %v894
        %v931 = vpop.xlane.xlu0 %930
        %932 = vmax.xlane.f32.xlu0 %v897
        %v933 = vpop.xlane.xlu0 %932
        %934 = vmax.xlane.f32.xlu0 %v899
        %v935 = vpop.xlane.xlu0 %934
        %936 = vmax.xlane.f32.xlu0 %v902
        %v937 = vpop.xlane.xlu0 %936
        %938 = vmax.xlane.f32.xlu0 %v904
        %v939 = vpop.xlane.xlu0 %938
        %940 = vmax.xlane.f32.xlu0 %v907
        %v941 = vpop.xlane.xlu0 %940
        %942 = vmax.xlane.f32.xlu0 %v909
        %v943 = vpop.xlane.xlu0 %942
        %944 = vmax.xlane.f32.xlu0 %v912
        %v945 = vpop.xlane.xlu0 %944
        %946 = vmax.xlane.f32.xlu0 %v914
        %v947 = vpop.xlane.xlu0 %946
        %v948 = vsub.f32 %v877, %v917
        %v949 = vsub.f32 %v879, %v919
        %v950 = vsub.f32 %v882, %v921
        %v951 = vsub.f32 %v884, %v923
        %v952 = vsub.f32 %v887, %v925
        %v953 = vsub.f32 %v889, %v927
        %v954 = vsub.f32 %v892, %v929
        %v955 = vsub.f32 %v894, %v931
        %v956 = vsub.f32 %v897, %v933
        %v957 = vsub.f32 %v899, %v935
        %v958 = vsub.f32 %v902, %v937
        %v959 = vsub.f32 %v904, %v939
        %v960 = vsub.f32 %v907, %v941
        %v961 = vsub.f32 %v909, %v943
        %v962 = vsub.f32 %v912, %v945
        %v963 = vsub.f32 %v914, %v947
        %v964 = vmul.f32 %v948, 1.442695
        %v965 = vpow.pop %v964
        %v966 = vmul.f32 %v949, 1.442695
        %v967 = vpow.pop %v966
        %v968 = vmul.f32 %v950, 1.442695
        %v969 = vpow.pop %v968
        %v970 = vmul.f32 %v951, 1.442695
        %v971 = vpow.pop %v970
        %v972 = vmul.f32 %v952, 1.442695
        %v973 = vpow.pop %v972
        %v974 = vmul.f32 %v953, 1.442695
        %v975 = vpow.pop %v974
        %v976 = vmul.f32 %v954, 1.442695
        %v977 = vpow.pop %v976
        %v978 = vmul.f32 %v955, 1.442695
        %v979 = vpow.pop %v978
        %v980 = vmul.f32 %v956, 1.442695
        %v981 = vpow.pop %v980
        %v982 = vmul.f32 %v957, 1.442695
        %v983 = vpow.pop %v982
        %v984 = vmul.f32 %v958, 1.442695
        %v985 = vpow.pop %v984
        %v986 = vmul.f32 %v959, 1.442695
        %v987 = vpow.pop %v986
        %v988 = vmul.f32 %v960, 1.442695
        %v989 = vpow.pop %v988
        %v990 = vmul.f32 %v961, 1.442695
        %v991 = vpow.pop %v990
        %v992 = vmul.f32 %v962, 1.442695
        %v993 = vpow.pop %v992
        %v994 = vmul.f32 %v963, 1.442695
        %v995 = vpow.pop %v994
        %996 = vadd.xlane.f32.xlu0 %v965
        %v997 = vpop.xlane.xlu0 %996
        %998 = vadd.xlane.f32.xlu0 %v967
        %v999 = vpop.xlane.xlu0 %998
        %1000 = vadd.xlane.f32.xlu0 %v969
        %v1001 = vpop.xlane.xlu0 %1000
        %1002 = vadd.xlane.f32.xlu0 %v971
        %v1003 = vpop.xlane.xlu0 %1002
        %1004 = vadd.xlane.f32.xlu0 %v973
        %v1005 = vpop.xlane.xlu0 %1004
        %1006 = vadd.xlane.f32.xlu0 %v975
        %v1007 = vpop.xlane.xlu0 %1006
        %1008 = vadd.xlane.f32.xlu0 %v977
        %v1009 = vpop.xlane.xlu0 %1008
        %1010 = vadd.xlane.f32.xlu0 %v979
        %v1011 = vpop.xlane.xlu0 %1010
        %1012 = vadd.xlane.f32.xlu0 %v981
        %v1013 = vpop.xlane.xlu0 %1012
        %1014 = vadd.xlane.f32.xlu0 %v983
        %v1015 = vpop.xlane.xlu0 %1014
        %1016 = vadd.xlane.f32.xlu0 %v985
        %v1017 = vpop.xlane.xlu0 %1016
        %1018 = vadd.xlane.f32.xlu0 %v987
        %v1019 = vpop.xlane.xlu0 %1018
        %1020 = vadd.xlane.f32.xlu0 %v989
        %v1021 = vpop.xlane.xlu0 %1020
        %1022 = vadd.xlane.f32.xlu0 %v991
        %v1023 = vpop.xlane.xlu0 %1022
        %1024 = vadd.xlane.f32.xlu0 %v993
        %v1025 = vpop.xlane.xlu0 %1024
        %1026 = vadd.xlane.f32.xlu0 %v995
        %v1027 = vpop.xlane.xlu0 %1026
        %v1028 = vpack.c.bf16 %v967, %v965
        %v1029 = vpack.c.bf16 %v971, %v969
        %v1030 = vpack.c.bf16 %v975, %v973
        %v1031 = vpack.c.bf16 %v979, %v977
        %v1032 = vpack.c.bf16 %v983, %v981
        %v1033 = vpack.c.bf16 %v987, %v985
        %v1034 = vpack.c.bf16 %v991, %v989
        %v1035 = vpack.c.bf16 %v995, %v993
        %v1052 = vunpack.c.l.b16 %v722
        %v1053 = vunpack.c.l.b16 %v723
        %v1054 = vunpack.c.l.b16 %v724
        %v1055 = vunpack.c.l.b16 %v725
        %v1056 = vunpack.c.l.b16 %v726
        %v1057 = vunpack.c.l.b16 %v727
        %v1058 = vunpack.c.l.b16 %v728
        %v1059 = vunpack.c.l.b16 %v729
        %v1060 = vunpack.c.l.b16 %v730
        %v1061 = vunpack.c.l.b16 %v731
        %v1062 = vunpack.c.l.b16 %v732
        %v1063 = vunpack.c.l.b16 %v733
        %v1064 = vunpack.c.l.b16 %v734
        %v1065 = vunpack.c.l.b16 %v735
        %v1066 = vunpack.c.l.b16 %v736
        %v1067 = vunpack.c.l.b16 %v737
        %v1068 = vpack.c.b16 %v1053, %v1052
        %v1069 = vpack.c.b16 %v1055, %v1054
        %v1070 = vpack.c.b16 %v1057, %v1056
        %v1071 = vpack.c.b16 %v1059, %v1058
        %v1072 = vpack.c.b16 %v1061, %v1060
        %v1073 = vpack.c.b16 %v1063, %v1062
        %v1074 = vpack.c.b16 %v1065, %v1064
        %v1075 = vpack.c.b16 %v1067, %v1066
        %1084 = vmatpush.bf16.msra.mxu0 %v1075
        %1085 = vmatpush.bf16.msra.mxu0 %v1074
        %1086 = vmatpush.bf16.msra.mxu0 %v1073
        %1087 = vmatpush.bf16.msra.mxu0 %v1072
        %1088 = vmatpush.bf16.msra.mxu0 %v1071
        %1089 = vmatpush.bf16.msra.mxu0 %v1070
        %1090 = vmatpush.bf16.msra.mxu0 %v1069
        %1091 = vmatpush.bf16.msra.mxu0 %v1068
        %1092 = vmatmul.bf16.gmra.mxu0 %v1028
        %v1093 = vpop.f32.mrf.mxu0
        %v1094 = vadd.f32 0.0, %v1093
        %v1095 = vpop.f32.mrf.mxu0
        %v1096 = vadd.f32 0.0, %v1095
        %1097 = vmatmul.bf16.gmra.mxu0 %v1029
        %v1098 = vpop.f32.mrf.mxu0
        %v1099 = vadd.f32 0.0, %v1098
        %v1100 = vpop.f32.mrf.mxu0
        %v1101 = vadd.f32 0.0, %v1100
        %1102 = vmatmul.bf16.gmra.mxu0 %v1030
        %v1103 = vpop.f32.mrf.mxu0
        %v1104 = vadd.f32 0.0, %v1103
        %v1105 = vpop.f32.mrf.mxu0
        %v1106 = vadd.f32 0.0, %v1105
        %1107 = vmatmul.bf16.gmra.mxu0 %v1031
        %v1108 = vpop.f32.mrf.mxu0
        %v1109 = vadd.f32 0.0, %v1108
        %v1110 = vpop.f32.mrf.mxu0
        %v1111 = vadd.f32 0.0, %v1110
        %1112 = vmatmul.bf16.gmra.mxu0 %v1032
        %v1113 = vpop.f32.mrf.mxu0
        %v1114 = vadd.f32 0.0, %v1113
        %v1115 = vpop.f32.mrf.mxu0
        %v1116 = vadd.f32 0.0, %v1115
        %1117 = vmatmul.bf16.gmra.mxu0 %v1033
        %v1118 = vpop.f32.mrf.mxu0
        %v1119 = vadd.f32 0.0, %v1118
        %v1120 = vpop.f32.mrf.mxu0
        %v1121 = vadd.f32 0.0, %v1120
        %1122 = vmatmul.bf16.gmra.mxu0 %v1034
        %v1123 = vpop.f32.mrf.mxu0
        %v1124 = vadd.f32 0.0, %v1123
        %v1125 = vpop.f32.mrf.mxu0
        %v1126 = vadd.f32 0.0, %v1125
        %1127 = vmatmul.bf16.gmra.mxu0 %v1035
        %v1128 = vpop.f32.mrf.mxu0
        %v1129 = vadd.f32 0.0, %v1128
        %v1130 = vpop.f32.mrf.mxu0
        %v1131 = vadd.f32 0.0, %v1130
        %1132 = vdwg.mxu0
        %v1133 = vrcp.pop %v997
        %v1134 = vrcp.pop %v999
        %v1135 = vrcp.pop %v1001
        %v1136 = vrcp.pop %v1003
        %v1137 = vrcp.pop %v1005
        %v1138 = vrcp.pop %v1007
        %v1139 = vrcp.pop %v1009
        %v1140 = vrcp.pop %v1011
        %v1141 = vrcp.pop %v1013
        %v1142 = vrcp.pop %v1015
        %v1143 = vrcp.pop %v1017
        %v1144 = vrcp.pop %v1019
        %v1145 = vrcp.pop %v1021
        %v1146 = vrcp.pop %v1023
        %v1147 = vrcp.pop %v1025
        %v1148 = vrcp.pop %v1027
        %v1149 = vmul.f32 %v1094, %v1133
        %v1150 = vmul.f32 %v1096, %v1134
        %v1151 = vmul.f32 %v1099, %v1135
        %v1152 = vmul.f32 %v1101, %v1136
        %v1153 = vmul.f32 %v1104, %v1137
        %v1154 = vmul.f32 %v1106, %v1138
        %v1155 = vmul.f32 %v1109, %v1139
        %v1156 = vmul.f32 %v1111, %v1140
        %v1157 = vmul.f32 %v1114, %v1141
        %v1158 = vmul.f32 %v1116, %v1142
        %v1159 = vmul.f32 %v1119, %v1143
        %v1160 = vmul.f32 %v1121, %v1144
        %v1161 = vmul.f32 %v1124, %v1145
        %v1162 = vmul.f32 %v1126, %v1146
        %v1163 = vmul.f32 %v1129, %v1147
        %v1164 = vmul.f32 %v1131, %v1148
        %1165 = vrot.lane.b32.xlu0 %v770, 112
        %v1166 = vpop.permute.xlu0 %1165
        %1167 = vrot.lane.b32.xlu0 %v771, 112
        %v1168 = vpop.permute.xlu0 %1167
        %1169 = vrot.lane.b32.xlu0 %v772, 112
        %v1170 = vpop.permute.xlu0 %1169
        %1171 = vrot.lane.b32.xlu0 %v773, 112
        %v1172 = vpop.permute.xlu0 %1171
        %1173 = vrot.lane.b32.xlu0 %v774, 112
        %v1174 = vpop.permute.xlu0 %1173
        %1175 = vrot.lane.b32.xlu0 %v775, 112
        %v1176 = vpop.permute.xlu0 %1175
        %1177 = vrot.lane.b32.xlu0 %v776, 112
        %v1178 = vpop.permute.xlu0 %1177
        %1179 = vrot.lane.b32.xlu0 %v777, 112
        %v1180 = vpop.permute.xlu0 %1179
        %1181 = vrot.lane.b32.xlu0 %v810, 112
        %v1182 = vpop.permute.xlu0 %1181
        %1183 = vrot.lane.b32.xlu0 %v811, 112
        %v1184 = vpop.permute.xlu0 %1183
        %1185 = vrot.lane.b32.xlu0 %v812, 112
        %v1186 = vpop.permute.xlu0 %1185
        %1187 = vrot.lane.b32.xlu0 %v813, 112
        %v1188 = vpop.permute.xlu0 %1187
        %1189 = vrot.lane.b32.xlu0 %v814, 112
        %v1190 = vpop.permute.xlu0 %1189
        %1191 = vrot.lane.b32.xlu0 %v815, 112
        %v1192 = vpop.permute.xlu0 %1191
        %1193 = vrot.lane.b32.xlu0 %v816, 112
        %v1194 = vpop.permute.xlu0 %1193
        %1195 = vrot.lane.b32.xlu0 %v817, 112
        %v1196 = vpop.permute.xlu0 %1195
        %v1198 = vsel %vm818, %v1166, 0
        %v1201 = vsel %vm818, %v1168, 0
        %v1204 = vsel %vm818, %v1170, 0
        %v1207 = vsel %vm818, %v1172, 0
        %v1210 = vsel %vm818, %v1174, 0
        %v1213 = vsel %vm818, %v1176, 0
        %v1216 = vsel %vm818, %v1178, 0
        %v1219 = vsel %vm818, %v1180, 0
        %v1222 = vsel %vm818, %v1182, 0
        %v1225 = vsel %vm818, %v1184, 0
        %v1228 = vsel %vm818, %v1186, 0
        %v1231 = vsel %vm818, %v1188, 0
        %v1234 = vsel %vm818, %v1190, 0
        %v1237 = vsel %vm818, %v1192, 0
        %v1240 = vsel %vm818, %v1194, 0
        %v1243 = vsel %vm818, %v1196, 0
        %1245 = vmatpush.bf16.xpose.msra.mxu0 %v1243
        %1246 = vmatpush.bf16.xpose.msra.mxu0 %v1240
        %1247 = vmatpush.bf16.xpose.msra.mxu0 %v1237
        %1248 = vmatpush.bf16.xpose.msra.mxu0 %v1234
        %1249 = vmatpush.bf16.xpose.msra.mxu0 %v1231
        %1250 = vmatpush.bf16.xpose.msra.mxu0 %v1228
        %1251 = vmatpush.bf16.xpose.msra.mxu0 %v1225
        %1252 = vmatpush.bf16.xpose.msra.mxu0 %v1222
        %1253 = vmatmul.bf16.gmra.mxu0 %v1198
        %v1254 = vpop.f32.mrf.mxu0
        %v1255 = vadd.f32 %v689, %v1254
        %v1256 = vpop.f32.mrf.mxu0
        %v1257 = vadd.f32 %v689, %v1256
        %1258 = vmatmul.bf16.gmra.mxu0 %v1201
        %v1259 = vpop.f32.mrf.mxu0
        %v1260 = vadd.f32 %v689, %v1259
        %v1261 = vpop.f32.mrf.mxu0
        %v1262 = vadd.f32 %v689, %v1261
        %1263 = vmatmul.bf16.gmra.mxu0 %v1204
        %v1264 = vpop.f32.mrf.mxu0
        %v1265 = vadd.f32 %v689, %v1264
        %v1266 = vpop.f32.mrf.mxu0
        %v1267 = vadd.f32 %v689, %v1266
        %1268 = vmatmul.bf16.gmra.mxu0 %v1207
        %v1269 = vpop.f32.mrf.mxu0
        %v1270 = vadd.f32 %v689, %v1269
        %v1271 = vpop.f32.mrf.mxu0
        %v1272 = vadd.f32 %v689, %v1271
        %1273 = vmatmul.bf16.gmra.mxu0 %v1210
        %v1274 = vpop.f32.mrf.mxu0
        %v1275 = vadd.f32 %v689, %v1274
        %v1276 = vpop.f32.mrf.mxu0
        %v1277 = vadd.f32 %v689, %v1276
        %1278 = vmatmul.bf16.gmra.mxu0 %v1213
        %v1279 = vpop.f32.mrf.mxu0
        %v1280 = vadd.f32 %v689, %v1279
        %v1281 = vpop.f32.mrf.mxu0
        %v1282 = vadd.f32 %v689, %v1281
        %1283 = vmatmul.bf16.gmra.mxu0 %v1216
        %v1284 = vpop.f32.mrf.mxu0
        %v1285 = vadd.f32 %v689, %v1284
        %v1286 = vpop.f32.mrf.mxu0
        %v1287 = vadd.f32 %v689, %v1286
        %1288 = vmatmul.bf16.gmra.mxu0 %v1219
        %v1289 = vpop.f32.mrf.mxu0
        %v1290 = vadd.f32 %v689, %v1289
        %v1291 = vpop.f32.mrf.mxu0
        %v1292 = vadd.f32 %v689, %v1291
        %1293 = vdwg.mxu0
        %1294 = vmax.xlane.f32.xlu0 %v1255
        %v1295 = vpop.xlane.xlu0 %1294
        %1296 = vmax.xlane.f32.xlu0 %v1257
        %v1297 = vpop.xlane.xlu0 %1296
        %1298 = vmax.xlane.f32.xlu0 %v1260
        %v1299 = vpop.xlane.xlu0 %1298
        %1300 = vmax.xlane.f32.xlu0 %v1262
        %v1301 = vpop.xlane.xlu0 %1300
        %1302 = vmax.xlane.f32.xlu0 %v1265
        %v1303 = vpop.xlane.xlu0 %1302
        %1304 = vmax.xlane.f32.xlu0 %v1267
        %v1305 = vpop.xlane.xlu0 %1304
        %1306 = vmax.xlane.f32.xlu0 %v1270
        %v1307 = vpop.xlane.xlu0 %1306
        %1308 = vmax.xlane.f32.xlu0 %v1272
        %v1309 = vpop.xlane.xlu0 %1308
        %1310 = vmax.xlane.f32.xlu0 %v1275
        %v1311 = vpop.xlane.xlu0 %1310
        %1312 = vmax.xlane.f32.xlu0 %v1277
        %v1313 = vpop.xlane.xlu0 %1312
        %1314 = vmax.xlane.f32.xlu0 %v1280
        %v1315 = vpop.xlane.xlu0 %1314
        %1316 = vmax.xlane.f32.xlu0 %v1282
        %v1317 = vpop.xlane.xlu0 %1316
        %1318 = vmax.xlane.f32.xlu0 %v1285
        %v1319 = vpop.xlane.xlu0 %1318
        %1320 = vmax.xlane.f32.xlu0 %v1287
        %v1321 = vpop.xlane.xlu0 %1320
        %1322 = vmax.xlane.f32.xlu0 %v1290
        %v1323 = vpop.xlane.xlu0 %1322
        %1324 = vmax.xlane.f32.xlu0 %v1292
        %v1325 = vpop.xlane.xlu0 %1324
        %v1326 = vsub.f32 %v1255, %v1295
        %v1327 = vsub.f32 %v1257, %v1297
        %v1328 = vsub.f32 %v1260, %v1299
        %v1329 = vsub.f32 %v1262, %v1301
        %v1330 = vsub.f32 %v1265, %v1303
        %v1331 = vsub.f32 %v1267, %v1305
        %v1332 = vsub.f32 %v1270, %v1307
        %v1333 = vsub.f32 %v1272, %v1309
        %v1334 = vsub.f32 %v1275, %v1311
        %v1335 = vsub.f32 %v1277, %v1313
        %v1336 = vsub.f32 %v1280, %v1315
        %v1337 = vsub.f32 %v1282, %v1317
        %v1338 = vsub.f32 %v1285, %v1319
        %v1339 = vsub.f32 %v1287, %v1321
        %v1340 = vsub.f32 %v1290, %v1323
        %v1341 = vsub.f32 %v1292, %v1325
        %v1342 = vmul.f32 %v1326, 1.442695
        %v1343 = vpow.pop %v1342
        %v1344 = vmul.f32 %v1327, 1.442695
        %v1345 = vpow.pop %v1344
        %v1346 = vmul.f32 %v1328, 1.442695
        %v1347 = vpow.pop %v1346
        %v1348 = vmul.f32 %v1329, 1.442695
        %v1349 = vpow.pop %v1348
        %v1350 = vmul.f32 %v1330, 1.442695
        %v1351 = vpow.pop %v1350
        %v1352 = vmul.f32 %v1331, 1.442695
        %v1353 = vpow.pop %v1352
        %v1354 = vmul.f32 %v1332, 1.442695
        %v1355 = vpow.pop %v1354
        %v1356 = vmul.f32 %v1333, 1.442695
        %v1357 = vpow.pop %v1356
        %v1358 = vmul.f32 %v1334, 1.442695
        %v1359 = vpow.pop %v1358
        %v1360 = vmul.f32 %v1335, 1.442695
        %v1361 = vpow.pop %v1360
        %v1362 = vmul.f32 %v1336, 1.442695
        %v1363 = vpow.pop %v1362
        %v1364 = vmul.f32 %v1337, 1.442695
        %v1365 = vpow.pop %v1364
        %v1366 = vmul.f32 %v1338, 1.442695
        %v1367 = vpow.pop %v1366
        %v1368 = vmul.f32 %v1339, 1.442695
        %v1369 = vpow.pop %v1368
        %v1370 = vmul.f32 %v1340, 1.442695
        %v1371 = vpow.pop %v1370
        %v1372 = vmul.f32 %v1341, 1.442695
        %v1373 = vpow.pop %v1372
        %1374 = vadd.xlane.f32.xlu0 %v1343
        %v1375 = vpop.xlane.xlu0 %1374
        %1376 = vadd.xlane.f32.xlu0 %v1345
        %v1377 = vpop.xlane.xlu0 %1376
        %1378 = vadd.xlane.f32.xlu0 %v1347
        %v1379 = vpop.xlane.xlu0 %1378
        %1380 = vadd.xlane.f32.xlu0 %v1349
        %v1381 = vpop.xlane.xlu0 %1380
        %1382 = vadd.xlane.f32.xlu0 %v1351
        %v1383 = vpop.xlane.xlu0 %1382
        %1384 = vadd.xlane.f32.xlu0 %v1353
        %v1385 = vpop.xlane.xlu0 %1384
        %1386 = vadd.xlane.f32.xlu0 %v1355
        %v1387 = vpop.xlane.xlu0 %1386
        %1388 = vadd.xlane.f32.xlu0 %v1357
        %v1389 = vpop.xlane.xlu0 %1388
        %1390 = vadd.xlane.f32.xlu0 %v1359
        %v1391 = vpop.xlane.xlu0 %1390
        %1392 = vadd.xlane.f32.xlu0 %v1361
        %v1393 = vpop.xlane.xlu0 %1392
        %1394 = vadd.xlane.f32.xlu0 %v1363
        %v1395 = vpop.xlane.xlu0 %1394
        %1396 = vadd.xlane.f32.xlu0 %v1365
        %v1397 = vpop.xlane.xlu0 %1396
        %1398 = vadd.xlane.f32.xlu0 %v1367
        %v1399 = vpop.xlane.xlu0 %1398
        %1400 = vadd.xlane.f32.xlu0 %v1369
        %v1401 = vpop.xlane.xlu0 %1400
        %1402 = vadd.xlane.f32.xlu0 %v1371
        %v1403 = vpop.xlane.xlu0 %1402
        %1404 = vadd.xlane.f32.xlu0 %v1373
        %v1405 = vpop.xlane.xlu0 %1404
        %v1406 = vpack.c.bf16 %v1345, %v1343
        %v1407 = vpack.c.bf16 %v1349, %v1347
        %v1408 = vpack.c.bf16 %v1353, %v1351
        %v1409 = vpack.c.bf16 %v1357, %v1355
        %v1410 = vpack.c.bf16 %v1361, %v1359
        %v1411 = vpack.c.bf16 %v1365, %v1363
        %v1412 = vpack.c.bf16 %v1369, %v1367
        %v1413 = vpack.c.bf16 %v1373, %v1371
        %1414 = vrot.lane.b32.xlu0 %v1068, 112
        %v1415 = vpop.permute.xlu0 %1414
        %1416 = vrot.lane.b32.xlu0 %v1069, 112
        %v1417 = vpop.permute.xlu0 %1416
        %1418 = vrot.lane.b32.xlu0 %v1070, 112
        %v1419 = vpop.permute.xlu0 %1418
        %1420 = vrot.lane.b32.xlu0 %v1071, 112
        %v1421 = vpop.permute.xlu0 %1420
        %1422 = vrot.lane.b32.xlu0 %v1072, 112
        %v1423 = vpop.permute.xlu0 %1422
        %1424 = vrot.lane.b32.xlu0 %v1073, 112
        %v1425 = vpop.permute.xlu0 %1424
        %1426 = vrot.lane.b32.xlu0 %v1074, 112
        %v1427 = vpop.permute.xlu0 %1426
        %1428 = vrot.lane.b32.xlu0 %v1075, 112
        %v1429 = vpop.permute.xlu0 %1428
        %1438 = vmatpush.bf16.msra.mxu0 %v1429
        %1439 = vmatpush.bf16.msra.mxu0 %v1427
        %1440 = vmatpush.bf16.msra.mxu0 %v1425
        %1441 = vmatpush.bf16.msra.mxu0 %v1423
        %1442 = vmatpush.bf16.msra.mxu0 %v1421
        %1443 = vmatpush.bf16.msra.mxu0 %v1419
        %1444 = vmatpush.bf16.msra.mxu0 %v1417
        %1445 = vmatpush.bf16.msra.mxu0 %v1415
        %1446 = vmatmul.bf16.gmra.mxu0 %v1406
        %v1447 = vpop.f32.mrf.mxu0
        %v1448 = vadd.f32 0.0, %v1447
        %v1449 = vpop.f32.mrf.mxu0
        %v1450 = vadd.f32 0.0, %v1449
        %1451 = vmatmul.bf16.gmra.mxu0 %v1407
        %v1452 = vpop.f32.mrf.mxu0
        %v1453 = vadd.f32 0.0, %v1452
        %v1454 = vpop.f32.mrf.mxu0
        %v1455 = vadd.f32 0.0, %v1454
        %1456 = vmatmul.bf16.gmra.mxu0 %v1408
        %v1457 = vpop.f32.mrf.mxu0
        %v1458 = vadd.f32 0.0, %v1457
        %v1459 = vpop.f32.mrf.mxu0
        %v1460 = vadd.f32 0.0, %v1459
        %1461 = vmatmul.bf16.gmra.mxu0 %v1409
        %v1462 = vpop.f32.mrf.mxu0
        %v1463 = vadd.f32 0.0, %v1462
        %v1464 = vpop.f32.mrf.mxu0
        %v1465 = vadd.f32 0.0, %v1464
        %1466 = vmatmul.bf16.gmra.mxu0 %v1410
        %v1467 = vpop.f32.mrf.mxu0
        %v1468 = vadd.f32 0.0, %v1467
        %v1469 = vpop.f32.mrf.mxu0
        %v1470 = vadd.f32 0.0, %v1469
        %1471 = vmatmul.bf16.gmra.mxu0 %v1411
        %v1472 = vpop.f32.mrf.mxu0
        %v1473 = vadd.f32 0.0, %v1472
        %v1474 = vpop.f32.mrf.mxu0
        %v1475 = vadd.f32 0.0, %v1474
        %1476 = vmatmul.bf16.gmra.mxu0 %v1412
        %v1477 = vpop.f32.mrf.mxu0
        %v1478 = vadd.f32 0.0, %v1477
        %v1479 = vpop.f32.mrf.mxu0
        %v1480 = vadd.f32 0.0, %v1479
        %1481 = vmatmul.bf16.gmra.mxu0 %v1413
        %v1482 = vpop.f32.mrf.mxu0
        %v1483 = vadd.f32 0.0, %v1482
        %v1484 = vpop.f32.mrf.mxu0
        %v1485 = vadd.f32 0.0, %v1484
        %1486 = vdwg.mxu0
        %v1487 = vrcp.pop %v1375
        %v1488 = vrcp.pop %v1377
        %v1489 = vrcp.pop %v1379
        %v1490 = vrcp.pop %v1381
        %v1491 = vrcp.pop %v1383
        %v1492 = vrcp.pop %v1385
        %v1493 = vrcp.pop %v1387
        %v1494 = vrcp.pop %v1389
        %v1495 = vrcp.pop %v1391
        %v1496 = vrcp.pop %v1393
        %v1497 = vrcp.pop %v1395
        %v1498 = vrcp.pop %v1397
        %v1499 = vrcp.pop %v1399
        %v1500 = vrcp.pop %v1401
        %v1501 = vrcp.pop %v1403
        %v1502 = vrcp.pop %v1405
        %v1503 = vmul.f32 %v1448, %v1487
        %v1504 = vmul.f32 %v1450, %v1488
        %v1505 = vmul.f32 %v1453, %v1489
        %v1506 = vmul.f32 %v1455, %v1490
        %v1507 = vmul.f32 %v1458, %v1491
        %v1508 = vmul.f32 %v1460, %v1492
        %v1509 = vmul.f32 %v1463, %v1493
        %v1510 = vmul.f32 %v1465, %v1494
        %v1511 = vmul.f32 %v1468, %v1495
        %v1512 = vmul.f32 %v1470, %v1496
        %v1513 = vmul.f32 %v1473, %v1497
        %v1514 = vmul.f32 %v1475, %v1498
        %v1515 = vmul.f32 %v1478, %v1499
        %v1516 = vmul.f32 %v1480, %v1500
        %v1517 = vmul.f32 %v1483, %v1501
        %v1518 = vmul.f32 %v1485, %v1502
        %1519 = vrot.lane.b32.xlu0 %v770, 96
        %v1520 = vpop.permute.xlu0 %1519
        %1521 = vrot.lane.b32.xlu0 %v771, 96
        %v1522 = vpop.permute.xlu0 %1521
        %1523 = vrot.lane.b32.xlu0 %v772, 96
        %v1524 = vpop.permute.xlu0 %1523
        %1525 = vrot.lane.b32.xlu0 %v773, 96
        %v1526 = vpop.permute.xlu0 %1525
        %1527 = vrot.lane.b32.xlu0 %v774, 96
        %v1528 = vpop.permute.xlu0 %1527
        %1529 = vrot.lane.b32.xlu0 %v775, 96
        %v1530 = vpop.permute.xlu0 %1529
        %1531 = vrot.lane.b32.xlu0 %v776, 96
        %v1532 = vpop.permute.xlu0 %1531
        %1533 = vrot.lane.b32.xlu0 %v777, 96
        %v1534 = vpop.permute.xlu0 %1533
        %1535 = vrot.lane.b32.xlu0 %v810, 96
        %v1536 = vpop.permute.xlu0 %1535
        %1537 = vrot.lane.b32.xlu0 %v811, 96
        %v1538 = vpop.permute.xlu0 %1537
        %1539 = vrot.lane.b32.xlu0 %v812, 96
        %v1540 = vpop.permute.xlu0 %1539
        %1541 = vrot.lane.b32.xlu0 %v813, 96
        %v1542 = vpop.permute.xlu0 %1541
        %1543 = vrot.lane.b32.xlu0 %v814, 96
        %v1544 = vpop.permute.xlu0 %1543
        %1545 = vrot.lane.b32.xlu0 %v815, 96
        %v1546 = vpop.permute.xlu0 %1545
        %1547 = vrot.lane.b32.xlu0 %v816, 96
        %v1548 = vpop.permute.xlu0 %1547
        %1549 = vrot.lane.b32.xlu0 %v817, 96
        %v1550 = vpop.permute.xlu0 %1549
        %v1552 = vsel %vm818, %v1520, 0
        %v1555 = vsel %vm818, %v1522, 0
        %v1558 = vsel %vm818, %v1524, 0
        %v1561 = vsel %vm818, %v1526, 0
        %v1564 = vsel %vm818, %v1528, 0
        %v1567 = vsel %vm818, %v1530, 0
        %v1570 = vsel %vm818, %v1532, 0
        %v1573 = vsel %vm818, %v1534, 0
        %v1576 = vsel %vm818, %v1536, 0
        %v1579 = vsel %vm818, %v1538, 0
        %v1582 = vsel %vm818, %v1540, 0
        %v1585 = vsel %vm818, %v1542, 0
        %v1588 = vsel %vm818, %v1544, 0
        %v1591 = vsel %vm818, %v1546, 0
        %v1594 = vsel %vm818, %v1548, 0
        %v1597 = vsel %vm818, %v1550, 0
        %1599 = vmatpush.bf16.xpose.msra.mxu0 %v1597
        %1600 = vmatpush.bf16.xpose.msra.mxu0 %v1594
        %1601 = vmatpush.bf16.xpose.msra.mxu0 %v1591
        %1602 = vmatpush.bf16.xpose.msra.mxu0 %v1588
        %1603 = vmatpush.bf16.xpose.msra.mxu0 %v1585
        %1604 = vmatpush.bf16.xpose.msra.mxu0 %v1582
        %1605 = vmatpush.bf16.xpose.msra.mxu0 %v1579
        %1606 = vmatpush.bf16.xpose.msra.mxu0 %v1576
        %1607 = vmatmul.bf16.gmra.mxu0 %v1552
        %v1608 = vpop.f32.mrf.mxu0
        %v1609 = vadd.f32 %v689, %v1608
        %v1610 = vpop.f32.mrf.mxu0
        %v1611 = vadd.f32 %v689, %v1610
        %1612 = vmatmul.bf16.gmra.mxu0 %v1555
        %v1613 = vpop.f32.mrf.mxu0
        %v1614 = vadd.f32 %v689, %v1613
        %v1615 = vpop.f32.mrf.mxu0
        %v1616 = vadd.f32 %v689, %v1615
        %1617 = vmatmul.bf16.gmra.mxu0 %v1558
        %v1618 = vpop.f32.mrf.mxu0
        %v1619 = vadd.f32 %v689, %v1618
        %v1620 = vpop.f32.mrf.mxu0
        %v1621 = vadd.f32 %v689, %v1620
        %1622 = vmatmul.bf16.gmra.mxu0 %v1561
        %v1623 = vpop.f32.mrf.mxu0
        %v1624 = vadd.f32 %v689, %v1623
        %v1625 = vpop.f32.mrf.mxu0
        %v1626 = vadd.f32 %v689, %v1625
        %1627 = vmatmul.bf16.gmra.mxu0 %v1564
        %v1628 = vpop.f32.mrf.mxu0
        %v1629 = vadd.f32 %v689, %v1628
        %v1630 = vpop.f32.mrf.mxu0
        %v1631 = vadd.f32 %v689, %v1630
        %1632 = vmatmul.bf16.gmra.mxu0 %v1567
        %v1633 = vpop.f32.mrf.mxu0
        %v1634 = vadd.f32 %v689, %v1633
        %v1635 = vpop.f32.mrf.mxu0
        %v1636 = vadd.f32 %v689, %v1635
        %1637 = vmatmul.bf16.gmra.mxu0 %v1570
        %v1638 = vpop.f32.mrf.mxu0
        %v1639 = vadd.f32 %v689, %v1638
        %v1640 = vpop.f32.mrf.mxu0
        %v1641 = vadd.f32 %v689, %v1640
        %1642 = vmatmul.bf16.gmra.mxu0 %v1573
        %v1643 = vpop.f32.mrf.mxu0
        %v1644 = vadd.f32 %v689, %v1643
        %v1645 = vpop.f32.mrf.mxu0
        %v1646 = vadd.f32 %v689, %v1645
        %1647 = vdwg.mxu0
        %1648 = vmax.xlane.f32.xlu0 %v1609
        %v1649 = vpop.xlane.xlu0 %1648
        %1650 = vmax.xlane.f32.xlu0 %v1611
        %v1651 = vpop.xlane.xlu0 %1650
        %1652 = vmax.xlane.f32.xlu0 %v1614
        %v1653 = vpop.xlane.xlu0 %1652
        %1654 = vmax.xlane.f32.xlu0 %v1616
        %v1655 = vpop.xlane.xlu0 %1654
        %1656 = vmax.xlane.f32.xlu0 %v1619
        %v1657 = vpop.xlane.xlu0 %1656
        %1658 = vmax.xlane.f32.xlu0 %v1621
        %v1659 = vpop.xlane.xlu0 %1658
        %1660 = vmax.xlane.f32.xlu0 %v1624
        %v1661 = vpop.xlane.xlu0 %1660
        %1662 = vmax.xlane.f32.xlu0 %v1626
        %v1663 = vpop.xlane.xlu0 %1662
        %1664 = vmax.xlane.f32.xlu0 %v1629
        %v1665 = vpop.xlane.xlu0 %1664
        %1666 = vmax.xlane.f32.xlu0 %v1631
        %v1667 = vpop.xlane.xlu0 %1666
        %1668 = vmax.xlane.f32.xlu0 %v1634
        %v1669 = vpop.xlane.xlu0 %1668
        %1670 = vmax.xlane.f32.xlu0 %v1636
        %v1671 = vpop.xlane.xlu0 %1670
        %1672 = vmax.xlane.f32.xlu0 %v1639
        %v1673 = vpop.xlane.xlu0 %1672
        %1674 = vmax.xlane.f32.xlu0 %v1641
        %v1675 = vpop.xlane.xlu0 %1674
        %1676 = vmax.xlane.f32.xlu0 %v1644
        %v1677 = vpop.xlane.xlu0 %1676
        %1678 = vmax.xlane.f32.xlu0 %v1646
        %v1679 = vpop.xlane.xlu0 %1678
        %v1680 = vsub.f32 %v1609, %v1649
        %v1681 = vsub.f32 %v1611, %v1651
        %v1682 = vsub.f32 %v1614, %v1653
        %v1683 = vsub.f32 %v1616, %v1655
        %v1684 = vsub.f32 %v1619, %v1657
        %v1685 = vsub.f32 %v1621, %v1659
        %v1686 = vsub.f32 %v1624, %v1661
        %v1687 = vsub.f32 %v1626, %v1663
        %v1688 = vsub.f32 %v1629, %v1665
        %v1689 = vsub.f32 %v1631, %v1667
        %v1690 = vsub.f32 %v1634, %v1669
        %v1691 = vsub.f32 %v1636, %v1671
        %v1692 = vsub.f32 %v1639, %v1673
        %v1693 = vsub.f32 %v1641, %v1675
        %v1694 = vsub.f32 %v1644, %v1677
        %v1695 = vsub.f32 %v1646, %v1679
        %v1696 = vmul.f32 %v1680, 1.442695
        %v1697 = vpow.pop %v1696
        %v1698 = vmul.f32 %v1681, 1.442695
        %v1699 = vpow.pop %v1698
        %v1700 = vmul.f32 %v1682, 1.442695
        %v1701 = vpow.pop %v1700
        %v1702 = vmul.f32 %v1683, 1.442695
        %v1703 = vpow.pop %v1702
        %v1704 = vmul.f32 %v1684, 1.442695
        %v1705 = vpow.pop %v1704
        %v1706 = vmul.f32 %v1685, 1.442695
        %v1707 = vpow.pop %v1706
        %v1708 = vmul.f32 %v1686, 1.442695
        %v1709 = vpow.pop %v1708
        %v1710 = vmul.f32 %v1687, 1.442695
        %v1711 = vpow.pop %v1710
        %v1712 = vmul.f32 %v1688, 1.442695
        %v1713 = vpow.pop %v1712
        %v1714 = vmul.f32 %v1689, 1.442695
        %v1715 = vpow.pop %v1714
        %v1716 = vmul.f32 %v1690, 1.442695
        %v1717 = vpow.pop %v1716
        %v1718 = vmul.f32 %v1691, 1.442695
        %v1719 = vpow.pop %v1718
        %v1720 = vmul.f32 %v1692, 1.442695
        %v1721 = vpow.pop %v1720
        %v1722 = vmul.f32 %v1693, 1.442695
        %v1723 = vpow.pop %v1722
        %v1724 = vmul.f32 %v1694, 1.442695
        %v1725 = vpow.pop %v1724
        %v1726 = vmul.f32 %v1695, 1.442695
        %v1727 = vpow.pop %v1726
        %1728 = vadd.xlane.f32.xlu0 %v1697
        %v1729 = vpop.xlane.xlu0 %1728
        %1730 = vadd.xlane.f32.xlu0 %v1699
        %v1731 = vpop.xlane.xlu0 %1730
        %1732 = vadd.xlane.f32.xlu0 %v1701
        %v1733 = vpop.xlane.xlu0 %1732
        %1734 = vadd.xlane.f32.xlu0 %v1703
        %v1735 = vpop.xlane.xlu0 %1734
        %1736 = vadd.xlane.f32.xlu0 %v1705
        %v1737 = vpop.xlane.xlu0 %1736
        %1738 = vadd.xlane.f32.xlu0 %v1707
        %v1739 = vpop.xlane.xlu0 %1738
        %1740 = vadd.xlane.f32.xlu0 %v1709
        %v1741 = vpop.xlane.xlu0 %1740
        %1742 = vadd.xlane.f32.xlu0 %v1711
        %v1743 = vpop.xlane.xlu0 %1742
        %1744 = vadd.xlane.f32.xlu0 %v1713
        %v1745 = vpop.xlane.xlu0 %1744
        %1746 = vadd.xlane.f32.xlu0 %v1715
        %v1747 = vpop.xlane.xlu0 %1746
        %1748 = vadd.xlane.f32.xlu0 %v1717
        %v1749 = vpop.xlane.xlu0 %1748
        %1750 = vadd.xlane.f32.xlu0 %v1719
        %v1751 = vpop.xlane.xlu0 %1750
        %1752 = vadd.xlane.f32.xlu0 %v1721
        %v1753 = vpop.xlane.xlu0 %1752
        %1754 = vadd.xlane.f32.xlu0 %v1723
        %v1755 = vpop.xlane.xlu0 %1754
        %1756 = vadd.xlane.f32.xlu0 %v1725
        %v1757 = vpop.xlane.xlu0 %1756
        %1758 = vadd.xlane.f32.xlu0 %v1727
        %v1759 = vpop.xlane.xlu0 %1758
        %v1760 = vpack.c.bf16 %v1699, %v1697
        %v1761 = vpack.c.bf16 %v1703, %v1701
        %v1762 = vpack.c.bf16 %v1707, %v1705
        %v1763 = vpack.c.bf16 %v1711, %v1709
        %v1764 = vpack.c.bf16 %v1715, %v1713
        %v1765 = vpack.c.bf16 %v1719, %v1717
        %v1766 = vpack.c.bf16 %v1723, %v1721
        %v1767 = vpack.c.bf16 %v1727, %v1725
        %1768 = vrot.lane.b32.xlu0 %v1068, 96
        %v1769 = vpop.permute.xlu0 %1768
        %1770 = vrot.lane.b32.xlu0 %v1069, 96
        %v1771 = vpop.permute.xlu0 %1770
        %1772 = vrot.lane.b32.xlu0 %v1070, 96
        %v1773 = vpop.permute.xlu0 %1772
        %1774 = vrot.lane.b32.xlu0 %v1071, 96
        %v1775 = vpop.permute.xlu0 %1774
        %1776 = vrot.lane.b32.xlu0 %v1072, 96
        %v1777 = vpop.permute.xlu0 %1776
        %1778 = vrot.lane.b32.xlu0 %v1073, 96
        %v1779 = vpop.permute.xlu0 %1778
        %1780 = vrot.lane.b32.xlu0 %v1074, 96
        %v1781 = vpop.permute.xlu0 %1780
        %1782 = vrot.lane.b32.xlu0 %v1075, 96
        %v1783 = vpop.permute.xlu0 %1782
        %1792 = vmatpush.bf16.msra.mxu0 %v1783
        %1793 = vmatpush.bf16.msra.mxu0 %v1781
        %1794 = vmatpush.bf16.msra.mxu0 %v1779
        %1795 = vmatpush.bf16.msra.mxu0 %v1777
        %1796 = vmatpush.bf16.msra.mxu0 %v1775
        %1797 = vmatpush.bf16.msra.mxu0 %v1773
        %1798 = vmatpush.bf16.msra.mxu0 %v1771
        %1799 = vmatpush.bf16.msra.mxu0 %v1769
        %1800 = vmatmul.bf16.gmra.mxu0 %v1760
        %v1801 = vpop.f32.mrf.mxu0
        %v1802 = vadd.f32 0.0, %v1801
        %v1803 = vpop.f32.mrf.mxu0
        %v1804 = vadd.f32 0.0, %v1803
        %1805 = vmatmul.bf16.gmra.mxu0 %v1761
        %v1806 = vpop.f32.mrf.mxu0
        %v1807 = vadd.f32 0.0, %v1806
        %v1808 = vpop.f32.mrf.mxu0
        %v1809 = vadd.f32 0.0, %v1808
        %1810 = vmatmul.bf16.gmra.mxu0 %v1762
        %v1811 = vpop.f32.mrf.mxu0
        %v1812 = vadd.f32 0.0, %v1811
        %v1813 = vpop.f32.mrf.mxu0
        %v1814 = vadd.f32 0.0, %v1813
        %1815 = vmatmul.bf16.gmra.mxu0 %v1763
        %v1816 = vpop.f32.mrf.mxu0
        %v1817 = vadd.f32 0.0, %v1816
        %v1818 = vpop.f32.mrf.mxu0
        %v1819 = vadd.f32 0.0, %v1818
        %1820 = vmatmul.bf16.gmra.mxu0 %v1764
        %v1821 = vpop.f32.mrf.mxu0
        %v1822 = vadd.f32 0.0, %v1821
        %v1823 = vpop.f32.mrf.mxu0
        %v1824 = vadd.f32 0.0, %v1823
        %1825 = vmatmul.bf16.gmra.mxu0 %v1765
        %v1826 = vpop.f32.mrf.mxu0
        %v1827 = vadd.f32 0.0, %v1826
        %v1828 = vpop.f32.mrf.mxu0
        %v1829 = vadd.f32 0.0, %v1828
        %1830 = vmatmul.bf16.gmra.mxu0 %v1766
        %v1831 = vpop.f32.mrf.mxu0
        %v1832 = vadd.f32 0.0, %v1831
        %v1833 = vpop.f32.mrf.mxu0
        %v1834 = vadd.f32 0.0, %v1833
        %1835 = vmatmul.bf16.gmra.mxu0 %v1767
        %v1836 = vpop.f32.mrf.mxu0
        %v1837 = vadd.f32 0.0, %v1836
        %v1838 = vpop.f32.mrf.mxu0
        %v1839 = vadd.f32 0.0, %v1838
        %1840 = vdwg.mxu0
        %v1841 = vrcp.pop %v1729
        %v1842 = vrcp.pop %v1731
        %v1843 = vrcp.pop %v1733
        %v1844 = vrcp.pop %v1735
        %v1845 = vrcp.pop %v1737
        %v1846 = vrcp.pop %v1739
        %v1847 = vrcp.pop %v1741
        %v1848 = vrcp.pop %v1743
        %v1849 = vrcp.pop %v1745
        %v1850 = vrcp.pop %v1747
        %v1851 = vrcp.pop %v1749
        %v1852 = vrcp.pop %v1751
        %v1853 = vrcp.pop %v1753
        %v1854 = vrcp.pop %v1755
        %v1855 = vrcp.pop %v1757
        %v1856 = vrcp.pop %v1759
        %v1857 = vmul.f32 %v1802, %v1841
        %v1858 = vmul.f32 %v1804, %v1842
        %v1859 = vmul.f32 %v1807, %v1843
        %v1860 = vmul.f32 %v1809, %v1844
        %v1861 = vmul.f32 %v1812, %v1845
        %v1862 = vmul.f32 %v1814, %v1846
        %v1863 = vmul.f32 %v1817, %v1847
        %v1864 = vmul.f32 %v1819, %v1848
        %v1865 = vmul.f32 %v1822, %v1849
        %v1866 = vmul.f32 %v1824, %v1850
        %v1867 = vmul.f32 %v1827, %v1851
        %v1868 = vmul.f32 %v1829, %v1852
        %v1869 = vmul.f32 %v1832, %v1853
        %v1870 = vmul.f32 %v1834, %v1854
        %v1871 = vmul.f32 %v1837, %v1855
        %v1872 = vmul.f32 %v1839, %v1856
        %1873 = vrot.lane.b32.xlu0 %v770, 80
        %v1874 = vpop.permute.xlu0 %1873
        %1875 = vrot.lane.b32.xlu0 %v771, 80
        %v1876 = vpop.permute.xlu0 %1875
        %1877 = vrot.lane.b32.xlu0 %v772, 80
        %v1878 = vpop.permute.xlu0 %1877
        %1879 = vrot.lane.b32.xlu0 %v773, 80
        %v1880 = vpop.permute.xlu0 %1879
        %1881 = vrot.lane.b32.xlu0 %v774, 80
        %v1882 = vpop.permute.xlu0 %1881
        %1883 = vrot.lane.b32.xlu0 %v775, 80
        %v1884 = vpop.permute.xlu0 %1883
        %1885 = vrot.lane.b32.xlu0 %v776, 80
        %v1886 = vpop.permute.xlu0 %1885
        %1887 = vrot.lane.b32.xlu0 %v777, 80
        %v1888 = vpop.permute.xlu0 %1887
        %1889 = vrot.lane.b32.xlu0 %v810, 80
        %v1890 = vpop.permute.xlu0 %1889
        %1891 = vrot.lane.b32.xlu0 %v811, 80
        %v1892 = vpop.permute.xlu0 %1891
        %1893 = vrot.lane.b32.xlu0 %v812, 80
        %v1894 = vpop.permute.xlu0 %1893
        %1895 = vrot.lane.b32.xlu0 %v813, 80
        %v1896 = vpop.permute.xlu0 %1895
        %1897 = vrot.lane.b32.xlu0 %v814, 80
        %v1898 = vpop.permute.xlu0 %1897
        %1899 = vrot.lane.b32.xlu0 %v815, 80
        %v1900 = vpop.permute.xlu0 %1899
        %1901 = vrot.lane.b32.xlu0 %v816, 80
        %v1902 = vpop.permute.xlu0 %1901
        %1903 = vrot.lane.b32.xlu0 %v817, 80
        %v1904 = vpop.permute.xlu0 %1903
        %v1906 = vsel %vm818, %v1874, 0
        %v1909 = vsel %vm818, %v1876, 0
        %v1912 = vsel %vm818, %v1878, 0
        %v1915 = vsel %vm818, %v1880, 0
        %v1918 = vsel %vm818, %v1882, 0
        %v1921 = vsel %vm818, %v1884, 0
        %v1924 = vsel %vm818, %v1886, 0
        %v1927 = vsel %vm818, %v1888, 0
        %v1930 = vsel %vm818, %v1890, 0
        %v1933 = vsel %vm818, %v1892, 0
        %v1936 = vsel %vm818, %v1894, 0
        %v1939 = vsel %vm818, %v1896, 0
        %v1942 = vsel %vm818, %v1898, 0
        %v1945 = vsel %vm818, %v1900, 0
        %v1948 = vsel %vm818, %v1902, 0
        %v1951 = vsel %vm818, %v1904, 0
        %1953 = vmatpush.bf16.xpose.msra.mxu0 %v1951
        %1954 = vmatpush.bf16.xpose.msra.mxu0 %v1948
        %1955 = vmatpush.bf16.xpose.msra.mxu0 %v1945
        %1956 = vmatpush.bf16.xpose.msra.mxu0 %v1942
        %1957 = vmatpush.bf16.xpose.msra.mxu0 %v1939
        %1958 = vmatpush.bf16.xpose.msra.mxu0 %v1936
        %1959 = vmatpush.bf16.xpose.msra.mxu0 %v1933
        %1960 = vmatpush.bf16.xpose.msra.mxu0 %v1930
        %1961 = vmatmul.bf16.gmra.mxu0 %v1906
        %v1962 = vpop.f32.mrf.mxu0
        %v1963 = vadd.f32 %v689, %v1962
        %v1964 = vpop.f32.mrf.mxu0
        %v1965 = vadd.f32 %v689, %v1964
        %1966 = vmatmul.bf16.gmra.mxu0 %v1909
        %v1967 = vpop.f32.mrf.mxu0
        %v1968 = vadd.f32 %v689, %v1967
        %v1969 = vpop.f32.mrf.mxu0
        %v1970 = vadd.f32 %v689, %v1969
        %1971 = vmatmul.bf16.gmra.mxu0 %v1912
        %v1972 = vpop.f32.mrf.mxu0
        %v1973 = vadd.f32 %v689, %v1972
        %v1974 = vpop.f32.mrf.mxu0
        %v1975 = vadd.f32 %v689, %v1974
        %1976 = vmatmul.bf16.gmra.mxu0 %v1915
        %v1977 = vpop.f32.mrf.mxu0
        %v1978 = vadd.f32 %v689, %v1977
        %v1979 = vpop.f32.mrf.mxu0
        %v1980 = vadd.f32 %v689, %v1979
        %1981 = vmatmul.bf16.gmra.mxu0 %v1918
        %v1982 = vpop.f32.mrf.mxu0
        %v1983 = vadd.f32 %v689, %v1982
        %v1984 = vpop.f32.mrf.mxu0
        %v1985 = vadd.f32 %v689, %v1984
        %1986 = vmatmul.bf16.gmra.mxu0 %v1921
        %v1987 = vpop.f32.mrf.mxu0
        %v1988 = vadd.f32 %v689, %v1987
        %v1989 = vpop.f32.mrf.mxu0
        %v1990 = vadd.f32 %v689, %v1989
        %1991 = vmatmul.bf16.gmra.mxu0 %v1924
        %v1992 = vpop.f32.mrf.mxu0
        %v1993 = vadd.f32 %v689, %v1992
        %v1994 = vpop.f32.mrf.mxu0
        %v1995 = vadd.f32 %v689, %v1994
        %1996 = vmatmul.bf16.gmra.mxu0 %v1927
        %v1997 = vpop.f32.mrf.mxu0
        %v1998 = vadd.f32 %v689, %v1997
        %v1999 = vpop.f32.mrf.mxu0
        %v2000 = vadd.f32 %v689, %v1999
        %2001 = vdwg.mxu0
        %2002 = vmax.xlane.f32.xlu0 %v1963
        %v2003 = vpop.xlane.xlu0 %2002
        %2004 = vmax.xlane.f32.xlu0 %v1965
        %v2005 = vpop.xlane.xlu0 %2004
        %2006 = vmax.xlane.f32.xlu0 %v1968
        %v2007 = vpop.xlane.xlu0 %2006
        %2008 = vmax.xlane.f32.xlu0 %v1970
        %v2009 = vpop.xlane.xlu0 %2008
        %2010 = vmax.xlane.f32.xlu0 %v1973
        %v2011 = vpop.xlane.xlu0 %2010
        %2012 = vmax.xlane.f32.xlu0 %v1975
        %v2013 = vpop.xlane.xlu0 %2012
        %2014 = vmax.xlane.f32.xlu0 %v1978
        %v2015 = vpop.xlane.xlu0 %2014
        %2016 = vmax.xlane.f32.xlu0 %v1980
        %v2017 = vpop.xlane.xlu0 %2016
        %2018 = vmax.xlane.f32.xlu0 %v1983
        %v2019 = vpop.xlane.xlu0 %2018
        %2020 = vmax.xlane.f32.xlu0 %v1985
        %v2021 = vpop.xlane.xlu0 %2020
        %2022 = vmax.xlane.f32.xlu0 %v1988
        %v2023 = vpop.xlane.xlu0 %2022
        %2024 = vmax.xlane.f32.xlu0 %v1990
        %v2025 = vpop.xlane.xlu0 %2024
        %2026 = vmax.xlane.f32.xlu0 %v1993
        %v2027 = vpop.xlane.xlu0 %2026
        %2028 = vmax.xlane.f32.xlu0 %v1995
        %v2029 = vpop.xlane.xlu0 %2028
        %2030 = vmax.xlane.f32.xlu0 %v1998
        %v2031 = vpop.xlane.xlu0 %2030
        %2032 = vmax.xlane.f32.xlu0 %v2000
        %v2033 = vpop.xlane.xlu0 %2032
        %v2034 = vsub.f32 %v1963, %v2003
        %v2035 = vsub.f32 %v1965, %v2005
        %v2036 = vsub.f32 %v1968, %v2007
        %v2037 = vsub.f32 %v1970, %v2009
        %v2038 = vsub.f32 %v1973, %v2011
        %v2039 = vsub.f32 %v1975, %v2013
        %v2040 = vsub.f32 %v1978, %v2015
        %v2041 = vsub.f32 %v1980, %v2017
        %v2042 = vsub.f32 %v1983, %v2019
        %v2043 = vsub.f32 %v1985, %v2021
        %v2044 = vsub.f32 %v1988, %v2023
        %v2045 = vsub.f32 %v1990, %v2025
        %v2046 = vsub.f32 %v1993, %v2027
        %v2047 = vsub.f32 %v1995, %v2029
        %v2048 = vsub.f32 %v1998, %v2031
        %v2049 = vsub.f32 %v2000, %v2033
        %v2050 = vmul.f32 %v2034, 1.442695
        %v2051 = vpow.pop %v2050
        %v2052 = vmul.f32 %v2035, 1.442695
        %v2053 = vpow.pop %v2052
        %v2054 = vmul.f32 %v2036, 1.442695
        %v2055 = vpow.pop %v2054
        %v2056 = vmul.f32 %v2037, 1.442695
        %v2057 = vpow.pop %v2056
        %v2058 = vmul.f32 %v2038, 1.442695
        %v2059 = vpow.pop %v2058
        %v2060 = vmul.f32 %v2039, 1.442695
        %v2061 = vpow.pop %v2060
        %v2062 = vmul.f32 %v2040, 1.442695
        %v2063 = vpow.pop %v2062
        %v2064 = vmul.f32 %v2041, 1.442695
        %v2065 = vpow.pop %v2064
        %v2066 = vmul.f32 %v2042, 1.442695
        %v2067 = vpow.pop %v2066
        %v2068 = vmul.f32 %v2043, 1.442695
        %v2069 = vpow.pop %v2068
        %v2070 = vmul.f32 %v2044, 1.442695
        %v2071 = vpow.pop %v2070
        %v2072 = vmul.f32 %v2045, 1.442695
        %v2073 = vpow.pop %v2072
        %v2074 = vmul.f32 %v2046, 1.442695
        %v2075 = vpow.pop %v2074
        %v2076 = vmul.f32 %v2047, 1.442695
        %v2077 = vpow.pop %v2076
        %v2078 = vmul.f32 %v2048, 1.442695
        %v2079 = vpow.pop %v2078
        %v2080 = vmul.f32 %v2049, 1.442695
        %v2081 = vpow.pop %v2080
        %2082 = vadd.xlane.f32.xlu0 %v2051
        %v2083 = vpop.xlane.xlu0 %2082
        %2084 = vadd.xlane.f32.xlu0 %v2053
        %v2085 = vpop.xlane.xlu0 %2084
        %2086 = vadd.xlane.f32.xlu0 %v2055
        %v2087 = vpop.xlane.xlu0 %2086
        %2088 = vadd.xlane.f32.xlu0 %v2057
        %v2089 = vpop.xlane.xlu0 %2088
        %2090 = vadd.xlane.f32.xlu0 %v2059
        %v2091 = vpop.xlane.xlu0 %2090
        %2092 = vadd.xlane.f32.xlu0 %v2061
        %v2093 = vpop.xlane.xlu0 %2092
        %2094 = vadd.xlane.f32.xlu0 %v2063
        %v2095 = vpop.xlane.xlu0 %2094
        %2096 = vadd.xlane.f32.xlu0 %v2065
        %v2097 = vpop.xlane.xlu0 %2096
        %2098 = vadd.xlane.f32.xlu0 %v2067
        %v2099 = vpop.xlane.xlu0 %2098
        %2100 = vadd.xlane.f32.xlu0 %v2069
        %v2101 = vpop.xlane.xlu0 %2100
        %2102 = vadd.xlane.f32.xlu0 %v2071
        %v2103 = vpop.xlane.xlu0 %2102
        %2104 = vadd.xlane.f32.xlu0 %v2073
        %v2105 = vpop.xlane.xlu0 %2104
        %2106 = vadd.xlane.f32.xlu0 %v2075
        %v2107 = vpop.xlane.xlu0 %2106
        %2108 = vadd.xlane.f32.xlu0 %v2077
        %v2109 = vpop.xlane.xlu0 %2108
        %2110 = vadd.xlane.f32.xlu0 %v2079
        %v2111 = vpop.xlane.xlu0 %2110
        %2112 = vadd.xlane.f32.xlu0 %v2081
        %v2113 = vpop.xlane.xlu0 %2112
        %v2114 = vpack.c.bf16 %v2053, %v2051
        %v2115 = vpack.c.bf16 %v2057, %v2055
        %v2116 = vpack.c.bf16 %v2061, %v2059
        %v2117 = vpack.c.bf16 %v2065, %v2063
        %v2118 = vpack.c.bf16 %v2069, %v2067
        %v2119 = vpack.c.bf16 %v2073, %v2071
        %v2120 = vpack.c.bf16 %v2077, %v2075
        %v2121 = vpack.c.bf16 %v2081, %v2079
        %2122 = vrot.lane.b32.xlu0 %v1068, 80
        %v2123 = vpop.permute.xlu0 %2122
        %2124 = vrot.lane.b32.xlu0 %v1069, 80
        %v2125 = vpop.permute.xlu0 %2124
        %2126 = vrot.lane.b32.xlu0 %v1070, 80
        %v2127 = vpop.permute.xlu0 %2126
        %2128 = vrot.lane.b32.xlu0 %v1071, 80
        %v2129 = vpop.permute.xlu0 %2128
        %2130 = vrot.lane.b32.xlu0 %v1072, 80
        %v2131 = vpop.permute.xlu0 %2130
        %2132 = vrot.lane.b32.xlu0 %v1073, 80
        %v2133 = vpop.permute.xlu0 %2132
        %2134 = vrot.lane.b32.xlu0 %v1074, 80
        %v2135 = vpop.permute.xlu0 %2134
        %2136 = vrot.lane.b32.xlu0 %v1075, 80
        %v2137 = vpop.permute.xlu0 %2136
        %2146 = vmatpush.bf16.msra.mxu0 %v2137
        %2147 = vmatpush.bf16.msra.mxu0 %v2135
        %2148 = vmatpush.bf16.msra.mxu0 %v2133
        %2149 = vmatpush.bf16.msra.mxu0 %v2131
        %2150 = vmatpush.bf16.msra.mxu0 %v2129
        %2151 = vmatpush.bf16.msra.mxu0 %v2127
        %2152 = vmatpush.bf16.msra.mxu0 %v2125
        %2153 = vmatpush.bf16.msra.mxu0 %v2123
        %2154 = vmatmul.bf16.gmra.mxu0 %v2114
        %v2155 = vpop.f32.mrf.mxu0
        %v2156 = vadd.f32 0.0, %v2155
        %v2157 = vpop.f32.mrf.mxu0
        %v2158 = vadd.f32 0.0, %v2157
        %2159 = vmatmul.bf16.gmra.mxu0 %v2115
        %v2160 = vpop.f32.mrf.mxu0
        %v2161 = vadd.f32 0.0, %v2160
        %v2162 = vpop.f32.mrf.mxu0
        %v2163 = vadd.f32 0.0, %v2162
        %2164 = vmatmul.bf16.gmra.mxu0 %v2116
        %v2165 = vpop.f32.mrf.mxu0
        %v2166 = vadd.f32 0.0, %v2165
        %v2167 = vpop.f32.mrf.mxu0
        %v2168 = vadd.f32 0.0, %v2167
        %2169 = vmatmul.bf16.gmra.mxu0 %v2117
        %v2170 = vpop.f32.mrf.mxu0
        %v2171 = vadd.f32 0.0, %v2170
        %v2172 = vpop.f32.mrf.mxu0
        %v2173 = vadd.f32 0.0, %v2172
        %2174 = vmatmul.bf16.gmra.mxu0 %v2118
        %v2175 = vpop.f32.mrf.mxu0
        %v2176 = vadd.f32 0.0, %v2175
        %v2177 = vpop.f32.mrf.mxu0
        %v2178 = vadd.f32 0.0, %v2177
        %2179 = vmatmul.bf16.gmra.mxu0 %v2119
        %v2180 = vpop.f32.mrf.mxu0
        %v2181 = vadd.f32 0.0, %v2180
        %v2182 = vpop.f32.mrf.mxu0
        %v2183 = vadd.f32 0.0, %v2182
        %2184 = vmatmul.bf16.gmra.mxu0 %v2120
        %v2185 = vpop.f32.mrf.mxu0
        %v2186 = vadd.f32 0.0, %v2185
        %v2187 = vpop.f32.mrf.mxu0
        %v2188 = vadd.f32 0.0, %v2187
        %2189 = vmatmul.bf16.gmra.mxu0 %v2121
        %v2190 = vpop.f32.mrf.mxu0
        %v2191 = vadd.f32 0.0, %v2190
        %v2192 = vpop.f32.mrf.mxu0
        %v2193 = vadd.f32 0.0, %v2192
        %2194 = vdwg.mxu0
        %v2195 = vrcp.pop %v2083
        %v2196 = vrcp.pop %v2085
        %v2197 = vrcp.pop %v2087
        %v2198 = vrcp.pop %v2089
        %v2199 = vrcp.pop %v2091
        %v2200 = vrcp.pop %v2093
        %v2201 = vrcp.pop %v2095
        %v2202 = vrcp.pop %v2097
        %v2203 = vrcp.pop %v2099
        %v2204 = vrcp.pop %v2101
        %v2205 = vrcp.pop %v2103
        %v2206 = vrcp.pop %v2105
        %v2207 = vrcp.pop %v2107
        %v2208 = vrcp.pop %v2109
        %v2209 = vrcp.pop %v2111
        %v2210 = vrcp.pop %v2113
        %v2211 = vmul.f32 %v2156, %v2195
        %v2212 = vmul.f32 %v2158, %v2196
        %v2213 = vmul.f32 %v2161, %v2197
        %v2214 = vmul.f32 %v2163, %v2198
        %v2215 = vmul.f32 %v2166, %v2199
        %v2216 = vmul.f32 %v2168, %v2200
        %v2217 = vmul.f32 %v2171, %v2201
        %v2218 = vmul.f32 %v2173, %v2202
        %v2219 = vmul.f32 %v2176, %v2203
        %v2220 = vmul.f32 %v2178, %v2204
        %v2221 = vmul.f32 %v2181, %v2205
        %v2222 = vmul.f32 %v2183, %v2206
        %v2223 = vmul.f32 %v2186, %v2207
        %v2224 = vmul.f32 %v2188, %v2208
        %v2225 = vmul.f32 %v2191, %v2209
        %v2226 = vmul.f32 %v2193, %v2210
        %2227 = vrot.lane.b32.xlu0 %v770, 64
        %v2228 = vpop.permute.xlu0 %2227
        %2229 = vrot.lane.b32.xlu0 %v771, 64
        %v2230 = vpop.permute.xlu0 %2229
        %2231 = vrot.lane.b32.xlu0 %v772, 64
        %v2232 = vpop.permute.xlu0 %2231
        %2233 = vrot.lane.b32.xlu0 %v773, 64
        %v2234 = vpop.permute.xlu0 %2233
        %2235 = vrot.lane.b32.xlu0 %v774, 64
        %v2236 = vpop.permute.xlu0 %2235
        %2237 = vrot.lane.b32.xlu0 %v775, 64
        %v2238 = vpop.permute.xlu0 %2237
        %2239 = vrot.lane.b32.xlu0 %v776, 64
        %v2240 = vpop.permute.xlu0 %2239
        %2241 = vrot.lane.b32.xlu0 %v777, 64
        %v2242 = vpop.permute.xlu0 %2241
        %2243 = vrot.lane.b32.xlu0 %v810, 64
        %v2244 = vpop.permute.xlu0 %2243
        %2245 = vrot.lane.b32.xlu0 %v811, 64
        %v2246 = vpop.permute.xlu0 %2245
        %2247 = vrot.lane.b32.xlu0 %v812, 64
        %v2248 = vpop.permute.xlu0 %2247
        %2249 = vrot.lane.b32.xlu0 %v813, 64
        %v2250 = vpop.permute.xlu0 %2249
        %2251 = vrot.lane.b32.xlu0 %v814, 64
        %v2252 = vpop.permute.xlu0 %2251
        %2253 = vrot.lane.b32.xlu0 %v815, 64
        %v2254 = vpop.permute.xlu0 %2253
        %2255 = vrot.lane.b32.xlu0 %v816, 64
        %v2256 = vpop.permute.xlu0 %2255
        %2257 = vrot.lane.b32.xlu0 %v817, 64
        %v2258 = vpop.permute.xlu0 %2257
        %v2260 = vsel %vm818, %v2228, 0
        %v2263 = vsel %vm818, %v2230, 0
        %v2266 = vsel %vm818, %v2232, 0
        %v2269 = vsel %vm818, %v2234, 0
        %v2272 = vsel %vm818, %v2236, 0
        %v2275 = vsel %vm818, %v2238, 0
        %v2278 = vsel %vm818, %v2240, 0
        %v2281 = vsel %vm818, %v2242, 0
        %v2284 = vsel %vm818, %v2244, 0
        %v2287 = vsel %vm818, %v2246, 0
        %v2290 = vsel %vm818, %v2248, 0
        %v2293 = vsel %vm818, %v2250, 0
        %v2296 = vsel %vm818, %v2252, 0
        %v2299 = vsel %vm818, %v2254, 0
        %v2302 = vsel %vm818, %v2256, 0
        %v2305 = vsel %vm818, %v2258, 0
        %2307 = vmatpush.bf16.xpose.msra.mxu0 %v2305
        %2308 = vmatpush.bf16.xpose.msra.mxu0 %v2302
        %2309 = vmatpush.bf16.xpose.msra.mxu0 %v2299
        %2310 = vmatpush.bf16.xpose.msra.mxu0 %v2296
        %2311 = vmatpush.bf16.xpose.msra.mxu0 %v2293
        %2312 = vmatpush.bf16.xpose.msra.mxu0 %v2290
        %2313 = vmatpush.bf16.xpose.msra.mxu0 %v2287
        %2314 = vmatpush.bf16.xpose.msra.mxu0 %v2284
        %2315 = vmatmul.bf16.gmra.mxu0 %v2260
        %v2316 = vpop.f32.mrf.mxu0
        %v2317 = vadd.f32 %v689, %v2316
        %v2318 = vpop.f32.mrf.mxu0
        %v2319 = vadd.f32 %v689, %v2318
        %2320 = vmatmul.bf16.gmra.mxu0 %v2263
        %v2321 = vpop.f32.mrf.mxu0
        %v2322 = vadd.f32 %v689, %v2321
        %v2323 = vpop.f32.mrf.mxu0
        %v2324 = vadd.f32 %v689, %v2323
        %2325 = vmatmul.bf16.gmra.mxu0 %v2266
        %v2326 = vpop.f32.mrf.mxu0
        %v2327 = vadd.f32 %v689, %v2326
        %v2328 = vpop.f32.mrf.mxu0
        %v2329 = vadd.f32 %v689, %v2328
        %2330 = vmatmul.bf16.gmra.mxu0 %v2269
        %v2331 = vpop.f32.mrf.mxu0
        %v2332 = vadd.f32 %v689, %v2331
        %v2333 = vpop.f32.mrf.mxu0
        %v2334 = vadd.f32 %v689, %v2333
        %2335 = vmatmul.bf16.gmra.mxu0 %v2272
        %v2336 = vpop.f32.mrf.mxu0
        %v2337 = vadd.f32 %v689, %v2336
        %v2338 = vpop.f32.mrf.mxu0
        %v2339 = vadd.f32 %v689, %v2338
        %2340 = vmatmul.bf16.gmra.mxu0 %v2275
        %v2341 = vpop.f32.mrf.mxu0
        %v2342 = vadd.f32 %v689, %v2341
        %v2343 = vpop.f32.mrf.mxu0
        %v2344 = vadd.f32 %v689, %v2343
        %2345 = vmatmul.bf16.gmra.mxu0 %v2278
        %v2346 = vpop.f32.mrf.mxu0
        %v2347 = vadd.f32 %v689, %v2346
        %v2348 = vpop.f32.mrf.mxu0
        %v2349 = vadd.f32 %v689, %v2348
        %2350 = vmatmul.bf16.gmra.mxu0 %v2281
        %v2351 = vpop.f32.mrf.mxu0
        %v2352 = vadd.f32 %v689, %v2351
        %v2353 = vpop.f32.mrf.mxu0
        %v2354 = vadd.f32 %v689, %v2353
        %2355 = vdwg.mxu0
        %2356 = vmax.xlane.f32.xlu0 %v2317
        %v2357 = vpop.xlane.xlu0 %2356
        %2358 = vmax.xlane.f32.xlu0 %v2319
        %v2359 = vpop.xlane.xlu0 %2358
        %2360 = vmax.xlane.f32.xlu0 %v2322
        %v2361 = vpop.xlane.xlu0 %2360
        %2362 = vmax.xlane.f32.xlu0 %v2324
        %v2363 = vpop.xlane.xlu0 %2362
        %2364 = vmax.xlane.f32.xlu0 %v2327
        %v2365 = vpop.xlane.xlu0 %2364
        %2366 = vmax.xlane.f32.xlu0 %v2329
        %v2367 = vpop.xlane.xlu0 %2366
        %2368 = vmax.xlane.f32.xlu0 %v2332
        %v2369 = vpop.xlane.xlu0 %2368
        %2370 = vmax.xlane.f32.xlu0 %v2334
        %v2371 = vpop.xlane.xlu0 %2370
        %2372 = vmax.xlane.f32.xlu0 %v2337
        %v2373 = vpop.xlane.xlu0 %2372
        %2374 = vmax.xlane.f32.xlu0 %v2339
        %v2375 = vpop.xlane.xlu0 %2374
        %2376 = vmax.xlane.f32.xlu0 %v2342
        %v2377 = vpop.xlane.xlu0 %2376
        %2378 = vmax.xlane.f32.xlu0 %v2344
        %v2379 = vpop.xlane.xlu0 %2378
        %2380 = vmax.xlane.f32.xlu0 %v2347
        %v2381 = vpop.xlane.xlu0 %2380
        %2382 = vmax.xlane.f32.xlu0 %v2349
        %v2383 = vpop.xlane.xlu0 %2382
        %2384 = vmax.xlane.f32.xlu0 %v2352
        %v2385 = vpop.xlane.xlu0 %2384
        %2386 = vmax.xlane.f32.xlu0 %v2354
        %v2387 = vpop.xlane.xlu0 %2386
        %v2388 = vsub.f32 %v2317, %v2357
        %v2389 = vsub.f32 %v2319, %v2359
        %v2390 = vsub.f32 %v2322, %v2361
        %v2391 = vsub.f32 %v2324, %v2363
        %v2392 = vsub.f32 %v2327, %v2365
        %v2393 = vsub.f32 %v2329, %v2367
        %v2394 = vsub.f32 %v2332, %v2369
        %v2395 = vsub.f32 %v2334, %v2371
        %v2396 = vsub.f32 %v2337, %v2373
        %v2397 = vsub.f32 %v2339, %v2375
        %v2398 = vsub.f32 %v2342, %v2377
        %v2399 = vsub.f32 %v2344, %v2379
        %v2400 = vsub.f32 %v2347, %v2381
        %v2401 = vsub.f32 %v2349, %v2383
        %v2402 = vsub.f32 %v2352, %v2385
        %v2403 = vsub.f32 %v2354, %v2387
        %v2404 = vmul.f32 %v2388, 1.442695
        %v2405 = vpow.pop %v2404
        %v2406 = vmul.f32 %v2389, 1.442695
        %v2407 = vpow.pop %v2406
        %v2408 = vmul.f32 %v2390, 1.442695
        %v2409 = vpow.pop %v2408
        %v2410 = vmul.f32 %v2391, 1.442695
        %v2411 = vpow.pop %v2410
        %v2412 = vmul.f32 %v2392, 1.442695
        %v2413 = vpow.pop %v2412
        %v2414 = vmul.f32 %v2393, 1.442695
        %v2415 = vpow.pop %v2414
        %v2416 = vmul.f32 %v2394, 1.442695
        %v2417 = vpow.pop %v2416
        %v2418 = vmul.f32 %v2395, 1.442695
        %v2419 = vpow.pop %v2418
        %v2420 = vmul.f32 %v2396, 1.442695
        %v2421 = vpow.pop %v2420
        %v2422 = vmul.f32 %v2397, 1.442695
        %v2423 = vpow.pop %v2422
        %v2424 = vmul.f32 %v2398, 1.442695
        %v2425 = vpow.pop %v2424
        %v2426 = vmul.f32 %v2399, 1.442695
        %v2427 = vpow.pop %v2426
        %v2428 = vmul.f32 %v2400, 1.442695
        %v2429 = vpow.pop %v2428
        %v2430 = vmul.f32 %v2401, 1.442695
        %v2431 = vpow.pop %v2430
        %v2432 = vmul.f32 %v2402, 1.442695
        %v2433 = vpow.pop %v2432
        %v2434 = vmul.f32 %v2403, 1.442695
        %v2435 = vpow.pop %v2434
        %2436 = vadd.xlane.f32.xlu0 %v2405
        %v2437 = vpop.xlane.xlu0 %2436
        %2438 = vadd.xlane.f32.xlu0 %v2407
        %v2439 = vpop.xlane.xlu0 %2438
        %2440 = vadd.xlane.f32.xlu0 %v2409
        %v2441 = vpop.xlane.xlu0 %2440
        %2442 = vadd.xlane.f32.xlu0 %v2411
        %v2443 = vpop.xlane.xlu0 %2442
        %2444 = vadd.xlane.f32.xlu0 %v2413
        %v2445 = vpop.xlane.xlu0 %2444
        %2446 = vadd.xlane.f32.xlu0 %v2415
        %v2447 = vpop.xlane.xlu0 %2446
        %2448 = vadd.xlane.f32.xlu0 %v2417
        %v2449 = vpop.xlane.xlu0 %2448
        %2450 = vadd.xlane.f32.xlu0 %v2419
        %v2451 = vpop.xlane.xlu0 %2450
        %2452 = vadd.xlane.f32.xlu0 %v2421
        %v2453 = vpop.xlane.xlu0 %2452
        %2454 = vadd.xlane.f32.xlu0 %v2423
        %v2455 = vpop.xlane.xlu0 %2454
        %2456 = vadd.xlane.f32.xlu0 %v2425
        %v2457 = vpop.xlane.xlu0 %2456
        %2458 = vadd.xlane.f32.xlu0 %v2427
        %v2459 = vpop.xlane.xlu0 %2458
        %2460 = vadd.xlane.f32.xlu0 %v2429
        %v2461 = vpop.xlane.xlu0 %2460
        %2462 = vadd.xlane.f32.xlu0 %v2431
        %v2463 = vpop.xlane.xlu0 %2462
        %2464 = vadd.xlane.f32.xlu0 %v2433
        %v2465 = vpop.xlane.xlu0 %2464
        %2466 = vadd.xlane.f32.xlu0 %v2435
        %v2467 = vpop.xlane.xlu0 %2466
        %v2468 = vpack.c.bf16 %v2407, %v2405
        %v2469 = vpack.c.bf16 %v2411, %v2409
        %v2470 = vpack.c.bf16 %v2415, %v2413
        %v2471 = vpack.c.bf16 %v2419, %v2417
        %v2472 = vpack.c.bf16 %v2423, %v2421
        %v2473 = vpack.c.bf16 %v2427, %v2425
        %v2474 = vpack.c.bf16 %v2431, %v2429
        %v2475 = vpack.c.bf16 %v2435, %v2433
        %2476 = vrot.lane.b32.xlu0 %v1068, 64
        %v2477 = vpop.permute.xlu0 %2476
        %2478 = vrot.lane.b32.xlu0 %v1069, 64
        %v2479 = vpop.permute.xlu0 %2478
        %2480 = vrot.lane.b32.xlu0 %v1070, 64
        %v2481 = vpop.permute.xlu0 %2480
        %2482 = vrot.lane.b32.xlu0 %v1071, 64
        %v2483 = vpop.permute.xlu0 %2482
        %2484 = vrot.lane.b32.xlu0 %v1072, 64
        %v2485 = vpop.permute.xlu0 %2484
        %2486 = vrot.lane.b32.xlu0 %v1073, 64
        %v2487 = vpop.permute.xlu0 %2486
        %2488 = vrot.lane.b32.xlu0 %v1074, 64
        %v2489 = vpop.permute.xlu0 %2488
        %2490 = vrot.lane.b32.xlu0 %v1075, 64
        %v2491 = vpop.permute.xlu0 %2490
        %2500 = vmatpush.bf16.msra.mxu0 %v2491
        %2501 = vmatpush.bf16.msra.mxu0 %v2489
        %2502 = vmatpush.bf16.msra.mxu0 %v2487
        %2503 = vmatpush.bf16.msra.mxu0 %v2485
        %2504 = vmatpush.bf16.msra.mxu0 %v2483
        %2505 = vmatpush.bf16.msra.mxu0 %v2481
        %2506 = vmatpush.bf16.msra.mxu0 %v2479
        %2507 = vmatpush.bf16.msra.mxu0 %v2477
        %2508 = vmatmul.bf16.gmra.mxu0 %v2468
        %v2509 = vpop.f32.mrf.mxu0
        %v2510 = vadd.f32 0.0, %v2509
        %v2511 = vpop.f32.mrf.mxu0
        %v2512 = vadd.f32 0.0, %v2511
        %2513 = vmatmul.bf16.gmra.mxu0 %v2469
        %v2514 = vpop.f32.mrf.mxu0
        %v2515 = vadd.f32 0.0, %v2514
        %v2516 = vpop.f32.mrf.mxu0
        %v2517 = vadd.f32 0.0, %v2516
        %2518 = vmatmul.bf16.gmra.mxu0 %v2470
        %v2519 = vpop.f32.mrf.mxu0
        %v2520 = vadd.f32 0.0, %v2519
        %v2521 = vpop.f32.mrf.mxu0
        %v2522 = vadd.f32 0.0, %v2521
        %2523 = vmatmul.bf16.gmra.mxu0 %v2471
        %v2524 = vpop.f32.mrf.mxu0
        %v2525 = vadd.f32 0.0, %v2524
        %v2526 = vpop.f32.mrf.mxu0
        %v2527 = vadd.f32 0.0, %v2526
        %2528 = vmatmul.bf16.gmra.mxu0 %v2472
        %v2529 = vpop.f32.mrf.mxu0
        %v2530 = vadd.f32 0.0, %v2529
        %v2531 = vpop.f32.mrf.mxu0
        %v2532 = vadd.f32 0.0, %v2531
        %2533 = vmatmul.bf16.gmra.mxu0 %v2473
        %v2534 = vpop.f32.mrf.mxu0
        %v2535 = vadd.f32 0.0, %v2534
        %v2536 = vpop.f32.mrf.mxu0
        %v2537 = vadd.f32 0.0, %v2536
        %2538 = vmatmul.bf16.gmra.mxu0 %v2474
        %v2539 = vpop.f32.mrf.mxu0
        %v2540 = vadd.f32 0.0, %v2539
        %v2541 = vpop.f32.mrf.mxu0
        %v2542 = vadd.f32 0.0, %v2541
        %2543 = vmatmul.bf16.gmra.mxu0 %v2475
        %v2544 = vpop.f32.mrf.mxu0
        %v2545 = vadd.f32 0.0, %v2544
        %v2546 = vpop.f32.mrf.mxu0
        %v2547 = vadd.f32 0.0, %v2546
        %2548 = vdwg.mxu0
        %v2549 = vrcp.pop %v2437
        %v2550 = vrcp.pop %v2439
        %v2551 = vrcp.pop %v2441
        %v2552 = vrcp.pop %v2443
        %v2553 = vrcp.pop %v2445
        %v2554 = vrcp.pop %v2447
        %v2555 = vrcp.pop %v2449
        %v2556 = vrcp.pop %v2451
        %v2557 = vrcp.pop %v2453
        %v2558 = vrcp.pop %v2455
        %v2559 = vrcp.pop %v2457
        %v2560 = vrcp.pop %v2459
        %v2561 = vrcp.pop %v2461
        %v2562 = vrcp.pop %v2463
        %v2563 = vrcp.pop %v2465
        %v2564 = vrcp.pop %v2467
        %v2565 = vmul.f32 %v2510, %v2549
        %v2566 = vmul.f32 %v2512, %v2550
        %v2567 = vmul.f32 %v2515, %v2551
        %v2568 = vmul.f32 %v2517, %v2552
        %v2569 = vmul.f32 %v2520, %v2553
        %v2570 = vmul.f32 %v2522, %v2554
        %v2571 = vmul.f32 %v2525, %v2555
        %v2572 = vmul.f32 %v2527, %v2556
        %v2573 = vmul.f32 %v2530, %v2557
        %v2574 = vmul.f32 %v2532, %v2558
        %v2575 = vmul.f32 %v2535, %v2559
        %v2576 = vmul.f32 %v2537, %v2560
        %v2577 = vmul.f32 %v2540, %v2561
        %v2578 = vmul.f32 %v2542, %v2562
        %v2579 = vmul.f32 %v2545, %v2563
        %v2580 = vmul.f32 %v2547, %v2564
        %2581 = vrot.lane.b32.xlu0 %v770, 48
        %v2582 = vpop.permute.xlu0 %2581
        %2583 = vrot.lane.b32.xlu0 %v771, 48
        %v2584 = vpop.permute.xlu0 %2583
        %2585 = vrot.lane.b32.xlu0 %v772, 48
        %v2586 = vpop.permute.xlu0 %2585
        %2587 = vrot.lane.b32.xlu0 %v773, 48
        %v2588 = vpop.permute.xlu0 %2587
        %2589 = vrot.lane.b32.xlu0 %v774, 48
        %v2590 = vpop.permute.xlu0 %2589
        %2591 = vrot.lane.b32.xlu0 %v775, 48
        %v2592 = vpop.permute.xlu0 %2591
        %2593 = vrot.lane.b32.xlu0 %v776, 48
        %v2594 = vpop.permute.xlu0 %2593
        %2595 = vrot.lane.b32.xlu0 %v777, 48
        %v2596 = vpop.permute.xlu0 %2595
        %2597 = vrot.lane.b32.xlu0 %v810, 48
        %v2598 = vpop.permute.xlu0 %2597
        %2599 = vrot.lane.b32.xlu0 %v811, 48
        %v2600 = vpop.permute.xlu0 %2599
        %2601 = vrot.lane.b32.xlu0 %v812, 48
        %v2602 = vpop.permute.xlu0 %2601
        %2603 = vrot.lane.b32.xlu0 %v813, 48
        %v2604 = vpop.permute.xlu0 %2603
        %2605 = vrot.lane.b32.xlu0 %v814, 48
        %v2606 = vpop.permute.xlu0 %2605
        %2607 = vrot.lane.b32.xlu0 %v815, 48
        %v2608 = vpop.permute.xlu0 %2607
        %2609 = vrot.lane.b32.xlu0 %v816, 48
        %v2610 = vpop.permute.xlu0 %2609
        %2611 = vrot.lane.b32.xlu0 %v817, 48
        %v2612 = vpop.permute.xlu0 %2611
        %v2614 = vsel %vm818, %v2582, 0
        %v2617 = vsel %vm818, %v2584, 0
        %v2620 = vsel %vm818, %v2586, 0
        %v2623 = vsel %vm818, %v2588, 0
        %v2626 = vsel %vm818, %v2590, 0
        %v2629 = vsel %vm818, %v2592, 0
        %v2632 = vsel %vm818, %v2594, 0
        %v2635 = vsel %vm818, %v2596, 0
        %v2638 = vsel %vm818, %v2598, 0
        %v2641 = vsel %vm818, %v2600, 0
        %v2644 = vsel %vm818, %v2602, 0
        %v2647 = vsel %vm818, %v2604, 0
        %v2650 = vsel %vm818, %v2606, 0
        %v2653 = vsel %vm818, %v2608, 0
        %v2656 = vsel %vm818, %v2610, 0
        %v2659 = vsel %vm818, %v2612, 0
        %2661 = vmatpush.bf16.xpose.msra.mxu0 %v2659
        %2662 = vmatpush.bf16.xpose.msra.mxu0 %v2656
        %2663 = vmatpush.bf16.xpose.msra.mxu0 %v2653
        %2664 = vmatpush.bf16.xpose.msra.mxu0 %v2650
        %2665 = vmatpush.bf16.xpose.msra.mxu0 %v2647
        %2666 = vmatpush.bf16.xpose.msra.mxu0 %v2644
        %2667 = vmatpush.bf16.xpose.msra.mxu0 %v2641
        %2668 = vmatpush.bf16.xpose.msra.mxu0 %v2638
        %2669 = vmatmul.bf16.gmra.mxu0 %v2614
        %v2670 = vpop.f32.mrf.mxu0
        %v2671 = vadd.f32 %v689, %v2670
        %v2672 = vpop.f32.mrf.mxu0
        %v2673 = vadd.f32 %v689, %v2672
        %2674 = vmatmul.bf16.gmra.mxu0 %v2617
        %v2675 = vpop.f32.mrf.mxu0
        %v2676 = vadd.f32 %v689, %v2675
        %v2677 = vpop.f32.mrf.mxu0
        %v2678 = vadd.f32 %v689, %v2677
        %2679 = vmatmul.bf16.gmra.mxu0 %v2620
        %v2680 = vpop.f32.mrf.mxu0
        %v2681 = vadd.f32 %v689, %v2680
        %v2682 = vpop.f32.mrf.mxu0
        %v2683 = vadd.f32 %v689, %v2682
        %2684 = vmatmul.bf16.gmra.mxu0 %v2623
        %v2685 = vpop.f32.mrf.mxu0
        %v2686 = vadd.f32 %v689, %v2685
        %v2687 = vpop.f32.mrf.mxu0
        %v2688 = vadd.f32 %v689, %v2687
        %2689 = vmatmul.bf16.gmra.mxu0 %v2626
        %v2690 = vpop.f32.mrf.mxu0
        %v2691 = vadd.f32 %v689, %v2690
        %v2692 = vpop.f32.mrf.mxu0
        %v2693 = vadd.f32 %v689, %v2692
        %2694 = vmatmul.bf16.gmra.mxu0 %v2629
        %v2695 = vpop.f32.mrf.mxu0
        %v2696 = vadd.f32 %v689, %v2695
        %v2697 = vpop.f32.mrf.mxu0
        %v2698 = vadd.f32 %v689, %v2697
        %2699 = vmatmul.bf16.gmra.mxu0 %v2632
        %v2700 = vpop.f32.mrf.mxu0
        %v2701 = vadd.f32 %v689, %v2700
        %v2702 = vpop.f32.mrf.mxu0
        %v2703 = vadd.f32 %v689, %v2702
        %2704 = vmatmul.bf16.gmra.mxu0 %v2635
        %v2705 = vpop.f32.mrf.mxu0
        %v2706 = vadd.f32 %v689, %v2705
        %v2707 = vpop.f32.mrf.mxu0
        %v2708 = vadd.f32 %v689, %v2707
        %2709 = vdwg.mxu0
        %2710 = vmax.xlane.f32.xlu0 %v2671
        %v2711 = vpop.xlane.xlu0 %2710
        %2712 = vmax.xlane.f32.xlu0 %v2673
        %v2713 = vpop.xlane.xlu0 %2712
        %2714 = vmax.xlane.f32.xlu0 %v2676
        %v2715 = vpop.xlane.xlu0 %2714
        %2716 = vmax.xlane.f32.xlu0 %v2678
        %v2717 = vpop.xlane.xlu0 %2716
        %2718 = vmax.xlane.f32.xlu0 %v2681
        %v2719 = vpop.xlane.xlu0 %2718
        %2720 = vmax.xlane.f32.xlu0 %v2683
        %v2721 = vpop.xlane.xlu0 %2720
        %2722 = vmax.xlane.f32.xlu0 %v2686
        %v2723 = vpop.xlane.xlu0 %2722
        %2724 = vmax.xlane.f32.xlu0 %v2688
        %v2725 = vpop.xlane.xlu0 %2724
        %2726 = vmax.xlane.f32.xlu0 %v2691
        %v2727 = vpop.xlane.xlu0 %2726
        %2728 = vmax.xlane.f32.xlu0 %v2693
        %v2729 = vpop.xlane.xlu0 %2728
        %2730 = vmax.xlane.f32.xlu0 %v2696
        %v2731 = vpop.xlane.xlu0 %2730
        %2732 = vmax.xlane.f32.xlu0 %v2698
        %v2733 = vpop.xlane.xlu0 %2732
        %2734 = vmax.xlane.f32.xlu0 %v2701
        %v2735 = vpop.xlane.xlu0 %2734
        %2736 = vmax.xlane.f32.xlu0 %v2703
        %v2737 = vpop.xlane.xlu0 %2736
        %2738 = vmax.xlane.f32.xlu0 %v2706
        %v2739 = vpop.xlane.xlu0 %2738
        %2740 = vmax.xlane.f32.xlu0 %v2708
        %v2741 = vpop.xlane.xlu0 %2740
        %v2742 = vsub.f32 %v2671, %v2711
        %v2743 = vsub.f32 %v2673, %v2713
        %v2744 = vsub.f32 %v2676, %v2715
        %v2745 = vsub.f32 %v2678, %v2717
        %v2746 = vsub.f32 %v2681, %v2719
        %v2747 = vsub.f32 %v2683, %v2721
        %v2748 = vsub.f32 %v2686, %v2723
        %v2749 = vsub.f32 %v2688, %v2725
        %v2750 = vsub.f32 %v2691, %v2727
        %v2751 = vsub.f32 %v2693, %v2729
        %v2752 = vsub.f32 %v2696, %v2731
        %v2753 = vsub.f32 %v2698, %v2733
        %v2754 = vsub.f32 %v2701, %v2735
        %v2755 = vsub.f32 %v2703, %v2737
        %v2756 = vsub.f32 %v2706, %v2739
        %v2757 = vsub.f32 %v2708, %v2741
        %v2758 = vmul.f32 %v2742, 1.442695
        %v2759 = vpow.pop %v2758
        %v2760 = vmul.f32 %v2743, 1.442695
        %v2761 = vpow.pop %v2760
        %v2762 = vmul.f32 %v2744, 1.442695
        %v2763 = vpow.pop %v2762
        %v2764 = vmul.f32 %v2745, 1.442695
        %v2765 = vpow.pop %v2764
        %v2766 = vmul.f32 %v2746, 1.442695
        %v2767 = vpow.pop %v2766
        %v2768 = vmul.f32 %v2747, 1.442695
        %v2769 = vpow.pop %v2768
        %v2770 = vmul.f32 %v2748, 1.442695
        %v2771 = vpow.pop %v2770
        %v2772 = vmul.f32 %v2749, 1.442695
        %v2773 = vpow.pop %v2772
        %v2774 = vmul.f32 %v2750, 1.442695
        %v2775 = vpow.pop %v2774
        %v2776 = vmul.f32 %v2751, 1.442695
        %v2777 = vpow.pop %v2776
        %v2778 = vmul.f32 %v2752, 1.442695
        %v2779 = vpow.pop %v2778
        %v2780 = vmul.f32 %v2753, 1.442695
        %v2781 = vpow.pop %v2780
        %v2782 = vmul.f32 %v2754, 1.442695
        %v2783 = vpow.pop %v2782
        %v2784 = vmul.f32 %v2755, 1.442695
        %v2785 = vpow.pop %v2784
        %v2786 = vmul.f32 %v2756, 1.442695
        %v2787 = vpow.pop %v2786
        %v2788 = vmul.f32 %v2757, 1.442695
        %v2789 = vpow.pop %v2788
        %2790 = vadd.xlane.f32.xlu0 %v2759
        %v2791 = vpop.xlane.xlu0 %2790
        %2792 = vadd.xlane.f32.xlu0 %v2761
        %v2793 = vpop.xlane.xlu0 %2792
        %2794 = vadd.xlane.f32.xlu0 %v2763
        %v2795 = vpop.xlane.xlu0 %2794
        %2796 = vadd.xlane.f32.xlu0 %v2765
        %v2797 = vpop.xlane.xlu0 %2796
        %2798 = vadd.xlane.f32.xlu0 %v2767
        %v2799 = vpop.xlane.xlu0 %2798
        %2800 = vadd.xlane.f32.xlu0 %v2769
        %v2801 = vpop.xlane.xlu0 %2800
        %2802 = vadd.xlane.f32.xlu0 %v2771
        %v2803 = vpop.xlane.xlu0 %2802
        %2804 = vadd.xlane.f32.xlu0 %v2773
        %v2805 = vpop.xlane.xlu0 %2804
        %2806 = vadd.xlane.f32.xlu0 %v2775
        %v2807 = vpop.xlane.xlu0 %2806
        %2808 = vadd.xlane.f32.xlu0 %v2777
        %v2809 = vpop.xlane.xlu0 %2808
        %2810 = vadd.xlane.f32.xlu0 %v2779
        %v2811 = vpop.xlane.xlu0 %2810
        %2812 = vadd.xlane.f32.xlu0 %v2781
        %v2813 = vpop.xlane.xlu0 %2812
        %2814 = vadd.xlane.f32.xlu0 %v2783
        %v2815 = vpop.xlane.xlu0 %2814
        %2816 = vadd.xlane.f32.xlu0 %v2785
        %v2817 = vpop.xlane.xlu0 %2816
        %2818 = vadd.xlane.f32.xlu0 %v2787
        %v2819 = vpop.xlane.xlu0 %2818
        %2820 = vadd.xlane.f32.xlu0 %v2789
        %v2821 = vpop.xlane.xlu0 %2820
        %v2822 = vpack.c.bf16 %v2761, %v2759
        %v2823 = vpack.c.bf16 %v2765, %v2763
        %v2824 = vpack.c.bf16 %v2769, %v2767
        %v2825 = vpack.c.bf16 %v2773, %v2771
        %v2826 = vpack.c.bf16 %v2777, %v2775
        %v2827 = vpack.c.bf16 %v2781, %v2779
        %v2828 = vpack.c.bf16 %v2785, %v2783
        %v2829 = vpack.c.bf16 %v2789, %v2787
        %2830 = vrot.lane.b32.xlu0 %v1068, 48
        %v2831 = vpop.permute.xlu0 %2830
        %2832 = vrot.lane.b32.xlu0 %v1069, 48
        %v2833 = vpop.permute.xlu0 %2832
        %2834 = vrot.lane.b32.xlu0 %v1070, 48
        %v2835 = vpop.permute.xlu0 %2834
        %2836 = vrot.lane.b32.xlu0 %v1071, 48
        %v2837 = vpop.permute.xlu0 %2836
        %2838 = vrot.lane.b32.xlu0 %v1072, 48
        %v2839 = vpop.permute.xlu0 %2838
        %2840 = vrot.lane.b32.xlu0 %v1073, 48
        %v2841 = vpop.permute.xlu0 %2840
        %2842 = vrot.lane.b32.xlu0 %v1074, 48
        %v2843 = vpop.permute.xlu0 %2842
        %2844 = vrot.lane.b32.xlu0 %v1075, 48
        %v2845 = vpop.permute.xlu0 %2844
        %2854 = vmatpush.bf16.msra.mxu0 %v2845
        %2855 = vmatpush.bf16.msra.mxu0 %v2843
        %2856 = vmatpush.bf16.msra.mxu0 %v2841
        %2857 = vmatpush.bf16.msra.mxu0 %v2839
        %2858 = vmatpush.bf16.msra.mxu0 %v2837
        %2859 = vmatpush.bf16.msra.mxu0 %v2835
        %2860 = vmatpush.bf16.msra.mxu0 %v2833
        %2861 = vmatpush.bf16.msra.mxu0 %v2831
        %2862 = vmatmul.bf16.gmra.mxu0 %v2822
        %v2863 = vpop.f32.mrf.mxu0
        %v2864 = vadd.f32 0.0, %v2863
        %v2865 = vpop.f32.mrf.mxu0
        %v2866 = vadd.f32 0.0, %v2865
        %2867 = vmatmul.bf16.gmra.mxu0 %v2823
        %v2868 = vpop.f32.mrf.mxu0
        %v2869 = vadd.f32 0.0, %v2868
        %v2870 = vpop.f32.mrf.mxu0
        %v2871 = vadd.f32 0.0, %v2870
        %2872 = vmatmul.bf16.gmra.mxu0 %v2824
        %v2873 = vpop.f32.mrf.mxu0
        %v2874 = vadd.f32 0.0, %v2873
        %v2875 = vpop.f32.mrf.mxu0
        %v2876 = vadd.f32 0.0, %v2875
        %2877 = vmatmul.bf16.gmra.mxu0 %v2825
        %v2878 = vpop.f32.mrf.mxu0
        %v2879 = vadd.f32 0.0, %v2878
        %v2880 = vpop.f32.mrf.mxu0
        %v2881 = vadd.f32 0.0, %v2880
        %2882 = vmatmul.bf16.gmra.mxu0 %v2826
        %v2883 = vpop.f32.mrf.mxu0
        %v2884 = vadd.f32 0.0, %v2883
        %v2885 = vpop.f32.mrf.mxu0
        %v2886 = vadd.f32 0.0, %v2885
        %2887 = vmatmul.bf16.gmra.mxu0 %v2827
        %v2888 = vpop.f32.mrf.mxu0
        %v2889 = vadd.f32 0.0, %v2888
        %v2890 = vpop.f32.mrf.mxu0
        %v2891 = vadd.f32 0.0, %v2890
        %2892 = vmatmul.bf16.gmra.mxu0 %v2828
        %v2893 = vpop.f32.mrf.mxu0
        %v2894 = vadd.f32 0.0, %v2893
        %v2895 = vpop.f32.mrf.mxu0
        %v2896 = vadd.f32 0.0, %v2895
        %2897 = vmatmul.bf16.gmra.mxu0 %v2829
        %v2898 = vpop.f32.mrf.mxu0
        %v2899 = vadd.f32 0.0, %v2898
        %v2900 = vpop.f32.mrf.mxu0
        %v2901 = vadd.f32 0.0, %v2900
        %2902 = vdwg.mxu0
        %v2903 = vrcp.pop %v2791
        %v2904 = vrcp.pop %v2793
        %v2905 = vrcp.pop %v2795
        %v2906 = vrcp.pop %v2797
        %v2907 = vrcp.pop %v2799
        %v2908 = vrcp.pop %v2801
        %v2909 = vrcp.pop %v2803
        %v2910 = vrcp.pop %v2805
        %v2911 = vrcp.pop %v2807
        %v2912 = vrcp.pop %v2809
        %v2913 = vrcp.pop %v2811
        %v2914 = vrcp.pop %v2813
        %v2915 = vrcp.pop %v2815
        %v2916 = vrcp.pop %v2817
        %v2917 = vrcp.pop %v2819
        %v2918 = vrcp.pop %v2821
        %v2919 = vmul.f32 %v2864, %v2903
        %v2920 = vmul.f32 %v2866, %v2904
        %v2921 = vmul.f32 %v2869, %v2905
        %v2922 = vmul.f32 %v2871, %v2906
        %v2923 = vmul.f32 %v2874, %v2907
        %v2924 = vmul.f32 %v2876, %v2908
        %v2925 = vmul.f32 %v2879, %v2909
        %v2926 = vmul.f32 %v2881, %v2910
        %v2927 = vmul.f32 %v2884, %v2911
        %v2928 = vmul.f32 %v2886, %v2912
        %v2929 = vmul.f32 %v2889, %v2913
        %v2930 = vmul.f32 %v2891, %v2914
        %v2931 = vmul.f32 %v2894, %v2915
        %v2932 = vmul.f32 %v2896, %v2916
        %v2933 = vmul.f32 %v2899, %v2917
        %v2934 = vmul.f32 %v2901, %v2918
        %2935 = vrot.lane.b32.xlu0 %v770, 32
        %v2936 = vpop.permute.xlu0 %2935
        %2937 = vrot.lane.b32.xlu0 %v771, 32
        %v2938 = vpop.permute.xlu0 %2937
        %2939 = vrot.lane.b32.xlu0 %v772, 32
        %v2940 = vpop.permute.xlu0 %2939
        %2941 = vrot.lane.b32.xlu0 %v773, 32
        %v2942 = vpop.permute.xlu0 %2941
        %2943 = vrot.lane.b32.xlu0 %v774, 32
        %v2944 = vpop.permute.xlu0 %2943
        %2945 = vrot.lane.b32.xlu0 %v775, 32
        %v2946 = vpop.permute.xlu0 %2945
        %2947 = vrot.lane.b32.xlu0 %v776, 32
        %v2948 = vpop.permute.xlu0 %2947
        %2949 = vrot.lane.b32.xlu0 %v777, 32
        %v2950 = vpop.permute.xlu0 %2949
        %2951 = vrot.lane.b32.xlu0 %v810, 32
        %v2952 = vpop.permute.xlu0 %2951
        %2953 = vrot.lane.b32.xlu0 %v811, 32
        %v2954 = vpop.permute.xlu0 %2953
        %2955 = vrot.lane.b32.xlu0 %v812, 32
        %v2956 = vpop.permute.xlu0 %2955
        %2957 = vrot.lane.b32.xlu0 %v813, 32
        %v2958 = vpop.permute.xlu0 %2957
        %2959 = vrot.lane.b32.xlu0 %v814, 32
        %v2960 = vpop.permute.xlu0 %2959
        %2961 = vrot.lane.b32.xlu0 %v815, 32
        %v2962 = vpop.permute.xlu0 %2961
        %2963 = vrot.lane.b32.xlu0 %v816, 32
        %v2964 = vpop.permute.xlu0 %2963
        %2965 = vrot.lane.b32.xlu0 %v817, 32
        %v2966 = vpop.permute.xlu0 %2965
        %v2968 = vsel %vm818, %v2936, 0
        %v2971 = vsel %vm818, %v2938, 0
        %v2974 = vsel %vm818, %v2940, 0
        %v2977 = vsel %vm818, %v2942, 0
        %v2980 = vsel %vm818, %v2944, 0
        %v2983 = vsel %vm818, %v2946, 0
        %v2986 = vsel %vm818, %v2948, 0
        %v2989 = vsel %vm818, %v2950, 0
        %v2992 = vsel %vm818, %v2952, 0
        %v2995 = vsel %vm818, %v2954, 0
        %v2998 = vsel %vm818, %v2956, 0
        %v3001 = vsel %vm818, %v2958, 0
        %v3004 = vsel %vm818, %v2960, 0
        %v3007 = vsel %vm818, %v2962, 0
        %v3010 = vsel %vm818, %v2964, 0
        %v3013 = vsel %vm818, %v2966, 0
        %3015 = vmatpush.bf16.xpose.msra.mxu0 %v3013
        %3016 = vmatpush.bf16.xpose.msra.mxu0 %v3010
        %3017 = vmatpush.bf16.xpose.msra.mxu0 %v3007
        %3018 = vmatpush.bf16.xpose.msra.mxu0 %v3004
        %3019 = vmatpush.bf16.xpose.msra.mxu0 %v3001
        %3020 = vmatpush.bf16.xpose.msra.mxu0 %v2998
        %3021 = vmatpush.bf16.xpose.msra.mxu0 %v2995
        %3022 = vmatpush.bf16.xpose.msra.mxu0 %v2992
        %3023 = vmatmul.bf16.gmra.mxu0 %v2968
        %v3024 = vpop.f32.mrf.mxu0
        %v3025 = vadd.f32 %v689, %v3024
        %v3026 = vpop.f32.mrf.mxu0
        %v3027 = vadd.f32 %v689, %v3026
        %3028 = vmatmul.bf16.gmra.mxu0 %v2971
        %v3029 = vpop.f32.mrf.mxu0
        %v3030 = vadd.f32 %v689, %v3029
        %v3031 = vpop.f32.mrf.mxu0
        %v3032 = vadd.f32 %v689, %v3031
        %3033 = vmatmul.bf16.gmra.mxu0 %v2974
        %v3034 = vpop.f32.mrf.mxu0
        %v3035 = vadd.f32 %v689, %v3034
        %v3036 = vpop.f32.mrf.mxu0
        %v3037 = vadd.f32 %v689, %v3036
        %3038 = vmatmul.bf16.gmra.mxu0 %v2977
        %v3039 = vpop.f32.mrf.mxu0
        %v3040 = vadd.f32 %v689, %v3039
        %v3041 = vpop.f32.mrf.mxu0
        %v3042 = vadd.f32 %v689, %v3041
        %3043 = vmatmul.bf16.gmra.mxu0 %v2980
        %v3044 = vpop.f32.mrf.mxu0
        %v3045 = vadd.f32 %v689, %v3044
        %v3046 = vpop.f32.mrf.mxu0
        %v3047 = vadd.f32 %v689, %v3046
        %3048 = vmatmul.bf16.gmra.mxu0 %v2983
        %v3049 = vpop.f32.mrf.mxu0
        %v3050 = vadd.f32 %v689, %v3049
        %v3051 = vpop.f32.mrf.mxu0
        %v3052 = vadd.f32 %v689, %v3051
        %3053 = vmatmul.bf16.gmra.mxu0 %v2986
        %v3054 = vpop.f32.mrf.mxu0
        %v3055 = vadd.f32 %v689, %v3054
        %v3056 = vpop.f32.mrf.mxu0
        %v3057 = vadd.f32 %v689, %v3056
        %3058 = vmatmul.bf16.gmra.mxu0 %v2989
        %v3059 = vpop.f32.mrf.mxu0
        %v3060 = vadd.f32 %v689, %v3059
        %v3061 = vpop.f32.mrf.mxu0
        %v3062 = vadd.f32 %v689, %v3061
        %3063 = vdwg.mxu0
        %3064 = vmax.xlane.f32.xlu0 %v3025
        %v3065 = vpop.xlane.xlu0 %3064
        %3066 = vmax.xlane.f32.xlu0 %v3027
        %v3067 = vpop.xlane.xlu0 %3066
        %3068 = vmax.xlane.f32.xlu0 %v3030
        %v3069 = vpop.xlane.xlu0 %3068
        %3070 = vmax.xlane.f32.xlu0 %v3032
        %v3071 = vpop.xlane.xlu0 %3070
        %3072 = vmax.xlane.f32.xlu0 %v3035
        %v3073 = vpop.xlane.xlu0 %3072
        %3074 = vmax.xlane.f32.xlu0 %v3037
        %v3075 = vpop.xlane.xlu0 %3074
        %3076 = vmax.xlane.f32.xlu0 %v3040
        %v3077 = vpop.xlane.xlu0 %3076
        %3078 = vmax.xlane.f32.xlu0 %v3042
        %v3079 = vpop.xlane.xlu0 %3078
        %3080 = vmax.xlane.f32.xlu0 %v3045
        %v3081 = vpop.xlane.xlu0 %3080
        %3082 = vmax.xlane.f32.xlu0 %v3047
        %v3083 = vpop.xlane.xlu0 %3082
        %3084 = vmax.xlane.f32.xlu0 %v3050
        %v3085 = vpop.xlane.xlu0 %3084
        %3086 = vmax.xlane.f32.xlu0 %v3052
        %v3087 = vpop.xlane.xlu0 %3086
        %3088 = vmax.xlane.f32.xlu0 %v3055
        %v3089 = vpop.xlane.xlu0 %3088
        %3090 = vmax.xlane.f32.xlu0 %v3057
        %v3091 = vpop.xlane.xlu0 %3090
        %3092 = vmax.xlane.f32.xlu0 %v3060
        %v3093 = vpop.xlane.xlu0 %3092
        %3094 = vmax.xlane.f32.xlu0 %v3062
        %v3095 = vpop.xlane.xlu0 %3094
        %v3096 = vsub.f32 %v3025, %v3065
        %v3097 = vsub.f32 %v3027, %v3067
        %v3098 = vsub.f32 %v3030, %v3069
        %v3099 = vsub.f32 %v3032, %v3071
        %v3100 = vsub.f32 %v3035, %v3073
        %v3101 = vsub.f32 %v3037, %v3075
        %v3102 = vsub.f32 %v3040, %v3077
        %v3103 = vsub.f32 %v3042, %v3079
        %v3104 = vsub.f32 %v3045, %v3081
        %v3105 = vsub.f32 %v3047, %v3083
        %v3106 = vsub.f32 %v3050, %v3085
        %v3107 = vsub.f32 %v3052, %v3087
        %v3108 = vsub.f32 %v3055, %v3089
        %v3109 = vsub.f32 %v3057, %v3091
        %v3110 = vsub.f32 %v3060, %v3093
        %v3111 = vsub.f32 %v3062, %v3095
        %v3112 = vmul.f32 %v3096, 1.442695
        %v3113 = vpow.pop %v3112
        %v3114 = vmul.f32 %v3097, 1.442695
        %v3115 = vpow.pop %v3114
        %v3116 = vmul.f32 %v3098, 1.442695
        %v3117 = vpow.pop %v3116
        %v3118 = vmul.f32 %v3099, 1.442695
        %v3119 = vpow.pop %v3118
        %v3120 = vmul.f32 %v3100, 1.442695
        %v3121 = vpow.pop %v3120
        %v3122 = vmul.f32 %v3101, 1.442695
        %v3123 = vpow.pop %v3122
        %v3124 = vmul.f32 %v3102, 1.442695
        %v3125 = vpow.pop %v3124
        %v3126 = vmul.f32 %v3103, 1.442695
        %v3127 = vpow.pop %v3126
        %v3128 = vmul.f32 %v3104, 1.442695
        %v3129 = vpow.pop %v3128
        %v3130 = vmul.f32 %v3105, 1.442695
        %v3131 = vpow.pop %v3130
        %v3132 = vmul.f32 %v3106, 1.442695
        %v3133 = vpow.pop %v3132
        %v3134 = vmul.f32 %v3107, 1.442695
        %v3135 = vpow.pop %v3134
        %v3136 = vmul.f32 %v3108, 1.442695
        %v3137 = vpow.pop %v3136
        %v3138 = vmul.f32 %v3109, 1.442695
        %v3139 = vpow.pop %v3138
        %v3140 = vmul.f32 %v3110, 1.442695
        %v3141 = vpow.pop %v3140
        %v3142 = vmul.f32 %v3111, 1.442695
        %v3143 = vpow.pop %v3142
        %3144 = vadd.xlane.f32.xlu0 %v3113
        %v3145 = vpop.xlane.xlu0 %3144
        %3146 = vadd.xlane.f32.xlu0 %v3115
        %v3147 = vpop.xlane.xlu0 %3146
        %3148 = vadd.xlane.f32.xlu0 %v3117
        %v3149 = vpop.xlane.xlu0 %3148
        %3150 = vadd.xlane.f32.xlu0 %v3119
        %v3151 = vpop.xlane.xlu0 %3150
        %3152 = vadd.xlane.f32.xlu0 %v3121
        %v3153 = vpop.xlane.xlu0 %3152
        %3154 = vadd.xlane.f32.xlu0 %v3123
        %v3155 = vpop.xlane.xlu0 %3154
        %3156 = vadd.xlane.f32.xlu0 %v3125
        %v3157 = vpop.xlane.xlu0 %3156
        %3158 = vadd.xlane.f32.xlu0 %v3127
        %v3159 = vpop.xlane.xlu0 %3158
        %3160 = vadd.xlane.f32.xlu0 %v3129
        %v3161 = vpop.xlane.xlu0 %3160
        %3162 = vadd.xlane.f32.xlu0 %v3131
        %v3163 = vpop.xlane.xlu0 %3162
        %3164 = vadd.xlane.f32.xlu0 %v3133
        %v3165 = vpop.xlane.xlu0 %3164
        %3166 = vadd.xlane.f32.xlu0 %v3135
        %v3167 = vpop.xlane.xlu0 %3166
        %3168 = vadd.xlane.f32.xlu0 %v3137
        %v3169 = vpop.xlane.xlu0 %3168
        %3170 = vadd.xlane.f32.xlu0 %v3139
        %v3171 = vpop.xlane.xlu0 %3170
        %3172 = vadd.xlane.f32.xlu0 %v3141
        %v3173 = vpop.xlane.xlu0 %3172
        %3174 = vadd.xlane.f32.xlu0 %v3143
        %v3175 = vpop.xlane.xlu0 %3174
        %v3176 = vpack.c.bf16 %v3115, %v3113
        %v3177 = vpack.c.bf16 %v3119, %v3117
        %v3178 = vpack.c.bf16 %v3123, %v3121
        %v3179 = vpack.c.bf16 %v3127, %v3125
        %v3180 = vpack.c.bf16 %v3131, %v3129
        %v3181 = vpack.c.bf16 %v3135, %v3133
        %v3182 = vpack.c.bf16 %v3139, %v3137
        %v3183 = vpack.c.bf16 %v3143, %v3141
        %3184 = vrot.lane.b32.xlu0 %v1068, 32
        %v3185 = vpop.permute.xlu0 %3184
        %3186 = vrot.lane.b32.xlu0 %v1069, 32
        %v3187 = vpop.permute.xlu0 %3186
        %3188 = vrot.lane.b32.xlu0 %v1070, 32
        %v3189 = vpop.permute.xlu0 %3188
        %3190 = vrot.lane.b32.xlu0 %v1071, 32
        %v3191 = vpop.permute.xlu0 %3190
        %3192 = vrot.lane.b32.xlu0 %v1072, 32
        %v3193 = vpop.permute.xlu0 %3192
        %3194 = vrot.lane.b32.xlu0 %v1073, 32
        %v3195 = vpop.permute.xlu0 %3194
        %3196 = vrot.lane.b32.xlu0 %v1074, 32
        %v3197 = vpop.permute.xlu0 %3196
        %3198 = vrot.lane.b32.xlu0 %v1075, 32
        %v3199 = vpop.permute.xlu0 %3198
        %3208 = vmatpush.bf16.msra.mxu0 %v3199
        %3209 = vmatpush.bf16.msra.mxu0 %v3197
        %3210 = vmatpush.bf16.msra.mxu0 %v3195
        %3211 = vmatpush.bf16.msra.mxu0 %v3193
        %3212 = vmatpush.bf16.msra.mxu0 %v3191
        %3213 = vmatpush.bf16.msra.mxu0 %v3189
        %3214 = vmatpush.bf16.msra.mxu0 %v3187
        %3215 = vmatpush.bf16.msra.mxu0 %v3185
        %3216 = vmatmul.bf16.gmra.mxu0 %v3176
        %v3217 = vpop.f32.mrf.mxu0
        %v3218 = vadd.f32 0.0, %v3217
        %v3219 = vpop.f32.mrf.mxu0
        %v3220 = vadd.f32 0.0, %v3219
        %3221 = vmatmul.bf16.gmra.mxu0 %v3177
        %v3222 = vpop.f32.mrf.mxu0
        %v3223 = vadd.f32 0.0, %v3222
        %v3224 = vpop.f32.mrf.mxu0
        %v3225 = vadd.f32 0.0, %v3224
        %3226 = vmatmul.bf16.gmra.mxu0 %v3178
        %v3227 = vpop.f32.mrf.mxu0
        %v3228 = vadd.f32 0.0, %v3227
        %v3229 = vpop.f32.mrf.mxu0
        %v3230 = vadd.f32 0.0, %v3229
        %3231 = vmatmul.bf16.gmra.mxu0 %v3179
        %v3232 = vpop.f32.mrf.mxu0
        %v3233 = vadd.f32 0.0, %v3232
        %v3234 = vpop.f32.mrf.mxu0
        %v3235 = vadd.f32 0.0, %v3234
        %3236 = vmatmul.bf16.gmra.mxu0 %v3180
        %v3237 = vpop.f32.mrf.mxu0
        %v3238 = vadd.f32 0.0, %v3237
        %v3239 = vpop.f32.mrf.mxu0
        %v3240 = vadd.f32 0.0, %v3239
        %3241 = vmatmul.bf16.gmra.mxu0 %v3181
        %v3242 = vpop.f32.mrf.mxu0
        %v3243 = vadd.f32 0.0, %v3242
        %v3244 = vpop.f32.mrf.mxu0
        %v3245 = vadd.f32 0.0, %v3244
        %3246 = vmatmul.bf16.gmra.mxu0 %v3182
        %v3247 = vpop.f32.mrf.mxu0
        %v3248 = vadd.f32 0.0, %v3247
        %v3249 = vpop.f32.mrf.mxu0
        %v3250 = vadd.f32 0.0, %v3249
        %3251 = vmatmul.bf16.gmra.mxu0 %v3183
        %v3252 = vpop.f32.mrf.mxu0
        %v3253 = vadd.f32 0.0, %v3252
        %v3254 = vpop.f32.mrf.mxu0
        %v3255 = vadd.f32 0.0, %v3254
        %3256 = vdwg.mxu0
        %v3257 = vrcp.pop %v3145
        %v3258 = vrcp.pop %v3147
        %v3259 = vrcp.pop %v3149
        %v3260 = vrcp.pop %v3151
        %v3261 = vrcp.pop %v3153
        %v3262 = vrcp.pop %v3155
        %v3263 = vrcp.pop %v3157
        %v3264 = vrcp.pop %v3159
        %v3265 = vrcp.pop %v3161
        %v3266 = vrcp.pop %v3163
        %v3267 = vrcp.pop %v3165
        %v3268 = vrcp.pop %v3167
        %v3269 = vrcp.pop %v3169
        %v3270 = vrcp.pop %v3171
        %v3271 = vrcp.pop %v3173
        %v3272 = vrcp.pop %v3175
        %v3273 = vmul.f32 %v3218, %v3257
        %v3274 = vmul.f32 %v3220, %v3258
        %v3275 = vmul.f32 %v3223, %v3259
        %v3276 = vmul.f32 %v3225, %v3260
        %v3277 = vmul.f32 %v3228, %v3261
        %v3278 = vmul.f32 %v3230, %v3262
        %v3279 = vmul.f32 %v3233, %v3263
        %v3280 = vmul.f32 %v3235, %v3264
        %v3281 = vmul.f32 %v3238, %v3265
        %v3282 = vmul.f32 %v3240, %v3266
        %v3283 = vmul.f32 %v3243, %v3267
        %v3284 = vmul.f32 %v3245, %v3268
        %v3285 = vmul.f32 %v3248, %v3269
        %v3286 = vmul.f32 %v3250, %v3270
        %v3287 = vmul.f32 %v3253, %v3271
        %v3288 = vmul.f32 %v3255, %v3272
        %3289 = vrot.lane.b32.xlu0 %v770, 16
        %v3290 = vpop.permute.xlu0 %3289
        %3291 = vrot.lane.b32.xlu0 %v771, 16
        %v3292 = vpop.permute.xlu0 %3291
        %3293 = vrot.lane.b32.xlu0 %v772, 16
        %v3294 = vpop.permute.xlu0 %3293
        %3295 = vrot.lane.b32.xlu0 %v773, 16
        %v3296 = vpop.permute.xlu0 %3295
        %3297 = vrot.lane.b32.xlu0 %v774, 16
        %v3298 = vpop.permute.xlu0 %3297
        %3299 = vrot.lane.b32.xlu0 %v775, 16
        %v3300 = vpop.permute.xlu0 %3299
        %3301 = vrot.lane.b32.xlu0 %v776, 16
        %v3302 = vpop.permute.xlu0 %3301
        %3303 = vrot.lane.b32.xlu0 %v777, 16
        %v3304 = vpop.permute.xlu0 %3303
        %3305 = vrot.lane.b32.xlu0 %v810, 16
        %v3306 = vpop.permute.xlu0 %3305
        %3307 = vrot.lane.b32.xlu0 %v811, 16
        %v3308 = vpop.permute.xlu0 %3307
        %3309 = vrot.lane.b32.xlu0 %v812, 16
        %v3310 = vpop.permute.xlu0 %3309
        %3311 = vrot.lane.b32.xlu0 %v813, 16
        %v3312 = vpop.permute.xlu0 %3311
        %3313 = vrot.lane.b32.xlu0 %v814, 16
        %v3314 = vpop.permute.xlu0 %3313
        %3315 = vrot.lane.b32.xlu0 %v815, 16
        %v3316 = vpop.permute.xlu0 %3315
        %3317 = vrot.lane.b32.xlu0 %v816, 16
        %v3318 = vpop.permute.xlu0 %3317
        %3319 = vrot.lane.b32.xlu0 %v817, 16
        %v3320 = vpop.permute.xlu0 %3319
        %v3322 = vsel %vm818, %v3290, 0
        %v3325 = vsel %vm818, %v3292, 0
        %v3328 = vsel %vm818, %v3294, 0
        %v3331 = vsel %vm818, %v3296, 0
        %v3334 = vsel %vm818, %v3298, 0
        %v3337 = vsel %vm818, %v3300, 0
        %v3340 = vsel %vm818, %v3302, 0
        %v3343 = vsel %vm818, %v3304, 0
        %v3346 = vsel %vm818, %v3306, 0
        %v3349 = vsel %vm818, %v3308, 0
        %v3352 = vsel %vm818, %v3310, 0
        %v3355 = vsel %vm818, %v3312, 0
        %v3358 = vsel %vm818, %v3314, 0
        %v3361 = vsel %vm818, %v3316, 0
        %v3364 = vsel %vm818, %v3318, 0
        %v3367 = vsel %vm818, %v3320, 0
        %3369 = vmatpush.bf16.xpose.msra.mxu0 %v3367
        %3370 = vmatpush.bf16.xpose.msra.mxu0 %v3364
        %3371 = vmatpush.bf16.xpose.msra.mxu0 %v3361
        %3372 = vmatpush.bf16.xpose.msra.mxu0 %v3358
        %3373 = vmatpush.bf16.xpose.msra.mxu0 %v3355
        %3374 = vmatpush.bf16.xpose.msra.mxu0 %v3352
        %3375 = vmatpush.bf16.xpose.msra.mxu0 %v3349
        %3376 = vmatpush.bf16.xpose.msra.mxu0 %v3346
        %3377 = vmatmul.bf16.gmra.mxu0 %v3322
        %v3378 = vpop.f32.mrf.mxu0
        %v3379 = vadd.f32 %v689, %v3378
        %v3380 = vpop.f32.mrf.mxu0
        %v3381 = vadd.f32 %v689, %v3380
        %3382 = vmatmul.bf16.gmra.mxu0 %v3325
        %v3383 = vpop.f32.mrf.mxu0
        %v3384 = vadd.f32 %v689, %v3383
        %v3385 = vpop.f32.mrf.mxu0
        %v3386 = vadd.f32 %v689, %v3385
        %3387 = vmatmul.bf16.gmra.mxu0 %v3328
        %v3388 = vpop.f32.mrf.mxu0
        %v3389 = vadd.f32 %v689, %v3388
        %v3390 = vpop.f32.mrf.mxu0
        %v3391 = vadd.f32 %v689, %v3390
        %3392 = vmatmul.bf16.gmra.mxu0 %v3331
        %v3393 = vpop.f32.mrf.mxu0
        %v3394 = vadd.f32 %v689, %v3393
        %v3395 = vpop.f32.mrf.mxu0
        %v3396 = vadd.f32 %v689, %v3395
        %3397 = vmatmul.bf16.gmra.mxu0 %v3334
        %v3398 = vpop.f32.mrf.mxu0
        %v3399 = vadd.f32 %v689, %v3398
        %v3400 = vpop.f32.mrf.mxu0
        %v3401 = vadd.f32 %v689, %v3400
        %3402 = vmatmul.bf16.gmra.mxu0 %v3337
        %v3403 = vpop.f32.mrf.mxu0
        %v3404 = vadd.f32 %v689, %v3403
        %v3405 = vpop.f32.mrf.mxu0
        %v3406 = vadd.f32 %v689, %v3405
        %3407 = vmatmul.bf16.gmra.mxu0 %v3340
        %v3408 = vpop.f32.mrf.mxu0
        %v3409 = vadd.f32 %v689, %v3408
        %v3410 = vpop.f32.mrf.mxu0
        %v3411 = vadd.f32 %v689, %v3410
        %3412 = vmatmul.bf16.gmra.mxu0 %v3343
        %v3413 = vpop.f32.mrf.mxu0
        %v3414 = vadd.f32 %v689, %v3413
        %v3415 = vpop.f32.mrf.mxu0
        %v3416 = vadd.f32 %v689, %v3415
        %3417 = vdwg.mxu0
        %3418 = vmax.xlane.f32.xlu0 %v3379
        %v3419 = vpop.xlane.xlu0 %3418
        %3420 = vmax.xlane.f32.xlu0 %v3381
        %v3421 = vpop.xlane.xlu0 %3420
        %3422 = vmax.xlane.f32.xlu0 %v3384
        %v3423 = vpop.xlane.xlu0 %3422
        %3424 = vmax.xlane.f32.xlu0 %v3386
        %v3425 = vpop.xlane.xlu0 %3424
        %3426 = vmax.xlane.f32.xlu0 %v3389
        %v3427 = vpop.xlane.xlu0 %3426
        %3428 = vmax.xlane.f32.xlu0 %v3391
        %v3429 = vpop.xlane.xlu0 %3428
        %3430 = vmax.xlane.f32.xlu0 %v3394
        %v3431 = vpop.xlane.xlu0 %3430
        %3432 = vmax.xlane.f32.xlu0 %v3396
        %v3433 = vpop.xlane.xlu0 %3432
        %3434 = vmax.xlane.f32.xlu0 %v3399
        %v3435 = vpop.xlane.xlu0 %3434
        %3436 = vmax.xlane.f32.xlu0 %v3401
        %v3437 = vpop.xlane.xlu0 %3436
        %3438 = vmax.xlane.f32.xlu0 %v3404
        %v3439 = vpop.xlane.xlu0 %3438
        %3440 = vmax.xlane.f32.xlu0 %v3406
        %v3441 = vpop.xlane.xlu0 %3440
        %3442 = vmax.xlane.f32.xlu0 %v3409
        %v3443 = vpop.xlane.xlu0 %3442
        %3444 = vmax.xlane.f32.xlu0 %v3411
        %v3445 = vpop.xlane.xlu0 %3444
        %3446 = vmax.xlane.f32.xlu0 %v3414
        %v3447 = vpop.xlane.xlu0 %3446
        %3448 = vmax.xlane.f32.xlu0 %v3416
        %v3449 = vpop.xlane.xlu0 %3448
        %v3450 = vsub.f32 %v3379, %v3419
        %v3451 = vsub.f32 %v3381, %v3421
        %v3452 = vsub.f32 %v3384, %v3423
        %v3453 = vsub.f32 %v3386, %v3425
        %v3454 = vsub.f32 %v3389, %v3427
        %v3455 = vsub.f32 %v3391, %v3429
        %v3456 = vsub.f32 %v3394, %v3431
        %v3457 = vsub.f32 %v3396, %v3433
        %v3458 = vsub.f32 %v3399, %v3435
        %v3459 = vsub.f32 %v3401, %v3437
        %v3460 = vsub.f32 %v3404, %v3439
        %v3461 = vsub.f32 %v3406, %v3441
        %v3462 = vsub.f32 %v3409, %v3443
        %v3463 = vsub.f32 %v3411, %v3445
        %v3464 = vsub.f32 %v3414, %v3447
        %v3465 = vsub.f32 %v3416, %v3449
        %v3466 = vmul.f32 %v3450, 1.442695
        %v3467 = vpow.pop %v3466
        %v3468 = vmul.f32 %v3451, 1.442695
        %v3469 = vpow.pop %v3468
        %v3470 = vmul.f32 %v3452, 1.442695
        %v3471 = vpow.pop %v3470
        %v3472 = vmul.f32 %v3453, 1.442695
        %v3473 = vpow.pop %v3472
        %v3474 = vmul.f32 %v3454, 1.442695
        %v3475 = vpow.pop %v3474
        %v3476 = vmul.f32 %v3455, 1.442695
        %v3477 = vpow.pop %v3476
        %v3478 = vmul.f32 %v3456, 1.442695
        %v3479 = vpow.pop %v3478
        %v3480 = vmul.f32 %v3457, 1.442695
        %v3481 = vpow.pop %v3480
        %v3482 = vmul.f32 %v3458, 1.442695
        %v3483 = vpow.pop %v3482
        %v3484 = vmul.f32 %v3459, 1.442695
        %v3485 = vpow.pop %v3484
        %v3486 = vmul.f32 %v3460, 1.442695
        %v3487 = vpow.pop %v3486
        %v3488 = vmul.f32 %v3461, 1.442695
        %v3489 = vpow.pop %v3488
        %v3490 = vmul.f32 %v3462, 1.442695
        %v3491 = vpow.pop %v3490
        %v3492 = vmul.f32 %v3463, 1.442695
        %v3493 = vpow.pop %v3492
        %v3494 = vmul.f32 %v3464, 1.442695
        %v3495 = vpow.pop %v3494
        %v3496 = vmul.f32 %v3465, 1.442695
        %v3497 = vpow.pop %v3496
        %3498 = vadd.xlane.f32.xlu0 %v3467
        %v3499 = vpop.xlane.xlu0 %3498
        %3500 = vadd.xlane.f32.xlu0 %v3469
        %v3501 = vpop.xlane.xlu0 %3500
        %3502 = vadd.xlane.f32.xlu0 %v3471
        %v3503 = vpop.xlane.xlu0 %3502
        %3504 = vadd.xlane.f32.xlu0 %v3473
        %v3505 = vpop.xlane.xlu0 %3504
        %3506 = vadd.xlane.f32.xlu0 %v3475
        %v3507 = vpop.xlane.xlu0 %3506
        %3508 = vadd.xlane.f32.xlu0 %v3477
        %v3509 = vpop.xlane.xlu0 %3508
        %3510 = vadd.xlane.f32.xlu0 %v3479
        %v3511 = vpop.xlane.xlu0 %3510
        %3512 = vadd.xlane.f32.xlu0 %v3481
        %v3513 = vpop.xlane.xlu0 %3512
        %3514 = vadd.xlane.f32.xlu0 %v3483
        %v3515 = vpop.xlane.xlu0 %3514
        %3516 = vadd.xlane.f32.xlu0 %v3485
        %v3517 = vpop.xlane.xlu0 %3516
        %3518 = vadd.xlane.f32.xlu0 %v3487
        %v3519 = vpop.xlane.xlu0 %3518
        %3520 = vadd.xlane.f32.xlu0 %v3489
        %v3521 = vpop.xlane.xlu0 %3520
        %3522 = vadd.xlane.f32.xlu0 %v3491
        %v3523 = vpop.xlane.xlu0 %3522
        %3524 = vadd.xlane.f32.xlu0 %v3493
        %v3525 = vpop.xlane.xlu0 %3524
        %3526 = vadd.xlane.f32.xlu0 %v3495
        %v3527 = vpop.xlane.xlu0 %3526
        %3528 = vadd.xlane.f32.xlu0 %v3497
        %v3529 = vpop.xlane.xlu0 %3528
        %v3530 = vpack.c.bf16 %v3469, %v3467
        %v3531 = vpack.c.bf16 %v3473, %v3471
        %v3532 = vpack.c.bf16 %v3477, %v3475
        %v3533 = vpack.c.bf16 %v3481, %v3479
        %v3534 = vpack.c.bf16 %v3485, %v3483
        %v3535 = vpack.c.bf16 %v3489, %v3487
        %v3536 = vpack.c.bf16 %v3493, %v3491
        %v3537 = vpack.c.bf16 %v3497, %v3495
        %3538 = vrot.lane.b32.xlu0 %v1068, 16
        %v3539 = vpop.permute.xlu0 %3538
        %3540 = vrot.lane.b32.xlu0 %v1069, 16
        %v3541 = vpop.permute.xlu0 %3540
        %3542 = vrot.lane.b32.xlu0 %v1070, 16
        %v3543 = vpop.permute.xlu0 %3542
        %3544 = vrot.lane.b32.xlu0 %v1071, 16
        %v3545 = vpop.permute.xlu0 %3544
        %3546 = vrot.lane.b32.xlu0 %v1072, 16
        %v3547 = vpop.permute.xlu0 %3546
        %3548 = vrot.lane.b32.xlu0 %v1073, 16
        %v3549 = vpop.permute.xlu0 %3548
        %3550 = vrot.lane.b32.xlu0 %v1074, 16
        %v3551 = vpop.permute.xlu0 %3550
        %3552 = vrot.lane.b32.xlu0 %v1075, 16
        %v3553 = vpop.permute.xlu0 %3552
        %3562 = vmatpush.bf16.msra.mxu0 %v3553
        %3563 = vmatpush.bf16.msra.mxu0 %v3551
        %3564 = vmatpush.bf16.msra.mxu0 %v3549
        %3565 = vmatpush.bf16.msra.mxu0 %v3547
        %3566 = vmatpush.bf16.msra.mxu0 %v3545
        %3567 = vmatpush.bf16.msra.mxu0 %v3543
        %3568 = vmatpush.bf16.msra.mxu0 %v3541
        %3569 = vmatpush.bf16.msra.mxu0 %v3539
        %3570 = vmatmul.bf16.gmra.mxu0 %v3530
        %v3571 = vpop.f32.mrf.mxu0
        %v3572 = vadd.f32 0.0, %v3571
        %v3573 = vpop.f32.mrf.mxu0
        %v3574 = vadd.f32 0.0, %v3573
        %3575 = vmatmul.bf16.gmra.mxu0 %v3531
        %v3576 = vpop.f32.mrf.mxu0
        %v3577 = vadd.f32 0.0, %v3576
        %v3578 = vpop.f32.mrf.mxu0
        %v3579 = vadd.f32 0.0, %v3578
        %3580 = vmatmul.bf16.gmra.mxu0 %v3532
        %v3581 = vpop.f32.mrf.mxu0
        %v3582 = vadd.f32 0.0, %v3581
        %v3583 = vpop.f32.mrf.mxu0
        %v3584 = vadd.f32 0.0, %v3583
        %3585 = vmatmul.bf16.gmra.mxu0 %v3533
        %v3586 = vpop.f32.mrf.mxu0
        %v3587 = vadd.f32 0.0, %v3586
        %v3588 = vpop.f32.mrf.mxu0
        %v3589 = vadd.f32 0.0, %v3588
        %3590 = vmatmul.bf16.gmra.mxu0 %v3534
        %v3591 = vpop.f32.mrf.mxu0
        %v3592 = vadd.f32 0.0, %v3591
        %v3593 = vpop.f32.mrf.mxu0
        %v3594 = vadd.f32 0.0, %v3593
        %3595 = vmatmul.bf16.gmra.mxu0 %v3535
        %v3596 = vpop.f32.mrf.mxu0
        %v3597 = vadd.f32 0.0, %v3596
        %v3598 = vpop.f32.mrf.mxu0
        %v3599 = vadd.f32 0.0, %v3598
        %3600 = vmatmul.bf16.gmra.mxu0 %v3536
        %v3601 = vpop.f32.mrf.mxu0
        %v3602 = vadd.f32 0.0, %v3601
        %v3603 = vpop.f32.mrf.mxu0
        %v3604 = vadd.f32 0.0, %v3603
        %3605 = vmatmul.bf16.gmra.mxu0 %v3537
        %v3606 = vpop.f32.mrf.mxu0
        %v3607 = vadd.f32 0.0, %v3606
        %v3608 = vpop.f32.mrf.mxu0
        %v3609 = vadd.f32 0.0, %v3608
        %3610 = vdwg.mxu0
        %v3611 = vrcp.pop %v3499
        %v3612 = vrcp.pop %v3501
        %v3613 = vrcp.pop %v3503
        %v3614 = vrcp.pop %v3505
        %v3615 = vrcp.pop %v3507
        %v3616 = vrcp.pop %v3509
        %v3617 = vrcp.pop %v3511
        %v3618 = vrcp.pop %v3513
        %v3619 = vrcp.pop %v3515
        %v3620 = vrcp.pop %v3517
        %v3621 = vrcp.pop %v3519
        %v3622 = vrcp.pop %v3521
        %v3623 = vrcp.pop %v3523
        %v3624 = vrcp.pop %v3525
        %v3625 = vrcp.pop %v3527
        %v3626 = vrcp.pop %v3529
        %v3627 = vmul.f32 %v3572, %v3611
        %v3628 = vmul.f32 %v3574, %v3612
        %v3629 = vmul.f32 %v3577, %v3613
        %v3630 = vmul.f32 %v3579, %v3614
        %v3631 = vmul.f32 %v3582, %v3615
        %v3632 = vmul.f32 %v3584, %v3616
        %v3633 = vmul.f32 %v3587, %v3617
        %v3634 = vmul.f32 %v3589, %v3618
        %v3635 = vmul.f32 %v3592, %v3619
        %v3636 = vmul.f32 %v3594, %v3620
        %v3637 = vmul.f32 %v3597, %v3621
        %v3638 = vmul.f32 %v3599, %v3622
        %v3639 = vmul.f32 %v3602, %v3623
        %v3640 = vmul.f32 %v3604, %v3624
        %v3641 = vmul.f32 %v3607, %v3625
        %v3642 = vmul.f32 %v3609, %v3626
        %3659 = vrot.lane.b32.xlu0 %v1503, 16
        %v3660 = vpop.permute.xlu0 %3659
        %3661 = vrot.lane.b32.xlu0 %v1504, 16
        %v3662 = vpop.permute.xlu0 %3661
        %3663 = vrot.lane.b32.xlu0 %v1505, 16
        %v3664 = vpop.permute.xlu0 %3663
        %3665 = vrot.lane.b32.xlu0 %v1506, 16
        %v3666 = vpop.permute.xlu0 %3665
        %3667 = vrot.lane.b32.xlu0 %v1507, 16
        %v3668 = vpop.permute.xlu0 %3667
        %3669 = vrot.lane.b32.xlu0 %v1508, 16
        %v3670 = vpop.permute.xlu0 %3669
        %3671 = vrot.lane.b32.xlu0 %v1509, 16
        %v3672 = vpop.permute.xlu0 %3671
        %3673 = vrot.lane.b32.xlu0 %v1510, 16
        %v3674 = vpop.permute.xlu0 %3673
        %3675 = vrot.lane.b32.xlu0 %v1511, 16
        %v3676 = vpop.permute.xlu0 %3675
        %3677 = vrot.lane.b32.xlu0 %v1512, 16
        %v3678 = vpop.permute.xlu0 %3677
        %3679 = vrot.lane.b32.xlu0 %v1513, 16
        %v3680 = vpop.permute.xlu0 %3679
        %3681 = vrot.lane.b32.xlu0 %v1514, 16
        %v3682 = vpop.permute.xlu0 %3681
        %3683 = vrot.lane.b32.xlu0 %v1515, 16
        %v3684 = vpop.permute.xlu0 %3683
        %3685 = vrot.lane.b32.xlu0 %v1516, 16
        %v3686 = vpop.permute.xlu0 %3685
        %3687 = vrot.lane.b32.xlu0 %v1517, 16
        %v3688 = vpop.permute.xlu0 %3687
        %3689 = vrot.lane.b32.xlu0 %v1518, 16
        %v3690 = vpop.permute.xlu0 %3689
        %3723 = vrot.lane.b32.xlu0 %v1857, 32
        %v3724 = vpop.permute.xlu0 %3723
        %3725 = vrot.lane.b32.xlu0 %v1858, 32
        %v3726 = vpop.permute.xlu0 %3725
        %3727 = vrot.lane.b32.xlu0 %v1859, 32
        %v3728 = vpop.permute.xlu0 %3727
        %3729 = vrot.lane.b32.xlu0 %v1860, 32
        %v3730 = vpop.permute.xlu0 %3729
        %3731 = vrot.lane.b32.xlu0 %v1861, 32
        %v3732 = vpop.permute.xlu0 %3731
        %3733 = vrot.lane.b32.xlu0 %v1862, 32
        %v3734 = vpop.permute.xlu0 %3733
        %3735 = vrot.lane.b32.xlu0 %v1863, 32
        %v3736 = vpop.permute.xlu0 %3735
        %3737 = vrot.lane.b32.xlu0 %v1864, 32
        %v3738 = vpop.permute.xlu0 %3737
        %3739 = vrot.lane.b32.xlu0 %v1865, 32
        %v3740 = vpop.permute.xlu0 %3739
        %3741 = vrot.lane.b32.xlu0 %v1866, 32
        %v3742 = vpop.permute.xlu0 %3741
        %3743 = vrot.lane.b32.xlu0 %v1867, 32
        %v3744 = vpop.permute.xlu0 %3743
        %3745 = vrot.lane.b32.xlu0 %v1868, 32
        %v3746 = vpop.permute.xlu0 %3745
        %3747 = vrot.lane.b32.xlu0 %v1869, 32
        %v3748 = vpop.permute.xlu0 %3747
        %3749 = vrot.lane.b32.xlu0 %v1870, 32
        %v3750 = vpop.permute.xlu0 %3749
        %3751 = vrot.lane.b32.xlu0 %v1871, 32
        %v3752 = vpop.permute.xlu0 %3751
        %3753 = vrot.lane.b32.xlu0 %v1872, 32
        %v3754 = vpop.permute.xlu0 %3753
        %3787 = vrot.lane.b32.xlu0 %v2211, 48
        %v3788 = vpop.permute.xlu0 %3787
        %3789 = vrot.lane.b32.xlu0 %v2212, 48
        %v3790 = vpop.permute.xlu0 %3789
        %3791 = vrot.lane.b32.xlu0 %v2213, 48
        %v3792 = vpop.permute.xlu0 %3791
        %3793 = vrot.lane.b32.xlu0 %v2214, 48
        %v3794 = vpop.permute.xlu0 %3793
        %3795 = vrot.lane.b32.xlu0 %v2215, 48
        %v3796 = vpop.permute.xlu0 %3795
        %3797 = vrot.lane.b32.xlu0 %v2216, 48
        %v3798 = vpop.permute.xlu0 %3797
        %3799 = vrot.lane.b32.xlu0 %v2217, 48
        %v3800 = vpop.permute.xlu0 %3799
        %3801 = vrot.lane.b32.xlu0 %v2218, 48
        %v3802 = vpop.permute.xlu0 %3801
        %3803 = vrot.lane.b32.xlu0 %v2219, 48
        %v3804 = vpop.permute.xlu0 %3803
        %3805 = vrot.lane.b32.xlu0 %v2220, 48
        %v3806 = vpop.permute.xlu0 %3805
        %3807 = vrot.lane.b32.xlu0 %v2221, 48
        %v3808 = vpop.permute.xlu0 %3807
        %3809 = vrot.lane.b32.xlu0 %v2222, 48
        %v3810 = vpop.permute.xlu0 %3809
        %3811 = vrot.lane.b32.xlu0 %v2223, 48
        %v3812 = vpop.permute.xlu0 %3811
        %3813 = vrot.lane.b32.xlu0 %v2224, 48
        %v3814 = vpop.permute.xlu0 %3813
        %3815 = vrot.lane.b32.xlu0 %v2225, 48
        %v3816 = vpop.permute.xlu0 %3815
        %3817 = vrot.lane.b32.xlu0 %v2226, 48
        %v3818 = vpop.permute.xlu0 %3817
        %3851 = vrot.lane.b32.xlu0 %v2565, 64
        %v3852 = vpop.permute.xlu0 %3851
        %3853 = vrot.lane.b32.xlu0 %v2566, 64
        %v3854 = vpop.permute.xlu0 %3853
        %3855 = vrot.lane.b32.xlu0 %v2567, 64
        %v3856 = vpop.permute.xlu0 %3855
        %3857 = vrot.lane.b32.xlu0 %v2568, 64
        %v3858 = vpop.permute.xlu0 %3857
        %3859 = vrot.lane.b32.xlu0 %v2569, 64
        %v3860 = vpop.permute.xlu0 %3859
        %3861 = vrot.lane.b32.xlu0 %v2570, 64
        %v3862 = vpop.permute.xlu0 %3861
        %3863 = vrot.lane.b32.xlu0 %v2571, 64
        %v3864 = vpop.permute.xlu0 %3863
        %3865 = vrot.lane.b32.xlu0 %v2572, 64
        %v3866 = vpop.permute.xlu0 %3865
        %3867 = vrot.lane.b32.xlu0 %v2573, 64
        %v3868 = vpop.permute.xlu0 %3867
        %3869 = vrot.lane.b32.xlu0 %v2574, 64
        %v3870 = vpop.permute.xlu0 %3869
        %3871 = vrot.lane.b32.xlu0 %v2575, 64
        %v3872 = vpop.permute.xlu0 %3871
        %3873 = vrot.lane.b32.xlu0 %v2576, 64
        %v3874 = vpop.permute.xlu0 %3873
        %3875 = vrot.lane.b32.xlu0 %v2577, 64
        %v3876 = vpop.permute.xlu0 %3875
        %3877 = vrot.lane.b32.xlu0 %v2578, 64
        %v3878 = vpop.permute.xlu0 %3877
        %3879 = vrot.lane.b32.xlu0 %v2579, 64
        %v3880 = vpop.permute.xlu0 %3879
        %3881 = vrot.lane.b32.xlu0 %v2580, 64
        %v3882 = vpop.permute.xlu0 %3881
        %3915 = vrot.lane.b32.xlu0 %v2919, 80
        %v3916 = vpop.permute.xlu0 %3915
        %3917 = vrot.lane.b32.xlu0 %v2920, 80
        %v3918 = vpop.permute.xlu0 %3917
        %3919 = vrot.lane.b32.xlu0 %v2921, 80
        %v3920 = vpop.permute.xlu0 %3919
        %3921 = vrot.lane.b32.xlu0 %v2922, 80
        %v3922 = vpop.permute.xlu0 %3921
        %3923 = vrot.lane.b32.xlu0 %v2923, 80
        %v3924 = vpop.permute.xlu0 %3923
        %3925 = vrot.lane.b32.xlu0 %v2924, 80
        %v3926 = vpop.permute.xlu0 %3925
        %3927 = vrot.lane.b32.xlu0 %v2925, 80
        %v3928 = vpop.permute.xlu0 %3927
        %3929 = vrot.lane.b32.xlu0 %v2926, 80
        %v3930 = vpop.permute.xlu0 %3929
        %3931 = vrot.lane.b32.xlu0 %v2927, 80
        %v3932 = vpop.permute.xlu0 %3931
        %3933 = vrot.lane.b32.xlu0 %v2928, 80
        %v3934 = vpop.permute.xlu0 %3933
        %3935 = vrot.lane.b32.xlu0 %v2929, 80
        %v3936 = vpop.permute.xlu0 %3935
        %3937 = vrot.lane.b32.xlu0 %v2930, 80
        %v3938 = vpop.permute.xlu0 %3937
        %3939 = vrot.lane.b32.xlu0 %v2931, 80
        %v3940 = vpop.permute.xlu0 %3939
        %3941 = vrot.lane.b32.xlu0 %v2932, 80
        %v3942 = vpop.permute.xlu0 %3941
        %3943 = vrot.lane.b32.xlu0 %v2933, 80
        %v3944 = vpop.permute.xlu0 %3943
        %3945 = vrot.lane.b32.xlu0 %v2934, 80
        %v3946 = vpop.permute.xlu0 %3945
        %3979 = vrot.lane.b32.xlu0 %v3273, 96
        %v3980 = vpop.permute.xlu0 %3979
        %3981 = vrot.lane.b32.xlu0 %v3274, 96
        %v3982 = vpop.permute.xlu0 %3981
        %3983 = vrot.lane.b32.xlu0 %v3275, 96
        %v3984 = vpop.permute.xlu0 %3983
        %3985 = vrot.lane.b32.xlu0 %v3276, 96
        %v3986 = vpop.permute.xlu0 %3985
        %3987 = vrot.lane.b32.xlu0 %v3277, 96
        %v3988 = vpop.permute.xlu0 %3987
        %3989 = vrot.lane.b32.xlu0 %v3278, 96
        %v3990 = vpop.permute.xlu0 %3989
        %3991 = vrot.lane.b32.xlu0 %v3279, 96
        %v3992 = vpop.permute.xlu0 %3991
        %3993 = vrot.lane.b32.xlu0 %v3280, 96
        %v3994 = vpop.permute.xlu0 %3993
        %3995 = vrot.lane.b32.xlu0 %v3281, 96
        %v3996 = vpop.permute.xlu0 %3995
        %3997 = vrot.lane.b32.xlu0 %v3282, 96
        %v3998 = vpop.permute.xlu0 %3997
        %3999 = vrot.lane.b32.xlu0 %v3283, 96
        %v4000 = vpop.permute.xlu0 %3999
        %4001 = vrot.lane.b32.xlu0 %v3284, 96
        %v4002 = vpop.permute.xlu0 %4001
        %4003 = vrot.lane.b32.xlu0 %v3285, 96
        %v4004 = vpop.permute.xlu0 %4003
        %4005 = vrot.lane.b32.xlu0 %v3286, 96
        %v4006 = vpop.permute.xlu0 %4005
        %4007 = vrot.lane.b32.xlu0 %v3287, 96
        %v4008 = vpop.permute.xlu0 %4007
        %4009 = vrot.lane.b32.xlu0 %v3288, 96
        %v4010 = vpop.permute.xlu0 %4009
        %4043 = vrot.lane.b32.xlu0 %v3627, 112
        %v4044 = vpop.permute.xlu0 %4043
        %4045 = vrot.lane.b32.xlu0 %v3628, 112
        %v4046 = vpop.permute.xlu0 %4045
        %4047 = vrot.lane.b32.xlu0 %v3629, 112
        %v4048 = vpop.permute.xlu0 %4047
        %4049 = vrot.lane.b32.xlu0 %v3630, 112
        %v4050 = vpop.permute.xlu0 %4049
        %4051 = vrot.lane.b32.xlu0 %v3631, 112
        %v4052 = vpop.permute.xlu0 %4051
        %4053 = vrot.lane.b32.xlu0 %v3632, 112
        %v4054 = vpop.permute.xlu0 %4053
        %4055 = vrot.lane.b32.xlu0 %v3633, 112
        %v4056 = vpop.permute.xlu0 %4055
        %4057 = vrot.lane.b32.xlu0 %v3634, 112
        %v4058 = vpop.permute.xlu0 %4057
        %4059 = vrot.lane.b32.xlu0 %v3635, 112
        %v4060 = vpop.permute.xlu0 %4059
        %4061 = vrot.lane.b32.xlu0 %v3636, 112
        %v4062 = vpop.permute.xlu0 %4061
        %4063 = vrot.lane.b32.xlu0 %v3637, 112
        %v4064 = vpop.permute.xlu0 %4063
        %4065 = vrot.lane.b32.xlu0 %v3638, 112
        %v4066 = vpop.permute.xlu0 %4065
        %4067 = vrot.lane.b32.xlu0 %v3639, 112
        %v4068 = vpop.permute.xlu0 %4067
        %4069 = vrot.lane.b32.xlu0 %v3640, 112
        %v4070 = vpop.permute.xlu0 %4069
        %4071 = vrot.lane.b32.xlu0 %v3641, 112
        %v4072 = vpop.permute.xlu0 %4071
        %4073 = vrot.lane.b32.xlu0 %v3642, 112
        %v4074 = vpop.permute.xlu0 %4073
        %v4091 = vsel %vm818, %v1149, %v3660
        %v4092 = vsel %vm818, %v1150, %v3662
        %v4093 = vsel %vm818, %v1151, %v3664
        %v4094 = vsel %vm818, %v1152, %v3666
        %v4095 = vsel %vm818, %v1153, %v3668
        %v4096 = vsel %vm818, %v1154, %v3670
        %v4097 = vsel %vm818, %v1155, %v3672
        %v4098 = vsel %vm818, %v1156, %v3674
        %v4099 = vsel %vm818, %v1157, %v3676
        %v4100 = vsel %vm818, %v1158, %v3678
        %v4101 = vsel %vm818, %v1159, %v3680
        %v4102 = vsel %vm818, %v1160, %v3682
        %v4103 = vsel %vm818, %v1161, %v3684
        %v4104 = vsel %vm818, %v1162, %v3686
        %v4105 = vsel %vm818, %v1163, %v3688
        %v4106 = vsel %vm818, %v1164, %v3690
        %vm4107 = vcmask 261120
        %v4108 = vsel %vm4107, %v4091, %v3724
        %v4109 = vsel %vm4107, %v4092, %v3726
        %v4110 = vsel %vm4107, %v4093, %v3728
        %v4111 = vsel %vm4107, %v4094, %v3730
        %v4112 = vsel %vm4107, %v4095, %v3732
        %v4113 = vsel %vm4107, %v4096, %v3734
        %v4114 = vsel %vm4107, %v4097, %v3736
        %v4115 = vsel %vm4107, %v4098, %v3738
        %v4116 = vsel %vm4107, %v4099, %v3740
        %v4117 = vsel %vm4107, %v4100, %v3742
        %v4118 = vsel %vm4107, %v4101, %v3744
        %v4119 = vsel %vm4107, %v4102, %v3746
        %v4120 = vsel %vm4107, %v4103, %v3748
        %v4121 = vsel %vm4107, %v4104, %v3750
        %v4122 = vsel %vm4107, %v4105, %v3752
        %v4123 = vsel %vm4107, %v4106, %v3754
        %vm4124 = vcmask 392192
        %v4125 = vsel %vm4124, %v4108, %v3788
        %v4126 = vsel %vm4124, %v4109, %v3790
        %v4127 = vsel %vm4124, %v4110, %v3792
        %v4128 = vsel %vm4124, %v4111, %v3794
        %v4129 = vsel %vm4124, %v4112, %v3796
        %v4130 = vsel %vm4124, %v4113, %v3798
        %v4131 = vsel %vm4124, %v4114, %v3800
        %v4132 = vsel %vm4124, %v4115, %v3802
        %v4133 = vsel %vm4124, %v4116, %v3804
        %v4134 = vsel %vm4124, %v4117, %v3806
        %v4135 = vsel %vm4124, %v4118, %v3808
        %v4136 = vsel %vm4124, %v4119, %v3810
        %v4137 = vsel %vm4124, %v4120, %v3812
        %v4138 = vsel %vm4124, %v4121, %v3814
        %v4139 = vsel %vm4124, %v4122, %v3816
        %v4140 = vsel %vm4124, %v4123, %v3818
        %vm4141 = vcmask 523264
        %v4142 = vsel %vm4141, %v4125, %v3852
        %v4143 = vsel %vm4141, %v4126, %v3854
        %v4144 = vsel %vm4141, %v4127, %v3856
        %v4145 = vsel %vm4141, %v4128, %v3858
        %v4146 = vsel %vm4141, %v4129, %v3860
        %v4147 = vsel %vm4141, %v4130, %v3862
        %v4148 = vsel %vm4141, %v4131, %v3864
        %v4149 = vsel %vm4141, %v4132, %v3866
        %v4150 = vsel %vm4141, %v4133, %v3868
        %v4151 = vsel %vm4141, %v4134, %v3870
        %v4152 = vsel %vm4141, %v4135, %v3872
        %v4153 = vsel %vm4141, %v4136, %v3874
        %v4154 = vsel %vm4141, %v4137, %v3876
        %v4155 = vsel %vm4141, %v4138, %v3878
        %v4156 = vsel %vm4141, %v4139, %v3880
        %v4157 = vsel %vm4141, %v4140, %v3882
        %vm4158 = vcmask 654336
        %v4159 = vsel %vm4158, %v4142, %v3916
        %v4160 = vsel %vm4158, %v4143, %v3918
        %v4161 = vsel %vm4158, %v4144, %v3920
        %v4162 = vsel %vm4158, %v4145, %v3922
        %v4163 = vsel %vm4158, %v4146, %v3924
        %v4164 = vsel %vm4158, %v4147, %v3926
        %v4165 = vsel %vm4158, %v4148, %v3928
        %v4166 = vsel %vm4158, %v4149, %v3930
        %v4167 = vsel %vm4158, %v4150, %v3932
        %v4168 = vsel %vm4158, %v4151, %v3934
        %v4169 = vsel %vm4158, %v4152, %v3936
        %v4170 = vsel %vm4158, %v4153, %v3938
        %v4171 = vsel %vm4158, %v4154, %v3940
        %v4172 = vsel %vm4158, %v4155, %v3942
        %v4173 = vsel %vm4158, %v4156, %v3944
        %v4174 = vsel %vm4158, %v4157, %v3946
        %vm4175 = vcmask 785408
        %v4176 = vsel %vm4175, %v4159, %v3980
        %v4177 = vsel %vm4175, %v4160, %v3982
        %v4178 = vsel %vm4175, %v4161, %v3984
        %v4179 = vsel %vm4175, %v4162, %v3986
        %v4180 = vsel %vm4175, %v4163, %v3988
        %v4181 = vsel %vm4175, %v4164, %v3990
        %v4182 = vsel %vm4175, %v4165, %v3992
        %v4183 = vsel %vm4175, %v4166, %v3994
        %v4184 = vsel %vm4175, %v4167, %v3996
        %v4185 = vsel %vm4175, %v4168, %v3998
        %v4186 = vsel %vm4175, %v4169, %v4000
        %v4187 = vsel %vm4175, %v4170, %v4002
        %v4188 = vsel %vm4175, %v4171, %v4004
        %v4189 = vsel %vm4175, %v4172, %v4006
        %v4190 = vsel %vm4175, %v4173, %v4008
        %v4191 = vsel %vm4175, %v4174, %v4010
        %vm4192 = vcmask 916480
        %v4193 = vsel %vm4192, %v4176, %v4044
        %v4194 = vsel %vm4192, %v4177, %v4046
        %v4195 = vsel %vm4192, %v4178, %v4048
        %v4196 = vsel %vm4192, %v4179, %v4050
        %v4197 = vsel %vm4192, %v4180, %v4052
        %v4198 = vsel %vm4192, %v4181, %v4054
        %v4199 = vsel %vm4192, %v4182, %v4056
        %v4200 = vsel %vm4192, %v4183, %v4058
        %v4201 = vsel %vm4192, %v4184, %v4060
        %v4202 = vsel %vm4192, %v4185, %v4062
        %v4203 = vsel %vm4192, %v4186, %v4064
        %v4204 = vsel %vm4192, %v4187, %v4066
        %v4205 = vsel %vm4192, %v4188, %v4068
        %v4206 = vsel %vm4192, %v4189, %v4070
        %v4207 = vsel %vm4192, %v4190, %v4072
        %v4208 = vsel %vm4192, %v4191, %v4074
        %v4209 = vpack.c.bf16 %v4193, %v4193
        %v4210 = vpack.c.bf16 %v4194, %v4194
        %v4211 = vpack.c.bf16 %v4195, %v4195
        %v4212 = vpack.c.bf16 %v4196, %v4196
        %v4213 = vpack.c.bf16 %v4197, %v4197
        %v4214 = vpack.c.bf16 %v4198, %v4198
        %v4215 = vpack.c.bf16 %v4199, %v4199
        %v4216 = vpack.c.bf16 %v4200, %v4200
        %v4217 = vpack.c.bf16 %v4201, %v4201
        %v4218 = vpack.c.bf16 %v4202, %v4202
        %v4219 = vpack.c.bf16 %v4203, %v4203
        %v4220 = vpack.c.bf16 %v4204, %v4204
        %v4221 = vpack.c.bf16 %v4205, %v4205
        %v4222 = vpack.c.bf16 %v4206, %v4206
        %v4223 = vpack.c.bf16 %v4207, %v4207
        %v4224 = vpack.c.bf16 %v4208, %v4208
        %4225 = vst [vmem:[#allocation3] sm:$0xf] %v4209
        %4226 = vst [vmem:[#allocation3 + $0x4] sm:$0xf] %v4210
        %4227 = vst [vmem:[#allocation3 + $0x8] sm:$0xf] %v4211
        %4228 = vst [vmem:[#allocation3 + $0xc] sm:$0xf] %v4212
        %4229 = vst [vmem:[#allocation3 + $0x10] sm:$0xf] %v4213
        %4230 = vst [vmem:[#allocation3 + $0x14] sm:$0xf] %v4214
        %4231 = vst [vmem:[#allocation3 + $0x18] sm:$0xf] %v4215
        %4232 = vst [vmem:[#allocation3 + $0x1c] sm:$0xf] %v4216
        %4233 = vst [vmem:[#allocation3 + $0x20] sm:$0xf] %v4217
        %4234 = vst [vmem:[#allocation3 + $0x24] sm:$0xf] %v4218
        %4235 = vst [vmem:[#allocation3 + $0x28] sm:$0xf] %v4219
        %4236 = vst [vmem:[#allocation3 + $0x2c] sm:$0xf] %v4220
        %4237 = vst [vmem:[#allocation3 + $0x30] sm:$0xf] %v4221
        %4238 = vst [vmem:[#allocation3 + $0x34] sm:$0xf] %v4222
        %4239 = vst [vmem:[#allocation3 + $0x38] sm:$0xf] %v4223
        %4240 = vst [vmem:[#allocation3 + $0x3c] sm:$0xf] %v4224
        %v4241 = vld [vmem:[#allocation3] sm:$0xf]
        %v4242 = vld [vmem:[#allocation3 + $0x4] sm:$0xf]
        %v4243 = vld [vmem:[#allocation3 + $0x8] sm:$0xf]
        %v4244 = vld [vmem:[#allocation3 + $0xc] sm:$0xf]
        %v4245 = vld [vmem:[#allocation3 + $0x10] sm:$0xf]
        %v4246 = vld [vmem:[#allocation3 + $0x14] sm:$0xf]
        %v4247 = vld [vmem:[#allocation3 + $0x18] sm:$0xf]
        %v4248 = vld [vmem:[#allocation3 + $0x1c] sm:$0xf]
        %v4249 = vld [vmem:[#allocation3 + $0x20] sm:$0xf]
        %v4250 = vld [vmem:[#allocation3 + $0x24] sm:$0xf]
        %v4251 = vld [vmem:[#allocation3 + $0x28] sm:$0xf]
        %v4252 = vld [vmem:[#allocation3 + $0x2c] sm:$0xf]
        %v4253 = vld [vmem:[#allocation3 + $0x30] sm:$0xf]
        %v4254 = vld [vmem:[#allocation3 + $0x34] sm:$0xf]
        %v4255 = vld [vmem:[#allocation3 + $0x38] sm:$0xf]
        %v4256 = vld [vmem:[#allocation3 + $0x3c] sm:$0xf]
        %v4257 = vld [vmem:[#allocation9] sm:$0xf]
        %v4258 = vld [vmem:[#allocation9 + $0x4] sm:$0xf]
        %v4259 = vld [vmem:[#allocation9 + $0x8] sm:$0xf]
        %v4260 = vld [vmem:[#allocation9 + $0xc] sm:$0xf]
        %v4261 = vld [vmem:[#allocation9 + $0x10] sm:$0xf]
        %v4262 = vld [vmem:[#allocation9 + $0x14] sm:$0xf]
        %v4263 = vld [vmem:[#allocation9 + $0x18] sm:$0xf]
        %v4264 = vld [vmem:[#allocation9 + $0x1c] sm:$0xf]
        %v4265 = vld [vmem:[#allocation9 + $0x20] sm:$0xf]
        %v4266 = vld [vmem:[#allocation9 + $0x24] sm:$0xf]
        %v4267 = vld [vmem:[#allocation9 + $0x28] sm:$0xf]
        %v4268 = vld [vmem:[#allocation9 + $0x2c] sm:$0xf]
        %v4269 = vld [vmem:[#allocation9 + $0x30] sm:$0xf]
        %v4270 = vld [vmem:[#allocation9 + $0x34] sm:$0xf]
        %v4271 = vld [vmem:[#allocation9 + $0x38] sm:$0xf]
        %v4272 = vld [vmem:[#allocation9 + $0x3c] sm:$0xf]
        %v4273 = vld [vmem:[%s3] sm:$0x1]
        %v4275 = vperm.slane %v4273, 0
        %v4293 = vunpack.c.l.b16 %v4241
        %v4294 = vunpack.c.l.b16 %v4242
        %v4295 = vunpack.c.l.b16 %v4243
        %v4296 = vunpack.c.l.b16 %v4244
        %v4297 = vunpack.c.l.b16 %v4245
        %v4298 = vunpack.c.l.b16 %v4246
        %v4299 = vunpack.c.l.b16 %v4247
        %v4300 = vunpack.c.l.b16 %v4248
        %v4301 = vunpack.c.l.b16 %v4249
        %v4302 = vunpack.c.l.b16 %v4250
        %v4303 = vunpack.c.l.b16 %v4251
        %v4304 = vunpack.c.l.b16 %v4252
        %v4305 = vunpack.c.l.b16 %v4253
        %v4306 = vunpack.c.l.b16 %v4254
        %v4307 = vunpack.c.l.b16 %v4255
        %v4308 = vunpack.c.l.b16 %v4256
        %v4309 = vpack.c.b16 %v4294, %v4293
        %v4310 = vpack.c.b16 %v4296, %v4295
        %v4311 = vpack.c.b16 %v4298, %v4297
        %v4312 = vpack.c.b16 %v4300, %v4299
        %v4313 = vpack.c.b16 %v4302, %v4301
        %v4314 = vpack.c.b16 %v4304, %v4303
        %v4315 = vpack.c.b16 %v4306, %v4305
        %v4316 = vpack.c.b16 %v4308, %v4307
        %v4341 = vunpack.c.l.b16 %v4257
        %v4342 = vunpack.c.l.b16 %v4258
        %v4343 = vunpack.c.l.b16 %v4259
        %v4344 = vunpack.c.l.b16 %v4260
        %v4345 = vunpack.c.l.b16 %v4261
        %v4346 = vunpack.c.l.b16 %v4262
        %v4347 = vunpack.c.l.b16 %v4263
        %v4348 = vunpack.c.l.b16 %v4264
        %v4349 = vunpack.c.l.b16 %v4265
        %v4350 = vunpack.c.l.b16 %v4266
        %v4351 = vunpack.c.l.b16 %v4267
        %v4352 = vunpack.c.l.b16 %v4268
        %v4353 = vunpack.c.l.b16 %v4269
        %v4354 = vunpack.c.l.b16 %v4270
        %v4355 = vunpack.c.l.b16 %v4271
        %v4356 = vunpack.c.l.b16 %v4272
        %v4357 = vpack.c.b16 %v4342, %v4341
        %v4358 = vpack.c.b16 %v4344, %v4343
        %v4359 = vpack.c.b16 %v4346, %v4345
        %v4360 = vpack.c.b16 %v4348, %v4347
        %v4361 = vpack.c.b16 %v4350, %v4349
        %v4362 = vpack.c.b16 %v4352, %v4351
        %v4363 = vpack.c.b16 %v4354, %v4353
        %v4364 = vpack.c.b16 %v4356, %v4355
        %4373 = vmatpush.bf16.msra.mxu0 %v4364
        %4374 = vmatpush.bf16.msra.mxu0 %v4363
        %4375 = vmatpush.bf16.msra.mxu0 %v4362
        %4376 = vmatpush.bf16.msra.mxu0 %v4361
        %4377 = vmatpush.bf16.msra.mxu0 %v4360
        %4378 = vmatpush.bf16.msra.mxu0 %v4359
        %4379 = vmatpush.bf16.msra.mxu0 %v4358
        %4380 = vmatpush.bf16.msra.mxu0 %v4357
        %4381 = vmatmul.bf16.gmra.mxu0 %v4309
        %v4382 = vpop.f32.mrf.mxu0
        %v4383 = vadd.f32 %v4275, %v4382
        %v4384 = vpop.f32.mrf.mxu0
        %v4385 = vadd.f32 %v4275, %v4384
        %4386 = vmatmul.bf16.gmra.mxu0 %v4310
        %v4387 = vpop.f32.mrf.mxu0
        %v4388 = vadd.f32 %v4275, %v4387
        %v4389 = vpop.f32.mrf.mxu0
        %v4390 = vadd.f32 %v4275, %v4389
        %4391 = vmatmul.bf16.gmra.mxu0 %v4311
        %v4392 = vpop.f32.mrf.mxu0
        %v4393 = vadd.f32 %v4275, %v4392
        %v4394 = vpop.f32.mrf.mxu0
        %v4395 = vadd.f32 %v4275, %v4394
        %4396 = vmatmul.bf16.gmra.mxu0 %v4312
        %v4397 = vpop.f32.mrf.mxu0
        %v4398 = vadd.f32 %v4275, %v4397
        %v4399 = vpop.f32.mrf.mxu0
        %v4400 = vadd.f32 %v4275, %v4399
        %4401 = vmatmul.bf16.gmra.mxu0 %v4313
        %v4402 = vpop.f32.mrf.mxu0
        %v4403 = vadd.f32 %v4275, %v4402
        %v4404 = vpop.f32.mrf.mxu0
        %v4405 = vadd.f32 %v4275, %v4404
        %4406 = vmatmul.bf16.gmra.mxu0 %v4314
        %v4407 = vpop.f32.mrf.mxu0
        %v4408 = vadd.f32 %v4275, %v4407
        %v4409 = vpop.f32.mrf.mxu0
        %v4410 = vadd.f32 %v4275, %v4409
        %4411 = vmatmul.bf16.gmra.mxu0 %v4315
        %v4412 = vpop.f32.mrf.mxu0
        %v4413 = vadd.f32 %v4275, %v4412
        %v4414 = vpop.f32.mrf.mxu0
        %v4415 = vadd.f32 %v4275, %v4414
        %4416 = vmatmul.bf16.gmra.mxu0 %v4316
        %v4417 = vpop.f32.mrf.mxu0
        %v4418 = vadd.f32 %v4275, %v4417
        %v4419 = vpop.f32.mrf.mxu0
        %v4420 = vadd.f32 %v4275, %v4419
        %4421 = vdwg.mxu0
        %4422 = vst [vmem:[%s250] sm:$0xff] %v4383
        %4423 = vst [vmem:[%s250 + $0x8] sm:$0xff] %v4385
        %4424 = vst [vmem:[%s250 + $0x10] sm:$0xff] %v4388
        %4425 = vst [vmem:[%s250 + $0x18] sm:$0xff] %v4390
        %4426 = vst [vmem:[%s250 + $0x20] sm:$0xff] %v4393
        %4427 = vst [vmem:[%s250 + $0x28] sm:$0xff] %v4395
        %4428 = vst [vmem:[%s250 + $0x30] sm:$0xff] %v4398
        %4429 = vst [vmem:[%s250 + $0x38] sm:$0xff] %v4400
        %4430 = vst [vmem:[%s250 + $0x40] sm:$0xff] %v4403
        %4431 = vst [vmem:[%s250 + $0x48] sm:$0xff] %v4405
        %4432 = vst [vmem:[%s250 + $0x50] sm:$0xff] %v4408
        %4433 = vst [vmem:[%s250 + $0x58] sm:$0xff] %v4410
        %4434 = vst [vmem:[%s250 + $0x60] sm:$0xff] %v4413
        %4435 = vst [vmem:[%s250 + $0x68] sm:$0xff] %v4415
        %4436 = vst [vmem:[%s250 + $0x70] sm:$0xff] %v4418
        %4437 = vst [vmem:[%s250 + $0x78] sm:$0xff] %v4420
        %s4438 = sand.u32 %s119, 1
        %s4439 = scalar_lea.sflag [#allocation6], %s4438
        %s4440 = sand.u32 %s119, 1
        %s4441 = smul.addr %s4440, 128
        %s4442 = scalar_lea.vmem [#allocation10], %s4441
        // Predicated region
        $region49: #{tpu_custom_call.1} parent=35 // pred_check
          %p4443 = pneg %p129
        $region50: #{tpu_custom_call.1} parent=35 // pred_check_branch
          %4445 = sbr.rel (%p4443) target = $region52
        $region51: #{tpu_custom_call.1} parent=35 // pred_region
          %4447 = vsyncadd %s4439, 0
          %s4448 = smul.addr %s22, 16
          %s4449 = smul.addr %s4448, 8
          %s4450 = scalar_lea.hbm %s4, %s4449
          %s4451 = sshll.u32 %s4442, 4
          %s4452 = int_to_ptr.vmem [resolvable:$true] %s4451
          %s4453 = sshll.u32 %s4450, 4
          %s4454 = int_to_ptr.hbm [resolvable:$true] %s4453
          %4459 = dma.vmem_to_hbm [thread:$0]  %s4452, 2048, %s4454, %s4439, 128, 128, 8
        $region52: #{tpu_custom_call.1} parent=35 // pred_fallthru
          _
      $region36: #{tpu_custom_call.1} parent=5 // pred_fallthru
        _
      %p4460 = scmp.le.s32.totalorder 2, %s17
      // Predicated region
      $region53: #{tpu_custom_call.1} parent=5 // pred_check
        %p4461 = pneg %p4460
      $region54: #{tpu_custom_call.1} parent=5 // pred_check_branch
        %4463 = sbr.rel (%p4461) target = $region56
      $region55: #{tpu_custom_call.1} parent=5 // pred_region
        %s4464 = ssub.s32 %s17, 2
        // Predicated region
        $region57: #{tpu_custom_call.1} parent=55 // pred_check
          %p4465 = pneg %p135
        $region58: #{tpu_custom_call.1} parent=55 // pred_check_branch
          %4467 = sbr.rel (%p4465) target = $region60
        $region59: #{tpu_custom_call.1} parent=55 // pred_region
          %s4468 = sand.u32 %s120, 1
          %s4469 = scalar_lea.sflag [#allocation6], %s4468
          %s4470 = sand.u32 %s120, 1
          %s4471 = smul.addr %s4470, 128
          %s4472 = scalar_lea.vmem [#allocation10], %s4471
          %4474 = dma.done %s4469, 2048
        $region60: #{tpu_custom_call.1} parent=55 // pred_fallthru
          _
      $region56: #{tpu_custom_call.1} parent=5 // pred_fallthru
        _
    $region6: #{tpu_custom_call.1} parent=1 // loop_footer
      %s21 = sadd.s32 1, %s17
    $region7: #{tpu_custom_call.1} parent=1 // loop_footer_branch
      %16 = sbr.rel target = $region3
    $region8: #{tpu_custom_call.1} parent=1 // loop_exit
      _
    %4475 = vsyncpa [#allocation5], 1
    %s4476 = scalar_lea.sflag [#allocation5], 1
    %4477 = vsyncpa %s4476, 1
    %4478 = vsyncpa [#allocation8], 1
    %4479 = vsyncpa [#allocation6], 1
    %s4480 = scalar_lea.sflag [#allocation6], 1
    %4481 = vsyncpa %s4480, 1

// kernel: tpu_custom_call.1
$region0: #{tpu_custom_call.1}
  #allocation0 [shape = 'u32[]', space=smem, size = 0x4, offset = 0x4, fixed_abs, tag = 'smem constant byte address 0x4 - core index']
  #allocation1 [shape = 'u32[72,128]{1,0:T(1,128)}', space=vmem, size = 0x9000, scoped, tag = 'internal scratch']
  #allocation2 [shape = 'bf16[128,384]{1,0:T(8,128)(2,1)}', space=vmem, size = 0x18000, scoped, tag = 'scratch operand']
  #allocation3 [shape = 'bf16[128,128]{1,0:T(8,128)(2,1)}', space=vmem, size = 0x8000, scoped, tag = 'scratch operand']
  %s0 = inlined_call_operand.hbm [shape: bf16[2,128,128], index: 0, kind: input, shape index: {}]
  %s1 = inlined_call_operand.hbm [shape: bf16[128,384], index: 1, kind: input, shape index: {}]
  %s2 = inlined_call_operand.hbm [shape: bf16[128,128], index: 2, kind: input, shape index: {}]
  %s3 = inlined_call_operand.vmem [shape: f32[1,128], index: 3, kind: input, shape index: {}]
  %s4 = inlined_call_operand.hbm [shape: f32[2,128,128], index: 4, kind: output, shape index: {}]
  %s5 = sld [smem:[#allocation0]]
  $region61: #{tpu_custom_call.1} parent=0
    _
  %s7 = ssub.s32 1, %s5
  %s8 = scalar_select 0, %s7, %s5
  $region1: #{tpu_custom_call.1} parent=0
    #allocation4 [shape = 'u8[65536]{0}', space=vmem, size = 0x10000, scoped, tag = 'input window, operand 0']
    #allocation5 [shape = 's32[2]{0}', space=sflag, size = 0x8, scoped, tag = 'scoped memory for tpu_custom_call.1']
    #allocation6 [shape = 's32[2]{0}', space=sflag, size = 0x8, scoped, tag = 'scoped memory for tpu_custom_call.1']
    #allocation7 [shape = 'u8[98304]{0}', space=vmem, size = 0x18000, scoped, tag = 'input window, operand 1, single buffered']
    #allocation8 [shape = 's32[1]{0}', space=sflag, size = 0x4, scoped, tag = 'scoped memory for tpu_custom_call.1']
    #allocation9 [shape = 'u8[32768]{0}', space=vmem, size = 0x8000, scoped, tag = 'input window, operand 2, single buffered']
    #allocation10 [shape = 'u8[131072]{0}', space=vmem, size = 0x20000, scoped, tag = 'output window, operand 0']
    %9 = vsyncpa [#allocation5], 0
    %s10 = scalar_lea.sflag [#allocation5], 1
    %11 = vsyncpa %s10, 0
    %12 = vsyncpa [#allocation8], 0
    %13 = vsyncpa [#allocation6], 0
    %s14 = scalar_lea.sflag [#allocation6], 1
    %15 = vsyncpa %s14, 0
    loop: start=0, step=1, limit=4
    $region2: #{tpu_custom_call.1} parent=1 // loop_pre_header
      _
    $region3: #{tpu_custom_call.1} parent=1 // loop_header
      %s17 = sphi 0, %s21
      %p18 = scmp.ge.s32.totalorder %s17, 4
      %s27 = sphi 0, %s29
      %s30 = sphi 0, %s27
      %s31 = sphi 0, %s30
      %s47 = sphi 0, %s31
      %s51 = sphi 0, %s51
      %s53 = sphi 0, %s51
      %s54 = sphi 0, %s53
      %s68 = sphi 0, %s54
      %s72 = sphi 0, %s72
      %s74 = sphi 0, %s72
      %s75 = sphi 0, %s74
      %s89 = sphi 0, %s75
      %s93 = sphi 0, %s93
      %s95 = sphi 0, %s93
      %s96 = sphi 0, %s95
      %s110 = sphi 0, %s96
      %s116 = sphi 0, %s118
      %s119 = sphi 0, %s116
      %s120 = sphi 0, %s119
      %s136 = sphi 0, %s120
    $region4: #{tpu_custom_call.1} parent=1 // loop_header_branch
      %20 = sbr.rel (%p18) target = $region8
    $region5: #{tpu_custom_call.1} parent=1 // loop_body
      %s22 = ssub.s32 %s17, 1
      %s23 = ssub.s32 %s17, 2
      %s24 = sadd.s32 %s17, 1
      %s25 = ssub.s32 %s17, %s24
      %p26 = scmp.eq.s32.totalorder %s25, 0
      %s28 = sadd.s32 %s27, 1
      %s29 = scalar_select %p26, %s27, %s28
      %p32 = pneg %p26
      %p33 = scmp.eq.s32.totalorder %s17, 1
      %p34 = por %p32, %p33
      %p35 = scmp.ne.s32.totalorder %s27, %s30
      %p36 = scmp.eq.s32.totalorder %s17, 0
      %p37 = por %p35, %p36
      %p38 = scmp.ne.s32.totalorder %s27, %s30
      %p39 = scmp.eq.s32.totalorder %s22, 1
      %p40 = por %p38, %p39
      %p41 = scmp.ne.s32.totalorder %s30, %s31
      %p42 = scmp.eq.s32.totalorder %s22, 0
      %p43 = por %p41, %p42
      %p44 = scmp.ne.s32.totalorder %s30, %s31
      %p45 = scmp.eq.s32.totalorder %s23, 1
      %p46 = por %p44, %p45
      %p48 = scmp.ne.s32.totalorder %s31, %s47
      %p49 = scmp.eq.s32.totalorder %s23, 0
      %p50 = por %p48, %p49
      %s52 = sadd.s32 %s51, 1
      %p55 = scmp.eq.s32.totalorder %s17, 1
      %p56 = scmp.ne.s32.totalorder %s51, %s53
      %p57 = scmp.eq.s32.totalorder %s17, 0
      %p58 = por %p56, %p57
      %p59 = scmp.ne.s32.totalorder %s51, %s53
      %p60 = scmp.eq.s32.totalorder %s22, 1
      %p61 = por %p59, %p60
      %p62 = scmp.ne.s32.totalorder %s53, %s54
      %p63 = scmp.eq.s32.totalorder %s22, 0
      %p64 = por %p62, %p63
      %p65 = scmp.ne.s32.totalorder %s53, %s54
      %p66 = scmp.eq.s32.totalorder %s23, 1
      %p67 = por %p65, %p66
      %p69 = scmp.ne.s32.totalorder %s54, %s68
      %p70 = scmp.eq.s32.totalorder %s23, 0
      %p71 = por %p69, %p70
      %s73 = sadd.s32 %s72, 1
      %p76 = scmp.eq.s32.totalorder %s17, 1
      %p77 = scmp.ne.s32.totalorder %s72, %s74
      %p78 = scmp.eq.s32.totalorder %s17, 0
      %p79 = por %p77, %p78
      %p80 = scmp.ne.s32.totalorder %s72, %s74
      %p81 = scmp.eq.s32.totalorder %s22, 1
      %p82 = por %p80, %p81
      %p83 = scmp.ne.s32.totalorder %s74, %s75
      %p84 = scmp.eq.s32.totalorder %s22, 0
      %p85 = por %p83, %p84
      %p86 = scmp.ne.s32.totalorder %s74, %s75
      %p87 = scmp.eq.s32.totalorder %s23, 1
      %p88 = por %p86, %p87
      %p90 = scmp.ne.s32.totalorder %s75, %s89
      %p91 = scmp.eq.s32.totalorder %s23, 0
      %p92 = por %p90, %p91
      %s94 = sadd.s32 %s93, 1
      %p97 = scmp.eq.s32.totalorder %s17, 1
      %p98 = scmp.ne.s32.totalorder %s93, %s95
      %p99 = scmp.eq.s32.totalorder %s17, 0
      %p100 = por %p98, %p99
      %p101 = scmp.ne.s32.totalorder %s93, %s95
      %p102 = scmp.eq.s32.totalorder %s22, 1
      %p103 = por %p101, %p102
      %p104 = scmp.ne.s32.totalorder %s95, %s96
      %p105 = scmp.eq.s32.totalorder %s22, 0
      %p106 = por %p104, %p105
      %p107 = scmp.ne.s32.totalorder %s95, %s96
      %p108 = scmp.eq.s32.totalorder %s23, 1
      %p109 = por %p107, %p108
      %p111 = scmp.ne.s32.totalorder %s96, %s110
      %p112 = scmp.eq.s32.totalorder %s23, 0
      %p113 = por %p111, %p112
      %s114 = ssub.s32 %s17, %s24
      %p115 = scmp.eq.s32.totalorder %s114, 0
      %s117 = sadd.s32 %s116, 1
      %s118 = scalar_select %p115, %s116, %s117
      %p121 = pneg %p115
      %p122 = scmp.eq.s32.totalorder %s17, 1
      %p123 = por %p121, %p122
      %p124 = scmp.ne.s32.totalorder %s116, %s119
      %p125 = scmp.eq.s32.totalorder %s17, 0
      %p126 = por %p124, %p125
      %p127 = scmp.ne.s32.totalorder %s116, %s119
      %p128 = scmp.eq.s32.totalorder %s22, 1
      %p129 = por %p127, %p128
      %p130 = scmp.ne.s32.totalorder %s119, %s120
      %p131 = scmp.eq.s32.totalorder %s22, 0
      %p132 = por %p130, %p131
      %p133 = scmp.ne.s32.totalorder %s119, %s120
      %p134 = scmp.eq.s32.totalorder %s23, 1
      %p135 = por %p133, %p134
      %p137 = scmp.ne.s32.totalorder %s120, %s136
      %p138 = scmp.eq.s32.totalorder %s23, 0
      %p139 = por %p137, %p138
      %p140 = scmp.le.s32.totalorder 1, %s17
      %p141 = scmp.lt.s32.totalorder %s17, 3
      %p142 = pnand %p140, %p141
      %p143 = pneg %p142
      // Predicated region
      $region9: #{tpu_custom_call.1} parent=5 // pred_check
        _
      $region10: #{tpu_custom_call.1} parent=5 // pred_check_branch
        %145 = sbr.rel (%p142) target = $region12
      $region11: #{tpu_custom_call.1} parent=5 // pred_region
        %s146 = ssub.s32 %s17, 1
        // Predicated region
        $region13: #{tpu_custom_call.1} parent=11 // pred_check
          %p147 = pneg %p64
        $region14: #{tpu_custom_call.1} parent=11 // pred_check_branch
          %149 = sbr.rel (%p147) target = $region16
        $region15: #{tpu_custom_call.1} parent=11 // pred_region
          %151 = vsyncadd [#allocation8], 0
          %s152 = sshll.u32 %s1, 4
          %s153 = int_to_ptr.hbm [resolvable:$true] %s152
          %s154 = sshll.u32 [#allocation7], 4
          %s155 = int_to_ptr.vmem [resolvable:$true] %s154
          %160 = dma.hbm_to_vmem [thread:$0]  %s153, 3072, %s155, [#allocation8], 192, 192, 12
        $region16: #{tpu_custom_call.1} parent=11 // pred_fallthru
          _
        // Predicated region
        $region17: #{tpu_custom_call.1} parent=11 // pred_check
          %p161 = pneg %p85
        $region18: #{tpu_custom_call.1} parent=11 // pred_check_branch
          %163 = sbr.rel (%p161) target = $region20
        $region19: #{tpu_custom_call.1} parent=11 // pred_region
          %165 = vsyncadd [#allocation8], 0
          %s166 = sshll.u32 %s2, 4
          %s167 = int_to_ptr.hbm [resolvable:$true] %s166
          %s168 = sshll.u32 [#allocation9], 4
          %s169 = int_to_ptr.vmem [resolvable:$true] %s168
          %174 = dma.hbm_to_vmem [thread:$0]  %s167, 1024, %s169, [#allocation8], 64, 64, 4
        $region20: #{tpu_custom_call.1} parent=11 // pred_fallthru
          _
        // Predicated region
        $region21: #{tpu_custom_call.1} parent=11 // pred_check
          %p175 = pneg %p106
        $region22: #{tpu_custom_call.1} parent=11 // pred_check_branch
          %177 = sbr.rel (%p175) target = $region24
        $region23: #{tpu_custom_call.1} parent=11 // pred_region
          _
        $region24: #{tpu_custom_call.1} parent=11 // pred_fallthru
          _
      $region12: #{tpu_custom_call.1} parent=5 // pred_fallthru
        _
      %p178 = scmp.lt.s32.totalorder %s17, 2
      // Predicated region
      $region25: #{tpu_custom_call.1} parent=5 // pred_check
        %p179 = pneg %p178
      $region26: #{tpu_custom_call.1} parent=5 // pred_check_branch
        %181 = sbr.rel (%p179) target = $region28
      $region27: #{tpu_custom_call.1} parent=5 // pred_region
        // Predicated region
        $region29: #{tpu_custom_call.1} parent=27 // pred_check
          %p182 = pneg %p37
        $region30: #{tpu_custom_call.1} parent=27 // pred_check_branch
          %184 = sbr.rel (%p182) target = $region32
        $region31: #{tpu_custom_call.1} parent=27 // pred_region
          %s185 = sand.u32 %s27, 1
          %s186 = scalar_lea.sflag [#allocation5], %s185
          %s187 = sand.u32 %s27, 1
          %s188 = smul.addr %s187, 64
          %s189 = scalar_lea.vmem [#allocation4], %s188
          %191 = vsyncadd %s186, 0
          %s192 = smul.addr %s17, 16
          %s193 = smul.addr %s192, 4
          %s194 = scalar_lea.hbm %s0, %s193
          %s195 = sshll.u32 %s194, 4
          %s196 = int_to_ptr.hbm [resolvable:$true] %s195
          %s197 = sshll.u32 %s189, 4
          %s198 = int_to_ptr.vmem [resolvable:$true] %s197
          %203 = dma.hbm_to_vmem [thread:$0]  %s196, 1024, %s198, %s186, 64, 64, 4
        $region32: #{tpu_custom_call.1} parent=27 // pred_fallthru
          _
      $region28: #{tpu_custom_call.1} parent=5 // pred_fallthru
        _
      %p204 = scmp.le.s32.totalorder 1, %s17
      %p205 = scmp.lt.s32.totalorder %s17, 3
      %p206 = pnand %p204, %p205
      %p207 = pneg %p206
      // Predicated region
      $region33: #{tpu_custom_call.1} parent=5 // pred_check
        _
      $region34: #{tpu_custom_call.1} parent=5 // pred_check_branch
        %209 = sbr.rel (%p206) target = $region36
      $region35: #{tpu_custom_call.1} parent=5 // pred_region
        %s210 = ssub.s32 %s17, 1
        %s211 = sand.u32 %s30, 1
        %s212 = scalar_lea.sflag [#allocation5], %s211
        %s213 = sand.u32 %s30, 1
        %s214 = smul.addr %s213, 64
        %s215 = scalar_lea.vmem [#allocation4], %s214
        // Predicated region
        $region37: #{tpu_custom_call.1} parent=35 // pred_check
          %p216 = pneg %p43
        $region38: #{tpu_custom_call.1} parent=35 // pred_check_branch
          %218 = sbr.rel (%p216) target = $region40
        $region39: #{tpu_custom_call.1} parent=35 // pred_region
          %220 = dma.done %s212, 1024
        $region40: #{tpu_custom_call.1} parent=35 // pred_fallthru
          _
        // Predicated region
        $region41: #{tpu_custom_call.1} parent=35 // pred_check
          %p221 = pneg %p64
        $region42: #{tpu_custom_call.1} parent=35 // pred_check_branch
          %223 = sbr.rel (%p221) target = $region44
        $region43: #{tpu_custom_call.1} parent=35 // pred_region
          %225 = dma.done [#allocation8], 3072
        $region44: #{tpu_custom_call.1} parent=35 // pred_fallthru
          _
        // Predicated region
        $region45: #{tpu_custom_call.1} parent=35 // pred_check
          %p226 = pneg %p85
        $region46: #{tpu_custom_call.1} parent=35 // pred_check_branch
          %228 = sbr.rel (%p226) target = $region48
        $region47: #{tpu_custom_call.1} parent=35 // pred_region
          %230 = dma.done [#allocation8], 1024
        $region48: #{tpu_custom_call.1} parent=35 // pred_fallthru
          _
        %s231 = sand.u32 %s30, 1
        %s232 = scalar_lea.sflag [#allocation5], %s231
        %s233 = sand.u32 %s30, 1
        %s234 = smul.addr %s233, 64
        %s235 = scalar_lea.vmem [#allocation4], %s234
        %p236 = pneg %p43
        %p237 = pneg %p40
        %p238 = pneg %p64
        %p239 = pneg %p61
        %p240 = pneg %p85
        %p241 = pneg %p82
        %p242 = pneg %p106
        %p243 = pneg %p103
        %p244 = pneg %p132
        %p245 = pneg %p129
        %s246 = sand.u32 %s119, 1
        %s247 = scalar_lea.sflag [#allocation6], %s246
        %s248 = sand.u32 %s119, 1
        %s249 = smul.addr %s248, 128
        %s250 = scalar_lea.vmem [#allocation10], %s249
        %v251 = vld [vmem:[%s215] sm:$0xf]
        %v252 = vld [vmem:[%s215 + $0x4] sm:$0xf]
        %v253 = vld [vmem:[%s215 + $0x8] sm:$0xf]
        %v254 = vld [vmem:[%s215 + $0xc] sm:$0xf]
        %v255 = vld [vmem:[%s215 + $0x10] sm:$0xf]
        %v256 = vld [vmem:[%s215 + $0x14] sm:$0xf]
        %v257 = vld [vmem:[%s215 + $0x18] sm:$0xf]
        %v258 = vld [vmem:[%s215 + $0x1c] sm:$0xf]
        %v259 = vld [vmem:[%s215 + $0x20] sm:$0xf]
        %v260 = vld [vmem:[%s215 + $0x24] sm:$0xf]
        %v261 = vld [vmem:[%s215 + $0x28] sm:$0xf]
        %v262 = vld [vmem:[%s215 + $0x2c] sm:$0xf]
        %v263 = vld [vmem:[%s215 + $0x30] sm:$0xf]
        %v264 = vld [vmem:[%s215 + $0x34] sm:$0xf]
        %v265 = vld [vmem:[%s215 + $0x38] sm:$0xf]
        %v266 = vld [vmem:[%s215 + $0x3c] sm:$0xf]
        %v267 = vld [vmem:[#allocation7] sm:$0xff]
        %v268 = vld [vmem:[#allocation7 + $0x8] sm:$0xf]
        %v269 = vld [vmem:[#allocation7 + $0xc] sm:$0xff]
        %v270 = vld [vmem:[#allocation7 + $0x14] sm:$0xf]
        %v271 = vld [vmem:[#allocation7 + $0x18] sm:$0xff]
        %v272 = vld [vmem:[#allocation7 + $0x20] sm:$0xf]
        %v273 = vld [vmem:[#allocation7 + $0x24] sm:$0xff]
        %v274 = vld [vmem:[#allocation7 + $0x2c] sm:$0xf]
        %v275 = vld [vmem:[#allocation7 + $0x30] sm:$0xff]
        %v276 = vld [vmem:[#allocation7 + $0x38] sm:$0xf]
        %v277 = vld [vmem:[#allocation7 + $0x3c] sm:$0xff]
        %v278 = vld [vmem:[#allocation7 + $0x44] sm:$0xf]
        %v279 = vld [vmem:[#allocation7 + $0x48] sm:$0xff]
        %v280 = vld [vmem:[#allocation7 + $0x50] sm:$0xf]
        %v281 = vld [vmem:[#allocation7 + $0x54] sm:$0xff]
        %v282 = vld [vmem:[#allocation7 + $0x5c] sm:$0xf]
        %v283 = vld [vmem:[#allocation7 + $0x60] sm:$0xff]
        %v284 = vld [vmem:[#allocation7 + $0x68] sm:$0xf]
        %v285 = vld [vmem:[#allocation7 + $0x6c] sm:$0xff]
        %v286 = vld [vmem:[#allocation7 + $0x74] sm:$0xf]
        %v287 = vld [vmem:[#allocation7 + $0x78] sm:$0xff]
        %v288 = vld [vmem:[#allocation7 + $0x80] sm:$0xf]
        %v289 = vld [vmem:[#allocation7 + $0x84] sm:$0xff]
        %v290 = vld [vmem:[#allocation7 + $0x8c] sm:$0xf]
        %v291 = vld [vmem:[#allocation7 + $0x90] sm:$0xff]
        %v292 = vld [vmem:[#allocation7 + $0x98] sm:$0xf]
        %v293 = vld [vmem:[#allocation7 + $0x9c] sm:$0xff]
        %v294 = vld [vmem:[#allocation7 + $0xa4] sm:$0xf]
        %v295 = vld [vmem:[#allocation7 + $0xa8] sm:$0xff]
        %v296 = vld [vmem:[#allocation7 + $0xb0] sm:$0xf]
        %v297 = vld [vmem:[#allocation7 + $0xb4] sm:$0xff]
        %v298 = vld [vmem:[#allocation7 + $0xbc] sm:$0xf]
        %v315 = vunpack.c.l.b16 %v251
        %v316 = vunpack.c.l.b16 %v252
        %v317 = vunpack.c.l.b16 %v253
        %v318 = vunpack.c.l.b16 %v254
        %v319 = vunpack.c.l.b16 %v255
        %v320 = vunpack.c.l.b16 %v256
        %v321 = vunpack.c.l.b16 %v257
        %v322 = vunpack.c.l.b16 %v258
        %v323 = vunpack.c.l.b16 %v259
        %v324 = vunpack.c.l.b16 %v260
        %v325 = vunpack.c.l.b16 %v261
        %v326 = vunpack.c.l.b16 %v262
        %v327 = vunpack.c.l.b16 %v263
        %v328 = vunpack.c.l.b16 %v264
        %v329 = vunpack.c.l.b16 %v265
        %v330 = vunpack.c.l.b16 %v266
        %v331 = vpack.c.b16 %v316, %v315
        %v332 = vpack.c.b16 %v318, %v317
        %v333 = vpack.c.b16 %v320, %v319
        %v334 = vpack.c.b16 %v322, %v321
        %v335 = vpack.c.b16 %v324, %v323
        %v336 = vpack.c.b16 %v326, %v325
        %v337 = vpack.c.b16 %v328, %v327
        %v338 = vpack.c.b16 %v330, %v329
        %v379 = vunpack.c.l.b16 %v267
        %v380 = vunpack.c.h.b16 %v267
        %v381 = vunpack.c.l.b16 %v268
        %v382 = vunpack.c.l.b16 %v269
        %v383 = vunpack.c.h.b16 %v269
        %v384 = vunpack.c.l.b16 %v270
        %v385 = vunpack.c.l.b16 %v271
        %v386 = vunpack.c.h.b16 %v271
        %v387 = vunpack.c.l.b16 %v272
        %v388 = vunpack.c.l.b16 %v273
        %v389 = vunpack.c.h.b16 %v273
        %v390 = vunpack.c.l.b16 %v274
        %v391 = vunpack.c.l.b16 %v275
        %v392 = vunpack.c.h.b16 %v275
        %v393 = vunpack.c.l.b16 %v276
        %v394 = vunpack.c.l.b16 %v277
        %v395 = vunpack.c.h.b16 %v277
        %v396 = vunpack.c.l.b16 %v278
        %v397 = vunpack.c.l.b16 %v279
        %v398 = vunpack.c.h.b16 %v279
        %v399 = vunpack.c.l.b16 %v280
        %v400 = vunpack.c.l.b16 %v281
        %v401 = vunpack.c.h.b16 %v281
        %v402 = vunpack.c.l.b16 %v282
        %v403 = vunpack.c.l.b16 %v283
        %v404 = vunpack.c.h.b16 %v283
        %v405 = vunpack.c.l.b16 %v284
        %v406 = vunpack.c.l.b16 %v285
        %v407 = vunpack.c.h.b16 %v285
        %v408 = vunpack.c.l.b16 %v286
        %v409 = vunpack.c.l.b16 %v287
        %v410 = vunpack.c.h.b16 %v287
        %v411 = vunpack.c.l.b16 %v288
        %v412 = vunpack.c.l.b16 %v289
        %v413 = vunpack.c.h.b16 %v289
        %v414 = vunpack.c.l.b16 %v290
        %v415 = vunpack.c.l.b16 %v291
        %v416 = vunpack.c.h.b16 %v291
        %v417 = vunpack.c.l.b16 %v292
        %v418 = vunpack.c.l.b16 %v293
        %v419 = vunpack.c.h.b16 %v293
        %v420 = vunpack.c.l.b16 %v294
        %v421 = vunpack.c.l.b16 %v295
        %v422 = vunpack.c.h.b16 %v295
        %v423 = vunpack.c.l.b16 %v296
        %v424 = vunpack.c.l.b16 %v297
        %v425 = vunpack.c.h.b16 %v297
        %v426 = vunpack.c.l.b16 %v298
        %v427 = vpack.c.b16 %v382, %v379
        %v428 = vpack.c.b16 %v383, %v380
        %v429 = vpack.c.b16 %v384, %v381
        %v430 = vpack.c.b16 %v388, %v385
        %v431 = vpack.c.b16 %v389, %v386
        %v432 = vpack.c.b16 %v390, %v387
        %v433 = vpack.c.b16 %v394, %v391
        %v434 = vpack.c.b16 %v395, %v392
        %v435 = vpack.c.b16 %v396, %v393
        %v436 = vpack.c.b16 %v400, %v397
        %v437 = vpack.c.b16 %v401, %v398
        %v438 = vpack.c.b16 %v402, %v399
        %v439 = vpack.c.b16 %v406, %v403
        %v440 = vpack.c.b16 %v407, %v404
        %v441 = vpack.c.b16 %v408, %v405
        %v442 = vpack.c.b16 %v412, %v409
        %v443 = vpack.c.b16 %v413, %v410
        %v444 = vpack.c.b16 %v414, %v411
        %v445 = vpack.c.b16 %v418, %v415
        %v446 = vpack.c.b16 %v419, %v416
        %v447 = vpack.c.b16 %v420, %v417
        %v448 = vpack.c.b16 %v424, %v421
        %v449 = vpack.c.b16 %v425, %v422
        %v450 = vpack.c.b16 %v426, %v423
        %475 = vmatpush.bf16.msra.mxu0 %v448
        %476 = vmatpush.bf16.msra.mxu0 %v445
        %477 = vmatpush.bf16.msra.mxu0 %v442
        %478 = vmatpush.bf16.msra.mxu0 %v439
        %479 = vmatpush.bf16.msra.mxu0 %v436
        %480 = vmatpush.bf16.msra.mxu0 %v433
        %481 = vmatpush.bf16.msra.mxu0 %v430
        %482 = vmatpush.bf16.msra.mxu0 %v427
        %483 = vmatmul.bf16.gmra.mxu0 %v331
        %v484 = vpop.f32.mrf.mxu0
        %v485 = vadd.f32 0.0, %v484
        %v486 = vpop.f32.mrf.mxu0
        %v487 = vadd.f32 0.0, %v486
        %488 = vmatmul.bf16.gmra.mxu0 %v332
        %v489 = vpop.f32.mrf.mxu0
        %v490 = vadd.f32 0.0, %v489
        %v491 = vpop.f32.mrf.mxu0
        %v492 = vadd.f32 0.0, %v491
        %493 = vmatmul.bf16.gmra.mxu0 %v333
        %v494 = vpop.f32.mrf.mxu0
        %v495 = vadd.f32 0.0, %v494
        %v496 = vpop.f32.mrf.mxu0
        %v497 = vadd.f32 0.0, %v496
        %498 = vmatmul.bf16.gmra.mxu0 %v334
        %v499 = vpop.f32.mrf.mxu0
        %v500 = vadd.f32 0.0, %v499
        %v501 = vpop.f32.mrf.mxu0
        %v502 = vadd.f32 0.0, %v501
        %503 = vmatmul.bf16.gmra.mxu0 %v335
        %v504 = vpop.f32.mrf.mxu0
        %v505 = vadd.f32 0.0, %v504
        %v506 = vpop.f32.mrf.mxu0
        %v507 = vadd.f32 0.0, %v506
        %508 = vmatmul.bf16.gmra.mxu0 %v336
        %v509 = vpop.f32.mrf.mxu0
        %v510 = vadd.f32 0.0, %v509
        %v511 = vpop.f32.mrf.mxu0
        %v512 = vadd.f32 0.0, %v511
        %513 = vmatmul.bf16.gmra.mxu0 %v337
        %v514 = vpop.f32.mrf.mxu0
        %v515 = vadd.f32 0.0, %v514
        %v516 = vpop.f32.mrf.mxu0
        %v517 = vadd.f32 0.0, %v516
        %518 = vmatmul.bf16.gmra.mxu0 %v338
        %v519 = vpop.f32.mrf.mxu0
        %v520 = vadd.f32 0.0, %v519
        %v521 = vpop.f32.mrf.mxu0
        %v522 = vadd.f32 0.0, %v521
        %523 = vdwg.mxu0
        %524 = vmatpush.bf16.msra.mxu0 %v449
        %525 = vmatpush.bf16.msra.mxu0 %v446
        %526 = vmatpush.bf16.msra.mxu0 %v443
        %527 = vmatpush.bf16.msra.mxu0 %v440
        %528 = vmatpush.bf16.msra.mxu0 %v437
        %529 = vmatpush.bf16.msra.mxu0 %v434
        %530 = vmatpush.bf16.msra.mxu0 %v431
        %531 = vmatpush.bf16.msra.mxu0 %v428
        %532 = vmatmul.bf16.gmra.mxu0 %v331
        %v533 = vpop.f32.mrf.mxu0
        %v534 = vadd.f32 0.0, %v533
        %v535 = vpop.f32.mrf.mxu0
        %v536 = vadd.f32 0.0, %v535
        %537 = vmatmul.bf16.gmra.mxu0 %v332
        %v538 = vpop.f32.mrf.mxu0
        %v539 = vadd.f32 0.0, %v538
        %v540 = vpop.f32.mrf.mxu0
        %v541 = vadd.f32 0.0, %v540
        %542 = vmatmul.bf16.gmra.mxu0 %v333
        %v543 = vpop.f32.mrf.mxu0
        %v544 = vadd.f32 0.0, %v543
        %v545 = vpop.f32.mrf.mxu0
        %v546 = vadd.f32 0.0, %v545
        %547 = vmatmul.bf16.gmra.mxu0 %v334
        %v548 = vpop.f32.mrf.mxu0
        %v549 = vadd.f32 0.0, %v548
        %v550 = vpop.f32.mrf.mxu0
        %v551 = vadd.f32 0.0, %v550
        %552 = vmatmul.bf16.gmra.mxu0 %v335
        %v553 = vpop.f32.mrf.mxu0
        %v554 = vadd.f32 0.0, %v553
        %v555 = vpop.f32.mrf.mxu0
        %v556 = vadd.f32 0.0, %v555
        %557 = vmatmul.bf16.gmra.mxu0 %v336
        %v558 = vpop.f32.mrf.mxu0
        %v559 = vadd.f32 0.0, %v558
        %v560 = vpop.f32.mrf.mxu0
        %v561 = vadd.f32 0.0, %v560
        %562 = vmatmul.bf16.gmra.mxu0 %v337
        %v563 = vpop.f32.mrf.mxu0
        %v564 = vadd.f32 0.0, %v563
        %v565 = vpop.f32.mrf.mxu0
        %v566 = vadd.f32 0.0, %v565
        %567 = vmatmul.bf16.gmra.mxu0 %v338
        %v568 = vpop.f32.mrf.mxu0
        %v569 = vadd.f32 0.0, %v568
        %v570 = vpop.f32.mrf.mxu0
        %v571 = vadd.f32 0.0, %v570
        %572 = vdwg.mxu0
        %573 = vmatpush.bf16.msra.mxu0 %v450
        %574 = vmatpush.bf16.msra.mxu0 %v447
        %575 = vmatpush.bf16.msra.mxu0 %v444
        %576 = vmatpush.bf16.msra.mxu0 %v441
        %577 = vmatpush.bf16.msra.mxu0 %v438
        %578 = vmatpush.bf16.msra.mxu0 %v435
        %579 = vmatpush.bf16.msra.mxu0 %v432
        %580 = vmatpush.bf16.msra.mxu0 %v429
        %581 = vmatmul.bf16.gmra.mxu0 %v331
        %v582 = vpop.f32.mrf.mxu0
        %v583 = vadd.f32 0.0, %v582
        %v584 = vpop.f32.mrf.mxu0
        %v585 = vadd.f32 0.0, %v584
        %586 = vmatmul.bf16.gmra.mxu0 %v332
        %v587 = vpop.f32.mrf.mxu0
        %v588 = vadd.f32 0.0, %v587
        %v589 = vpop.f32.mrf.mxu0
        %v590 = vadd.f32 0.0, %v589
        %591 = vmatmul.bf16.gmra.mxu0 %v333
        %v592 = vpop.f32.mrf.mxu0
        %v593 = vadd.f32 0.0, %v592
        %v594 = vpop.f32.mrf.mxu0
        %v595 = vadd.f32 0.0, %v594
        %596 = vmatmul.bf16.gmra.mxu0 %v334
        %v597 = vpop.f32.mrf.mxu0
        %v598 = vadd.f32 0.0, %v597
        %v599 = vpop.f32.mrf.mxu0
        %v600 = vadd.f32 0.0, %v599
        %601 = vmatmul.bf16.gmra.mxu0 %v335
        %v602 = vpop.f32.mrf.mxu0
        %v603 = vadd.f32 0.0, %v602
        %v604 = vpop.f32.mrf.mxu0
        %v605 = vadd.f32 0.0, %v604
        %606 = vmatmul.bf16.gmra.mxu0 %v336
        %v607 = vpop.f32.mrf.mxu0
        %v608 = vadd.f32 0.0, %v607
        %v609 = vpop.f32.mrf.mxu0
        %v610 = vadd.f32 0.0, %v609
        %611 = vmatmul.bf16.gmra.mxu0 %v337
        %v612 = vpop.f32.mrf.mxu0
        %v613 = vadd.f32 0.0, %v612
        %v614 = vpop.f32.mrf.mxu0
        %v615 = vadd.f32 0.0, %v614
        %616 = vmatmul.bf16.gmra.mxu0 %v338
        %v617 = vpop.f32.mrf.mxu0
        %v618 = vadd.f32 0.0, %v617
        %v619 = vpop.f32.mrf.mxu0
        %v620 = vadd.f32 0.0, %v619
        %621 = vdwg.mxu0
        %v622 = vpack.c.bf16 %v534, %v485
        %v623 = vpack.c.bf16 %v583, %v583
        %v624 = vpack.c.bf16 %v536, %v487
        %v625 = vpack.c.bf16 %v585, %v585
        %v626 = vpack.c.bf16 %v539, %v490
        %v627 = vpack.c.bf16 %v588, %v588
        %v628 = vpack.c.bf16 %v541, %v492
        %v629 = vpack.c.bf16 %v590, %v590
        %v630 = vpack.c.bf16 %v544, %v495
        %v631 = vpack.c.bf16 %v593, %v593
        %v632 = vpack.c.bf16 %v546, %v497
        %v633 = vpack.c.bf16 %v595, %v595
        %v634 = vpack.c.bf16 %v549, %v500
        %v635 = vpack.c.bf16 %v598, %v598
        %v636 = vpack.c.bf16 %v551, %v502
        %v637 = vpack.c.bf16 %v600, %v600
        %v638 = vpack.c.bf16 %v554, %v505
        %v639 = vpack.c.bf16 %v603, %v603
        %v640 = vpack.c.bf16 %v556, %v507
        %v641 = vpack.c.bf16 %v605, %v605
        %v642 = vpack.c.bf16 %v559, %v510
        %v643 = vpack.c.bf16 %v608, %v608
        %v644 = vpack.c.bf16 %v561, %v512
        %v645 = vpack.c.bf16 %v610, %v610
        %v646 = vpack.c.bf16 %v564, %v515
        %v647 = vpack.c.bf16 %v613, %v613
        %v648 = vpack.c.bf16 %v566, %v517
        %v649 = vpack.c.bf16 %v615, %v615
        %v650 = vpack.c.bf16 %v569, %v520
        %v651 = vpack.c.bf16 %v618, %v618
        %v652 = vpack.c.bf16 %v571, %v522
        %v653 = vpack.c.bf16 %v620, %v620
        %654 = vst [vmem:[#allocation2] sm:$0xff] %v622
        %655 = vst [vmem:[#allocation2 + $0x8] sm:$0xf] %v623
        %656 = vst [vmem:[#allocation2 + $0xc] sm:$0xff] %v624
        %657 = vst [vmem:[#allocation2 + $0x14] sm:$0xf] %v625
        %658 = vst [vmem:[#allocation2 + $0x18] sm:$0xff] %v626
        %659 = vst [vmem:[#allocation2 + $0x20] sm:$0xf] %v627
        %660 = vst [vmem:[#allocation2 + $0x24] sm:$0xff] %v628
        %661 = vst [vmem:[#allocation2 + $0x2c] sm:$0xf] %v629
        %662 = vst [vmem:[#allocation2 + $0x30] sm:$0xff] %v630
        %663 = vst [vmem:[#allocation2 + $0x38] sm:$0xf] %v631
        %664 = vst [vmem:[#allocation2 + $0x3c] sm:$0xff] %v632
        %665 = vst [vmem:[#allocation2 + $0x44] sm:$0xf] %v633
        %666 = vst [vmem:[#allocation2 + $0x48] sm:$0xff] %v634
        %667 = vst [vmem:[#allocation2 + $0x50] sm:$0xf] %v635
        %668 = vst [vmem:[#allocation2 + $0x54] sm:$0xff] %v636
        %669 = vst [vmem:[#allocation2 + $0x5c] sm:$0xf] %v637
        %670 = vst [vmem:[#allocation2 + $0x60] sm:$0xff] %v638
        %671 = vst [vmem:[#allocation2 + $0x68] sm:$0xf] %v639
        %672 = vst [vmem:[#allocation2 + $0x6c] sm:$0xff] %v640
        %673 = vst [vmem:[#allocation2 + $0x74] sm:$0xf] %v641
        %674 = vst [vmem:[#allocation2 + $0x78] sm:$0xff] %v642
        %675 = vst [vmem:[#allocation2 + $0x80] sm:$0xf] %v643
        %676 = vst [vmem:[#allocation2 + $0x84] sm:$0xff] %v644
        %677 = vst [vmem:[#allocation2 + $0x8c] sm:$0xf] %v645
        %678 = vst [vmem:[#allocation2 + $0x90] sm:$0xff] %v646
        %679 = vst [vmem:[#allocation2 + $0x98] sm:$0xf] %v647
        %680 = vst [vmem:[#allocation2 + $0x9c] sm:$0xff] %v648
        %681 = vst [vmem:[#allocation2 + $0xa4] sm:$0xf] %v649
        %682 = vst [vmem:[#allocation2 + $0xa8] sm:$0xff] %v650
        %683 = vst [vmem:[#allocation2 + $0xb0] sm:$0xf] %v651
        %684 = vst [vmem:[#allocation2 + $0xb4] sm:$0xff] %v652
        %685 = vst [vmem:[#allocation2 + $0xbc] sm:$0xf] %v653
        %v686 = vlaneseq
        %v687 = vand.u32 %v686, 127
        %vm688 = vcmp.lt.s32.totalorder %v687, 64
        %v689 = vsel %vm688, 0.0, -1e+30
        %v690 = vld [vmem:[#allocation2] sm:$0xf]
        %v691 = vld [vmem:[#allocation2 + $0xc] sm:$0xf]
        %v692 = vld [vmem:[#allocation2 + $0x18] sm:$0xf]
        %v693 = vld [vmem:[#allocation2 + $0x24] sm:$0xf]
        %v694 = vld [vmem:[#allocation2 + $0x30] sm:$0xf]
        %v695 = vld [vmem:[#allocation2 + $0x3c] sm:$0xf]
        %v696 = vld [vmem:[#allocation2 + $0x48] sm:$0xf]
        %v697 = vld [vmem:[#allocation2 + $0x54] sm:$0xf]
        %v698 = vld [vmem:[#allocation2 + $0x60] sm:$0xf]
        %v699 = vld [vmem:[#allocation2 + $0x6c] sm:$0xf]
        %v700 = vld [vmem:[#allocation2 + $0x78] sm:$0xf]
        %v701 = vld [vmem:[#allocation2 + $0x84] sm:$0xf]
        %v702 = vld [vmem:[#allocation2 + $0x90] sm:$0xf]
        %v703 = vld [vmem:[#allocation2 + $0x9c] sm:$0xf]
        %v704 = vld [vmem:[#allocation2 + $0xa8] sm:$0xf]
        %v705 = vld [vmem:[#allocation2 + $0xb4] sm:$0xf]
        %v706 = vld [vmem:[#allocation2 + $0x4] sm:$0xf]
        %v707 = vld [vmem:[#allocation2 + $0x10] sm:$0xf]
        %v708 = vld [vmem:[#allocation2 + $0x1c] sm:$0xf]
        %v709 = vld [vmem:[#allocation2 + $0x28] sm:$0xf]
        %v710 = vld [vmem:[#allocation2 + $0x34] sm:$0xf]
        %v711 = vld [vmem:[#allocation2 + $0x40] sm:$0xf]
        %v712 = vld [vmem:[#allocation2 + $0x4c] sm:$0xf]
        %v713 = vld [vmem:[#allocation2 + $0x58] sm:$0xf]
        %v714 = vld [vmem:[#allocation2 + $0x64] sm:$0xf]
        %v715 = vld [vmem:[#allocation2 + $0x70] sm:$0xf]
        %v716 = vld [vmem:[#allocation2 + $0x7c] sm:$0xf]
        %v717 = vld [vmem:[#allocation2 + $0x88] sm:$0xf]
        %v718 = vld [vmem:[#allocation2 + $0x94] sm:$0xf]
        %v719 = vld [vmem:[#allocation2 + $0xa0] sm:$0xf]
        %v720 = vld [vmem:[#allocation2 + $0xac] sm:$0xf]
        %v721 = vld [vmem:[#allocation2 + $0xb8] sm:$0xf]
        %v722 = vld [vmem:[#allocation2 + $0x8] sm:$0xf]
        %v723 = vld [vmem:[#allocation2 + $0x14] sm:$0xf]
        %v724 = vld [vmem:[#allocation2 + $0x20] sm:$0xf]
        %v725 = vld [vmem:[#allocation2 + $0x2c] sm:$0xf]
        %v726 = vld [vmem:[#allocation2 + $0x38] sm:$0xf]
        %v727 = vld [vmem:[#allocation2 + $0x44] sm:$0xf]
        %v728 = vld [vmem:[#allocation2 + $0x50] sm:$0xf]
        %v729 = vld [vmem:[#allocation2 + $0x5c] sm:$0xf]
        %v730 = vld [vmem:[#allocation2 + $0x68] sm:$0xf]
        %v731 = vld [vmem:[#allocation2 + $0x74] sm:$0xf]
        %v732 = vld [vmem:[#allocation2 + $0x80] sm:$0xf]
        %v733 = vld [vmem:[#allocation2 + $0x8c] sm:$0xf]
        %v734 = vld [vmem:[#allocation2 + $0x98] sm:$0xf]
        %v735 = vld [vmem:[#allocation2 + $0xa4] sm:$0xf]
        %v736 = vld [vmem:[#allocation2 + $0xb0] sm:$0xf]
        %v737 = vld [vmem:[#allocation2 + $0xbc] sm:$0xf]
        %v754 = vunpack.c.l.b16 %v690
        %v755 = vunpack.c.l.b16 %v691
        %v756 = vunpack.c.l.b16 %v692
        %v757 = vunpack.c.l.b16 %v693
        %v758 = vunpack.c.l.b16 %v694
        %v759 = vunpack.c.l.b16 %v695
        %v760 = vunpack.c.l.b16 %v696
        %v761 = vunpack.c.l.b16 %v697
        %v762 = vunpack.c.l.b16 %v698
        %v763 = vunpack.c.l.b16 %v699
        %v764 = vunpack.c.l.b16 %v700
        %v765 = vunpack.c.l.b16 %v701
        %v766 = vunpack.c.l.b16 %v702
        %v767 = vunpack.c.l.b16 %v703
        %v768 = vunpack.c.l.b16 %v704
        %v769 = vunpack.c.l.b16 %v705
        %v770 = vpack.c.b16 %v755, %v754
        %v771 = vpack.c.b16 %v757, %v756
        %v772 = vpack.c.b16 %v759, %v758
        %v773 = vpack.c.b16 %v761, %v760
        %v774 = vpack.c.b16 %v763, %v762
        %v775 = vpack.c.b16 %v765, %v764
        %v776 = vpack.c.b16 %v767, %v766
        %v777 = vpack.c.b16 %v769, %v768
        %v794 = vunpack.c.l.b16 %v706
        %v795 = vunpack.c.l.b16 %v707
        %v796 = vunpack.c.l.b16 %v708
        %v797 = vunpack.c.l.b16 %v709
        %v798 = vunpack.c.l.b16 %v710
        %v799 = vunpack.c.l.b16 %v711
        %v800 = vunpack.c.l.b16 %v712
        %v801 = vunpack.c.l.b16 %v713
        %v802 = vunpack.c.l.b16 %v714
        %v803 = vunpack.c.l.b16 %v715
        %v804 = vunpack.c.l.b16 %v716
        %v805 = vunpack.c.l.b16 %v717
        %v806 = vunpack.c.l.b16 %v718
        %v807 = vunpack.c.l.b16 %v719
        %v808 = vunpack.c.l.b16 %v720
        %v809 = vunpack.c.l.b16 %v721
        %v810 = vpack.c.b16 %v795, %v794
        %v811 = vpack.c.b16 %v797, %v796
        %v812 = vpack.c.b16 %v799, %v798
        %v813 = vpack.c.b16 %v801, %v800
        %v814 = vpack.c.b16 %v803, %v802
        %v815 = vpack.c.b16 %v805, %v804
        %v816 = vpack.c.b16 %v807, %v806
        %v817 = vpack.c.b16 %v809, %v808
        %vm818 = vcmask 130048
        %v820 = vsel %vm818, %v770, 0
        %v823 = vsel %vm818, %v771, 0
        %v826 = vsel %vm818, %v772, 0
        %v829 = vsel %vm818, %v773, 0
        %v832 = vsel %vm818, %v774, 0
        %v835 = vsel %vm818, %v775, 0
        %v838 = vsel %vm818, %v776, 0
        %v841 = vsel %vm818, %v777, 0
        %v844 = vsel %vm818, %v810, 0
        %v847 = vsel %vm818, %v811, 0
        %v850 = vsel %vm818, %v812, 0
        %v853 = vsel %vm818, %v813, 0
        %v856 = vsel %vm818, %v814, 0
        %v859 = vsel %vm818, %v815, 0
        %v862 = vsel %vm818, %v816, 0
        %v865 = vsel %vm818, %v817, 0
        %867 = vmatpush.bf16.xpose.msra.mxu0 %v865
        %868 = vmatpush.bf16.xpose.msra.mxu0 %v862
        %869 = vmatpush.bf16.xpose.msra.mxu0 %v859
        %870 = vmatpush.bf16.xpose.msra.mxu0 %v856
        %871 = vmatpush.bf16.xpose.msra.mxu0 %v853
        %872 = vmatpush.bf16.xpose.msra.mxu0 %v850
        %873 = vmatpush.bf16.xpose.msra.mxu0 %v847
        %874 = vmatpush.bf16.xpose.msra.mxu0 %v844
        %875 = vmatmul.bf16.gmra.mxu0 %v820
        %v876 = vpop.f32.mrf.mxu0
        %v877 = vadd.f32 %v689, %v876
        %v878 = vpop.f32.mrf.mxu0
        %v879 = vadd.f32 %v689, %v878
        %880 = vmatmul.bf16.gmra.mxu0 %v823
        %v881 = vpop.f32.mrf.mxu0
        %v882 = vadd.f32 %v689, %v881
        %v883 = vpop.f32.mrf.mxu0
        %v884 = vadd.f32 %v689, %v883
        %885 = vmatmul.bf16.gmra.mxu0 %v826
        %v886 = vpop.f32.mrf.mxu0
        %v887 = vadd.f32 %v689, %v886
        %v888 = vpop.f32.mrf.mxu0
        %v889 = vadd.f32 %v689, %v888
        %890 = vmatmul.bf16.gmra.mxu0 %v829
        %v891 = vpop.f32.mrf.mxu0
        %v892 = vadd.f32 %v689, %v891
        %v893 = vpop.f32.mrf.mxu0
        %v894 = vadd.f32 %v689, %v893
        %895 = vmatmul.bf16.gmra.mxu0 %v832
        %v896 = vpop.f32.mrf.mxu0
        %v897 = vadd.f32 %v689, %v896
        %v898 = vpop.f32.mrf.mxu0
        %v899 = vadd.f32 %v689, %v898
        %900 = vmatmul.bf16.gmra.mxu0 %v835
        %v901 = vpop.f32.mrf.mxu0
        %v902 = vadd.f32 %v689, %v901
        %v903 = vpop.f32.mrf.mxu0
        %v904 = vadd.f32 %v689, %v903
        %905 = vmatmul.bf16.gmra.mxu0 %v838
        %v906 = vpop.f32.mrf.mxu0
        %v907 = vadd.f32 %v689, %v906
        %v908 = vpop.f32.mrf.mxu0
        %v909 = vadd.f32 %v689, %v908
        %910 = vmatmul.bf16.gmra.mxu0 %v841
        %v911 = vpop.f32.mrf.mxu0
        %v912 = vadd.f32 %v689, %v911
        %v913 = vpop.f32.mrf.mxu0
        %v914 = vadd.f32 %v689, %v913
        %915 = vdwg.mxu0
        %916 = vmax.xlane.f32.xlu0 %v877
        %v917 = vpop.xlane.xlu0 %916
        %918 = vmax.xlane.f32.xlu0 %v879
        %v919 = vpop.xlane.xlu0 %918
        %920 = vmax.xlane.f32.xlu0 %v882
        %v921 = vpop.xlane.xlu0 %920
        %922 = vmax.xlane.f32.xlu0 %v884
        %v923 = vpop.xlane.xlu0 %922
        %924 = vmax.xlane.f32.xlu0 %v887
        %v925 = vpop.xlane.xlu0 %924
        %926 = vmax.xlane.f32.xlu0 %v889
        %v927 = vpop.xlane.xlu0 %926
        %928 = vmax.xlane.f32.xlu0 %v892
        %v929 = vpop.xlane.xlu0 %928
        %930 = vmax.xlane.f32.xlu0 %v894
        %v931 = vpop.xlane.xlu0 %930
        %932 = vmax.xlane.f32.xlu0 %v897
        %v933 = vpop.xlane.xlu0 %932
        %934 = vmax.xlane.f32.xlu0 %v899
        %v935 = vpop.xlane.xlu0 %934
        %936 = vmax.xlane.f32.xlu0 %v902
        %v937 = vpop.xlane.xlu0 %936
        %938 = vmax.xlane.f32.xlu0 %v904
        %v939 = vpop.xlane.xlu0 %938
        %940 = vmax.xlane.f32.xlu0 %v907
        %v941 = vpop.xlane.xlu0 %940
        %942 = vmax.xlane.f32.xlu0 %v909
        %v943 = vpop.xlane.xlu0 %942
        %944 = vmax.xlane.f32.xlu0 %v912
        %v945 = vpop.xlane.xlu0 %944
        %946 = vmax.xlane.f32.xlu0 %v914
        %v947 = vpop.xlane.xlu0 %946
        %v948 = vsub.f32 %v877, %v917
        %v949 = vsub.f32 %v879, %v919
        %v950 = vsub.f32 %v882, %v921
        %v951 = vsub.f32 %v884, %v923
        %v952 = vsub.f32 %v887, %v925
        %v953 = vsub.f32 %v889, %v927
        %v954 = vsub.f32 %v892, %v929
        %v955 = vsub.f32 %v894, %v931
        %v956 = vsub.f32 %v897, %v933
        %v957 = vsub.f32 %v899, %v935
        %v958 = vsub.f32 %v902, %v937
        %v959 = vsub.f32 %v904, %v939
        %v960 = vsub.f32 %v907, %v941
        %v961 = vsub.f32 %v909, %v943
        %v962 = vsub.f32 %v912, %v945
        %v963 = vsub.f32 %v914, %v947
        %v964 = vmul.f32 %v948, 1.442695
        %v965 = vpow.pop %v964
        %v966 = vmul.f32 %v949, 1.442695
        %v967 = vpow.pop %v966
        %v968 = vmul.f32 %v950, 1.442695
        %v969 = vpow.pop %v968
        %v970 = vmul.f32 %v951, 1.442695
        %v971 = vpow.pop %v970
        %v972 = vmul.f32 %v952, 1.442695
        %v973 = vpow.pop %v972
        %v974 = vmul.f32 %v953, 1.442695
        %v975 = vpow.pop %v974
        %v976 = vmul.f32 %v954, 1.442695
        %v977 = vpow.pop %v976
        %v978 = vmul.f32 %v955, 1.442695
        %v979 = vpow.pop %v978
        %v980 = vmul.f32 %v956, 1.442695
        %v981 = vpow.pop %v980
        %v982 = vmul.f32 %v957, 1.442695
        %v983 = vpow.pop %v982
        %v984 = vmul.f32 %v958, 1.442695
        %v985 = vpow.pop %v984
        %v986 = vmul.f32 %v959, 1.442695
        %v987 = vpow.pop %v986
        %v988 = vmul.f32 %v960, 1.442695
        %v989 = vpow.pop %v988
        %v990 = vmul.f32 %v961, 1.442695
        %v991 = vpow.pop %v990
        %v992 = vmul.f32 %v962, 1.442695
        %v993 = vpow.pop %v992
        %v994 = vmul.f32 %v963, 1.442695
        %v995 = vpow.pop %v994
        %996 = vadd.xlane.f32.xlu0 %v965
        %v997 = vpop.xlane.xlu0 %996
        %998 = vadd.xlane.f32.xlu0 %v967
        %v999 = vpop.xlane.xlu0 %998
        %1000 = vadd.xlane.f32.xlu0 %v969
        %v1001 = vpop.xlane.xlu0 %1000
        %1002 = vadd.xlane.f32.xlu0 %v971
        %v1003 = vpop.xlane.xlu0 %1002
        %1004 = vadd.xlane.f32.xlu0 %v973
        %v1005 = vpop.xlane.xlu0 %1004
        %1006 = vadd.xlane.f32.xlu0 %v975
        %v1007 = vpop.xlane.xlu0 %1006
        %1008 = vadd.xlane.f32.xlu0 %v977
        %v1009 = vpop.xlane.xlu0 %1008
        %1010 = vadd.xlane.f32.xlu0 %v979
        %v1011 = vpop.xlane.xlu0 %1010
        %1012 = vadd.xlane.f32.xlu0 %v981
        %v1013 = vpop.xlane.xlu0 %1012
        %1014 = vadd.xlane.f32.xlu0 %v983
        %v1015 = vpop.xlane.xlu0 %1014
        %1016 = vadd.xlane.f32.xlu0 %v985
        %v1017 = vpop.xlane.xlu0 %1016
        %1018 = vadd.xlane.f32.xlu0 %v987
        %v1019 = vpop.xlane.xlu0 %1018
        %1020 = vadd.xlane.f32.xlu0 %v989
        %v1021 = vpop.xlane.xlu0 %1020
        %1022 = vadd.xlane.f32.xlu0 %v991
        %v1023 = vpop.xlane.xlu0 %1022
        %1024 = vadd.xlane.f32.xlu0 %v993
        %v1025 = vpop.xlane.xlu0 %1024
        %1026 = vadd.xlane.f32.xlu0 %v995
        %v1027 = vpop.xlane.xlu0 %1026
        %v1028 = vpack.c.bf16 %v967, %v965
        %v1029 = vpack.c.bf16 %v971, %v969
        %v1030 = vpack.c.bf16 %v975, %v973
        %v1031 = vpack.c.bf16 %v979, %v977
        %v1032 = vpack.c.bf16 %v983, %v981
        %v1033 = vpack.c.bf16 %v987, %v985
        %v1034 = vpack.c.bf16 %v991, %v989
        %v1035 = vpack.c.bf16 %v995, %v993
        %v1052 = vunpack.c.l.b16 %v722
        %v1053 = vunpack.c.l.b16 %v723
        %v1054 = vunpack.c.l.b16 %v724
        %v1055 = vunpack.c.l.b16 %v725
        %v1056 = vunpack.c.l.b16 %v726
        %v1057 = vunpack.c.l.b16 %v727
        %v1058 = vunpack.c.l.b16 %v728
        %v1059 = vunpack.c.l.b16 %v729
        %v1060 = vunpack.c.l.b16 %v730
        %v1061 = vunpack.c.l.b16 %v731
        %v1062 = vunpack.c.l.b16 %v732
        %v1063 = vunpack.c.l.b16 %v733
        %v1064 = vunpack.c.l.b16 %v734
        %v1065 = vunpack.c.l.b16 %v735
        %v1066 = vunpack.c.l.b16 %v736
        %v1067 = vunpack.c.l.b16 %v737
        %v1068 = vpack.c.b16 %v1053, %v1052
        %v1069 = vpack.c.b16 %v1055, %v1054
        %v1070 = vpack.c.b16 %v1057, %v1056
        %v1071 = vpack.c.b16 %v1059, %v1058
        %v1072 = vpack.c.b16 %v1061, %v1060
        %v1073 = vpack.c.b16 %v1063, %v1062
        %v1074 = vpack.c.b16 %v1065, %v1064
        %v1075 = vpack.c.b16 %v1067, %v1066
        %1084 = vmatpush.bf16.msra.mxu0 %v1075
        %1085 = vmatpush.bf16.msra.mxu0 %v1074
        %1086 = vmatpush.bf16.msra.mxu0 %v1073
        %1087 = vmatpush.bf16.msra.mxu0 %v1072
        %1088 = vmatpush.bf16.msra.mxu0 %v1071
        %1089 = vmatpush.bf16.msra.mxu0 %v1070
        %1090 = vmatpush.bf16.msra.mxu0 %v1069
        %1091 = vmatpush.bf16.msra.mxu0 %v1068
        %1092 = vmatmul.bf16.gmra.mxu0 %v1028
        %v1093 = vpop.f32.mrf.mxu0
        %v1094 = vadd.f32 0.0, %v1093
        %v1095 = vpop.f32.mrf.mxu0
        %v1096 = vadd.f32 0.0, %v1095
        %1097 = vmatmul.bf16.gmra.mxu0 %v1029
        %v1098 = vpop.f32.mrf.mxu0
        %v1099 = vadd.f32 0.0, %v1098
        %v1100 = vpop.f32.mrf.mxu0
        %v1101 = vadd.f32 0.0, %v1100
        %1102 = vmatmul.bf16.gmra.mxu0 %v1030
        %v1103 = vpop.f32.mrf.mxu0
        %v1104 = vadd.f32 0.0, %v1103
        %v1105 = vpop.f32.mrf.mxu0
        %v1106 = vadd.f32 0.0, %v1105
        %1107 = vmatmul.bf16.gmra.mxu0 %v1031
        %v1108 = vpop.f32.mrf.mxu0
        %v1109 = vadd.f32 0.0, %v1108
        %v1110 = vpop.f32.mrf.mxu0
        %v1111 = vadd.f32 0.0, %v1110
        %1112 = vmatmul.bf16.gmra.mxu0 %v1032
        %v1113 = vpop.f32.mrf.mxu0
        %v1114 = vadd.f32 0.0, %v1113
        %v1115 = vpop.f32.mrf.mxu0
        %v1116 = vadd.f32 0.0, %v1115
        %1117 = vmatmul.bf16.gmra.mxu0 %v1033
        %v1118 = vpop.f32.mrf.mxu0
        %v1119 = vadd.f32 0.0, %v1118
        %v1120 = vpop.f32.mrf.mxu0
        %v1121 = vadd.f32 0.0, %v1120
        %1122 = vmatmul.bf16.gmra.mxu0 %v1034
        %v1123 = vpop.f32.mrf.mxu0
        %v1124 = vadd.f32 0.0, %v1123
        %v1125 = vpop.f32.mrf.mxu0
        %v1126 = vadd.f32 0.0, %v1125
        %1127 = vmatmul.bf16.gmra.mxu0 %v1035
        %v1128 = vpop.f32.mrf.mxu0
        %v1129 = vadd.f32 0.0, %v1128
        %v1130 = vpop.f32.mrf.mxu0
        %v1131 = vadd.f32 0.0, %v1130
        %1132 = vdwg.mxu0
        %v1133 = vrcp.pop %v997
        %v1134 = vrcp.pop %v999
        %v1135 = vrcp.pop %v1001
        %v1136 = vrcp.pop %v1003
        %v1137 = vrcp.pop %v1005
        %v1138 = vrcp.pop %v1007
        %v1139 = vrcp.pop %v1009
        %v1140 = vrcp.pop %v1011
        %v1141 = vrcp.pop %v1013
        %v1142 = vrcp.pop %v1015
        %v1143 = vrcp.pop %v1017
        %v1144 = vrcp.pop %v1019
        %v1145 = vrcp.pop %v1021
        %v1146 = vrcp.pop %v1023
        %v1147 = vrcp.pop %v1025
        %v1148 = vrcp.pop %v1027
        %v1149 = vmul.f32 %v1094, %v1133
        %v1150 = vmul.f32 %v1096, %v1134
        %v1151 = vmul.f32 %v1099, %v1135
        %v1152 = vmul.f32 %v1101, %v1136
        %v1153 = vmul.f32 %v1104, %v1137
        %v1154 = vmul.f32 %v1106, %v1138
        %v1155 = vmul.f32 %v1109, %v1139
        %v1156 = vmul.f32 %v1111, %v1140
        %v1157 = vmul.f32 %v1114, %v1141
        %v1158 = vmul.f32 %v1116, %v1142
        %v1159 = vmul.f32 %v1119, %v1143
        %v1160 = vmul.f32 %v1121, %v1144
        %v1161 = vmul.f32 %v1124, %v1145
        %v1162 = vmul.f32 %v1126, %v1146
        %v1163 = vmul.f32 %v1129, %v1147
        %v1164 = vmul.f32 %v1131, %v1148
        %1165 = vrot.lane.b32.xlu0 %v770, 112
        %v1166 = vpop.permute.xlu0 %1165
        %1167 = vrot.lane.b32.xlu0 %v771, 112
        %v1168 = vpop.permute.xlu0 %1167
        %1169 = vrot.lane.b32.xlu0 %v772, 112
        %v1170 = vpop.permute.xlu0 %1169
        %1171 = vrot.lane.b32.xlu0 %v773, 112
        %v1172 = vpop.permute.xlu0 %1171
        %1173 = vrot.lane.b32.xlu0 %v774, 112
        %v1174 = vpop.permute.xlu0 %1173
        %1175 = vrot.lane.b32.xlu0 %v775, 112
        %v1176 = vpop.permute.xlu0 %1175
        %1177 = vrot.lane.b32.xlu0 %v776, 112
        %v1178 = vpop.permute.xlu0 %1177
        %1179 = vrot.lane.b32.xlu0 %v777, 112
        %v1180 = vpop.permute.xlu0 %1179
        %1181 = vrot.lane.b32.xlu0 %v810, 112
        %v1182 = vpop.permute.xlu0 %1181
        %1183 = vrot.lane.b32.xlu0 %v811, 112
        %v1184 = vpop.permute.xlu0 %1183
        %1185 = vrot.lane.b32.xlu0 %v812, 112
        %v1186 = vpop.permute.xlu0 %1185
        %1187 = vrot.lane.b32.xlu0 %v813, 112
        %v1188 = vpop.permute.xlu0 %1187
        %1189 = vrot.lane.b32.xlu0 %v814, 112
        %v1190 = vpop.permute.xlu0 %1189
        %1191 = vrot.lane.b32.xlu0 %v815, 112
        %v1192 = vpop.permute.xlu0 %1191
        %1193 = vrot.lane.b32.xlu0 %v816, 112
        %v1194 = vpop.permute.xlu0 %1193
        %1195 = vrot.lane.b32.xlu0 %v817, 112
        %v1196 = vpop.permute.xlu0 %1195
        %v1198 = vsel %vm818, %v1166, 0
        %v1201 = vsel %vm818, %v1168, 0
        %v1204 = vsel %vm818, %v1170, 0
        %v1207 = vsel %vm818, %v1172, 0
        %v1210 = vsel %vm818, %v1174, 0
        %v1213 = vsel %vm818, %v1176, 0
        %v1216 = vsel %vm818, %v1178, 0
        %v1219 = vsel %vm818, %v1180, 0
        %v1222 = vsel %vm818, %v1182, 0
        %v1225 = vsel %vm818, %v1184, 0
        %v1228 = vsel %vm818, %v1186, 0
        %v1231 = vsel %vm818, %v1188, 0
        %v1234 = vsel %vm818, %v1190, 0
        %v1237 = vsel %vm818, %v1192, 0
        %v1240 = vsel %vm818, %v1194, 0
        %v1243 = vsel %vm818, %v1196, 0
        %1245 = vmatpush.bf16.xpose.msra.mxu0 %v1243
        %1246 = vmatpush.bf16.xpose.msra.mxu0 %v1240
        %1247 = vmatpush.bf16.xpose.msra.mxu0 %v1237
        %1248 = vmatpush.bf16.xpose.msra.mxu0 %v1234
        %1249 = vmatpush.bf16.xpose.msra.mxu0 %v1231
        %1250 = vmatpush.bf16.xpose.msra.mxu0 %v1228
        %1251 = vmatpush.bf16.xpose.msra.mxu0 %v1225
        %1252 = vmatpush.bf16.xpose.msra.mxu0 %v1222
        %1253 = vmatmul.bf16.gmra.mxu0 %v1198
        %v1254 = vpop.f32.mrf.mxu0
        %v1255 = vadd.f32 %v689, %v1254
        %v1256 = vpop.f32.mrf.mxu0
        %v1257 = vadd.f32 %v689, %v1256
        %1258 = vmatmul.bf16.gmra.mxu0 %v1201
        %v1259 = vpop.f32.mrf.mxu0
        %v1260 = vadd.f32 %v689, %v1259
        %v1261 = vpop.f32.mrf.mxu0
        %v1262 = vadd.f32 %v689, %v1261
        %1263 = vmatmul.bf16.gmra.mxu0 %v1204
        %v1264 = vpop.f32.mrf.mxu0
        %v1265 = vadd.f32 %v689, %v1264
        %v1266 = vpop.f32.mrf.mxu0
        %v1267 = vadd.f32 %v689, %v1266
        %1268 = vmatmul.bf16.gmra.mxu0 %v1207
        %v1269 = vpop.f32.mrf.mxu0
        %v1270 = vadd.f32 %v689, %v1269
        %v1271 = vpop.f32.mrf.mxu0
        %v1272 = vadd.f32 %v689, %v1271
        %1273 = vmatmul.bf16.gmra.mxu0 %v1210
        %v1274 = vpop.f32.mrf.mxu0
        %v1275 = vadd.f32 %v689, %v1274
        %v1276 = vpop.f32.mrf.mxu0
        %v1277 = vadd.f32 %v689, %v1276
        %1278 = vmatmul.bf16.gmra.mxu0 %v1213
        %v1279 = vpop.f32.mrf.mxu0
        %v1280 = vadd.f32 %v689, %v1279
        %v1281 = vpop.f32.mrf.mxu0
        %v1282 = vadd.f32 %v689, %v1281
        %1283 = vmatmul.bf16.gmra.mxu0 %v1216
        %v1284 = vpop.f32.mrf.mxu0
        %v1285 = vadd.f32 %v689, %v1284
        %v1286 = vpop.f32.mrf.mxu0
        %v1287 = vadd.f32 %v689, %v1286
        %1288 = vmatmul.bf16.gmra.mxu0 %v1219
        %v1289 = vpop.f32.mrf.mxu0
        %v1290 = vadd.f32 %v689, %v1289
        %v1291 = vpop.f32.mrf.mxu0
        %v1292 = vadd.f32 %v689, %v1291
        %1293 = vdwg.mxu0
        %1294 = vmax.xlane.f32.xlu0 %v1255
        %v1295 = vpop.xlane.xlu0 %1294
        %1296 = vmax.xlane.f32.xlu0 %v1257
        %v1297 = vpop.xlane.xlu0 %1296
        %1298 = vmax.xlane.f32.xlu0 %v1260
        %v1299 = vpop.xlane.xlu0 %1298
        %1300 = vmax.xlane.f32.xlu0 %v1262
        %v1301 = vpop.xlane.xlu0 %1300
        %1302 = vmax.xlane.f32.xlu0 %v1265
        %v1303 = vpop.xlane.xlu0 %1302
        %1304 = vmax.xlane.f32.xlu0 %v1267
        %v1305 = vpop.xlane.xlu0 %1304
        %1306 = vmax.xlane.f32.xlu0 %v1270
        %v1307 = vpop.xlane.xlu0 %1306
        %1308 = vmax.xlane.f32.xlu0 %v1272
        %v1309 = vpop.xlane.xlu0 %1308
        %1310 = vmax.xlane.f32.xlu0 %v1275
        %v1311 = vpop.xlane.xlu0 %1310
        %1312 = vmax.xlane.f32.xlu0 %v1277
        %v1313 = vpop.xlane.xlu0 %1312
        %1314 = vmax.xlane.f32.xlu0 %v1280
        %v1315 = vpop.xlane.xlu0 %1314
        %1316 = vmax.xlane.f32.xlu0 %v1282
        %v1317 = vpop.xlane.xlu0 %1316
        %1318 = vmax.xlane.f32.xlu0 %v1285
        %v1319 = vpop.xlane.xlu0 %1318
        %1320 = vmax.xlane.f32.xlu0 %v1287
        %v1321 = vpop.xlane.xlu0 %1320
        %1322 = vmax.xlane.f32.xlu0 %v1290
        %v1323 = vpop.xlane.xlu0 %1322
        %1324 = vmax.xlane.f32.xlu0 %v1292
        %v1325 = vpop.xlane.xlu0 %1324
        %v1326 = vsub.f32 %v1255, %v1295
        %v1327 = vsub.f32 %v1257, %v1297
        %v1328 = vsub.f32 %v1260, %v1299
        %v1329 = vsub.f32 %v1262, %v1301
        %v1330 = vsub.f32 %v1265, %v1303
        %v1331 = vsub.f32 %v1267, %v1305
        %v1332 = vsub.f32 %v1270, %v1307
        %v1333 = vsub.f32 %v1272, %v1309
        %v1334 = vsub.f32 %v1275, %v1311
        %v1335 = vsub.f32 %v1277, %v1313
        %v1336 = vsub.f32 %v1280, %v1315
        %v1337 = vsub.f32 %v1282, %v1317
        %v1338 = vsub.f32 %v1285, %v1319
        %v1339 = vsub.f32 %v1287, %v1321
        %v1340 = vsub.f32 %v1290, %v1323
        %v1341 = vsub.f32 %v1292, %v1325
        %v1342 = vmul.f32 %v1326, 1.442695
        %v1343 = vpow.pop %v1342
        %v1344 = vmul.f32 %v1327, 1.442695
        %v1345 = vpow.pop %v1344
        %v1346 = vmul.f32 %v1328, 1.442695
        %v1347 = vpow.pop %v1346
        %v1348 = vmul.f32 %v1329, 1.442695
        %v1349 = vpow.pop %v1348
        %v1350 = vmul.f32 %v1330, 1.442695
        %v1351 = vpow.pop %v1350
        %v1352 = vmul.f32 %v1331, 1.442695
        %v1353 = vpow.pop %v1352
        %v1354 = vmul.f32 %v1332, 1.442695
        %v1355 = vpow.pop %v1354
        %v1356 = vmul.f32 %v1333, 1.442695
        %v1357 = vpow.pop %v1356
        %v1358 = vmul.f32 %v1334, 1.442695
        %v1359 = vpow.pop %v1358
        %v1360 = vmul.f32 %v1335, 1.442695
        %v1361 = vpow.pop %v1360
        %v1362 = vmul.f32 %v1336, 1.442695
        %v1363 = vpow.pop %v1362
        %v1364 = vmul.f32 %v1337, 1.442695
        %v1365 = vpow.pop %v1364
        %v1366 = vmul.f32 %v1338, 1.442695
        %v1367 = vpow.pop %v1366
        %v1368 = vmul.f32 %v1339, 1.442695
        %v1369 = vpow.pop %v1368
        %v1370 = vmul.f32 %v1340, 1.442695
        %v1371 = vpow.pop %v1370
        %v1372 = vmul.f32 %v1341, 1.442695
        %v1373 = vpow.pop %v1372
        %1374 = vadd.xlane.f32.xlu0 %v1343
        %v1375 = vpop.xlane.xlu0 %1374
        %1376 = vadd.xlane.f32.xlu0 %v1345
        %v1377 = vpop.xlane.xlu0 %1376
        %1378 = vadd.xlane.f32.xlu0 %v1347
        %v1379 = vpop.xlane.xlu0 %1378
        %1380 = vadd.xlane.f32.xlu0 %v1349
        %v1381 = vpop.xlane.xlu0 %1380
        %1382 = vadd.xlane.f32.xlu0 %v1351
        %v1383 = vpop.xlane.xlu0 %1382
        %1384 = vadd.xlane.f32.xlu0 %v1353
        %v1385 = vpop.xlane.xlu0 %1384
        %1386 = vadd.xlane.f32.xlu0 %v1355
        %v1387 = vpop.xlane.xlu0 %1386
        %1388 = vadd.xlane.f32.xlu0 %v1357
        %v1389 = vpop.xlane.xlu0 %1388
        %1390 = vadd.xlane.f32.xlu0 %v1359
        %v1391 = vpop.xlane.xlu0 %1390
        %1392 = vadd.xlane.f32.xlu0 %v1361
        %v1393 = vpop.xlane.xlu0 %1392
        %1394 = vadd.xlane.f32.xlu0 %v1363
        %v1395 = vpop.xlane.xlu0 %1394
        %1396 = vadd.xlane.f32.xlu0 %v1365
        %v1397 = vpop.xlane.xlu0 %1396
        %1398 = vadd.xlane.f32.xlu0 %v1367
        %v1399 = vpop.xlane.xlu0 %1398
        %1400 = vadd.xlane.f32.xlu0 %v1369
        %v1401 = vpop.xlane.xlu0 %1400
        %1402 = vadd.xlane.f32.xlu0 %v1371
        %v1403 = vpop.xlane.xlu0 %1402
        %1404 = vadd.xlane.f32.xlu0 %v1373
        %v1405 = vpop.xlane.xlu0 %1404
        %v1406 = vpack.c.bf16 %v1345, %v1343
        %v1407 = vpack.c.bf16 %v1349, %v1347
        %v1408 = vpack.c.bf16 %v1353, %v1351
        %v1409 = vpack.c.bf16 %v1357, %v1355
        %v1410 = vpack.c.bf16 %v1361, %v1359
        %v1411 = vpack.c.bf16 %v1365, %v1363
        %v1412 = vpack.c.bf16 %v1369, %v1367
        %v1413 = vpack.c.bf16 %v1373, %v1371
        %1414 = vrot.lane.b32.xlu0 %v1068, 112
        %v1415 = vpop.permute.xlu0 %1414
        %1416 = vrot.lane.b32.xlu0 %v1069, 112
        %v1417 = vpop.permute.xlu0 %1416
        %1418 = vrot.lane.b32.xlu0 %v1070, 112
        %v1419 = vpop.permute.xlu0 %1418
        %1420 = vrot.lane.b32.xlu0 %v1071, 112
        %v1421 = vpop.permute.xlu0 %1420
        %1422 = vrot.lane.b32.xlu0 %v1072, 112
        %v1423 = vpop.permute.xlu0 %1422
        %1424 = vrot.lane.b32.xlu0 %v1073, 112
        %v1425 = vpop.permute.xlu0 %1424
        %1426 = vrot.lane.b32.xlu0 %v1074, 112
        %v1427 = vpop.permute.xlu0 %1426
        %1428 = vrot.lane.b32.xlu0 %v1075, 112
        %v1429 = vpop.permute.xlu0 %1428
        %1438 = vmatpush.bf16.msra.mxu0 %v1429
        %1439 = vmatpush.bf16.msra.mxu0 %v1427
        %1440 = vmatpush.bf16.msra.mxu0 %v1425
        %1441 = vmatpush.bf16.msra.mxu0 %v1423
        %1442 = vmatpush.bf16.msra.mxu0 %v1421
        %1443 = vmatpush.bf16.msra.mxu0 %v1419
        %1444 = vmatpush.bf16.msra.mxu0 %v1417
        %1445 = vmatpush.bf16.msra.mxu0 %v1415
        %1446 = vmatmul.bf16.gmra.mxu0 %v1406
        %v1447 = vpop.f32.mrf.mxu0
        %v1448 = vadd.f32 0.0, %v1447
        %v1449 = vpop.f32.mrf.mxu0
        %v1450 = vadd.f32 0.0, %v1449
        %1451 = vmatmul.bf16.gmra.mxu0 %v1407
        %v1452 = vpop.f32.mrf.mxu0
        %v1453 = vadd.f32 0.0, %v1452
        %v1454 = vpop.f32.mrf.mxu0
        %v1455 = vadd.f32 0.0, %v1454
        %1456 = vmatmul.bf16.gmra.mxu0 %v1408
        %v1457 = vpop.f32.mrf.mxu0
        %v1458 = vadd.f32 0.0, %v1457
        %v1459 = vpop.f32.mrf.mxu0
        %v1460 = vadd.f32 0.0, %v1459
        %1461 = vmatmul.bf16.gmra.mxu0 %v1409
        %v1462 = vpop.f32.mrf.mxu0
        %v1463 = vadd.f32 0.0, %v1462
        %v1464 = vpop.f32.mrf.mxu0
        %v1465 = vadd.f32 0.0, %v1464
        %1466 = vmatmul.bf16.gmra.mxu0 %v1410
        %v1467 = vpop.f32.mrf.mxu0
        %v1468 = vadd.f32 0.0, %v1467
        %v1469 = vpop.f32.mrf.mxu0
        %v1470 = vadd.f32 0.0, %v1469
        %1471 = vmatmul.bf16.gmra.mxu0 %v1411
        %v1472 = vpop.f32.mrf.mxu0
        %v1473 = vadd.f32 0.0, %v1472
        %v1474 = vpop.f32.mrf.mxu0
        %v1475 = vadd.f32 0.0, %v1474
        %1476 = vmatmul.bf16.gmra.mxu0 %v1412
        %v1477 = vpop.f32.mrf.mxu0
        %v1478 = vadd.f32 0.0, %v1477
        %v1479 = vpop.f32.mrf.mxu0
        %v1480 = vadd.f32 0.0, %v1479
        %1481 = vmatmul.bf16.gmra.mxu0 %v1413
        %v1482 = vpop.f32.mrf.mxu0
        %v1483 = vadd.f32 0.0, %v1482
        %v1484 = vpop.f32.mrf.mxu0
        %v1485 = vadd.f32 0.0, %v1484
        %1486 = vdwg.mxu0
        %v1487 = vrcp.pop %v1375
        %v1488 = vrcp.pop %v1377
        %v1489 = vrcp.pop %v1379
        %v1490 = vrcp.pop %v1381
        %v1491 = vrcp.pop %v1383
        %v1492 = vrcp.pop %v1385
        %v1493 = vrcp.pop %v1387
        %v1494 = vrcp.pop %v1389
        %v1495 = vrcp.pop %v1391
        %v1496 = vrcp.pop %v1393
        %v1497 = vrcp.pop %v1395
        %v1498 = vrcp.pop %v1397
        %v1499 = vrcp.pop %v1399
        %v1500 = vrcp.pop %v1401
        %v1501 = vrcp.pop %v1403
        %v1502 = vrcp.pop %v1405
        %v1503 = vmul.f32 %v1448, %v1487
        %v1504 = vmul.f32 %v1450, %v1488
        %v1505 = vmul.f32 %v1453, %v1489
        %v1506 = vmul.f32 %v1455, %v1490
        %v1507 = vmul.f32 %v1458, %v1491
        %v1508 = vmul.f32 %v1460, %v1492
        %v1509 = vmul.f32 %v1463, %v1493
        %v1510 = vmul.f32 %v1465, %v1494
        %v1511 = vmul.f32 %v1468, %v1495
        %v1512 = vmul.f32 %v1470, %v1496
        %v1513 = vmul.f32 %v1473, %v1497
        %v1514 = vmul.f32 %v1475, %v1498
        %v1515 = vmul.f32 %v1478, %v1499
        %v1516 = vmul.f32 %v1480, %v1500
        %v1517 = vmul.f32 %v1483, %v1501
        %v1518 = vmul.f32 %v1485, %v1502
        %1519 = vrot.lane.b32.xlu0 %v770, 96
        %v1520 = vpop.permute.xlu0 %1519
        %1521 = vrot.lane.b32.xlu0 %v771, 96
        %v1522 = vpop.permute.xlu0 %1521
        %1523 = vrot.lane.b32.xlu0 %v772, 96
        %v1524 = vpop.permute.xlu0 %1523
        %1525 = vrot.lane.b32.xlu0 %v773, 96
        %v1526 = vpop.permute.xlu0 %1525
        %1527 = vrot.lane.b32.xlu0 %v774, 96
        %v1528 = vpop.permute.xlu0 %1527
        %1529 = vrot.lane.b32.xlu0 %v775, 96
        %v1530 = vpop.permute.xlu0 %1529
        %1531 = vrot.lane.b32.xlu0 %v776, 96
        %v1532 = vpop.permute.xlu0 %1531
        %1533 = vrot.lane.b32.xlu0 %v777, 96
        %v1534 = vpop.permute.xlu0 %1533
        %1535 = vrot.lane.b32.xlu0 %v810, 96
        %v1536 = vpop.permute.xlu0 %1535
        %1537 = vrot.lane.b32.xlu0 %v811, 96
        %v1538 = vpop.permute.xlu0 %1537
        %1539 = vrot.lane.b32.xlu0 %v812, 96
        %v1540 = vpop.permute.xlu0 %1539
        %1541 = vrot.lane.b32.xlu0 %v813, 96
        %v1542 = vpop.permute.xlu0 %1541
        %1543 = vrot.lane.b32.xlu0 %v814, 96
        %v1544 = vpop.permute.xlu0 %1543
        %1545 = vrot.lane.b32.xlu0 %v815, 96
        %v1546 = vpop.permute.xlu0 %1545
        %1547 = vrot.lane.b32.xlu0 %v816, 96
        %v1548 = vpop.permute.xlu0 %1547
        %1549 = vrot.lane.b32.xlu0 %v817, 96
        %v1550 = vpop.permute.xlu0 %1549
        %v1552 = vsel %vm818, %v1520, 0
        %v1555 = vsel %vm818, %v1522, 0
        %v1558 = vsel %vm818, %v1524, 0
        %v1561 = vsel %vm818, %v1526, 0
        %v1564 = vsel %vm818, %v1528, 0
        %v1567 = vsel %vm818, %v1530, 0
        %v1570 = vsel %vm818, %v1532, 0
        %v1573 = vsel %vm818, %v1534, 0
        %v1576 = vsel %vm818, %v1536, 0
        %v1579 = vsel %vm818, %v1538, 0
        %v1582 = vsel %vm818, %v1540, 0
        %v1585 = vsel %vm818, %v1542, 0
        %v1588 = vsel %vm818, %v1544, 0
        %v1591 = vsel %vm818, %v1546, 0
        %v1594 = vsel %vm818, %v1548, 0
        %v1597 = vsel %vm818, %v1550, 0
        %1599 = vmatpush.bf16.xpose.msra.mxu0 %v1597
        %1600 = vmatpush.bf16.xpose.msra.mxu0 %v1594
        %1601 = vmatpush.bf16.xpose.msra.mxu0 %v1591
        %1602 = vmatpush.bf16.xpose.msra.mxu0 %v1588
        %1603 = vmatpush.bf16.xpose.msra.mxu0 %v1585
        %1604 = vmatpush.bf16.xpose.msra.mxu0 %v1582
        %1605 = vmatpush.bf16.xpose.msra.mxu0 %v1579
        %1606 = vmatpush.bf16.xpose.msra.mxu0 %v1576
        %1607 = vmatmul.bf16.gmra.mxu0 %v1552
        %v1608 = vpop.f32.mrf.mxu0
        %v1609 = vadd.f32 %v689, %v1608
        %v1610 = vpop.f32.mrf.mxu0
        %v1611 = vadd.f32 %v689, %v1610
        %1612 = vmatmul.bf16.gmra.mxu0 %v1555
        %v1613 = vpop.f32.mrf.mxu0
        %v1614 = vadd.f32 %v689, %v1613
        %v1615 = vpop.f32.mrf.mxu0
        %v1616 = vadd.f32 %v689, %v1615
        %1617 = vmatmul.bf16.gmra.mxu0 %v1558
        %v1618 = vpop.f32.mrf.mxu0
        %v1619 = vadd.f32 %v689, %v1618
        %v1620 = vpop.f32.mrf.mxu0
        %v1621 = vadd.f32 %v689, %v1620
        %1622 = vmatmul.bf16.gmra.mxu0 %v1561
        %v1623 = vpop.f32.mrf.mxu0
        %v1624 = vadd.f32 %v689, %v1623
        %v1625 = vpop.f32.mrf.mxu0
        %v1626 = vadd.f32 %v689, %v1625
        %1627 = vmatmul.bf16.gmra.mxu0 %v1564
        %v1628 = vpop.f32.mrf.mxu0
        %v1629 = vadd.f32 %v689, %v1628
        %v1630 = vpop.f32.mrf.mxu0
        %v1631 = vadd.f32 %v689, %v1630
        %1632 = vmatmul.bf16.gmra.mxu0 %v1567
        %v1633 = vpop.f32.mrf.mxu0
        %v1634 = vadd.f32 %v689, %v1633
        %v1635 = vpop.f32.mrf.mxu0
        %v1636 = vadd.f32 %v689, %v1635
        %1637 = vmatmul.bf16.gmra.mxu0 %v1570
        %v1638 = vpop.f32.mrf.mxu0
        %v1639 = vadd.f32 %v689, %v1638
        %v1640 = vpop.f32.mrf.mxu0
        %v1641 = vadd.f32 %v689, %v1640
        %1642 = vmatmul.bf16.gmra.mxu0 %v1573
        %v1643 = vpop.f32.mrf.mxu0
        %v1644 = vadd.f32 %v689, %v1643
        %v1645 = vpop.f32.mrf.mxu0
        %v1646 = vadd.f32 %v689, %v1645
        %1647 = vdwg.mxu0
        %1648 = vmax.xlane.f32.xlu0 %v1609
        %v1649 = vpop.xlane.xlu0 %1648
        %1650 = vmax.xlane.f32.xlu0 %v1611
        %v1651 = vpop.xlane.xlu0 %1650
        %1652 = vmax.xlane.f32.xlu0 %v1614
        %v1653 = vpop.xlane.xlu0 %1652
        %1654 = vmax.xlane.f32.xlu0 %v1616
        %v1655 = vpop.xlane.xlu0 %1654
        %1656 = vmax.xlane.f32.xlu0 %v1619
        %v1657 = vpop.xlane.xlu0 %1656
        %1658 = vmax.xlane.f32.xlu0 %v1621
        %v1659 = vpop.xlane.xlu0 %1658
        %1660 = vmax.xlane.f32.xlu0 %v1624
        %v1661 = vpop.xlane.xlu0 %1660
        %1662 = vmax.xlane.f32.xlu0 %v1626
        %v1663 = vpop.xlane.xlu0 %1662
        %1664 = vmax.xlane.f32.xlu0 %v1629
        %v1665 = vpop.xlane.xlu0 %1664
        %1666 = vmax.xlane.f32.xlu0 %v1631
        %v1667 = vpop.xlane.xlu0 %1666
        %1668 = vmax.xlane.f32.xlu0 %v1634
        %v1669 = vpop.xlane.xlu0 %1668
        %1670 = vmax.xlane.f32.xlu0 %v1636
        %v1671 = vpop.xlane.xlu0 %1670
        %1672 = vmax.xlane.f32.xlu0 %v1639
        %v1673 = vpop.xlane.xlu0 %1672
        %1674 = vmax.xlane.f32.xlu0 %v1641
        %v1675 = vpop.xlane.xlu0 %1674
        %1676 = vmax.xlane.f32.xlu0 %v1644
        %v1677 = vpop.xlane.xlu0 %1676
        %1678 = vmax.xlane.f32.xlu0 %v1646
        %v1679 = vpop.xlane.xlu0 %1678
        %v1680 = vsub.f32 %v1609, %v1649
        %v1681 = vsub.f32 %v1611, %v1651
        %v1682 = vsub.f32 %v1614, %v1653
        %v1683 = vsub.f32 %v1616, %v1655
        %v1684 = vsub.f32 %v1619, %v1657
        %v1685 = vsub.f32 %v1621, %v1659
        %v1686 = vsub.f32 %v1624, %v1661
        %v1687 = vsub.f32 %v1626, %v1663
        %v1688 = vsub.f32 %v1629, %v1665
        %v1689 = vsub.f32 %v1631, %v1667
        %v1690 = vsub.f32 %v1634, %v1669
        %v1691 = vsub.f32 %v1636, %v1671
        %v1692 = vsub.f32 %v1639, %v1673
        %v1693 = vsub.f32 %v1641, %v1675
        %v1694 = vsub.f32 %v1644, %v1677
        %v1695 = vsub.f32 %v1646, %v1679
        %v1696 = vmul.f32 %v1680, 1.442695
        %v1697 = vpow.pop %v1696
        %v1698 = vmul.f32 %v1681, 1.442695
        %v1699 = vpow.pop %v1698
        %v1700 = vmul.f32 %v1682, 1.442695
        %v1701 = vpow.pop %v1700
        %v1702 = vmul.f32 %v1683, 1.442695
        %v1703 = vpow.pop %v1702
        %v1704 = vmul.f32 %v1684, 1.442695
        %v1705 = vpow.pop %v1704
        %v1706 = vmul.f32 %v1685, 1.442695
        %v1707 = vpow.pop %v1706
        %v1708 = vmul.f32 %v1686, 1.442695
        %v1709 = vpow.pop %v1708
        %v1710 = vmul.f32 %v1687, 1.442695
        %v1711 = vpow.pop %v1710
        %v1712 = vmul.f32 %v1688, 1.442695
        %v1713 = vpow.pop %v1712
        %v1714 = vmul.f32 %v1689, 1.442695
        %v1715 = vpow.pop %v1714
        %v1716 = vmul.f32 %v1690, 1.442695
        %v1717 = vpow.pop %v1716
        %v1718 = vmul.f32 %v1691, 1.442695
        %v1719 = vpow.pop %v1718
        %v1720 = vmul.f32 %v1692, 1.442695
        %v1721 = vpow.pop %v1720
        %v1722 = vmul.f32 %v1693, 1.442695
        %v1723 = vpow.pop %v1722
        %v1724 = vmul.f32 %v1694, 1.442695
        %v1725 = vpow.pop %v1724
        %v1726 = vmul.f32 %v1695, 1.442695
        %v1727 = vpow.pop %v1726
        %1728 = vadd.xlane.f32.xlu0 %v1697
        %v1729 = vpop.xlane.xlu0 %1728
        %1730 = vadd.xlane.f32.xlu0 %v1699
        %v1731 = vpop.xlane.xlu0 %1730
        %1732 = vadd.xlane.f32.xlu0 %v1701
        %v1733 = vpop.xlane.xlu0 %1732
        %1734 = vadd.xlane.f32.xlu0 %v1703
        %v1735 = vpop.xlane.xlu0 %1734
        %1736 = vadd.xlane.f32.xlu0 %v1705
        %v1737 = vpop.xlane.xlu0 %1736
        %1738 = vadd.xlane.f32.xlu0 %v1707
        %v1739 = vpop.xlane.xlu0 %1738
        %1740 = vadd.xlane.f32.xlu0 %v1709
        %v1741 = vpop.xlane.xlu0 %1740
        %1742 = vadd.xlane.f32.xlu0 %v1711
        %v1743 = vpop.xlane.xlu0 %1742
        %1744 = vadd.xlane.f32.xlu0 %v1713
        %v1745 = vpop.xlane.xlu0 %1744
        %1746 = vadd.xlane.f32.xlu0 %v1715
        %v1747 = vpop.xlane.xlu0 %1746
        %1748 = vadd.xlane.f32.xlu0 %v1717
        %v1749 = vpop.xlane.xlu0 %1748
        %1750 = vadd.xlane.f32.xlu0 %v1719
        %v1751 = vpop.xlane.xlu0 %1750
        %1752 = vadd.xlane.f32.xlu0 %v1721
        %v1753 = vpop.xlane.xlu0 %1752
        %1754 = vadd.xlane.f32.xlu0 %v1723
        %v1755 = vpop.xlane.xlu0 %1754
        %1756 = vadd.xlane.f32.xlu0 %v1725
        %v1757 = vpop.xlane.xlu0 %1756
        %1758 = vadd.xlane.f32.xlu0 %v1727
        %v1759 = vpop.xlane.xlu0 %1758
        %v1760 = vpack.c.bf16 %v1699, %v1697
        %v1761 = vpack.c.bf16 %v1703, %v1701
        %v1762 = vpack.c.bf16 %v1707, %v1705
        %v1763 = vpack.c.bf16 %v1711, %v1709
        %v1764 = vpack.c.bf16 %v1715, %v1713
        %v1765 = vpack.c.bf16 %v1719, %v1717
        %v1766 = vpack.c.bf16 %v1723, %v1721
        %v1767 = vpack.c.bf16 %v1727, %v1725
        %1768 = vrot.lane.b32.xlu0 %v1068, 96
        %v1769 = vpop.permute.xlu0 %1768
        %1770 = vrot.lane.b32.xlu0 %v1069, 96
        %v1771 = vpop.permute.xlu0 %1770
        %1772 = vrot.lane.b32.xlu0 %v1070, 96
        %v1773 = vpop.permute.xlu0 %1772
        %1774 = vrot.lane.b32.xlu0 %v1071, 96
        %v1775 = vpop.permute.xlu0 %1774
        %1776 = vrot.lane.b32.xlu0 %v1072, 96
        %v1777 = vpop.permute.xlu0 %1776
        %1778 = vrot.lane.b32.xlu0 %v1073, 96
        %v1779 = vpop.permute.xlu0 %1778
        %1780 = vrot.lane.b32.xlu0 %v1074, 96
        %v1781 = vpop.permute.xlu0 %1780
        %1782 = vrot.lane.b32.xlu0 %v1075, 96
        %v1783 = vpop.permute.xlu0 %1782
        %1792 = vmatpush.bf16.msra.mxu0 %v1783
        %1793 = vmatpush.bf16.msra.mxu0 %v1781
        %1794 = vmatpush.bf16.msra.mxu0 %v1779
        %1795 = vmatpush.bf16.msra.mxu0 %v1777
        %1796 = vmatpush.bf16.msra.mxu0 %v1775
        %1797 = vmatpush.bf16.msra.mxu0 %v1773
        %1798 = vmatpush.bf16.msra.mxu0 %v1771
        %1799 = vmatpush.bf16.msra.mxu0 %v1769
        %1800 = vmatmul.bf16.gmra.mxu0 %v1760
        %v1801 = vpop.f32.mrf.mxu0
        %v1802 = vadd.f32 0.0, %v1801
        %v1803 = vpop.f32.mrf.mxu0
        %v1804 = vadd.f32 0.0, %v1803
        %1805 = vmatmul.bf16.gmra.mxu0 %v1761
        %v1806 = vpop.f32.mrf.mxu0
        %v1807 = vadd.f32 0.0, %v1806
        %v1808 = vpop.f32.mrf.mxu0
        %v1809 = vadd.f32 0.0, %v1808
        %1810 = vmatmul.bf16.gmra.mxu0 %v1762
        %v1811 = vpop.f32.mrf.mxu0
        %v1812 = vadd.f32 0.0, %v1811
        %v1813 = vpop.f32.mrf.mxu0
        %v1814 = vadd.f32 0.0, %v1813
        %1815 = vmatmul.bf16.gmra.mxu0 %v1763
        %v1816 = vpop.f32.mrf.mxu0
        %v1817 = vadd.f32 0.0, %v1816
        %v1818 = vpop.f32.mrf.mxu0
        %v1819 = vadd.f32 0.0, %v1818
        %1820 = vmatmul.bf16.gmra.mxu0 %v1764
        %v1821 = vpop.f32.mrf.mxu0
        %v1822 = vadd.f32 0.0, %v1821
        %v1823 = vpop.f32.mrf.mxu0
        %v1824 = vadd.f32 0.0, %v1823
        %1825 = vmatmul.bf16.gmra.mxu0 %v1765
        %v1826 = vpop.f32.mrf.mxu0
        %v1827 = vadd.f32 0.0, %v1826
        %v1828 = vpop.f32.mrf.mxu0
        %v1829 = vadd.f32 0.0, %v1828
        %1830 = vmatmul.bf16.gmra.mxu0 %v1766
        %v1831 = vpop.f32.mrf.mxu0
        %v1832 = vadd.f32 0.0, %v1831
        %v1833 = vpop.f32.mrf.mxu0
        %v1834 = vadd.f32 0.0, %v1833
        %1835 = vmatmul.bf16.gmra.mxu0 %v1767
        %v1836 = vpop.f32.mrf.mxu0
        %v1837 = vadd.f32 0.0, %v1836
        %v1838 = vpop.f32.mrf.mxu0
        %v1839 = vadd.f32 0.0, %v1838
        %1840 = vdwg.mxu0
        %v1841 = vrcp.pop %v1729
        %v1842 = vrcp.pop %v1731
        %v1843 = vrcp.pop %v1733
        %v1844 = vrcp.pop %v1735
        %v1845 = vrcp.pop %v1737
        %v1846 = vrcp.pop %v1739
        %v1847 = vrcp.pop %v1741
        %v1848 = vrcp.pop %v1743
        %v1849 = vrcp.pop %v1745
        %v1850 = vrcp.pop %v1747
        %v1851 = vrcp.pop %v1749
        %v1852 = vrcp.pop %v1751
        %v1853 = vrcp.pop %v1753
        %v1854 = vrcp.pop %v1755
        %v1855 = vrcp.pop %v1757
        %v1856 = vrcp.pop %v1759
        %v1857 = vmul.f32 %v1802, %v1841
        %v1858 = vmul.f32 %v1804, %v1842
        %v1859 = vmul.f32 %v1807, %v1843
        %v1860 = vmul.f32 %v1809, %v1844
        %v1861 = vmul.f32 %v1812, %v1845
        %v1862 = vmul.f32 %v1814, %v1846
        %v1863 = vmul.f32 %v1817, %v1847
        %v1864 = vmul.f32 %v1819, %v1848
        %v1865 = vmul.f32 %v1822, %v1849
        %v1866 = vmul.f32 %v1824, %v1850
        %v1867 = vmul.f32 %v1827, %v1851
        %v1868 = vmul.f32 %v1829, %v1852
        %v1869 = vmul.f32 %v1832, %v1853
        %v1870 = vmul.f32 %v1834, %v1854
        %v1871 = vmul.f32 %v1837, %v1855
        %v1872 = vmul.f32 %v1839, %v1856
        %1873 = vrot.lane.b32.xlu0 %v770, 80
        %v1874 = vpop.permute.xlu0 %1873
        %1875 = vrot.lane.b32.xlu0 %v771, 80
        %v1876 = vpop.permute.xlu0 %1875
        %1877 = vrot.lane.b32.xlu0 %v772, 80
        %v1878 = vpop.permute.xlu0 %1877
        %1879 = vrot.lane.b32.xlu0 %v773, 80
        %v1880 = vpop.permute.xlu0 %1879
        %1881 = vrot.lane.b32.xlu0 %v774, 80
        %v1882 = vpop.permute.xlu0 %1881
        %1883 = vrot.lane.b32.xlu0 %v775, 80
        %v1884 = vpop.permute.xlu0 %1883
        %1885 = vrot.lane.b32.xlu0 %v776, 80
        %v1886 = vpop.permute.xlu0 %1885
        %1887 = vrot.lane.b32.xlu0 %v777, 80
        %v1888 = vpop.permute.xlu0 %1887
        %1889 = vrot.lane.b32.xlu0 %v810, 80
        %v1890 = vpop.permute.xlu0 %1889
        %1891 = vrot.lane.b32.xlu0 %v811, 80
        %v1892 = vpop.permute.xlu0 %1891
        %1893 = vrot.lane.b32.xlu0 %v812, 80
        %v1894 = vpop.permute.xlu0 %1893
        %1895 = vrot.lane.b32.xlu0 %v813, 80
        %v1896 = vpop.permute.xlu0 %1895
        %1897 = vrot.lane.b32.xlu0 %v814, 80
        %v1898 = vpop.permute.xlu0 %1897
        %1899 = vrot.lane.b32.xlu0 %v815, 80
        %v1900 = vpop.permute.xlu0 %1899
        %1901 = vrot.lane.b32.xlu0 %v816, 80
        %v1902 = vpop.permute.xlu0 %1901
        %1903 = vrot.lane.b32.xlu0 %v817, 80
        %v1904 = vpop.permute.xlu0 %1903
        %v1906 = vsel %vm818, %v1874, 0
        %v1909 = vsel %vm818, %v1876, 0
        %v1912 = vsel %vm818, %v1878, 0
        %v1915 = vsel %vm818, %v1880, 0
        %v1918 = vsel %vm818, %v1882, 0
        %v1921 = vsel %vm818, %v1884, 0
        %v1924 = vsel %vm818, %v1886, 0
        %v1927 = vsel %vm818, %v1888, 0
        %v1930 = vsel %vm818, %v1890, 0
        %v1933 = vsel %vm818, %v1892, 0
        %v1936 = vsel %vm818, %v1894, 0
        %v1939 = vsel %vm818, %v1896, 0
        %v1942 = vsel %vm818, %v1898, 0
        %v1945 = vsel %vm818, %v1900, 0
        %v1948 = vsel %vm818, %v1902, 0
        %v1951 = vsel %vm818, %v1904, 0
        %1953 = vmatpush.bf16.xpose.msra.mxu0 %v1951
        %1954 = vmatpush.bf16.xpose.msra.mxu0 %v1948
        %1955 = vmatpush.bf16.xpose.msra.mxu0 %v1945
        %1956 = vmatpush.bf16.xpose.msra.mxu0 %v1942
        %1957 = vmatpush.bf16.xpose.msra.mxu0 %v1939
        %1958 = vmatpush.bf16.xpose.msra.mxu0 %v1936
        %1959 = vmatpush.bf16.xpose.msra.mxu0 %v1933
        %1960 = vmatpush.bf16.xpose.msra.mxu0 %v1930
        %1961 = vmatmul.bf16.gmra.mxu0 %v1906
        %v1962 = vpop.f32.mrf.mxu0
        %v1963 = vadd.f32 %v689, %v1962
        %v1964 = vpop.f32.mrf.mxu0
        %v1965 = vadd.f32 %v689, %v1964
        %1966 = vmatmul.bf16.gmra.mxu0 %v1909
        %v1967 = vpop.f32.mrf.mxu0
        %v1968 = vadd.f32 %v689, %v1967
        %v1969 = vpop.f32.mrf.mxu0
        %v1970 = vadd.f32 %v689, %v1969
        %1971 = vmatmul.bf16.gmra.mxu0 %v1912
        %v1972 = vpop.f32.mrf.mxu0
        %v1973 = vadd.f32 %v689, %v1972
        %v1974 = vpop.f32.mrf.mxu0
        %v1975 = vadd.f32 %v689, %v1974
        %1976 = vmatmul.bf16.gmra.mxu0 %v1915
        %v1977 = vpop.f32.mrf.mxu0
        %v1978 = vadd.f32 %v689, %v1977
        %v1979 = vpop.f32.mrf.mxu0
        %v1980 = vadd.f32 %v689, %v1979
        %1981 = vmatmul.bf16.gmra.mxu0 %v1918
        %v1982 = vpop.f32.mrf.mxu0
        %v1983 = vadd.f32 %v689, %v1982
        %v1984 = vpop.f32.mrf.mxu0
        %v1985 = vadd.f32 %v689, %v1984
        %1986 = vmatmul.bf16.gmra.mxu0 %v1921
        %v1987 = vpop.f32.mrf.mxu0
        %v1988 = vadd.f32 %v689, %v1987
        %v1989 = vpop.f32.mrf.mxu0
        %v1990 = vadd.f32 %v689, %v1989
        %1991 = vmatmul.bf16.gmra.mxu0 %v1924
        %v1992 = vpop.f32.mrf.mxu0
        %v1993 = vadd.f32 %v689, %v1992
        %v1994 = vpop.f32.mrf.mxu0
        %v1995 = vadd.f32 %v689, %v1994
        %1996 = vmatmul.bf16.gmra.mxu0 %v1927
        %v1997 = vpop.f32.mrf.mxu0
        %v1998 = vadd.f32 %v689, %v1997
        %v1999 = vpop.f32.mrf.mxu0
        %v2000 = vadd.f32 %v689, %v1999
        %2001 = vdwg.mxu0
        %2002 = vmax.xlane.f32.xlu0 %v1963
        %v2003 = vpop.xlane.xlu0 %2002
        %2004 = vmax.xlane.f32.xlu0 %v1965
        %v2005 = vpop.xlane.xlu0 %2004
        %2006 = vmax.xlane.f32.xlu0 %v1968
        %v2007 = vpop.xlane.xlu0 %2006
        %2008 = vmax.xlane.f32.xlu0 %v1970
        %v2009 = vpop.xlane.xlu0 %2008
        %2010 = vmax.xlane.f32.xlu0 %v1973
        %v2011 = vpop.xlane.xlu0 %2010
        %2012 = vmax.xlane.f32.xlu0 %v1975
        %v2013 = vpop.xlane.xlu0 %2012
        %2014 = vmax.xlane.f32.xlu0 %v1978
        %v2015 = vpop.xlane.xlu0 %2014
        %2016 = vmax.xlane.f32.xlu0 %v1980
        %v2017 = vpop.xlane.xlu0 %2016
        %2018 = vmax.xlane.f32.xlu0 %v1983
        %v2019 = vpop.xlane.xlu0 %2018
        %2020 = vmax.xlane.f32.xlu0 %v1985
        %v2021 = vpop.xlane.xlu0 %2020
        %2022 = vmax.xlane.f32.xlu0 %v1988
        %v2023 = vpop.xlane.xlu0 %2022
        %2024 = vmax.xlane.f32.xlu0 %v1990
        %v2025 = vpop.xlane.xlu0 %2024
        %2026 = vmax.xlane.f32.xlu0 %v1993
        %v2027 = vpop.xlane.xlu0 %2026
        %2028 = vmax.xlane.f32.xlu0 %v1995
        %v2029 = vpop.xlane.xlu0 %2028
        %2030 = vmax.xlane.f32.xlu0 %v1998
        %v2031 = vpop.xlane.xlu0 %2030
        %2032 = vmax.xlane.f32.xlu0 %v2000
        %v2033 = vpop.xlane.xlu0 %2032
        %v2034 = vsub.f32 %v1963, %v2003
        %v2035 = vsub.f32 %v1965, %v2005
        %v2036 = vsub.f32 %v1968, %v2007
        %v2037 = vsub.f32 %v1970, %v2009
        %v2038 = vsub.f32 %v1973, %v2011
        %v2039 = vsub.f32 %v1975, %v2013
        %v2040 = vsub.f32 %v1978, %v2015
        %v2041 = vsub.f32 %v1980, %v2017
        %v2042 = vsub.f32 %v1983, %v2019
        %v2043 = vsub.f32 %v1985, %v2021
        %v2044 = vsub.f32 %v1988, %v2023
        %v2045 = vsub.f32 %v1990, %v2025
        %v2046 = vsub.f32 %v1993, %v2027
        %v2047 = vsub.f32 %v1995, %v2029
        %v2048 = vsub.f32 %v1998, %v2031
        %v2049 = vsub.f32 %v2000, %v2033
        %v2050 = vmul.f32 %v2034, 1.442695
        %v2051 = vpow.pop %v2050
        %v2052 = vmul.f32 %v2035, 1.442695
        %v2053 = vpow.pop %v2052
        %v2054 = vmul.f32 %v2036, 1.442695
        %v2055 = vpow.pop %v2054
        %v2056 = vmul.f32 %v2037, 1.442695
        %v2057 = vpow.pop %v2056
        %v2058 = vmul.f32 %v2038, 1.442695
        %v2059 = vpow.pop %v2058
        %v2060 = vmul.f32 %v2039, 1.442695
        %v2061 = vpow.pop %v2060
        %v2062 = vmul.f32 %v2040, 1.442695
        %v2063 = vpow.pop %v2062
        %v2064 = vmul.f32 %v2041, 1.442695
        %v2065 = vpow.pop %v2064
        %v2066 = vmul.f32 %v2042, 1.442695
        %v2067 = vpow.pop %v2066
        %v2068 = vmul.f32 %v2043, 1.442695
        %v2069 = vpow.pop %v2068
        %v2070 = vmul.f32 %v2044, 1.442695
        %v2071 = vpow.pop %v2070
        %v2072 = vmul.f32 %v2045, 1.442695
        %v2073 = vpow.pop %v2072
        %v2074 = vmul.f32 %v2046, 1.442695
        %v2075 = vpow.pop %v2074
        %v2076 = vmul.f32 %v2047, 1.442695
        %v2077 = vpow.pop %v2076
        %v2078 = vmul.f32 %v2048, 1.442695
        %v2079 = vpow.pop %v2078
        %v2080 = vmul.f32 %v2049, 1.442695
        %v2081 = vpow.pop %v2080
        %2082 = vadd.xlane.f32.xlu0 %v2051
        %v2083 = vpop.xlane.xlu0 %2082
        %2084 = vadd.xlane.f32.xlu0 %v2053
        %v2085 = vpop.xlane.xlu0 %2084
        %2086 = vadd.xlane.f32.xlu0 %v2055
        %v2087 = vpop.xlane.xlu0 %2086
        %2088 = vadd.xlane.f32.xlu0 %v2057
        %v2089 = vpop.xlane.xlu0 %2088
        %2090 = vadd.xlane.f32.xlu0 %v2059
        %v2091 = vpop.xlane.xlu0 %2090
        %2092 = vadd.xlane.f32.xlu0 %v2061
        %v2093 = vpop.xlane.xlu0 %2092
        %2094 = vadd.xlane.f32.xlu0 %v2063
        %v2095 = vpop.xlane.xlu0 %2094
        %2096 = vadd.xlane.f32.xlu0 %v2065
        %v2097 = vpop.xlane.xlu0 %2096
        %2098 = vadd.xlane.f32.xlu0 %v2067
        %v2099 = vpop.xlane.xlu0 %2098
        %2100 = vadd.xlane.f32.xlu0 %v2069
        %v2101 = vpop.xlane.xlu0 %2100
        %2102 = vadd.xlane.f32.xlu0 %v2071
        %v2103 = vpop.xlane.xlu0 %2102
        %2104 = vadd.xlane.f32.xlu0 %v2073
        %v2105 = vpop.xlane.xlu0 %2104
        %2106 = vadd.xlane.f32.xlu0 %v2075
        %v2107 = vpop.xlane.xlu0 %2106
        %2108 = vadd.xlane.f32.xlu0 %v2077
        %v2109 = vpop.xlane.xlu0 %2108
        %2110 = vadd.xlane.f32.xlu0 %v2079
        %v2111 = vpop.xlane.xlu0 %2110
        %2112 = vadd.xlane.f32.xlu0 %v2081
        %v2113 = vpop.xlane.xlu0 %2112
        %v2114 = vpack.c.bf16 %v2053, %v2051
        %v2115 = vpack.c.bf16 %v2057, %v2055
        %v2116 = vpack.c.bf16 %v2061, %v2059
        %v2117 = vpack.c.bf16 %v2065, %v2063
        %v2118 = vpack.c.bf16 %v2069, %v2067
        %v2119 = vpack.c.bf16 %v2073, %v2071
        %v2120 = vpack.c.bf16 %v2077, %v2075
        %v2121 = vpack.c.bf16 %v2081, %v2079
        %2122 = vrot.lane.b32.xlu0 %v1068, 80
        %v2123 = vpop.permute.xlu0 %2122
        %2124 = vrot.lane.b32.xlu0 %v1069, 80
        %v2125 = vpop.permute.xlu0 %2124
        %2126 = vrot.lane.b32.xlu0 %v1070, 80
        %v2127 = vpop.permute.xlu0 %2126
        %2128 = vrot.lane.b32.xlu0 %v1071, 80
        %v2129 = vpop.permute.xlu0 %2128
        %2130 = vrot.lane.b32.xlu0 %v1072, 80
        %v2131 = vpop.permute.xlu0 %2130
        %2132 = vrot.lane.b32.xlu0 %v1073, 80
        %v2133 = vpop.permute.xlu0 %2132
        %2134 = vrot.lane.b32.xlu0 %v1074, 80
        %v2135 = vpop.permute.xlu0 %2134
        %2136 = vrot.lane.b32.xlu0 %v1075, 80
        %v2137 = vpop.permute.xlu0 %2136
        %2146 = vmatpush.bf16.msra.mxu0 %v2137
        %2147 = vmatpush.bf16.msra.mxu0 %v2135
        %2148 = vmatpush.bf16.msra.mxu0 %v2133
        %2149 = vmatpush.bf16.msra.mxu0 %v2131
        %2150 = vmatpush.bf16.msra.mxu0 %v2129
        %2151 = vmatpush.bf16.msra.mxu0 %v2127
        %2152 = vmatpush.bf16.msra.mxu0 %v2125
        %2153 = vmatpush.bf16.msra.mxu0 %v2123
        %2154 = vmatmul.bf16.gmra.mxu0 %v2114
        %v2155 = vpop.f32.mrf.mxu0
        %v2156 = vadd.f32 0.0, %v2155
        %v2157 = vpop.f32.mrf.mxu0
        %v2158 = vadd.f32 0.0, %v2157
        %2159 = vmatmul.bf16.gmra.mxu0 %v2115
        %v2160 = vpop.f32.mrf.mxu0
        %v2161 = vadd.f32 0.0, %v2160
        %v2162 = vpop.f32.mrf.mxu0
        %v2163 = vadd.f32 0.0, %v2162
        %2164 = vmatmul.bf16.gmra.mxu0 %v2116
        %v2165 = vpop.f32.mrf.mxu0
        %v2166 = vadd.f32 0.0, %v2165
        %v2167 = vpop.f32.mrf.mxu0
        %v2168 = vadd.f32 0.0, %v2167
        %2169 = vmatmul.bf16.gmra.mxu0 %v2117
        %v2170 = vpop.f32.mrf.mxu0
        %v2171 = vadd.f32 0.0, %v2170
        %v2172 = vpop.f32.mrf.mxu0
        %v2173 = vadd.f32 0.0, %v2172
        %2174 = vmatmul.bf16.gmra.mxu0 %v2118
        %v2175 = vpop.f32.mrf.mxu0
        %v2176 = vadd.f32 0.0, %v2175
        %v2177 = vpop.f32.mrf.mxu0
        %v2178 = vadd.f32 0.0, %v2177
        %2179 = vmatmul.bf16.gmra.mxu0 %v2119
        %v2180 = vpop.f32.mrf.mxu0
        %v2181 = vadd.f32 0.0, %v2180
        %v2182 = vpop.f32.mrf.mxu0
        %v2183 = vadd.f32 0.0, %v2182
        %2184 = vmatmul.bf16.gmra.mxu0 %v2120
        %v2185 = vpop.f32.mrf.mxu0
        %v2186 = vadd.f32 0.0, %v2185
        %v2187 = vpop.f32.mrf.mxu0
        %v2188 = vadd.f32 0.0, %v2187
        %2189 = vmatmul.bf16.gmra.mxu0 %v2121
        %v2190 = vpop.f32.mrf.mxu0
        %v2191 = vadd.f32 0.0, %v2190
        %v2192 = vpop.f32.mrf.mxu0
        %v2193 = vadd.f32 0.0, %v2192
        %2194 = vdwg.mxu0
        %v2195 = vrcp.pop %v2083
        %v2196 = vrcp.pop %v2085
        %v2197 = vrcp.pop %v2087
        %v2198 = vrcp.pop %v2089
        %v2199 = vrcp.pop %v2091
        %v2200 = vrcp.pop %v2093
        %v2201 = vrcp.pop %v2095
        %v2202 = vrcp.pop %v2097
        %v2203 = vrcp.pop %v2099
        %v2204 = vrcp.pop %v2101
        %v2205 = vrcp.pop %v2103
        %v2206 = vrcp.pop %v2105
        %v2207 = vrcp.pop %v2107
        %v2208 = vrcp.pop %v2109
        %v2209 = vrcp.pop %v2111
        %v2210 = vrcp.pop %v2113
        %v2211 = vmul.f32 %v2156, %v2195
        %v2212 = vmul.f32 %v2158, %v2196
        %v2213 = vmul.f32 %v2161, %v2197
        %v2214 = vmul.f32 %v2163, %v2198
        %v2215 = vmul.f32 %v2166, %v2199
        %v2216 = vmul.f32 %v2168, %v2200
        %v2217 = vmul.f32 %v2171, %v2201
        %v2218 = vmul.f32 %v2173, %v2202
        %v2219 = vmul.f32 %v2176, %v2203
        %v2220 = vmul.f32 %v2178, %v2204
        %v2221 = vmul.f32 %v2181, %v2205
        %v2222 = vmul.f32 %v2183, %v2206
        %v2223 = vmul.f32 %v2186, %v2207
        %v2224 = vmul.f32 %v2188, %v2208
        %v2225 = vmul.f32 %v2191, %v2209
        %v2226 = vmul.f32 %v2193, %v2210
        %2227 = vrot.lane.b32.xlu0 %v770, 64
        %v2228 = vpop.permute.xlu0 %2227
        %2229 = vrot.lane.b32.xlu0 %v771, 64
        %v2230 = vpop.permute.xlu0 %2229
        %2231 = vrot.lane.b32.xlu0 %v772, 64
        %v2232 = vpop.permute.xlu0 %2231
        %2233 = vrot.lane.b32.xlu0 %v773, 64
        %v2234 = vpop.permute.xlu0 %2233
        %2235 = vrot.lane.b32.xlu0 %v774, 64
        %v2236 = vpop.permute.xlu0 %2235
        %2237 = vrot.lane.b32.xlu0 %v775, 64
        %v2238 = vpop.permute.xlu0 %2237
        %2239 = vrot.lane.b32.xlu0 %v776, 64
        %v2240 = vpop.permute.xlu0 %2239
        %2241 = vrot.lane.b32.xlu0 %v777, 64
        %v2242 = vpop.permute.xlu0 %2241
        %2243 = vrot.lane.b32.xlu0 %v810, 64
        %v2244 = vpop.permute.xlu0 %2243
        %2245 = vrot.lane.b32.xlu0 %v811, 64
        %v2246 = vpop.permute.xlu0 %2245
        %2247 = vrot.lane.b32.xlu0 %v812, 64
        %v2248 = vpop.permute.xlu0 %2247
        %2249 = vrot.lane.b32.xlu0 %v813, 64
        %v2250 = vpop.permute.xlu0 %2249
        %2251 = vrot.lane.b32.xlu0 %v814, 64
        %v2252 = vpop.permute.xlu0 %2251
        %2253 = vrot.lane.b32.xlu0 %v815, 64
        %v2254 = vpop.permute.xlu0 %2253
        %2255 = vrot.lane.b32.xlu0 %v816, 64
        %v2256 = vpop.permute.xlu0 %2255
        %2257 = vrot.lane.b32.xlu0 %v817, 64
        %v2258 = vpop.permute.xlu0 %2257
        %v2260 = vsel %vm818, %v2228, 0
        %v2263 = vsel %vm818, %v2230, 0
        %v2266 = vsel %vm818, %v2232, 0
        %v2269 = vsel %vm818, %v2234, 0
        %v2272 = vsel %vm818, %v2236, 0
        %v2275 = vsel %vm818, %v2238, 0
        %v2278 = vsel %vm818, %v2240, 0
        %v2281 = vsel %vm818, %v2242, 0
        %v2284 = vsel %vm818, %v2244, 0
        %v2287 = vsel %vm818, %v2246, 0
        %v2290 = vsel %vm818, %v2248, 0
        %v2293 = vsel %vm818, %v2250, 0
        %v2296 = vsel %vm818, %v2252, 0
        %v2299 = vsel %vm818, %v2254, 0
        %v2302 = vsel %vm818, %v2256, 0
        %v2305 = vsel %vm818, %v2258, 0
        %2307 = vmatpush.bf16.xpose.msra.mxu0 %v2305
        %2308 = vmatpush.bf16.xpose.msra.mxu0 %v2302
        %2309 = vmatpush.bf16.xpose.msra.mxu0 %v2299
        %2310 = vmatpush.bf16.xpose.msra.mxu0 %v2296
        %2311 = vmatpush.bf16.xpose.msra.mxu0 %v2293
        %2312 = vmatpush.bf16.xpose.msra.mxu0 %v2290
        %2313 = vmatpush.bf16.xpose.msra.mxu0 %v2287
        %2314 = vmatpush.bf16.xpose.msra.mxu0 %v2284
        %2315 = vmatmul.bf16.gmra.mxu0 %v2260
        %v2316 = vpop.f32.mrf.mxu0
        %v2317 = vadd.f32 %v689, %v2316
        %v2318 = vpop.f32.mrf.mxu0
        %v2319 = vadd.f32 %v689, %v2318
        %2320 = vmatmul.bf16.gmra.mxu0 %v2263
        %v2321 = vpop.f32.mrf.mxu0
        %v2322 = vadd.f32 %v689, %v2321
        %v2323 = vpop.f32.mrf.mxu0
        %v2324 = vadd.f32 %v689, %v2323
        %2325 = vmatmul.bf16.gmra.mxu0 %v2266
        %v2326 = vpop.f32.mrf.mxu0
        %v2327 = vadd.f32 %v689, %v2326
        %v2328 = vpop.f32.mrf.mxu0
        %v2329 = vadd.f32 %v689, %v2328
        %2330 = vmatmul.bf16.gmra.mxu0 %v2269
        %v2331 = vpop.f32.mrf.mxu0
        %v2332 = vadd.f32 %v689, %v2331
        %v2333 = vpop.f32.mrf.mxu0
        %v2334 = vadd.f32 %v689, %v2333
        %2335 = vmatmul.bf16.gmra.mxu0 %v2272
        %v2336 = vpop.f32.mrf.mxu0
        %v2337 = vadd.f32 %v689, %v2336
        %v2338 = vpop.f32.mrf.mxu0
        %v2339 = vadd.f32 %v689, %v2338
        %2340 = vmatmul.bf16.gmra.mxu0 %v2275
        %v2341 = vpop.f32.mrf.mxu0
        %v2342 = vadd.f32 %v689, %v2341
        %v2343 = vpop.f32.mrf.mxu0
        %v2344 = vadd.f32 %v689, %v2343
        %2345 = vmatmul.bf16.gmra.mxu0 %v2278
        %v2346 = vpop.f32.mrf.mxu0
        %v2347 = vadd.f32 %v689, %v2346
        %v2348 = vpop.f32.mrf.mxu0
        %v2349 = vadd.f32 %v689, %v2348
        %2350 = vmatmul.bf16.gmra.mxu0 %v2281
        %v2351 = vpop.f32.mrf.mxu0
        %v2352 = vadd.f32 %v689, %v2351
        %v2353 = vpop.f32.mrf.mxu0
        %v2354 = vadd.f32 %v689, %v2353
        %2355 = vdwg.mxu0
        %2356 = vmax.xlane.f32.xlu0 %v2317
        %v2357 = vpop.xlane.xlu0 %2356
        %2358 = vmax.xlane.f32.xlu0 %v2319
        %v2359 = vpop.xlane.xlu0 %2358
        %2360 = vmax.xlane.f32.xlu0 %v2322
        %v2361 = vpop.xlane.xlu0 %2360
        %2362 = vmax.xlane.f32.xlu0 %v2324
        %v2363 = vpop.xlane.xlu0 %2362
        %2364 = vmax.xlane.f32.xlu0 %v2327
        %v2365 = vpop.xlane.xlu0 %2364
        %2366 = vmax.xlane.f32.xlu0 %v2329
        %v2367 = vpop.xlane.xlu0 %2366
        %2368 = vmax.xlane.f32.xlu0 %v2332
        %v2369 = vpop.xlane.xlu0 %2368
        %2370 = vmax.xlane.f32.xlu0 %v2334
        %v2371 = vpop.xlane.xlu0 %2370
        %2372 = vmax.xlane.f32.xlu0 %v2337
        %v2373 = vpop.xlane.xlu0 %2372
        %2374 = vmax.xlane.f32.xlu0 %v2339
        %v2375 = vpop.xlane.xlu0 %2374
        %2376 = vmax.xlane.f32.xlu0 %v2342
        %v2377 = vpop.xlane.xlu0 %2376
        %2378 = vmax.xlane.f32.xlu0 %v2344
        %v2379 = vpop.xlane.xlu0 %2378
        %2380 = vmax.xlane.f32.xlu0 %v2347
        %v2381 = vpop.xlane.xlu0 %2380
        %2382 = vmax.xlane.f32.xlu0 %v2349
        %v2383 = vpop.xlane.xlu0 %2382
        %2384 = vmax.xlane.f32.xlu0 %v2352
        %v2385 = vpop.xlane.xlu0 %2384
        %2386 = vmax.xlane.f32.xlu0 %v2354
        %v2387 = vpop.xlane.xlu0 %2386
        %v2388 = vsub.f32 %v2317, %v2357
        %v2389 = vsub.f32 %v2319, %v2359
        %v2390 = vsub.f32 %v2322, %v2361
        %v2391 = vsub.f32 %v2324, %v2363
        %v2392 = vsub.f32 %v2327, %v2365
        %v2393 = vsub.f32 %v2329, %v2367
        %v2394 = vsub.f32 %v2332, %v2369
        %v2395 = vsub.f32 %v2334, %v2371
        %v2396 = vsub.f32 %v2337, %v2373
        %v2397 = vsub.f32 %v2339, %v2375
        %v2398 = vsub.f32 %v2342, %v2377
        %v2399 = vsub.f32 %v2344, %v2379
        %v2400 = vsub.f32 %v2347, %v2381
        %v2401 = vsub.f32 %v2349, %v2383
        %v2402 = vsub.f32 %v2352, %v2385
        %v2403 = vsub.f32 %v2354, %v2387
        %v2404 = vmul.f32 %v2388, 1.442695
        %v2405 = vpow.pop %v2404
        %v2406 = vmul.f32 %v2389, 1.442695
        %v2407 = vpow.pop %v2406
        %v2408 = vmul.f32 %v2390, 1.442695
        %v2409 = vpow.pop %v2408
        %v2410 = vmul.f32 %v2391, 1.442695
        %v2411 = vpow.pop %v2410
        %v2412 = vmul.f32 %v2392, 1.442695
        %v2413 = vpow.pop %v2412
        %v2414 = vmul.f32 %v2393, 1.442695
        %v2415 = vpow.pop %v2414
        %v2416 = vmul.f32 %v2394, 1.442695
        %v2417 = vpow.pop %v2416
        %v2418 = vmul.f32 %v2395, 1.442695
        %v2419 = vpow.pop %v2418
        %v2420 = vmul.f32 %v2396, 1.442695
        %v2421 = vpow.pop %v2420
        %v2422 = vmul.f32 %v2397, 1.442695
        %v2423 = vpow.pop %v2422
        %v2424 = vmul.f32 %v2398, 1.442695
        %v2425 = vpow.pop %v2424
        %v2426 = vmul.f32 %v2399, 1.442695
        %v2427 = vpow.pop %v2426
        %v2428 = vmul.f32 %v2400, 1.442695
        %v2429 = vpow.pop %v2428
        %v2430 = vmul.f32 %v2401, 1.442695
        %v2431 = vpow.pop %v2430
        %v2432 = vmul.f32 %v2402, 1.442695
        %v2433 = vpow.pop %v2432
        %v2434 = vmul.f32 %v2403, 1.442695
        %v2435 = vpow.pop %v2434
        %2436 = vadd.xlane.f32.xlu0 %v2405
        %v2437 = vpop.xlane.xlu0 %2436
        %2438 = vadd.xlane.f32.xlu0 %v2407
        %v2439 = vpop.xlane.xlu0 %2438
        %2440 = vadd.xlane.f32.xlu0 %v2409
        %v2441 = vpop.xlane.xlu0 %2440
        %2442 = vadd.xlane.f32.xlu0 %v2411
        %v2443 = vpop.xlane.xlu0 %2442
        %2444 = vadd.xlane.f32.xlu0 %v2413
        %v2445 = vpop.xlane.xlu0 %2444
        %2446 = vadd.xlane.f32.xlu0 %v2415
        %v2447 = vpop.xlane.xlu0 %2446
        %2448 = vadd.xlane.f32.xlu0 %v2417
        %v2449 = vpop.xlane.xlu0 %2448
        %2450 = vadd.xlane.f32.xlu0 %v2419
        %v2451 = vpop.xlane.xlu0 %2450
        %2452 = vadd.xlane.f32.xlu0 %v2421
        %v2453 = vpop.xlane.xlu0 %2452
        %2454 = vadd.xlane.f32.xlu0 %v2423
        %v2455 = vpop.xlane.xlu0 %2454
        %2456 = vadd.xlane.f32.xlu0 %v2425
        %v2457 = vpop.xlane.xlu0 %2456
        %2458 = vadd.xlane.f32.xlu0 %v2427
        %v2459 = vpop.xlane.xlu0 %2458
        %2460 = vadd.xlane.f32.xlu0 %v2429
        %v2461 = vpop.xlane.xlu0 %2460
        %2462 = vadd.xlane.f32.xlu0 %v2431
        %v2463 = vpop.xlane.xlu0 %2462
        %2464 = vadd.xlane.f32.xlu0 %v2433
        %v2465 = vpop.xlane.xlu0 %2464
        %2466 = vadd.xlane.f32.xlu0 %v2435
        %v2467 = vpop.xlane.xlu0 %2466
        %v2468 = vpack.c.bf16 %v2407, %v2405
        %v2469 = vpack.c.bf16 %v2411, %v2409
        %v2470 = vpack.c.bf16 %v2415, %v2413
        %v2471 = vpack.c.bf16 %v2419, %v2417
        %v2472 = vpack.c.bf16 %v2423, %v2421
        %v2473 = vpack.c.bf16 %v2427, %v2425
        %v2474 = vpack.c.bf16 %v2431, %v2429
        %v2475 = vpack.c.bf16 %v2435, %v2433
        %2476 = vrot.lane.b32.xlu0 %v1068, 64
        %v2477 = vpop.permute.xlu0 %2476
        %2478 = vrot.lane.b32.xlu0 %v1069, 64
        %v2479 = vpop.permute.xlu0 %2478
        %2480 = vrot.lane.b32.xlu0 %v1070, 64
        %v2481 = vpop.permute.xlu0 %2480
        %2482 = vrot.lane.b32.xlu0 %v1071, 64
        %v2483 = vpop.permute.xlu0 %2482
        %2484 = vrot.lane.b32.xlu0 %v1072, 64
        %v2485 = vpop.permute.xlu0 %2484
        %2486 = vrot.lane.b32.xlu0 %v1073, 64
        %v2487 = vpop.permute.xlu0 %2486
        %2488 = vrot.lane.b32.xlu0 %v1074, 64
        %v2489 = vpop.permute.xlu0 %2488
        %2490 = vrot.lane.b32.xlu0 %v1075, 64
        %v2491 = vpop.permute.xlu0 %2490
        %2500 = vmatpush.bf16.msra.mxu0 %v2491
        %2501 = vmatpush.bf16.msra.mxu0 %v2489
        %2502 = vmatpush.bf16.msra.mxu0 %v2487
        %2503 = vmatpush.bf16.msra.mxu0 %v2485
        %2504 = vmatpush.bf16.msra.mxu0 %v2483
        %2505 = vmatpush.bf16.msra.mxu0 %v2481
        %2506 = vmatpush.bf16.msra.mxu0 %v2479
        %2507 = vmatpush.bf16.msra.mxu0 %v2477
        %2508 = vmatmul.bf16.gmra.mxu0 %v2468
        %v2509 = vpop.f32.mrf.mxu0
        %v2510 = vadd.f32 0.0, %v2509
        %v2511 = vpop.f32.mrf.mxu0
        %v2512 = vadd.f32 0.0, %v2511
        %2513 = vmatmul.bf16.gmra.mxu0 %v2469
        %v2514 = vpop.f32.mrf.mxu0
        %v2515 = vadd.f32 0.0, %v2514
        %v2516 = vpop.f32.mrf.mxu0
        %v2517 = vadd.f32 0.0, %v2516
        %2518 = vmatmul.bf16.gmra.mxu0 %v2470
        %v2519 = vpop.f32.mrf.mxu0
        %v2520 = vadd.f32 0.0, %v2519
        %v2521 = vpop.f32.mrf.mxu0
        %v2522 = vadd.f32 0.0, %v2521
        %2523 = vmatmul.bf16.gmra.mxu0 %v2471
        %v2524 = vpop.f32.mrf.mxu0
        %v2525 = vadd.f32 0.0, %v2524
        %v2526 = vpop.f32.mrf.mxu0
        %v2527 = vadd.f32 0.0, %v2526
        %2528 = vmatmul.bf16.gmra.mxu0 %v2472
        %v2529 = vpop.f32.mrf.mxu0
        %v2530 = vadd.f32 0.0, %v2529
        %v2531 = vpop.f32.mrf.mxu0
        %v2532 = vadd.f32 0.0, %v2531
        %2533 = vmatmul.bf16.gmra.mxu0 %v2473
        %v2534 = vpop.f32.mrf.mxu0
        %v2535 = vadd.f32 0.0, %v2534
        %v2536 = vpop.f32.mrf.mxu0
        %v2537 = vadd.f32 0.0, %v2536
        %2538 = vmatmul.bf16.gmra.mxu0 %v2474
        %v2539 = vpop.f32.mrf.mxu0
        %v2540 = vadd.f32 0.0, %v2539
        %v2541 = vpop.f32.mrf.mxu0
        %v2542 = vadd.f32 0.0, %v2541
        %2543 = vmatmul.bf16.gmra.mxu0 %v2475
        %v2544 = vpop.f32.mrf.mxu0
        %v2545 = vadd.f32 0.0, %v2544
        %v2546 = vpop.f32.mrf.mxu0
        %v2547 = vadd.f32 0.0, %v2546
        %2548 = vdwg.mxu0
        %v2549 = vrcp.pop %v2437
        %v2550 = vrcp.pop %v2439
        %v2551 = vrcp.pop %v2441
        %v2552 = vrcp.pop %v2443
        %v2553 = vrcp.pop %v2445
        %v2554 = vrcp.pop %v2447
        %v2555 = vrcp.pop %v2449
        %v2556 = vrcp.pop %v2451
        %v2557 = vrcp.pop %v2453
        %v2558 = vrcp.pop %v2455
        %v2559 = vrcp.pop %v2457
        %v2560 = vrcp.pop %v2459
        %v2561 = vrcp.pop %v2461
        %v2562 = vrcp.pop %v2463
        %v2563 = vrcp.pop %v2465
        %v2564 = vrcp.pop %v2467
        %v2565 = vmul.f32 %v2510, %v2549
        %v2566 = vmul.f32 %v2512, %v2550
        %v2567 = vmul.f32 %v2515, %v2551
        %v2568 = vmul.f32 %v2517, %v2552
        %v2569 = vmul.f32 %v2520, %v2553
        %v2570 = vmul.f32 %v2522, %v2554
        %v2571 = vmul.f32 %v2525, %v2555
        %v2572 = vmul.f32 %v2527, %v2556
        %v2573 = vmul.f32 %v2530, %v2557
        %v2574 = vmul.f32 %v2532, %v2558
        %v2575 = vmul.f32 %v2535, %v2559
        %v2576 = vmul.f32 %v2537, %v2560
        %v2577 = vmul.f32 %v2540, %v2561
        %v2578 = vmul.f32 %v2542, %v2562
        %v2579 = vmul.f32 %v2545, %v2563
        %v2580 = vmul.f32 %v2547, %v2564
        %2581 = vrot.lane.b32.xlu0 %v770, 48
        %v2582 = vpop.permute.xlu0 %2581
        %2583 = vrot.lane.b32.xlu0 %v771, 48
        %v2584 = vpop.permute.xlu0 %2583
        %2585 = vrot.lane.b32.xlu0 %v772, 48
        %v2586 = vpop.permute.xlu0 %2585
        %2587 = vrot.lane.b32.xlu0 %v773, 48
        %v2588 = vpop.permute.xlu0 %2587
        %2589 = vrot.lane.b32.xlu0 %v774, 48
        %v2590 = vpop.permute.xlu0 %2589
        %2591 = vrot.lane.b32.xlu0 %v775, 48
        %v2592 = vpop.permute.xlu0 %2591
        %2593 = vrot.lane.b32.xlu0 %v776, 48
        %v2594 = vpop.permute.xlu0 %2593
        %2595 = vrot.lane.b32.xlu0 %v777, 48
        %v2596 = vpop.permute.xlu0 %2595
        %2597 = vrot.lane.b32.xlu0 %v810, 48
        %v2598 = vpop.permute.xlu0 %2597
        %2599 = vrot.lane.b32.xlu0 %v811, 48
        %v2600 = vpop.permute.xlu0 %2599
        %2601 = vrot.lane.b32.xlu0 %v812, 48
        %v2602 = vpop.permute.xlu0 %2601
        %2603 = vrot.lane.b32.xlu0 %v813, 48
        %v2604 = vpop.permute.xlu0 %2603
        %2605 = vrot.lane.b32.xlu0 %v814, 48
        %v2606 = vpop.permute.xlu0 %2605
        %2607 = vrot.lane.b32.xlu0 %v815, 48
        %v2608 = vpop.permute.xlu0 %2607
        %2609 = vrot.lane.b32.xlu0 %v816, 48
        %v2610 = vpop.permute.xlu0 %2609
        %2611 = vrot.lane.b32.xlu0 %v817, 48
        %v2612 = vpop.permute.xlu0 %2611
        %v2614 = vsel %vm818, %v2582, 0
        %v2617 = vsel %vm818, %v2584, 0
        %v2620 = vsel %vm818, %v2586, 0
        %v2623 = vsel %vm818, %v2588, 0
        %v2626 = vsel %vm818, %v2590, 0
        %v2629 = vsel %vm818, %v2592, 0
        %v2632 = vsel %vm818, %v2594, 0
        %v2635 = vsel %vm818, %v2596, 0
        %v2638 = vsel %vm818, %v2598, 0
        %v2641 = vsel %vm818, %v2600, 0
        %v2644 = vsel %vm818, %v2602, 0
        %v2647 = vsel %vm818, %v2604, 0
        %v2650 = vsel %vm818, %v2606, 0
        %v2653 = vsel %vm818, %v2608, 0
        %v2656 = vsel %vm818, %v2610, 0
        %v2659 = vsel %vm818, %v2612, 0
        %2661 = vmatpush.bf16.xpose.msra.mxu0 %v2659
        %2662 = vmatpush.bf16.xpose.msra.mxu0 %v2656
        %2663 = vmatpush.bf16.xpose.msra.mxu0 %v2653
        %2664 = vmatpush.bf16.xpose.msra.mxu0 %v2650
        %2665 = vmatpush.bf16.xpose.msra.mxu0 %v2647
        %2666 = vmatpush.bf16.xpose.msra.mxu0 %v2644
        %2667 = vmatpush.bf16.xpose.msra.mxu0 %v2641
        %2668 = vmatpush.bf16.xpose.msra.mxu0 %v2638
        %2669 = vmatmul.bf16.gmra.mxu0 %v2614
        %v2670 = vpop.f32.mrf.mxu0
        %v2671 = vadd.f32 %v689, %v2670
        %v2672 = vpop.f32.mrf.mxu0
        %v2673 = vadd.f32 %v689, %v2672
        %2674 = vmatmul.bf16.gmra.mxu0 %v2617
        %v2675 = vpop.f32.mrf.mxu0
        %v2676 = vadd.f32 %v689, %v2675
        %v2677 = vpop.f32.mrf.mxu0
        %v2678 = vadd.f32 %v689, %v2677
        %2679 = vmatmul.bf16.gmra.mxu0 %v2620
        %v2680 = vpop.f32.mrf.mxu0
        %v2681 = vadd.f32 %v689, %v2680
        %v2682 = vpop.f32.mrf.mxu0
        %v2683 = vadd.f32 %v689, %v2682
        %2684 = vmatmul.bf16.gmra.mxu0 %v2623
        %v2685 = vpop.f32.mrf.mxu0
        %v2686 = vadd.f32 %v689, %v2685
        %v2687 = vpop.f32.mrf.mxu0
        %v2688 = vadd.f32 %v689, %v2687
        %2689 = vmatmul.bf16.gmra.mxu0 %v2626
        %v2690 = vpop.f32.mrf.mxu0
        %v2691 = vadd.f32 %v689, %v2690
        %v2692 = vpop.f32.mrf.mxu0
        %v2693 = vadd.f32 %v689, %v2692
        %2694 = vmatmul.bf16.gmra.mxu0 %v2629
        %v2695 = vpop.f32.mrf.mxu0
        %v2696 = vadd.f32 %v689, %v2695
        %v2697 = vpop.f32.mrf.mxu0
        %v2698 = vadd.f32 %v689, %v2697
        %2699 = vmatmul.bf16.gmra.mxu0 %v2632
        %v2700 = vpop.f32.mrf.mxu0
        %v2701 = vadd.f32 %v689, %v2700
        %v2702 = vpop.f32.mrf.mxu0
        %v2703 = vadd.f32 %v689, %v2702
        %2704 = vmatmul.bf16.gmra.mxu0 %v2635
        %v2705 = vpop.f32.mrf.mxu0
        %v2706 = vadd.f32 %v689, %v2705
        %v2707 = vpop.f32.mrf.mxu0
        %v2708 = vadd.f32 %v689, %v2707
        %2709 = vdwg.mxu0
        %2710 = vmax.xlane.f32.xlu0 %v2671
        %v2711 = vpop.xlane.xlu0 %2710
        %2712 = vmax.xlane.f32.xlu0 %v2673
        %v2713 = vpop.xlane.xlu0 %2712
        %2714 = vmax.xlane.f32.xlu0 %v2676
        %v2715 = vpop.xlane.xlu0 %2714
        %2716 = vmax.xlane.f32.xlu0 %v2678
        %v2717 = vpop.xlane.xlu0 %2716
        %2718 = vmax.xlane.f32.xlu0 %v2681
        %v2719 = vpop.xlane.xlu0 %2718
        %2720 = vmax.xlane.f32.xlu0 %v2683
        %v2721 = vpop.xlane.xlu0 %2720
        %2722 = vmax.xlane.f32.xlu0 %v2686
        %v2723 = vpop.xlane.xlu0 %2722
        %2724 = vmax.xlane.f32.xlu0 %v2688
        %v2725 = vpop.xlane.xlu0 %2724
        %2726 = vmax.xlane.f32.xlu0 %v2691
        %v2727 = vpop.xlane.xlu0 %2726
        %2728 = vmax.xlane.f32.xlu0 %v2693
        %v2729 = vpop.xlane.xlu0 %2728
        %2730 = vmax.xlane.f32.xlu0 %v2696
        %v2731 = vpop.xlane.xlu0 %2730
        %2732 = vmax.xlane.f32.xlu0 %v2698
        %v2733 = vpop.xlane.xlu0 %2732
        %2734 = vmax.xlane.f32.xlu0 %v2701
        %v2735 = vpop.xlane.xlu0 %2734
        %2736 = vmax.xlane.f32.xlu0 %v2703
        %v2737 = vpop.xlane.xlu0 %2736
        %2738 = vmax.xlane.f32.xlu0 %v2706
        %v2739 = vpop.xlane.xlu0 %2738
        %2740 = vmax.xlane.f32.xlu0 %v2708
        %v2741 = vpop.xlane.xlu0 %2740
        %v2742 = vsub.f32 %v2671, %v2711
        %v2743 = vsub.f32 %v2673, %v2713
        %v2744 = vsub.f32 %v2676, %v2715
        %v2745 = vsub.f32 %v2678, %v2717
        %v2746 = vsub.f32 %v2681, %v2719
        %v2747 = vsub.f32 %v2683, %v2721
        %v2748 = vsub.f32 %v2686, %v2723
        %v2749 = vsub.f32 %v2688, %v2725
        %v2750 = vsub.f32 %v2691, %v2727
        %v2751 = vsub.f32 %v2693, %v2729
        %v2752 = vsub.f32 %v2696, %v2731
        %v2753 = vsub.f32 %v2698, %v2733
        %v2754 = vsub.f32 %v2701, %v2735
        %v2755 = vsub.f32 %v2703, %v2737
        %v2756 = vsub.f32 %v2706, %v2739
        %v2757 = vsub.f32 %v2708, %v2741
        %v2758 = vmul.f32 %v2742, 1.442695
        %v2759 = vpow.pop %v2758
        %v2760 = vmul.f32 %v2743, 1.442695
        %v2761 = vpow.pop %v2760
        %v2762 = vmul.f32 %v2744, 1.442695
        %v2763 = vpow.pop %v2762
        %v2764 = vmul.f32 %v2745, 1.442695
        %v2765 = vpow.pop %v2764
        %v2766 = vmul.f32 %v2746, 1.442695
        %v2767 = vpow.pop %v2766
        %v2768 = vmul.f32 %v2747, 1.442695
        %v2769 = vpow.pop %v2768
        %v2770 = vmul.f32 %v2748, 1.442695
        %v2771 = vpow.pop %v2770
        %v2772 = vmul.f32 %v2749, 1.442695
        %v2773 = vpow.pop %v2772
        %v2774 = vmul.f32 %v2750, 1.442695
        %v2775 = vpow.pop %v2774
        %v2776 = vmul.f32 %v2751, 1.442695
        %v2777 = vpow.pop %v2776
        %v2778 = vmul.f32 %v2752, 1.442695
        %v2779 = vpow.pop %v2778
        %v2780 = vmul.f32 %v2753, 1.442695
        %v2781 = vpow.pop %v2780
        %v2782 = vmul.f32 %v2754, 1.442695
        %v2783 = vpow.pop %v2782
        %v2784 = vmul.f32 %v2755, 1.442695
        %v2785 = vpow.pop %v2784
        %v2786 = vmul.f32 %v2756, 1.442695
        %v2787 = vpow.pop %v2786
        %v2788 = vmul.f32 %v2757, 1.442695
        %v2789 = vpow.pop %v2788
        %2790 = vadd.xlane.f32.xlu0 %v2759
        %v2791 = vpop.xlane.xlu0 %2790
        %2792 = vadd.xlane.f32.xlu0 %v2761
        %v2793 = vpop.xlane.xlu0 %2792
        %2794 = vadd.xlane.f32.xlu0 %v2763
        %v2795 = vpop.xlane.xlu0 %2794
        %2796 = vadd.xlane.f32.xlu0 %v2765
        %v2797 = vpop.xlane.xlu0 %2796
        %2798 = vadd.xlane.f32.xlu0 %v2767
        %v2799 = vpop.xlane.xlu0 %2798
        %2800 = vadd.xlane.f32.xlu0 %v2769
        %v2801 = vpop.xlane.xlu0 %2800
        %2802 = vadd.xlane.f32.xlu0 %v2771
        %v2803 = vpop.xlane.xlu0 %2802
        %2804 = vadd.xlane.f32.xlu0 %v2773
        %v2805 = vpop.xlane.xlu0 %2804
        %2806 = vadd.xlane.f32.xlu0 %v2775
        %v2807 = vpop.xlane.xlu0 %2806
        %2808 = vadd.xlane.f32.xlu0 %v2777
        %v2809 = vpop.xlane.xlu0 %2808
        %2810 = vadd.xlane.f32.xlu0 %v2779
        %v2811 = vpop.xlane.xlu0 %2810
        %2812 = vadd.xlane.f32.xlu0 %v2781
        %v2813 = vpop.xlane.xlu0 %2812
        %2814 = vadd.xlane.f32.xlu0 %v2783
        %v2815 = vpop.xlane.xlu0 %2814
        %2816 = vadd.xlane.f32.xlu0 %v2785
        %v2817 = vpop.xlane.xlu0 %2816
        %2818 = vadd.xlane.f32.xlu0 %v2787
        %v2819 = vpop.xlane.xlu0 %2818
        %2820 = vadd.xlane.f32.xlu0 %v2789
        %v2821 = vpop.xlane.xlu0 %2820
        %v2822 = vpack.c.bf16 %v2761, %v2759
        %v2823 = vpack.c.bf16 %v2765, %v2763
        %v2824 = vpack.c.bf16 %v2769, %v2767
        %v2825 = vpack.c.bf16 %v2773, %v2771
        %v2826 = vpack.c.bf16 %v2777, %v2775
        %v2827 = vpack.c.bf16 %v2781, %v2779
        %v2828 = vpack.c.bf16 %v2785, %v2783
        %v2829 = vpack.c.bf16 %v2789, %v2787
        %2830 = vrot.lane.b32.xlu0 %v1068, 48
        %v2831 = vpop.permute.xlu0 %2830
        %2832 = vrot.lane.b32.xlu0 %v1069, 48
        %v2833 = vpop.permute.xlu0 %2832
        %2834 = vrot.lane.b32.xlu0 %v1070, 48
        %v2835 = vpop.permute.xlu0 %2834
        %2836 = vrot.lane.b32.xlu0 %v1071, 48
        %v2837 = vpop.permute.xlu0 %2836
        %2838 = vrot.lane.b32.xlu0 %v1072, 48
        %v2839 = vpop.permute.xlu0 %2838
        %2840 = vrot.lane.b32.xlu0 %v1073, 48
        %v2841 = vpop.permute.xlu0 %2840
        %2842 = vrot.lane.b32.xlu0 %v1074, 48
        %v2843 = vpop.permute.xlu0 %2842
        %2844 = vrot.lane.b32.xlu0 %v1075, 48
        %v2845 = vpop.permute.xlu0 %2844
        %2854 = vmatpush.bf16.msra.mxu0 %v2845
        %2855 = vmatpush.bf16.msra.mxu0 %v2843
        %2856 = vmatpush.bf16.msra.mxu0 %v2841
        %2857 = vmatpush.bf16.msra.mxu0 %v2839
        %2858 = vmatpush.bf16.msra.mxu0 %v2837
        %2859 = vmatpush.bf16.msra.mxu0 %v2835
        %2860 = vmatpush.bf16.msra.mxu0 %v2833
        %2861 = vmatpush.bf16.msra.mxu0 %v2831
        %2862 = vmatmul.bf16.gmra.mxu0 %v2822
        %v2863 = vpop.f32.mrf.mxu0
        %v2864 = vadd.f32 0.0, %v2863
        %v2865 = vpop.f32.mrf.mxu0
        %v2866 = vadd.f32 0.0, %v2865
        %2867 = vmatmul.bf16.gmra.mxu0 %v2823
        %v2868 = vpop.f32.mrf.mxu0
        %v2869 = vadd.f32 0.0, %v2868
        %v2870 = vpop.f32.mrf.mxu0
        %v2871 = vadd.f32 0.0, %v2870
        %2872 = vmatmul.bf16.gmra.mxu0 %v2824
        %v2873 = vpop.f32.mrf.mxu0
        %v2874 = vadd.f32 0.0, %v2873
        %v2875 = vpop.f32.mrf.mxu0
        %v2876 = vadd.f32 0.0, %v2875
        %2877 = vmatmul.bf16.gmra.mxu0 %v2825
        %v2878 = vpop.f32.mrf.mxu0
        %v2879 = vadd.f32 0.0, %v2878
        %v2880 = vpop.f32.mrf.mxu0
        %v2881 = vadd.f32 0.0, %v2880
        %2882 = vmatmul.bf16.gmra.mxu0 %v2826
        %v2883 = vpop.f32.mrf.mxu0
        %v2884 = vadd.f32 0.0, %v2883
        %v2885 = vpop.f32.mrf.mxu0
        %v2886 = vadd.f32 0.0, %v2885
        %2887 = vmatmul.bf16.gmra.mxu0 %v2827
        %v2888 = vpop.f32.mrf.mxu0
        %v2889 = vadd.f32 0.0, %v2888
        %v2890 = vpop.f32.mrf.mxu0
        %v2891 = vadd.f32 0.0, %v2890
        %2892 = vmatmul.bf16.gmra.mxu0 %v2828
        %v2893 = vpop.f32.mrf.mxu0
        %v2894 = vadd.f32 0.0, %v2893
        %v2895 = vpop.f32.mrf.mxu0
        %v2896 = vadd.f32 0.0, %v2895
        %2897 = vmatmul.bf16.gmra.mxu0 %v2829
        %v2898 = vpop.f32.mrf.mxu0
        %v2899 = vadd.f32 0.0, %v2898
        %v2900 = vpop.f32.mrf.mxu0
        %v2901 = vadd.f32 0.0, %v2900
        %2902 = vdwg.mxu0
        %v2903 = vrcp.pop %v2791
        %v2904 = vrcp.pop %v2793
        %v2905 = vrcp.pop %v2795
        %v2906 = vrcp.pop %v2797
        %v2907 = vrcp.pop %v2799
        %v2908 = vrcp.pop %v2801
        %v2909 = vrcp.pop %v2803
        %v2910 = vrcp.pop %v2805
        %v2911 = vrcp.pop %v2807
        %v2912 = vrcp.pop %v2809
        %v2913 = vrcp.pop %v2811
        %v2914 = vrcp.pop %v2813
        %v2915 = vrcp.pop %v2815
        %v2916 = vrcp.pop %v2817
        %v2917 = vrcp.pop %v2819
        %v2918 = vrcp.pop %v2821
        %v2919 = vmul.f32 %v2864, %v2903
        %v2920 = vmul.f32 %v2866, %v2904
        %v2921 = vmul.f32 %v2869, %v2905
        %v2922 = vmul.f32 %v2871, %v2906
        %v2923 = vmul.f32 %v2874, %v2907
        %v2924 = vmul.f32 %v2876, %v2908
        %v2925 = vmul.f32 %v2879, %v2909
        %v2926 = vmul.f32 %v2881, %v2910
        %v2927 = vmul.f32 %v2884, %v2911
        %v2928 = vmul.f32 %v2886, %v2912
        %v2929 = vmul.f32 %v2889, %v2913
        %v2930 = vmul.f32 %v2891, %v2914
        %v2931 = vmul.f32 %v2894, %v2915
        %v2932 = vmul.f32 %v2896, %v2916
        %v2933 = vmul.f32 %v2899, %v2917
        %v2934 = vmul.f32 %v2901, %v2918
        %2935 = vrot.lane.b32.xlu0 %v770, 32
        %v2936 = vpop.permute.xlu0 %2935
        %2937 = vrot.lane.b32.xlu0 %v771, 32
        %v2938 = vpop.permute.xlu0 %2937
        %2939 = vrot.lane.b32.xlu0 %v772, 32
        %v2940 = vpop.permute.xlu0 %2939
        %2941 = vrot.lane.b32.xlu0 %v773, 32
        %v2942 = vpop.permute.xlu0 %2941
        %2943 = vrot.lane.b32.xlu0 %v774, 32
        %v2944 = vpop.permute.xlu0 %2943
        %2945 = vrot.lane.b32.xlu0 %v775, 32
        %v2946 = vpop.permute.xlu0 %2945
        %2947 = vrot.lane.b32.xlu0 %v776, 32
        %v2948 = vpop.permute.xlu0 %2947
        %2949 = vrot.lane.b32.xlu0 %v777, 32
        %v2950 = vpop.permute.xlu0 %2949
        %2951 = vrot.lane.b32.xlu0 %v810, 32
        %v2952 = vpop.permute.xlu0 %2951
        %2953 = vrot.lane.b32.xlu0 %v811, 32
        %v2954 = vpop.permute.xlu0 %2953
        %2955 = vrot.lane.b32.xlu0 %v812, 32
        %v2956 = vpop.permute.xlu0 %2955
        %2957 = vrot.lane.b32.xlu0 %v813, 32
        %v2958 = vpop.permute.xlu0 %2957
        %2959 = vrot.lane.b32.xlu0 %v814, 32
        %v2960 = vpop.permute.xlu0 %2959
        %2961 = vrot.lane.b32.xlu0 %v815, 32
        %v2962 = vpop.permute.xlu0 %2961
        %2963 = vrot.lane.b32.xlu0 %v816, 32
        %v2964 = vpop.permute.xlu0 %2963
        %2965 = vrot.lane.b32.xlu0 %v817, 32
        %v2966 = vpop.permute.xlu0 %2965
        %v2968 = vsel %vm818, %v2936, 0
        %v2971 = vsel %vm818, %v2938, 0
        %v2974 = vsel %vm818, %v2940, 0
        %v2977 = vsel %vm818, %v2942, 0
        %v2980 = vsel %vm818, %v2944, 0
        %v2983 = vsel %vm818, %v2946, 0
        %v2986 = vsel %vm818, %v2948, 0
        %v2989 = vsel %vm818, %v2950, 0
        %v2992 = vsel %vm818, %v2952, 0
        %v2995 = vsel %vm818, %v2954, 0
        %v2998 = vsel %vm818, %v2956, 0
        %v3001 = vsel %vm818, %v2958, 0
        %v3004 = vsel %vm818, %v2960, 0
        %v3007 = vsel %vm818, %v2962, 0
        %v3010 = vsel %vm818, %v2964, 0
        %v3013 = vsel %vm818, %v2966, 0
        %3015 = vmatpush.bf16.xpose.msra.mxu0 %v3013
        %3016 = vmatpush.bf16.xpose.msra.mxu0 %v3010
        %3017 = vmatpush.bf16.xpose.msra.mxu0 %v3007
        %3018 = vmatpush.bf16.xpose.msra.mxu0 %v3004
        %3019 = vmatpush.bf16.xpose.msra.mxu0 %v3001
        %3020 = vmatpush.bf16.xpose.msra.mxu0 %v2998
        %3021 = vmatpush.bf16.xpose.msra.mxu0 %v2995
        %3022 = vmatpush.bf16.xpose.msra.mxu0 %v2992
        %3023 = vmatmul.bf16.gmra.mxu0 %v2968
        %v3024 = vpop.f32.mrf.mxu0
        %v3025 = vadd.f32 %v689, %v3024
        %v3026 = vpop.f32.mrf.mxu0
        %v3027 = vadd.f32 %v689, %v3026
        %3028 = vmatmul.bf16.gmra.mxu0 %v2971
        %v3029 = vpop.f32.mrf.mxu0
        %v3030 = vadd.f32 %v689, %v3029
        %v3031 = vpop.f32.mrf.mxu0
        %v3032 = vadd.f32 %v689, %v3031
        %3033 = vmatmul.bf16.gmra.mxu0 %v2974
        %v3034 = vpop.f32.mrf.mxu0
        %v3035 = vadd.f32 %v689, %v3034
        %v3036 = vpop.f32.mrf.mxu0
        %v3037 = vadd.f32 %v689, %v3036
        %3038 = vmatmul.bf16.gmra.mxu0 %v2977
        %v3039 = vpop.f32.mrf.mxu0
        %v3040 = vadd.f32 %v689, %v3039
        %v3041 = vpop.f32.mrf.mxu0
        %v3042 = vadd.f32 %v689, %v3041
        %3043 = vmatmul.bf16.gmra.mxu0 %v2980
        %v3044 = vpop.f32.mrf.mxu0
        %v3045 = vadd.f32 %v689, %v3044
        %v3046 = vpop.f32.mrf.mxu0
        %v3047 = vadd.f32 %v689, %v3046
        %3048 = vmatmul.bf16.gmra.mxu0 %v2983
        %v3049 = vpop.f32.mrf.mxu0
        %v3050 = vadd.f32 %v689, %v3049
        %v3051 = vpop.f32.mrf.mxu0
        %v3052 = vadd.f32 %v689, %v3051
        %3053 = vmatmul.bf16.gmra.mxu0 %v2986
        %v3054 = vpop.f32.mrf.mxu0
        %v3055 = vadd.f32 %v689, %v3054
        %v3056 = vpop.f32.mrf.mxu0
        %v3057 = vadd.f32 %v689, %v3056
        %3058 = vmatmul.bf16.gmra.mxu0 %v2989
        %v3059 = vpop.f32.mrf.mxu0
        %v3060 = vadd.f32 %v689, %v3059
        %v3061 = vpop.f32.mrf.mxu0
        %v3062 = vadd.f32 %v689, %v3061
        %3063 = vdwg.mxu0
        %3064 = vmax.xlane.f32.xlu0 %v3025
        %v3065 = vpop.xlane.xlu0 %3064
        %3066 = vmax.xlane.f32.xlu0 %v3027
        %v3067 = vpop.xlane.xlu0 %3066
        %3068 = vmax.xlane.f32.xlu0 %v3030
        %v3069 = vpop.xlane.xlu0 %3068
        %3070 = vmax.xlane.f32.xlu0 %v3032
        %v3071 = vpop.xlane.xlu0 %3070
        %3072 = vmax.xlane.f32.xlu0 %v3035
        %v3073 = vpop.xlane.xlu0 %3072
        %3074 = vmax.xlane.f32.xlu0 %v3037
        %v3075 = vpop.xlane.xlu0 %3074
        %3076 = vmax.xlane.f32.xlu0 %v3040
        %v3077 = vpop.xlane.xlu0 %3076
        %3078 = vmax.xlane.f32.xlu0 %v3042
        %v3079 = vpop.xlane.xlu0 %3078
        %3080 = vmax.xlane.f32.xlu0 %v3045
        %v3081 = vpop.xlane.xlu0 %3080
        %3082 = vmax.xlane.f32.xlu0 %v3047
        %v3083 = vpop.xlane.xlu0 %3082
        %3084 = vmax.xlane.f32.xlu0 %v3050
        %v3085 = vpop.xlane.xlu0 %3084
        %3086 = vmax.xlane.f32.xlu0 %v3052
        %v3087 = vpop.xlane.xlu0 %3086
        %3088 = vmax.xlane.f32.xlu0 %v3055
        %v3089 = vpop.xlane.xlu0 %3088
        %3090 = vmax.xlane.f32.xlu0 %v3057
        %v3091 = vpop.xlane.xlu0 %3090
        %3092 = vmax.xlane.f32.xlu0 %v3060
        %v3093 = vpop.xlane.xlu0 %3092
        %3094 = vmax.xlane.f32.xlu0 %v3062
        %v3095 = vpop.xlane.xlu0 %3094
        %v3096 = vsub.f32 %v3025, %v3065
        %v3097 = vsub.f32 %v3027, %v3067
        %v3098 = vsub.f32 %v3030, %v3069
        %v3099 = vsub.f32 %v3032, %v3071
        %v3100 = vsub.f32 %v3035, %v3073
        %v3101 = vsub.f32 %v3037, %v3075
        %v3102 = vsub.f32 %v3040, %v3077
        %v3103 = vsub.f32 %v3042, %v3079
        %v3104 = vsub.f32 %v3045, %v3081
        %v3105 = vsub.f32 %v3047, %v3083
        %v3106 = vsub.f32 %v3050, %v3085
        %v3107 = vsub.f32 %v3052, %v3087
        %v3108 = vsub.f32 %v3055, %v3089
        %v3109 = vsub.f32 %v3057, %v3091
        %v3110 = vsub.f32 %v3060, %v3093
        %v3111 = vsub.f32 %v3062, %v3095
        %v3112 = vmul.f32 %v3096, 1.442695
        %v3113 = vpow.pop %v3112
        %v3114 = vmul.f32 %v3097, 1.442695
        %v3115 = vpow.pop %v3114
        %v3116 = vmul.f32 %v3098, 1.442695
        %v3117 = vpow.pop %v3116
        %v3118 = vmul.f32 %v3099, 1.442695
        %v3119 = vpow.pop %v3118
        %v3120 = vmul.f32 %v3100, 1.442695
        %v3121 = vpow.pop %v3120
        %v3122 = vmul.f32 %v3101, 1.442695
        %v3123 = vpow.pop %v3122
        %v3124 = vmul.f32 %v3102, 1.442695
        %v3125 = vpow.pop %v3124
        %v3126 = vmul.f32 %v3103, 1.442695
        %v3127 = vpow.pop %v3126
        %v3128 = vmul.f32 %v3104, 1.442695
        %v3129 = vpow.pop %v3128
        %v3130 = vmul.f32 %v3105, 1.442695
        %v3131 = vpow.pop %v3130
        %v3132 = vmul.f32 %v3106, 1.442695
        %v3133 = vpow.pop %v3132
        %v3134 = vmul.f32 %v3107, 1.442695
        %v3135 = vpow.pop %v3134
        %v3136 = vmul.f32 %v3108, 1.442695
        %v3137 = vpow.pop %v3136
        %v3138 = vmul.f32 %v3109, 1.442695
        %v3139 = vpow.pop %v3138
        %v3140 = vmul.f32 %v3110, 1.442695
        %v3141 = vpow.pop %v3140
        %v3142 = vmul.f32 %v3111, 1.442695
        %v3143 = vpow.pop %v3142
        %3144 = vadd.xlane.f32.xlu0 %v3113
        %v3145 = vpop.xlane.xlu0 %3144
        %3146 = vadd.xlane.f32.xlu0 %v3115
        %v3147 = vpop.xlane.xlu0 %3146
        %3148 = vadd.xlane.f32.xlu0 %v3117
        %v3149 = vpop.xlane.xlu0 %3148
        %3150 = vadd.xlane.f32.xlu0 %v3119
        %v3151 = vpop.xlane.xlu0 %3150
        %3152 = vadd.xlane.f32.xlu0 %v3121
        %v3153 = vpop.xlane.xlu0 %3152
        %3154 = vadd.xlane.f32.xlu0 %v3123
        %v3155 = vpop.xlane.xlu0 %3154
        %3156 = vadd.xlane.f32.xlu0 %v3125
        %v3157 = vpop.xlane.xlu0 %3156
        %3158 = vadd.xlane.f32.xlu0 %v3127
        %v3159 = vpop.xlane.xlu0 %3158
        %3160 = vadd.xlane.f32.xlu0 %v3129
        %v3161 = vpop.xlane.xlu0 %3160
        %3162 = vadd.xlane.f32.xlu0 %v3131
        %v3163 = vpop.xlane.xlu0 %3162
        %3164 = vadd.xlane.f32.xlu0 %v3133
        %v3165 = vpop.xlane.xlu0 %3164
        %3166 = vadd.xlane.f32.xlu0 %v3135
        %v3167 = vpop.xlane.xlu0 %3166
        %3168 = vadd.xlane.f32.xlu0 %v3137
        %v3169 = vpop.xlane.xlu0 %3168
        %3170 = vadd.xlane.f32.xlu0 %v3139
        %v3171 = vpop.xlane.xlu0 %3170
        %3172 = vadd.xlane.f32.xlu0 %v3141
        %v3173 = vpop.xlane.xlu0 %3172
        %3174 = vadd.xlane.f32.xlu0 %v3143
        %v3175 = vpop.xlane.xlu0 %3174
        %v3176 = vpack.c.bf16 %v3115, %v3113
        %v3177 = vpack.c.bf16 %v3119, %v3117
        %v3178 = vpack.c.bf16 %v3123, %v3121
        %v3179 = vpack.c.bf16 %v3127, %v3125
        %v3180 = vpack.c.bf16 %v3131, %v3129
        %v3181 = vpack.c.bf16 %v3135, %v3133
        %v3182 = vpack.c.bf16 %v3139, %v3137
        %v3183 = vpack.c.bf16 %v3143, %v3141
        %3184 = vrot.lane.b32.xlu0 %v1068, 32
        %v3185 = vpop.permute.xlu0 %3184
        %3186 = vrot.lane.b32.xlu0 %v1069, 32
        %v3187 = vpop.permute.xlu0 %3186
        %3188 = vrot.lane.b32.xlu0 %v1070, 32
        %v3189 = vpop.permute.xlu0 %3188
        %3190 = vrot.lane.b32.xlu0 %v1071, 32
        %v3191 = vpop.permute.xlu0 %3190
        %3192 = vrot.lane.b32.xlu0 %v1072, 32
        %v3193 = vpop.permute.xlu0 %3192
        %3194 = vrot.lane.b32.xlu0 %v1073, 32
        %v3195 = vpop.permute.xlu0 %3194
        %3196 = vrot.lane.b32.xlu0 %v1074, 32
        %v3197 = vpop.permute.xlu0 %3196
        %3198 = vrot.lane.b32.xlu0 %v1075, 32
        %v3199 = vpop.permute.xlu0 %3198
        %3208 = vmatpush.bf16.msra.mxu0 %v3199
        %3209 = vmatpush.bf16.msra.mxu0 %v3197
        %3210 = vmatpush.bf16.msra.mxu0 %v3195
        %3211 = vmatpush.bf16.msra.mxu0 %v3193
        %3212 = vmatpush.bf16.msra.mxu0 %v3191
        %3213 = vmatpush.bf16.msra.mxu0 %v3189
        %3214 = vmatpush.bf16.msra.mxu0 %v3187
        %3215 = vmatpush.bf16.msra.mxu0 %v3185
        %3216 = vmatmul.bf16.gmra.mxu0 %v3176
        %v3217 = vpop.f32.mrf.mxu0
        %v3218 = vadd.f32 0.0, %v3217
        %v3219 = vpop.f32.mrf.mxu0
        %v3220 = vadd.f32 0.0, %v3219
        %3221 = vmatmul.bf16.gmra.mxu0 %v3177
        %v3222 = vpop.f32.mrf.mxu0
        %v3223 = vadd.f32 0.0, %v3222
        %v3224 = vpop.f32.mrf.mxu0
        %v3225 = vadd.f32 0.0, %v3224
        %3226 = vmatmul.bf16.gmra.mxu0 %v3178
        %v3227 = vpop.f32.mrf.mxu0
        %v3228 = vadd.f32 0.0, %v3227
        %v3229 = vpop.f32.mrf.mxu0
        %v3230 = vadd.f32 0.0, %v3229
        %3231 = vmatmul.bf16.gmra.mxu0 %v3179
        %v3232 = vpop.f32.mrf.mxu0
        %v3233 = vadd.f32 0.0, %v3232
        %v3234 = vpop.f32.mrf.mxu0
        %v3235 = vadd.f32 0.0, %v3234
        %3236 = vmatmul.bf16.gmra.mxu0 %v3180
        %v3237 = vpop.f32.mrf.mxu0
        %v3238 = vadd.f32 0.0, %v3237
        %v3239 = vpop.f32.mrf.mxu0
        %v3240 = vadd.f32 0.0, %v3239
        %3241 = vmatmul.bf16.gmra.mxu0 %v3181
        %v3242 = vpop.f32.mrf.mxu0
        %v3243 = vadd.f32 0.0, %v3242
        %v3244 = vpop.f32.mrf.mxu0
        %v3245 = vadd.f32 0.0, %v3244
        %3246 = vmatmul.bf16.gmra.mxu0 %v3182
        %v3247 = vpop.f32.mrf.mxu0
        %v3248 = vadd.f32 0.0, %v3247
        %v3249 = vpop.f32.mrf.mxu0
        %v3250 = vadd.f32 0.0, %v3249
        %3251 = vmatmul.bf16.gmra.mxu0 %v3183
        %v3252 = vpop.f32.mrf.mxu0
        %v3253 = vadd.f32 0.0, %v3252
        %v3254 = vpop.f32.mrf.mxu0
        %v3255 = vadd.f32 0.0, %v3254
        %3256 = vdwg.mxu0
        %v3257 = vrcp.pop %v3145
        %v3258 = vrcp.pop %v3147
        %v3259 = vrcp.pop %v3149
        %v3260 = vrcp.pop %v3151
        %v3261 = vrcp.pop %v3153
        %v3262 = vrcp.pop %v3155
        %v3263 = vrcp.pop %v3157
        %v3264 = vrcp.pop %v3159
        %v3265 = vrcp.pop %v3161
        %v3266 = vrcp.pop %v3163
        %v3267 = vrcp.pop %v3165
        %v3268 = vrcp.pop %v3167
        %v3269 = vrcp.pop %v3169
        %v3270 = vrcp.pop %v3171
        %v3271 = vrcp.pop %v3173
        %v3272 = vrcp.pop %v3175
        %v3273 = vmul.f32 %v3218, %v3257
        %v3274 = vmul.f32 %v3220, %v3258
        %v3275 = vmul.f32 %v3223, %v3259
        %v3276 = vmul.f32 %v3225, %v3260
        %v3277 = vmul.f32 %v3228, %v3261
        %v3278 = vmul.f32 %v3230, %v3262
        %v3279 = vmul.f32 %v3233, %v3263
        %v3280 = vmul.f32 %v3235, %v3264
        %v3281 = vmul.f32 %v3238, %v3265
        %v3282 = vmul.f32 %v3240, %v3266
        %v3283 = vmul.f32 %v3243, %v3267
        %v3284 = vmul.f32 %v3245, %v3268
        %v3285 = vmul.f32 %v3248, %v3269
        %v3286 = vmul.f32 %v3250, %v3270
        %v3287 = vmul.f32 %v3253, %v3271
        %v3288 = vmul.f32 %v3255, %v3272
        %3289 = vrot.lane.b32.xlu0 %v770, 16
        %v3290 = vpop.permute.xlu0 %3289
        %3291 = vrot.lane.b32.xlu0 %v771, 16
        %v3292 = vpop.permute.xlu0 %3291
        %3293 = vrot.lane.b32.xlu0 %v772, 16
        %v3294 = vpop.permute.xlu0 %3293
        %3295 = vrot.lane.b32.xlu0 %v773, 16
        %v3296 = vpop.permute.xlu0 %3295
        %3297 = vrot.lane.b32.xlu0 %v774, 16
        %v3298 = vpop.permute.xlu0 %3297
        %3299 = vrot.lane.b32.xlu0 %v775, 16
        %v3300 = vpop.permute.xlu0 %3299
        %3301 = vrot.lane.b32.xlu0 %v776, 16
        %v3302 = vpop.permute.xlu0 %3301
        %3303 = vrot.lane.b32.xlu0 %v777, 16
        %v3304 = vpop.permute.xlu0 %3303
        %3305 = vrot.lane.b32.xlu0 %v810, 16
        %v3306 = vpop.permute.xlu0 %3305
        %3307 = vrot.lane.b32.xlu0 %v811, 16
        %v3308 = vpop.permute.xlu0 %3307
        %3309 = vrot.lane.b32.xlu0 %v812, 16
        %v3310 = vpop.permute.xlu0 %3309
        %3311 = vrot.lane.b32.xlu0 %v813, 16
        %v3312 = vpop.permute.xlu0 %3311
        %3313 = vrot.lane.b32.xlu0 %v814, 16
        %v3314 = vpop.permute.xlu0 %3313
        %3315 = vrot.lane.b32.xlu0 %v815, 16
        %v3316 = vpop.permute.xlu0 %3315
        %3317 = vrot.lane.b32.xlu0 %v816, 16
        %v3318 = vpop.permute.xlu0 %3317
        %3319 = vrot.lane.b32.xlu0 %v817, 16
        %v3320 = vpop.permute.xlu0 %3319
        %v3322 = vsel %vm818, %v3290, 0
        %v3325 = vsel %vm818, %v3292, 0
        %v3328 = vsel %vm818, %v3294, 0
        %v3331 = vsel %vm818, %v3296, 0
        %v3334 = vsel %vm818, %v3298, 0
        %v3337 = vsel %vm818, %v3300, 0
        %v3340 = vsel %vm818, %v3302, 0
        %v3343 = vsel %vm818, %v3304, 0
        %v3346 = vsel %vm818, %v3306, 0
        %v3349 = vsel %vm818, %v3308, 0
        %v3352 = vsel %vm818, %v3310, 0
        %v3355 = vsel %vm818, %v3312, 0
        %v3358 = vsel %vm818, %v3314, 0
        %v3361 = vsel %vm818, %v3316, 0
        %v3364 = vsel %vm818, %v3318, 0
        %v3367 = vsel %vm818, %v3320, 0
        %3369 = vmatpush.bf16.xpose.msra.mxu0 %v3367
        %3370 = vmatpush.bf16.xpose.msra.mxu0 %v3364
        %3371 = vmatpush.bf16.xpose.msra.mxu0 %v3361
        %3372 = vmatpush.bf16.xpose.msra.mxu0 %v3358
        %3373 = vmatpush.bf16.xpose.msra.mxu0 %v3355
        %3374 = vmatpush.bf16.xpose.msra.mxu0 %v3352
        %3375 = vmatpush.bf16.xpose.msra.mxu0 %v3349
        %3376 = vmatpush.bf16.xpose.msra.mxu0 %v3346
        %3377 = vmatmul.bf16.gmra.mxu0 %v3322
        %v3378 = vpop.f32.mrf.mxu0
        %v3379 = vadd.f32 %v689, %v3378
        %v3380 = vpop.f32.mrf.mxu0
        %v3381 = vadd.f32 %v689, %v3380
        %3382 = vmatmul.bf16.gmra.mxu0 %v3325
        %v3383 = vpop.f32.mrf.mxu0
        %v3384 = vadd.f32 %v689, %v3383
        %v3385 = vpop.f32.mrf.mxu0
        %v3386 = vadd.f32 %v689, %v3385
        %3387 = vmatmul.bf16.gmra.mxu0 %v3328
        %v3388 = vpop.f32.mrf.mxu0
        %v3389 = vadd.f32 %v689, %v3388
        %v3390 = vpop.f32.mrf.mxu0
        %v3391 = vadd.f32 %v689, %v3390
        %3392 = vmatmul.bf16.gmra.mxu0 %v3331
        %v3393 = vpop.f32.mrf.mxu0
        %v3394 = vadd.f32 %v689, %v3393
        %v3395 = vpop.f32.mrf.mxu0
        %v3396 = vadd.f32 %v689, %v3395
        %3397 = vmatmul.bf16.gmra.mxu0 %v3334
        %v3398 = vpop.f32.mrf.mxu0
        %v3399 = vadd.f32 %v689, %v3398
        %v3400 = vpop.f32.mrf.mxu0
        %v3401 = vadd.f32 %v689, %v3400
        %3402 = vmatmul.bf16.gmra.mxu0 %v3337
        %v3403 = vpop.f32.mrf.mxu0
        %v3404 = vadd.f32 %v689, %v3403
        %v3405 = vpop.f32.mrf.mxu0
        %v3406 = vadd.f32 %v689, %v3405
        %3407 = vmatmul.bf16.gmra.mxu0 %v3340
        %v3408 = vpop.f32.mrf.mxu0
        %v3409 = vadd.f32 %v689, %v3408
        %v3410 = vpop.f32.mrf.mxu0
        %v3411 = vadd.f32 %v689, %v3410
        %3412 = vmatmul.bf16.gmra.mxu0 %v3343
        %v3413 = vpop.f32.mrf.mxu0
        %v3414 = vadd.f32 %v689, %v3413
        %v3415 = vpop.f32.mrf.mxu0
        %v3416 = vadd.f32 %v689, %v3415
        %3417 = vdwg.mxu0
        %3418 = vmax.xlane.f32.xlu0 %v3379
        %v3419 = vpop.xlane.xlu0 %3418
        %3420 = vmax.xlane.f32.xlu0 %v3381
        %v3421 = vpop.xlane.xlu0 %3420
        %3422 = vmax.xlane.f32.xlu0 %v3384
        %v3423 = vpop.xlane.xlu0 %3422
        %3424 = vmax.xlane.f32.xlu0 %v3386
        %v3425 = vpop.xlane.xlu0 %3424
        %3426 = vmax.xlane.f32.xlu0 %v3389
        %v3427 = vpop.xlane.xlu0 %3426
        %3428 = vmax.xlane.f32.xlu0 %v3391
        %v3429 = vpop.xlane.xlu0 %3428
        %3430 = vmax.xlane.f32.xlu0 %v3394
        %v3431 = vpop.xlane.xlu0 %3430
        %3432 = vmax.xlane.f32.xlu0 %v3396
        %v3433 = vpop.xlane.xlu0 %3432
        %3434 = vmax.xlane.f32.xlu0 %v3399
        %v3435 = vpop.xlane.xlu0 %3434
        %3436 = vmax.xlane.f32.xlu0 %v3401
        %v3437 = vpop.xlane.xlu0 %3436
        %3438 = vmax.xlane.f32.xlu0 %v3404
        %v3439 = vpop.xlane.xlu0 %3438
        %3440 = vmax.xlane.f32.xlu0 %v3406
        %v3441 = vpop.xlane.xlu0 %3440
        %3442 = vmax.xlane.f32.xlu0 %v3409
        %v3443 = vpop.xlane.xlu0 %3442
        %3444 = vmax.xlane.f32.xlu0 %v3411
        %v3445 = vpop.xlane.xlu0 %3444
        %3446 = vmax.xlane.f32.xlu0 %v3414
        %v3447 = vpop.xlane.xlu0 %3446
        %3448 = vmax.xlane.f32.xlu0 %v3416
        %v3449 = vpop.xlane.xlu0 %3448
        %v3450 = vsub.f32 %v3379, %v3419
        %v3451 = vsub.f32 %v3381, %v3421
        %v3452 = vsub.f32 %v3384, %v3423
        %v3453 = vsub.f32 %v3386, %v3425
        %v3454 = vsub.f32 %v3389, %v3427
        %v3455 = vsub.f32 %v3391, %v3429
        %v3456 = vsub.f32 %v3394, %v3431
        %v3457 = vsub.f32 %v3396, %v3433
        %v3458 = vsub.f32 %v3399, %v3435
        %v3459 = vsub.f32 %v3401, %v3437
        %v3460 = vsub.f32 %v3404, %v3439
        %v3461 = vsub.f32 %v3406, %v3441
        %v3462 = vsub.f32 %v3409, %v3443
        %v3463 = vsub.f32 %v3411, %v3445
        %v3464 = vsub.f32 %v3414, %v3447
        %v3465 = vsub.f32 %v3416, %v3449
        %v3466 = vmul.f32 %v3450, 1.442695
        %v3467 = vpow.pop %v3466
        %v3468 = vmul.f32 %v3451, 1.442695
        %v3469 = vpow.pop %v3468
        %v3470 = vmul.f32 %v3452, 1.442695
        %v3471 = vpow.pop %v3470
        %v3472 = vmul.f32 %v3453, 1.442695
        %v3473 = vpow.pop %v3472
        %v3474 = vmul.f32 %v3454, 1.442695
        %v3475 = vpow.pop %v3474
        %v3476 = vmul.f32 %v3455, 1.442695
        %v3477 = vpow.pop %v3476
        %v3478 = vmul.f32 %v3456, 1.442695
        %v3479 = vpow.pop %v3478
        %v3480 = vmul.f32 %v3457, 1.442695
        %v3481 = vpow.pop %v3480
        %v3482 = vmul.f32 %v3458, 1.442695
        %v3483 = vpow.pop %v3482
        %v3484 = vmul.f32 %v3459, 1.442695
        %v3485 = vpow.pop %v3484
        %v3486 = vmul.f32 %v3460, 1.442695
        %v3487 = vpow.pop %v3486
        %v3488 = vmul.f32 %v3461, 1.442695
        %v3489 = vpow.pop %v3488
        %v3490 = vmul.f32 %v3462, 1.442695
        %v3491 = vpow.pop %v3490
        %v3492 = vmul.f32 %v3463, 1.442695
        %v3493 = vpow.pop %v3492
        %v3494 = vmul.f32 %v3464, 1.442695
        %v3495 = vpow.pop %v3494
        %v3496 = vmul.f32 %v3465, 1.442695
        %v3497 = vpow.pop %v3496
        %3498 = vadd.xlane.f32.xlu0 %v3467
        %v3499 = vpop.xlane.xlu0 %3498
        %3500 = vadd.xlane.f32.xlu0 %v3469
        %v3501 = vpop.xlane.xlu0 %3500
        %3502 = vadd.xlane.f32.xlu0 %v3471
        %v3503 = vpop.xlane.xlu0 %3502
        %3504 = vadd.xlane.f32.xlu0 %v3473
        %v3505 = vpop.xlane.xlu0 %3504
        %3506 = vadd.xlane.f32.xlu0 %v3475
        %v3507 = vpop.xlane.xlu0 %3506
        %3508 = vadd.xlane.f32.xlu0 %v3477
        %v3509 = vpop.xlane.xlu0 %3508
        %3510 = vadd.xlane.f32.xlu0 %v3479
        %v3511 = vpop.xlane.xlu0 %3510
        %3512 = vadd.xlane.f32.xlu0 %v3481
        %v3513 = vpop.xlane.xlu0 %3512
        %3514 = vadd.xlane.f32.xlu0 %v3483
        %v3515 = vpop.xlane.xlu0 %3514
        %3516 = vadd.xlane.f32.xlu0 %v3485
        %v3517 = vpop.xlane.xlu0 %3516
        %3518 = vadd.xlane.f32.xlu0 %v3487
        %v3519 = vpop.xlane.xlu0 %3518
        %3520 = vadd.xlane.f32.xlu0 %v3489
        %v3521 = vpop.xlane.xlu0 %3520
        %3522 = vadd.xlane.f32.xlu0 %v3491
        %v3523 = vpop.xlane.xlu0 %3522
        %3524 = vadd.xlane.f32.xlu0 %v3493
        %v3525 = vpop.xlane.xlu0 %3524
        %3526 = vadd.xlane.f32.xlu0 %v3495
        %v3527 = vpop.xlane.xlu0 %3526
        %3528 = vadd.xlane.f32.xlu0 %v3497
        %v3529 = vpop.xlane.xlu0 %3528
        %v3530 = vpack.c.bf16 %v3469, %v3467
        %v3531 = vpack.c.bf16 %v3473, %v3471
        %v3532 = vpack.c.bf16 %v3477, %v3475
        %v3533 = vpack.c.bf16 %v3481, %v3479
        %v3534 = vpack.c.bf16 %v3485, %v3483
        %v3535 = vpack.c.bf16 %v3489, %v3487
        %v3536 = vpack.c.bf16 %v3493, %v3491
        %v3537 = vpack.c.bf16 %v3497, %v3495
        %3538 = vrot.lane.b32.xlu0 %v1068, 16
        %v3539 = vpop.permute.xlu0 %3538
        %3540 = vrot.lane.b32.xlu0 %v1069, 16
        %v3541 = vpop.permute.xlu0 %3540
        %3542 = vrot.lane.b32.xlu0 %v1070, 16
        %v3543 = vpop.permute.xlu0 %3542
        %3544 = vrot.lane.b32.xlu0 %v1071, 16
        %v3545 = vpop.permute.xlu0 %3544
        %3546 = vrot.lane.b32.xlu0 %v1072, 16
        %v3547 = vpop.permute.xlu0 %3546
        %3548 = vrot.lane.b32.xlu0 %v1073, 16
        %v3549 = vpop.permute.xlu0 %3548
        %3550 = vrot.lane.b32.xlu0 %v1074, 16
        %v3551 = vpop.permute.xlu0 %3550
        %3552 = vrot.lane.b32.xlu0 %v1075, 16
        %v3553 = vpop.permute.xlu0 %3552
        %3562 = vmatpush.bf16.msra.mxu0 %v3553
        %3563 = vmatpush.bf16.msra.mxu0 %v3551
        %3564 = vmatpush.bf16.msra.mxu0 %v3549
        %3565 = vmatpush.bf16.msra.mxu0 %v3547
        %3566 = vmatpush.bf16.msra.mxu0 %v3545
        %3567 = vmatpush.bf16.msra.mxu0 %v3543
        %3568 = vmatpush.bf16.msra.mxu0 %v3541
        %3569 = vmatpush.bf16.msra.mxu0 %v3539
        %3570 = vmatmul.bf16.gmra.mxu0 %v3530
        %v3571 = vpop.f32.mrf.mxu0
        %v3572 = vadd.f32 0.0, %v3571
        %v3573 = vpop.f32.mrf.mxu0
        %v3574 = vadd.f32 0.0, %v3573
        %3575 = vmatmul.bf16.gmra.mxu0 %v3531
        %v3576 = vpop.f32.mrf.mxu0
        %v3577 = vadd.f32 0.0, %v3576
        %v3578 = vpop.f32.mrf.mxu0
        %v3579 = vadd.f32 0.0, %v3578
        %3580 = vmatmul.bf16.gmra.mxu0 %v3532
        %v3581 = vpop.f32.mrf.mxu0
        %v3582 = vadd.f32 0.0, %v3581
        %v3583 = vpop.f32.mrf.mxu0
        %v3584 = vadd.f32 0.0, %v3583
        %3585 = vmatmul.bf16.gmra.mxu0 %v3533
        %v3586 = vpop.f32.mrf.mxu0
        %v3587 = vadd.f32 0.0, %v3586
        %v3588 = vpop.f32.mrf.mxu0
        %v3589 = vadd.f32 0.0, %v3588
        %3590 = vmatmul.bf16.gmra.mxu0 %v3534
        %v3591 = vpop.f32.mrf.mxu0
        %v3592 = vadd.f32 0.0, %v3591
        %v3593 = vpop.f32.mrf.mxu0
        %v3594 = vadd.f32 0.0, %v3593
        %3595 = vmatmul.bf16.gmra.mxu0 %v3535
        %v3596 = vpop.f32.mrf.mxu0
        %v3597 = vadd.f32 0.0, %v3596
        %v3598 = vpop.f32.mrf.mxu0
        %v3599 = vadd.f32 0.0, %v3598
        %3600 = vmatmul.bf16.gmra.mxu0 %v3536
        %v3601 = vpop.f32.mrf.mxu0
        %v3602 = vadd.f32 0.0, %v3601
        %v3603 = vpop.f32.mrf.mxu0
        %v3604 = vadd.f32 0.0, %v3603
        %3605 = vmatmul.bf16.gmra.mxu0 %v3537
        %v3606 = vpop.f32.mrf.mxu0
        %v3607 = vadd.f32 0.0, %v3606
        %v3608 = vpop.f32.mrf.mxu0
        %v3609 = vadd.f32 0.0, %v3608
        %3610 = vdwg.mxu0
        %v3611 = vrcp.pop %v3499
        %v3612 = vrcp.pop %v3501
        %v3613 = vrcp.pop %v3503
        %v3614 = vrcp.pop %v3505
        %v3615 = vrcp.pop %v3507
        %v3616 = vrcp.pop %v3509
        %v3617 = vrcp.pop %v3511
        %v3618 = vrcp.pop %v3513
        %v3619 = vrcp.pop %v3515
        %v3620 = vrcp.pop %v3517
        %v3621 = vrcp.pop %v3519
        %v3622 = vrcp.pop %v3521
        %v3623 = vrcp.pop %v3523
        %v3624 = vrcp.pop %v3525
        %v3625 = vrcp.pop %v3527
        %v3626 = vrcp.pop %v3529
        %v3627 = vmul.f32 %v3572, %v3611
        %v3628 = vmul.f32 %v3574, %v3612
        %v3629 = vmul.f32 %v3577, %v3613
        %v3630 = vmul.f32 %v3579, %v3614
        %v3631 = vmul.f32 %v3582, %v3615
        %v3632 = vmul.f32 %v3584, %v3616
        %v3633 = vmul.f32 %v3587, %v3617
        %v3634 = vmul.f32 %v3589, %v3618
        %v3635 = vmul.f32 %v3592, %v3619
        %v3636 = vmul.f32 %v3594, %v3620
        %v3637 = vmul.f32 %v3597, %v3621
        %v3638 = vmul.f32 %v3599, %v3622
        %v3639 = vmul.f32 %v3602, %v3623
        %v3640 = vmul.f32 %v3604, %v3624
        %v3641 = vmul.f32 %v3607, %v3625
        %v3642 = vmul.f32 %v3609, %v3626
        %3659 = vrot.lane.b32.xlu0 %v1503, 16
        %v3660 = vpop.permute.xlu0 %3659
        %3661 = vrot.lane.b32.xlu0 %v1504, 16
        %v3662 = vpop.permute.xlu0 %3661
        %3663 = vrot.lane.b32.xlu0 %v1505, 16
        %v3664 = vpop.permute.xlu0 %3663
        %3665 = vrot.lane.b32.xlu0 %v1506, 16
        %v3666 = vpop.permute.xlu0 %3665
        %3667 = vrot.lane.b32.xlu0 %v1507, 16
        %v3668 = vpop.permute.xlu0 %3667
        %3669 = vrot.lane.b32.xlu0 %v1508, 16
        %v3670 = vpop.permute.xlu0 %3669
        %3671 = vrot.lane.b32.xlu0 %v1509, 16
        %v3672 = vpop.permute.xlu0 %3671
        %3673 = vrot.lane.b32.xlu0 %v1510, 16
        %v3674 = vpop.permute.xlu0 %3673
        %3675 = vrot.lane.b32.xlu0 %v1511, 16
        %v3676 = vpop.permute.xlu0 %3675
        %3677 = vrot.lane.b32.xlu0 %v1512, 16
        %v3678 = vpop.permute.xlu0 %3677
        %3679 = vrot.lane.b32.xlu0 %v1513, 16
        %v3680 = vpop.permute.xlu0 %3679
        %3681 = vrot.lane.b32.xlu0 %v1514, 16
        %v3682 = vpop.permute.xlu0 %3681
        %3683 = vrot.lane.b32.xlu0 %v1515, 16
        %v3684 = vpop.permute.xlu0 %3683
        %3685 = vrot.lane.b32.xlu0 %v1516, 16
        %v3686 = vpop.permute.xlu0 %3685
        %3687 = vrot.lane.b32.xlu0 %v1517, 16
        %v3688 = vpop.permute.xlu0 %3687
        %3689 = vrot.lane.b32.xlu0 %v1518, 16
        %v3690 = vpop.permute.xlu0 %3689
        %3723 = vrot.lane.b32.xlu0 %v1857, 32
        %v3724 = vpop.permute.xlu0 %3723
        %3725 = vrot.lane.b32.xlu0 %v1858, 32
        %v3726 = vpop.permute.xlu0 %3725
        %3727 = vrot.lane.b32.xlu0 %v1859, 32
        %v3728 = vpop.permute.xlu0 %3727
        %3729 = vrot.lane.b32.xlu0 %v1860, 32
        %v3730 = vpop.permute.xlu0 %3729
        %3731 = vrot.lane.b32.xlu0 %v1861, 32
        %v3732 = vpop.permute.xlu0 %3731
        %3733 = vrot.lane.b32.xlu0 %v1862, 32
        %v3734 = vpop.permute.xlu0 %3733
        %3735 = vrot.lane.b32.xlu0 %v1863, 32
        %v3736 = vpop.permute.xlu0 %3735
        %3737 = vrot.lane.b32.xlu0 %v1864, 32
        %v3738 = vpop.permute.xlu0 %3737
        %3739 = vrot.lane.b32.xlu0 %v1865, 32
        %v3740 = vpop.permute.xlu0 %3739
        %3741 = vrot.lane.b32.xlu0 %v1866, 32
        %v3742 = vpop.permute.xlu0 %3741
        %3743 = vrot.lane.b32.xlu0 %v1867, 32
        %v3744 = vpop.permute.xlu0 %3743
        %3745 = vrot.lane.b32.xlu0 %v1868, 32
        %v3746 = vpop.permute.xlu0 %3745
        %3747 = vrot.lane.b32.xlu0 %v1869, 32
        %v3748 = vpop.permute.xlu0 %3747
        %3749 = vrot.lane.b32.xlu0 %v1870, 32
        %v3750 = vpop.permute.xlu0 %3749
        %3751 = vrot.lane.b32.xlu0 %v1871, 32
        %v3752 = vpop.permute.xlu0 %3751
        %3753 = vrot.lane.b32.xlu0 %v1872, 32
        %v3754 = vpop.permute.xlu0 %3753
        %3787 = vrot.lane.b32.xlu0 %v2211, 48
        %v3788 = vpop.permute.xlu0 %3787
        %3789 = vrot.lane.b32.xlu0 %v2212, 48
        %v3790 = vpop.permute.xlu0 %3789
        %3791 = vrot.lane.b32.xlu0 %v2213, 48
        %v3792 = vpop.permute.xlu0 %3791
        %3793 = vrot.lane.b32.xlu0 %v2214, 48
        %v3794 = vpop.permute.xlu0 %3793
        %3795 = vrot.lane.b32.xlu0 %v2215, 48
        %v3796 = vpop.permute.xlu0 %3795
        %3797 = vrot.lane.b32.xlu0 %v2216, 48
        %v3798 = vpop.permute.xlu0 %3797
        %3799 = vrot.lane.b32.xlu0 %v2217, 48
        %v3800 = vpop.permute.xlu0 %3799
        %3801 = vrot.lane.b32.xlu0 %v2218, 48
        %v3802 = vpop.permute.xlu0 %3801
        %3803 = vrot.lane.b32.xlu0 %v2219, 48
        %v3804 = vpop.permute.xlu0 %3803
        %3805 = vrot.lane.b32.xlu0 %v2220, 48
        %v3806 = vpop.permute.xlu0 %3805
        %3807 = vrot.lane.b32.xlu0 %v2221, 48
        %v3808 = vpop.permute.xlu0 %3807
        %3809 = vrot.lane.b32.xlu0 %v2222, 48
        %v3810 = vpop.permute.xlu0 %3809
        %3811 = vrot.lane.b32.xlu0 %v2223, 48
        %v3812 = vpop.permute.xlu0 %3811
        %3813 = vrot.lane.b32.xlu0 %v2224, 48
        %v3814 = vpop.permute.xlu0 %3813
        %3815 = vrot.lane.b32.xlu0 %v2225, 48
        %v3816 = vpop.permute.xlu0 %3815
        %3817 = vrot.lane.b32.xlu0 %v2226, 48
        %v3818 = vpop.permute.xlu0 %3817
        %3851 = vrot.lane.b32.xlu0 %v2565, 64
        %v3852 = vpop.permute.xlu0 %3851
        %3853 = vrot.lane.b32.xlu0 %v2566, 64
        %v3854 = vpop.permute.xlu0 %3853
        %3855 = vrot.lane.b32.xlu0 %v2567, 64
        %v3856 = vpop.permute.xlu0 %3855
        %3857 = vrot.lane.b32.xlu0 %v2568, 64
        %v3858 = vpop.permute.xlu0 %3857
        %3859 = vrot.lane.b32.xlu0 %v2569, 64
        %v3860 = vpop.permute.xlu0 %3859
        %3861 = vrot.lane.b32.xlu0 %v2570, 64
        %v3862 = vpop.permute.xlu0 %3861
        %3863 = vrot.lane.b32.xlu0 %v2571, 64
        %v3864 = vpop.permute.xlu0 %3863
        %3865 = vrot.lane.b32.xlu0 %v2572, 64
        %v3866 = vpop.permute.xlu0 %3865
        %3867 = vrot.lane.b32.xlu0 %v2573, 64
        %v3868 = vpop.permute.xlu0 %3867
        %3869 = vrot.lane.b32.xlu0 %v2574, 64
        %v3870 = vpop.permute.xlu0 %3869
        %3871 = vrot.lane.b32.xlu0 %v2575, 64
        %v3872 = vpop.permute.xlu0 %3871
        %3873 = vrot.lane.b32.xlu0 %v2576, 64
        %v3874 = vpop.permute.xlu0 %3873
        %3875 = vrot.lane.b32.xlu0 %v2577, 64
        %v3876 = vpop.permute.xlu0 %3875
        %3877 = vrot.lane.b32.xlu0 %v2578, 64
        %v3878 = vpop.permute.xlu0 %3877
        %3879 = vrot.lane.b32.xlu0 %v2579, 64
        %v3880 = vpop.permute.xlu0 %3879
        %3881 = vrot.lane.b32.xlu0 %v2580, 64
        %v3882 = vpop.permute.xlu0 %3881
        %3915 = vrot.lane.b32.xlu0 %v2919, 80
        %v3916 = vpop.permute.xlu0 %3915
        %3917 = vrot.lane.b32.xlu0 %v2920, 80
        %v3918 = vpop.permute.xlu0 %3917
        %3919 = vrot.lane.b32.xlu0 %v2921, 80
        %v3920 = vpop.permute.xlu0 %3919
        %3921 = vrot.lane.b32.xlu0 %v2922, 80
        %v3922 = vpop.permute.xlu0 %3921
        %3923 = vrot.lane.b32.xlu0 %v2923, 80
        %v3924 = vpop.permute.xlu0 %3923
        %3925 = vrot.lane.b32.xlu0 %v2924, 80
        %v3926 = vpop.permute.xlu0 %3925
        %3927 = vrot.lane.b32.xlu0 %v2925, 80
        %v3928 = vpop.permute.xlu0 %3927
        %3929 = vrot.lane.b32.xlu0 %v2926, 80
        %v3930 = vpop.permute.xlu0 %3929
        %3931 = vrot.lane.b32.xlu0 %v2927, 80
        %v3932 = vpop.permute.xlu0 %3931
        %3933 = vrot.lane.b32.xlu0 %v2928, 80
        %v3934 = vpop.permute.xlu0 %3933
        %3935 = vrot.lane.b32.xlu0 %v2929, 80
        %v3936 = vpop.permute.xlu0 %3935
        %3937 = vrot.lane.b32.xlu0 %v2930, 80
        %v3938 = vpop.permute.xlu0 %3937
        %3939 = vrot.lane.b32.xlu0 %v2931, 80
        %v3940 = vpop.permute.xlu0 %3939
        %3941 = vrot.lane.b32.xlu0 %v2932, 80
        %v3942 = vpop.permute.xlu0 %3941
        %3943 = vrot.lane.b32.xlu0 %v2933, 80
        %v3944 = vpop.permute.xlu0 %3943
        %3945 = vrot.lane.b32.xlu0 %v2934, 80
        %v3946 = vpop.permute.xlu0 %3945
        %3979 = vrot.lane.b32.xlu0 %v3273, 96
        %v3980 = vpop.permute.xlu0 %3979
        %3981 = vrot.lane.b32.xlu0 %v3274, 96
        %v3982 = vpop.permute.xlu0 %3981
        %3983 = vrot.lane.b32.xlu0 %v3275, 96
        %v3984 = vpop.permute.xlu0 %3983
        %3985 = vrot.lane.b32.xlu0 %v3276, 96
        %v3986 = vpop.permute.xlu0 %3985
        %3987 = vrot.lane.b32.xlu0 %v3277, 96
        %v3988 = vpop.permute.xlu0 %3987
        %3989 = vrot.lane.b32.xlu0 %v3278, 96
        %v3990 = vpop.permute.xlu0 %3989
        %3991 = vrot.lane.b32.xlu0 %v3279, 96
        %v3992 = vpop.permute.xlu0 %3991
        %3993 = vrot.lane.b32.xlu0 %v3280, 96
        %v3994 = vpop.permute.xlu0 %3993
        %3995 = vrot.lane.b32.xlu0 %v3281, 96
        %v3996 = vpop.permute.xlu0 %3995
        %3997 = vrot.lane.b32.xlu0 %v3282, 96
        %v3998 = vpop.permute.xlu0 %3997
        %3999 = vrot.lane.b32.xlu0 %v3283, 96
        %v4000 = vpop.permute.xlu0 %3999
        %4001 = vrot.lane.b32.xlu0 %v3284, 96
        %v4002 = vpop.permute.xlu0 %4001
        %4003 = vrot.lane.b32.xlu0 %v3285, 96
        %v4004 = vpop.permute.xlu0 %4003
        %4005 = vrot.lane.b32.xlu0 %v3286, 96
        %v4006 = vpop.permute.xlu0 %4005
        %4007 = vrot.lane.b32.xlu0 %v3287, 96
        %v4008 = vpop.permute.xlu0 %4007
        %4009 = vrot.lane.b32.xlu0 %v3288, 96
        %v4010 = vpop.permute.xlu0 %4009
        %4043 = vrot.lane.b32.xlu0 %v3627, 112
        %v4044 = vpop.permute.xlu0 %4043
        %4045 = vrot.lane.b32.xlu0 %v3628, 112
        %v4046 = vpop.permute.xlu0 %4045
        %4047 = vrot.lane.b32.xlu0 %v3629, 112
        %v4048 = vpop.permute.xlu0 %4047
        %4049 = vrot.lane.b32.xlu0 %v3630, 112
        %v4050 = vpop.permute.xlu0 %4049
        %4051 = vrot.lane.b32.xlu0 %v3631, 112
        %v4052 = vpop.permute.xlu0 %4051
        %4053 = vrot.lane.b32.xlu0 %v3632, 112
        %v4054 = vpop.permute.xlu0 %4053
        %4055 = vrot.lane.b32.xlu0 %v3633, 112
        %v4056 = vpop.permute.xlu0 %4055
        %4057 = vrot.lane.b32.xlu0 %v3634, 112
        %v4058 = vpop.permute.xlu0 %4057
        %4059 = vrot.lane.b32.xlu0 %v3635, 112
        %v4060 = vpop.permute.xlu0 %4059
        %4061 = vrot.lane.b32.xlu0 %v3636, 112
        %v4062 = vpop.permute.xlu0 %4061
        %4063 = vrot.lane.b32.xlu0 %v3637, 112
        %v4064 = vpop.permute.xlu0 %4063
        %4065 = vrot.lane.b32.xlu0 %v3638, 112
        %v4066 = vpop.permute.xlu0 %4065
        %4067 = vrot.lane.b32.xlu0 %v3639, 112
        %v4068 = vpop.permute.xlu0 %4067
        %4069 = vrot.lane.b32.xlu0 %v3640, 112
        %v4070 = vpop.permute.xlu0 %4069
        %4071 = vrot.lane.b32.xlu0 %v3641, 112
        %v4072 = vpop.permute.xlu0 %4071
        %4073 = vrot.lane.b32.xlu0 %v3642, 112
        %v4074 = vpop.permute.xlu0 %4073
        %v4091 = vsel %vm818, %v1149, %v3660
        %v4092 = vsel %vm818, %v1150, %v3662
        %v4093 = vsel %vm818, %v1151, %v3664
        %v4094 = vsel %vm818, %v1152, %v3666
        %v4095 = vsel %vm818, %v1153, %v3668
        %v4096 = vsel %vm818, %v1154, %v3670
        %v4097 = vsel %vm818, %v1155, %v3672
        %v4098 = vsel %vm818, %v1156, %v3674
        %v4099 = vsel %vm818, %v1157, %v3676
        %v4100 = vsel %vm818, %v1158, %v3678
        %v4101 = vsel %vm818, %v1159, %v3680
        %v4102 = vsel %vm818, %v1160, %v3682
        %v4103 = vsel %vm818, %v1161, %v3684
        %v4104 = vsel %vm818, %v1162, %v3686
        %v4105 = vsel %vm818, %v1163, %v3688
        %v4106 = vsel %vm818, %v1164, %v3690
        %vm4107 = vcmask 261120
        %v4108 = vsel %vm4107, %v4091, %v3724
        %v4109 = vsel %vm4107, %v4092, %v3726
        %v4110 = vsel %vm4107, %v4093, %v3728
        %v4111 = vsel %vm4107, %v4094, %v3730
        %v4112 = vsel %vm4107, %v4095, %v3732
        %v4113 = vsel %vm4107, %v4096, %v3734
        %v4114 = vsel %vm4107, %v4097, %v3736
        %v4115 = vsel %vm4107, %v4098, %v3738
        %v4116 = vsel %vm4107, %v4099, %v3740
        %v4117 = vsel %vm4107, %v4100, %v3742
        %v4118 = vsel %vm4107, %v4101, %v3744
        %v4119 = vsel %vm4107, %v4102, %v3746
        %v4120 = vsel %vm4107, %v4103, %v3748
        %v4121 = vsel %vm4107, %v4104, %v3750
        %v4122 = vsel %vm4107, %v4105, %v3752
        %v4123 = vsel %vm4107, %v4106, %v3754
        %vm4124 = vcmask 392192
        %v4125 = vsel %vm4124, %v4108, %v3788
        %v4126 = vsel %vm4124, %v4109, %v3790
        %v4127 = vsel %vm4124, %v4110, %v3792
        %v4128 = vsel %vm4124, %v4111, %v3794
        %v4129 = vsel %vm4124, %v4112, %v3796
        %v4130 = vsel %vm4124, %v4113, %v3798
        %v4131 = vsel %vm4124, %v4114, %v3800
        %v4132 = vsel %vm4124, %v4115, %v3802
        %v4133 = vsel %vm4124, %v4116, %v3804
        %v4134 = vsel %vm4124, %v4117, %v3806
        %v4135 = vsel %vm4124, %v4118, %v3808
        %v4136 = vsel %vm4124, %v4119, %v3810
        %v4137 = vsel %vm4124, %v4120, %v3812
        %v4138 = vsel %vm4124, %v4121, %v3814
        %v4139 = vsel %vm4124, %v4122, %v3816
        %v4140 = vsel %vm4124, %v4123, %v3818
        %vm4141 = vcmask 523264
        %v4142 = vsel %vm4141, %v4125, %v3852
        %v4143 = vsel %vm4141, %v4126, %v3854
        %v4144 = vsel %vm4141, %v4127, %v3856
        %v4145 = vsel %vm4141, %v4128, %v3858
        %v4146 = vsel %vm4141, %v4129, %v3860
        %v4147 = vsel %vm4141, %v4130, %v3862
        %v4148 = vsel %vm4141, %v4131, %v3864
        %v4149 = vsel %vm4141, %v4132, %v3866
        %v4150 = vsel %vm4141, %v4133, %v3868
        %v4151 = vsel %vm4141, %v4134, %v3870
        %v4152 = vsel %vm4141, %v4135, %v3872
        %v4153 = vsel %vm4141, %v4136, %v3874
        %v4154 = vsel %vm4141, %v4137, %v3876
        %v4155 = vsel %vm4141, %v4138, %v3878
        %v4156 = vsel %vm4141, %v4139, %v3880
        %v4157 = vsel %vm4141, %v4140, %v3882
        %vm4158 = vcmask 654336
        %v4159 = vsel %vm4158, %v4142, %v3916
        %v4160 = vsel %vm4158, %v4143, %v3918
        %v4161 = vsel %vm4158, %v4144, %v3920
        %v4162 = vsel %vm4158, %v4145, %v3922
        %v4163 = vsel %vm4158, %v4146, %v3924
        %v4164 = vsel %vm4158, %v4147, %v3926
        %v4165 = vsel %vm4158, %v4148, %v3928
        %v4166 = vsel %vm4158, %v4149, %v3930
        %v4167 = vsel %vm4158, %v4150, %v3932
        %v4168 = vsel %vm4158, %v4151, %v3934
        %v4169 = vsel %vm4158, %v4152, %v3936
        %v4170 = vsel %vm4158, %v4153, %v3938
        %v4171 = vsel %vm4158, %v4154, %v3940
        %v4172 = vsel %vm4158, %v4155, %v3942
        %v4173 = vsel %vm4158, %v4156, %v3944
        %v4174 = vsel %vm4158, %v4157, %v3946
        %vm4175 = vcmask 785408
        %v4176 = vsel %vm4175, %v4159, %v3980
        %v4177 = vsel %vm4175, %v4160, %v3982
        %v4178 = vsel %vm4175, %v4161, %v3984
        %v4179 = vsel %vm4175, %v4162, %v3986
        %v4180 = vsel %vm4175, %v4163, %v3988
        %v4181 = vsel %vm4175, %v4164, %v3990
        %v4182 = vsel %vm4175, %v4165, %v3992
        %v4183 = vsel %vm4175, %v4166, %v3994
        %v4184 = vsel %vm4175, %v4167, %v3996
        %v4185 = vsel %vm4175, %v4168, %v3998
        %v4186 = vsel %vm4175, %v4169, %v4000
        %v4187 = vsel %vm4175, %v4170, %v4002
        %v4188 = vsel %vm4175, %v4171, %v4004
        %v4189 = vsel %vm4175, %v4172, %v4006
        %v4190 = vsel %vm4175, %v4173, %v4008
        %v4191 = vsel %vm4175, %v4174, %v4010
        %vm4192 = vcmask 916480
        %v4193 = vsel %vm4192, %v4176, %v4044
        %v4194 = vsel %vm4192, %v4177, %v4046
        %v4195 = vsel %vm4192, %v4178, %v4048
        %v4196 = vsel %vm4192, %v4179, %v4050
        %v4197 = vsel %vm4192, %v4180, %v4052
        %v4198 = vsel %vm4192, %v4181, %v4054
        %v4199 = vsel %vm4192, %v4182, %v4056
        %v4200 = vsel %vm4192, %v4183, %v4058
        %v4201 = vsel %vm4192, %v4184, %v4060
        %v4202 = vsel %vm4192, %v4185, %v4062
        %v4203 = vsel %vm4192, %v4186, %v4064
        %v4204 = vsel %vm4192, %v4187, %v4066
        %v4205 = vsel %vm4192, %v4188, %v4068
        %v4206 = vsel %vm4192, %v4189, %v4070
        %v4207 = vsel %vm4192, %v4190, %v4072
        %v4208 = vsel %vm4192, %v4191, %v4074
        %v4209 = vpack.c.bf16 %v4193, %v4193
        %v4210 = vpack.c.bf16 %v4194, %v4194
        %v4211 = vpack.c.bf16 %v4195, %v4195
        %v4212 = vpack.c.bf16 %v4196, %v4196
        %v4213 = vpack.c.bf16 %v4197, %v4197
        %v4214 = vpack.c.bf16 %v4198, %v4198
        %v4215 = vpack.c.bf16 %v4199, %v4199
        %v4216 = vpack.c.bf16 %v4200, %v4200
        %v4217 = vpack.c.bf16 %v4201, %v4201
        %v4218 = vpack.c.bf16 %v4202, %v4202
        %v4219 = vpack.c.bf16 %v4203, %v4203
        %v4220 = vpack.c.bf16 %v4204, %v4204
        %v4221 = vpack.c.bf16 %v4205, %v4205
        %v4222 = vpack.c.bf16 %v4206, %v4206
        %v4223 = vpack.c.bf16 %v4207, %v4207
        %v4224 = vpack.c.bf16 %v4208, %v4208
        %4225 = vst [vmem:[#allocation3] sm:$0xf] %v4209
        %4226 = vst [vmem:[#allocation3 + $0x4] sm:$0xf] %v4210
        %4227 = vst [vmem:[#allocation3 + $0x8] sm:$0xf] %v4211
        %4228 = vst [vmem:[#allocation3 + $0xc] sm:$0xf] %v4212
        %4229 = vst [vmem:[#allocation3 + $0x10] sm:$0xf] %v4213
        %4230 = vst [vmem:[#allocation3 + $0x14] sm:$0xf] %v4214
        %4231 = vst [vmem:[#allocation3 + $0x18] sm:$0xf] %v4215
        %4232 = vst [vmem:[#allocation3 + $0x1c] sm:$0xf] %v4216
        %4233 = vst [vmem:[#allocation3 + $0x20] sm:$0xf] %v4217
        %4234 = vst [vmem:[#allocation3 + $0x24] sm:$0xf] %v4218
        %4235 = vst [vmem:[#allocation3 + $0x28] sm:$0xf] %v4219
        %4236 = vst [vmem:[#allocation3 + $0x2c] sm:$0xf] %v4220
        %4237 = vst [vmem:[#allocation3 + $0x30] sm:$0xf] %v4221
        %4238 = vst [vmem:[#allocation3 + $0x34] sm:$0xf] %v4222
        %4239 = vst [vmem:[#allocation3 + $0x38] sm:$0xf] %v4223
        %4240 = vst [vmem:[#allocation3 + $0x3c] sm:$0xf] %v4224
        %v4241 = vld [vmem:[#allocation3] sm:$0xf]
        %v4242 = vld [vmem:[#allocation3 + $0x4] sm:$0xf]
        %v4243 = vld [vmem:[#allocation3 + $0x8] sm:$0xf]
        %v4244 = vld [vmem:[#allocation3 + $0xc] sm:$0xf]
        %v4245 = vld [vmem:[#allocation3 + $0x10] sm:$0xf]
        %v4246 = vld [vmem:[#allocation3 + $0x14] sm:$0xf]
        %v4247 = vld [vmem:[#allocation3 + $0x18] sm:$0xf]
        %v4248 = vld [vmem:[#allocation3 + $0x1c] sm:$0xf]
        %v4249 = vld [vmem:[#allocation3 + $0x20] sm:$0xf]
        %v4250 = vld [vmem:[#allocation3 + $0x24] sm:$0xf]
        %v4251 = vld [vmem:[#allocation3 + $0x28] sm:$0xf]
        %v4252 = vld [vmem:[#allocation3 + $0x2c] sm:$0xf]
        %v4253 = vld [vmem:[#allocation3 + $0x30] sm:$0xf]
        %v4254 = vld [vmem:[#allocation3 + $0x34] sm:$0xf]
        %v4255 = vld [vmem:[#allocation3 + $0x38] sm:$0xf]
        %v4256 = vld [vmem:[#allocation3 + $0x3c] sm:$0xf]
        %v4257 = vld [vmem:[#allocation9] sm:$0xf]
        %v4258 = vld [vmem:[#allocation9 + $0x4] sm:$0xf]
        %v4259 = vld [vmem:[#allocation9 + $0x8] sm:$0xf]
        %v4260 = vld [vmem:[#allocation9 + $0xc] sm:$0xf]
        %v4261 = vld [vmem:[#allocation9 + $0x10] sm:$0xf]
        %v4262 = vld [vmem:[#allocation9 + $0x14] sm:$0xf]
        %v4263 = vld [vmem:[#allocation9 + $0x18] sm:$0xf]
        %v4264 = vld [vmem:[#allocation9 + $0x1c] sm:$0xf]
        %v4265 = vld [vmem:[#allocation9 + $0x20] sm:$0xf]
        %v4266 = vld [vmem:[#allocation9 + $0x24] sm:$0xf]
        %v4267 = vld [vmem:[#allocation9 + $0x28] sm:$0xf]
        %v4268 = vld [vmem:[#allocation9 + $0x2c] sm:$0xf]
        %v4269 = vld [vmem:[#allocation9 + $0x30] sm:$0xf]
        %v4270 = vld [vmem:[#allocation9 + $0x34] sm:$0xf]
        %v4271 = vld [vmem:[#allocation9 + $0x38] sm:$0xf]
        %v4272 = vld [vmem:[#allocation9 + $0x3c] sm:$0xf]
        %v4273 = vld [vmem:[%s3] sm:$0x1]
        %v4275 = vperm.slane %v4273, 0
        %v4293 = vunpack.c.l.b16 %v4241
        %v4294 = vunpack.c.l.b16 %v4242
        %v4295 = vunpack.c.l.b16 %v4243
        %v4296 = vunpack.c.l.b16 %v4244
        %v4297 = vunpack.c.l.b16 %v4245
        %v4298 = vunpack.c.l.b16 %v4246
        %v4299 = vunpack.c.l.b16 %v4247
        %v4300 = vunpack.c.l.b16 %v4248
        %v4301 = vunpack.c.l.b16 %v4249
        %v4302 = vunpack.c.l.b16 %v4250
        %v4303 = vunpack.c.l.b16 %v4251
        %v4304 = vunpack.c.l.b16 %v4252
        %v4305 = vunpack.c.l.b16 %v4253
        %v4306 = vunpack.c.l.b16 %v4254
        %v4307 = vunpack.c.l.b16 %v4255
        %v4308 = vunpack.c.l.b16 %v4256
        %v4309 = vpack.c.b16 %v4294, %v4293
        %v4310 = vpack.c.b16 %v4296, %v4295
        %v4311 = vpack.c.b16 %v4298, %v4297
        %v4312 = vpack.c.b16 %v4300, %v4299
        %v4313 = vpack.c.b16 %v4302, %v4301
        %v4314 = vpack.c.b16 %v4304, %v4303
        %v4315 = vpack.c.b16 %v4306, %v4305
        %v4316 = vpack.c.b16 %v4308, %v4307
        %v4341 = vunpack.c.l.b16 %v4257
        %v4342 = vunpack.c.l.b16 %v4258
        %v4343 = vunpack.c.l.b16 %v4259
        %v4344 = vunpack.c.l.b16 %v4260
        %v4345 = vunpack.c.l.b16 %v4261
        %v4346 = vunpack.c.l.b16 %v4262
        %v4347 = vunpack.c.l.b16 %v4263
        %v4348 = vunpack.c.l.b16 %v4264
        %v4349 = vunpack.c.l.b16 %v4265
        %v4350 = vunpack.c.l.b16 %v4266
        %v4351 = vunpack.c.l.b16 %v4267
        %v4352 = vunpack.c.l.b16 %v4268
        %v4353 = vunpack.c.l.b16 %v4269
        %v4354 = vunpack.c.l.b16 %v4270
        %v4355 = vunpack.c.l.b16 %v4271
        %v4356 = vunpack.c.l.b16 %v4272
        %v4357 = vpack.c.b16 %v4342, %v4341
        %v4358 = vpack.c.b16 %v4344, %v4343
        %v4359 = vpack.c.b16 %v4346, %v4345
        %v4360 = vpack.c.b16 %v4348, %v4347
        %v4361 = vpack.c.b16 %v4350, %v4349
        %v4362 = vpack.c.b16 %v4352, %v4351
        %v4363 = vpack.c.b16 %v4354, %v4353
        %v4364 = vpack.c.b16 %v4356, %v4355
        %4373 = vmatpush.bf16.msra.mxu0 %v4364
        %4374 = vmatpush.bf16.msra.mxu0 %v4363
        %4375 = vmatpush.bf16.msra.mxu0 %v4362
        %4376 = vmatpush.bf16.msra.mxu0 %v4361
        %4377 = vmatpush.bf16.msra.mxu0 %v4360
        %4378 = vmatpush.bf16.msra.mxu0 %v4359
        %4379 = vmatpush.bf16.msra.mxu0 %v4358
        %4380 = vmatpush.bf16.msra.mxu0 %v4357
        %4381 = vmatmul.bf16.gmra.mxu0 %v4309
        %v4382 = vpop.f32.mrf.mxu0
        %v4383 = vadd.f32 %v4275, %v4382
        %v4384 = vpop.f32.mrf.mxu0
        %v4385 = vadd.f32 %v4275, %v4384
        %4386 = vmatmul.bf16.gmra.mxu0 %v4310
        %v4387 = vpop.f32.mrf.mxu0
        %v4388 = vadd.f32 %v4275, %v4387
        %v4389 = vpop.f32.mrf.mxu0
        %v4390 = vadd.f32 %v4275, %v4389
        %4391 = vmatmul.bf16.gmra.mxu0 %v4311
        %v4392 = vpop.f32.mrf.mxu0
        %v4393 = vadd.f32 %v4275, %v4392
        %v4394 = vpop.f32.mrf.mxu0
        %v4395 = vadd.f32 %v4275, %v4394
        %4396 = vmatmul.bf16.gmra.mxu0 %v4312
        %v4397 = vpop.f32.mrf.mxu0
        %v4398 = vadd.f32 %v4275, %v4397
        %v4399 = vpop.f32.mrf.mxu0
        %v4400 = vadd.f32 %v4275, %v4399
        %4401 = vmatmul.bf16.gmra.mxu0 %v4313
        %v4402 = vpop.f32.mrf.mxu0
        %v4403 = vadd.f32 %v4275, %v4402
        %v4404 = vpop.f32.mrf.mxu0
        %v4405 = vadd.f32 %v4275, %v4404
        %4406 = vmatmul.bf16.gmra.mxu0 %v4314
        %v4407 = vpop.f32.mrf.mxu0
        %v4408 = vadd.f32 %v4275, %v4407
        %v4409 = vpop.f32.mrf.mxu0
        %v4410 = vadd.f32 %v4275, %v4409
        %4411 = vmatmul.bf16.gmra.mxu0 %v4315
        %v4412 = vpop.f32.mrf.mxu0
        %v4413 = vadd.f32 %v4275, %v4412
        %v4414 = vpop.f32.mrf.mxu0
        %v4415 = vadd.f32 %v4275, %v4414
        %4416 = vmatmul.bf16.gmra.mxu0 %v4316
        %v4417 = vpop.f32.mrf.mxu0
        %v4418 = vadd.f32 %v4275, %v4417
        %v4419 = vpop.f32.mrf.mxu0
        %v4420 = vadd.f32 %v4275, %v4419
        %4421 = vdwg.mxu0
        %4422 = vst [vmem:[%s250] sm:$0xff] %v4383
        %4423 = vst [vmem:[%s250 + $0x8] sm:$0xff] %v4385
        %4424 = vst [vmem:[%s250 + $0x10] sm:$0xff] %v4388
        %4425 = vst [vmem:[%s250 + $0x18] sm:$0xff] %v4390
        %4426 = vst [vmem:[%s250 + $0x20] sm:$0xff] %v4393
        %4427 = vst [vmem:[%s250 + $0x28] sm:$0xff] %v4395
        %4428 = vst [vmem:[%s250 + $0x30] sm:$0xff] %v4398
        %4429 = vst [vmem:[%s250 + $0x38] sm:$0xff] %v4400
        %4430 = vst [vmem:[%s250 + $0x40] sm:$0xff] %v4403
        %4431 = vst [vmem:[%s250 + $0x48] sm:$0xff] %v4405
        %4432 = vst [vmem:[%s250 + $0x50] sm:$0xff] %v4408
        %4433 = vst [vmem:[%s250 + $0x58] sm:$0xff] %v4410
        %4434 = vst [vmem:[%s250 + $0x60] sm:$0xff] %v4413
        %4435 = vst [vmem:[%s250 + $0x68] sm:$0xff] %v4415
        %4436 = vst [vmem:[%s250 + $0x70] sm:$0xff] %v4418
        %4437 = vst [vmem:[%s250 + $0x78] sm:$0xff] %v4420
        %s4438 = sand.u32 %s119, 1
        %s4439 = scalar_lea.sflag [#allocation6], %s4438
        %s4440 = sand.u32 %s119, 1
        %s4441 = smul.addr %s4440, 128
        %s4442 = scalar_lea.vmem [#allocation10], %s4441
        // Predicated region
        $region49: #{tpu_custom_call.1} parent=35 // pred_check
          %p4443 = pneg %p129
        $region50: #{tpu_custom_call.1} parent=35 // pred_check_branch
          %4445 = sbr.rel (%p4443) target = $region52
        $region51: #{tpu_custom_call.1} parent=35 // pred_region
          %4447 = vsyncadd %s4439, 0
          %s4448 = smul.addr %s22, 16
          %s4449 = smul.addr %s4448, 8
          %s4450 = scalar_lea.hbm %s4, %s4449
          %s4451 = sshll.u32 %s4442, 4
          %s4452 = int_to_ptr.vmem [resolvable:$true] %s4451
          %s4453 = sshll.u32 %s4450, 4
          %s4454 = int_to_ptr.hbm [resolvable:$true] %s4453
          %4459 = dma.vmem_to_hbm [thread:$0]  %s4452, 2048, %s4454, %s4439, 128, 128, 8
        $region52: #{tpu_custom_call.1} parent=35 // pred_fallthru
          _
      $region36: #{tpu_custom_call.1} parent=5 // pred_fallthru
        _
      %p4460 = scmp.le.s32.totalorder 2, %s17
      // Predicated region
      $region53: #{tpu_custom_call.1} parent=5 // pred_check
        %p4461 = pneg %p4460
      $region54: #{tpu_custom_call.1} parent=5 // pred_check_branch
        %4463 = sbr.rel (%p4461) target = $region56
      $region55: #{tpu_custom_call.1} parent=5 // pred_region
        %s4464 = ssub.s32 %s17, 2
        // Predicated region
        $region57: #{tpu_custom_call.1} parent=55 // pred_check
          %p4465 = pneg %p135
        $region58: #{tpu_custom_call.1} parent=55 // pred_check_branch
          %4467 = sbr.rel (%p4465) target = $region60
        $region59: #{tpu_custom_call.1} parent=55 // pred_region
          %s4468 = sand.u32 %s120, 1
          %s4469 = scalar_lea.sflag [#allocation6], %s4468
          %s4470 = sand.u32 %s120, 1
          %s4471 = smul.addr %s4470, 128
          %s4472 = scalar_lea.vmem [#allocation10], %s4471
          %4474 = dma.done %s4469, 2048
        $region60: #{tpu_custom_call.1} parent=55 // pred_fallthru
          _
      $region56: #{tpu_custom_call.1} parent=5 // pred_fallthru
        _
    $region6: #{tpu_custom_call.1} parent=1 // loop_footer
      %s21 = sadd.s32 1, %s17
    $region7: #{tpu_custom_call.1} parent=1 // loop_footer_branch
      %16 = sbr.rel target = $region3
    $region8: #{tpu_custom_call.1} parent=1 // loop_exit
      _
    %4475 = vsyncpa [#allocation5], 1
    %s4476 = scalar_lea.sflag [#allocation5], 1
    %4477 = vsyncpa %s4476, 1
    %4478 = vsyncpa [#allocation8], 1
    %4479 = vsyncpa [#allocation6], 1
    %s4480 = scalar_lea.sflag [#allocation6], 1
    %4481 = vsyncpa %s4480, 1

</llo_original>
